<compile_context>
chip_gen: v6e
topology: v6e:2x2x1
jax: 0.10.0
libtpu: 0.0.40
codegen_flags: <defaults>
</compile_context>

<pallas_src>
import functools

import jax
import jax.numpy as jnp
from jax.experimental import pallas as pl
from jax.experimental.pallas import tpu as pltpu


def _round_up(x, m):
    return ((x + m - 1) // m) * m


# ---------------------------------------------------------------------------
# Generic tiled matmul-with-bias:  out = sum_i a_i @ w_i + bias
# Used for the per-layer gates_x precompute (one big GEMM, both directions)
# and for the final Linear.
#
# Grid is (cols, rows) — columns OUTER — so each (K, tn) weight block (index
# map (0, j)) stays resident across the whole inner row sweep and the full
# weight matrix is streamed from HBM only once (important on v5e bandwidth).
# ---------------------------------------------------------------------------
def _matmul_bias(a_list, w_list, bias, *, out_dtype=jnp.float32,
                 tm_cap=512, tn_cap=2048):
    M = a_list[0].shape[0]
    N = w_list[0].shape[1]
    n_a = len(a_list)

    tm = min(tm_cap, _round_up(M, 16))   # 16: keep bf16 sublane tiling happy
    tn = min(tn_cap, N)                  # N is always a multiple of 128 here
    grid = (pl.cdiv(N, tn), pl.cdiv(M, tm))   # cols outer -> weight-resident

    def kernel(*refs):
        a_refs = refs[:n_a]
        w_refs = refs[n_a:2 * n_a]
        b_ref = refs[2 * n_a]
        o_ref = refs[2 * n_a + 1]
        acc = jnp.dot(a_refs[0][...], w_refs[0][...],
                      preferred_element_type=jnp.float32)
        for idx in range(1, n_a):
            acc = acc + jnp.dot(a_refs[idx][...], w_refs[idx][...],
                                preferred_element_type=jnp.float32)
        o_ref[...] = (acc + b_ref[...]).astype(o_ref.dtype)

    # NOTE: if M is not a multiple of tm the edge activation block reads past
    # the array; the garbage only lands in output rows that are discarded
    # (purely row-wise dependence) — do not add any cross-row reduction here.
    in_specs = (
        [pl.BlockSpec((tm, a.shape[1]), lambda j, i: (i, 0)) for a in a_list]
        + [pl.BlockSpec((w.shape[0], tn), lambda j, i: (0, j)) for w in w_list]
        + [pl.BlockSpec((1, tn), lambda j, i: (0, j))]
    )
    return pl.pallas_call(
        kernel,
        grid=grid,
        in_specs=in_specs,
        out_specs=pl.BlockSpec((tm, tn), lambda j, i: (i, j)),
        out_shape=jax.ShapeDtypeStruct((M, N), out_dtype),
        compiler_params=pltpu.CompilerParams(
            dimension_semantics=("parallel", "parallel"),
            vmem_limit_bytes=64 * 1024 * 1024),
    )(*a_list, *w_list, bias)


# ---------------------------------------------------------------------------
# Fused bidirectional LSTM recurrence (one layer, both directions),
# time-chunked: grid axis 0 = chunk index (sequential, "arbitrary").
# gx holds the precomputed input projection for both directions:
#   columns [0, 4Hp)  -> forward  [i|f|g|o]
#   columns [4Hp,8Hp) -> reverse  [i|f|g|o]
# ---------------------------------------------------------------------------
def _bilstm_chunk_kernel(gxf_ref, gxr_ref, whh_f_ref, whh_r_ref,
                         out_f_ref, out_r_ref,
                         hf_scr, cf_scr, hr_scr, cr_scr,
                         hbuf_f, hbuf_r, *, Tc):
    t = pl.program_id(0)

    @pl.when(t == 0)
    def _():
        for s in (hf_scr, cf_scr, hr_scr, cr_scr):
            s[...] = jnp.zeros_like(s)

    Hp = hf_scr.shape[-1]   # multiple of 128 -> 128-aligned gate slices
    whh_f = whh_f_ref[...]  # hoist weight loads out of the unrolled loop
    whh_r = whh_r_ref[...]

    def lstm_step(gx_row, h, c, whh):
        # gx_row already contains x @ W_ih + b_ih + b_hh (bf16); accumulate f32.
        gates = gx_row.astype(jnp.float32) + jnp.dot(
            h.astype(jnp.bfloat16), whh, preferred_element_type=jnp.float32)
        i_g = jax.nn.sigmoid(gates[:, 0 * Hp:1 * Hp])
        f_g = jax.nn.sigmoid(gates[:, 1 * Hp:2 * Hp])
        g_g = jnp.tanh(gates[:, 2 * Hp:3 * Hp])
        o_g = jax.nn.sigmoid(gates[:, 3 * Hp:4 * Hp])
        c_new = f_g * c + i_g * g_g
        h_new = o_g * jnp.tanh(c_new)
        return h_new, c_new

    def body(tau, carry):
        h_f, c_f, h_r, c_r = carry
        # forward: local step tau of this chunk
        h_f, c_f = lstm_step(gxf_ref[tau], h_f, c_f, whh_f)
        hbuf_f[tau] = h_f                       # (B, Hp) f32: dense (8,128) store
        # reverse: local step Tc-1-tau of the mirrored chunk
        h_r, c_r = lstm_step(gxr_ref[Tc - 1 - tau], h_r, c_r, whh_r)
        hbuf_r[Tc - 1 - tau] = h_r
        return (h_f, c_f, h_r, c_r)

    carry0 = (hf_scr[...], cf_scr[...], hr_scr[...], cr_scr[...])
    h_f, c_f, h_r, c_r = jax.lax.fori_loop(0, Tc, body, carry0, unroll=True)
    hf_scr[...] = h_f
    cf_scr[...] = c_f
    hr_scr[...] = h_r
    cr_scr[...] = c_r

    # One dense (Tc*B, Hp) bf16 store per chunk per direction.
    out_f_ref[...] = hbuf_f[...].astype(out_f_ref.dtype)
    out_r_ref[...] = hbuf_r[...].astype(out_r_ref.dtype)


def _bilstm_layer(gx, whh_f, whh_r, *, B, Hp, tc=8):
    """gx: (T, B, 8*Hp) bf16.  Returns (hf, hr), each (T, B, Hp) bf16."""
    T = gx.shape[0]
    Tc = max(1, min(tc, T))
    n_chunks = (T + Tc - 1) // Tc
    Tp = n_chunks * Tc
    if Tp > T:
        # Zero-gx steps on zero state are exact no-ops (see header comment).
        gx = jnp.pad(gx, ((0, Tp - T), (0, 0), (0, 0)))

    kernel = functools.partial(_bilstm_chunk_kernel, Tc=Tc)
    outs = pl.pallas_call(
        kernel,
        grid=(n_chunks,),
        in_specs=[
            pl.BlockSpec((Tc, B, 4 * Hp), lambda t: (t, 0, 0)),               # fwd gx
            pl.BlockSpec((Tc, B, 4 * Hp), lambda t: (n_chunks - 1 - t, 0, 1)),# rev gx
            pl.BlockSpec((Hp, 4 * Hp), lambda t: (0, 0)),                     # W_hh fwd
            pl.BlockSpec((Hp, 4 * Hp), lambda t: (0, 0)),                     # W_hh rev
        ],
        out_specs=[
            pl.BlockSpec((Tc, B, Hp), lambda t: (t, 0, 0)),                   # fwd out
            pl.BlockSpec((Tc, B, Hp), lambda t: (n_chunks - 1 - t, 0, 0)),    # rev out
        ],
        out_shape=[
            jax.ShapeDtypeStruct((Tp, B, Hp), jnp.bfloat16),
            jax.ShapeDtypeStruct((Tp, B, Hp), jnp.bfloat16),
        ],
        scratch_shapes=(
            [pltpu.VMEM((B, Hp), jnp.float32) for _ in range(4)]       # h/c x 2 dir
            + [pltpu.VMEM((Tc, B, Hp), jnp.float32) for _ in range(2)]  # chunk h bufs
        ),
        compiler_params=pltpu.CompilerParams(
            dimension_semantics=("arbitrary",),        # recurrence is sequential
            vmem_limit_bytes=64 * 1024 * 1024),
    )(gx, gx, whh_f, whh_r)
    hf, hr = outs
    if Tp > T:
        hf, hr = hf[:T], hr[:T]
    return hf, hr


# ---------------------------------------------------------------------------
# Parameters: raw PyTorch-layout init + transformation to the kernel layout.
# ---------------------------------------------------------------------------
def init_params(key, input_dim, hidden_dim, output_dim, num_layers=3):
    """PyTorch-layout params: w_ih (4H, Din), w_hh (4H, H), b_ih/b_hh (4H,)."""
    bound = 1.0 / float(hidden_dim) ** 0.5
    layers = []
    for layer in range(num_layers):
        d_in = input_dim if layer == 0 else 2 * hidden_dim
        dirs = []
        for _direction in range(2):  # 0 = forward, 1 = reverse
            key, k1, k2, k3, k4 = jax.random.split(key, 5)
            w_ih = jax.random.uniform(k1, (4 * hidden_dim, d_in), jnp.float32,
                                      -bound, bound)
            w_hh = jax.random.uniform(k2, (4 * hidden_dim, hidden_dim),
                                      jnp.float32, -bound, bound)
            b_ih = jax.random.uniform(k3, (4 * hidden_dim,), jnp.float32,
                                      -bound, bound)
            b_hh = jax.random.uniform(k4, (4 * hidden_dim,), jnp.float32,
                                      -bound, bound)
            dirs.append((w_ih, w_hh, b_ih, b_hh))
        layers.append(tuple(dirs))
    fc_bound = 1.0 / float(2 * hidden_dim) ** 0.5
    key, kw, kb = jax.random.split(key, 3)
    fc_w = jax.random.uniform(kw, (output_dim, 2 * hidden_dim), jnp.float32,
                              -fc_bound, fc_bound)
    fc_b = jax.random.uniform(kb, (output_dim,), jnp.float32, -fc_bound, fc_bound)
    return {"lstm": layers, "fc_w": fc_w, "fc_b": fc_b}


def prepare_params(raw, input_dim, hidden_dim, output_dim):
    """Transform PyTorch-layout params into the padded, pre-transposed,
    direction-fused bf16 layout used by the kernels."""
    H = hidden_dim
    Hp = _round_up(H, 128)                 # pad hidden to 128-lane alignment
    Op = _round_up(output_dim, 128)        # pad vocab to 128-lane alignment
    Dp = _round_up(input_dim, 128)         # pad layer-0 K to 128-lane alignment

    def pad_gate_cols(w_t):                # (K, 4H) -> (K, 4Hp), per-gate pad
        K = w_t.shape[0]
        w = w_t.reshape(K, 4, H)
        w = jnp.pad(w, ((0, 0), (0, 0), (0, Hp - H)))
        return w.reshape(K, 4 * Hp)

    layers = []
    for li, (fwd, rev) in enumerate(raw["lstm"]):
        per_dir = []
        for (w_ih, w_hh, b_ih, b_hh) in (fwd, rev):
            w_ih_t = pad_gate_cols(w_ih.T)                        # (Din, 4Hp)
            w_hh_t = pad_gate_cols(w_hh.T)                        # (H,   4Hp)
            w_hh_t = jnp.pad(w_hh_t, ((0, Hp - H), (0, 0)))       # (Hp,  4Hp)
            b = pad_gate_cols((b_ih + b_hh)[None, :])[0]          # (4Hp,)
            per_dir.append((w_ih_t, w_hh_t, b))

        bias = jnp.concatenate([per_dir[0][2], per_dir[1][2]])[None, :]
        bias = bias.astype(jnp.float32)                           # (1, 8Hp)
        whh_f = per_dir[0][1].astype(jnp.bfloat16)
        whh_r = per_dir[1][1].astype(jnp.bfloat16)

        if li == 0:
            # single input x: one (Dp, 8Hp) weight for both directions, with the
            # K dim zero-padded to a multiple of 128 (x is padded to match).
            w_in = jnp.concatenate([per_dir[0][0], per_dir[1][0]], axis=1)
            w_in = jnp.pad(w_in, ((0, Dp - input_dim), (0, 0)))
            layers.append(dict(w_in=w_in.astype(jnp.bfloat16), bias=bias,
                               whh_f=whh_f, whh_r=whh_r))
        else:
            # input is (hf, hr): split each direction's (2H, 4Hp) into the
            # contribution from hf (rows :H) and from hr (rows H:2H).
            parts = []
            for d in range(2):
                wt = per_dir[d][0]
                top = jnp.pad(wt[:H], ((0, Hp - H), (0, 0)))      # (Hp, 4Hp)
                bot = jnp.pad(wt[H:2 * H], ((0, Hp - H), (0, 0))) # (Hp, 4Hp)
                parts.append((top, bot))
            w_in_f = jnp.concatenate([parts[0][0], parts[1][0]],
                                     axis=1).astype(jnp.bfloat16)  # (Hp, 8Hp)
            w_in_r = jnp.concatenate([parts[0][1], parts[1][1]],
                                     axis=1).astype(jnp.bfloat16)  # (Hp, 8Hp)
            layers.append(dict(w_in_f=w_in_f, w_in_r=w_in_r, bias=bias,
                               whh_f=whh_f, whh_r=whh_r))

    fc_w_t = raw["fc_w"].T                                        # (2H, O)
    fc_w_f = jnp.pad(fc_w_t[:H], ((0, Hp - H), (0, Op - output_dim)))
    fc_w_r = jnp.pad(fc_w_t[H:], ((0, Hp - H), (0, Op - output_dim)))
    fc_b = jnp.pad(raw["fc_b"], (0, Op - output_dim))[None, :].astype(jnp.float32)
    return dict(layers=layers,
                fc_w_f=fc_w_f.astype(jnp.bfloat16),
                fc_w_r=fc_w_r.astype(jnp.bfloat16),
                fc_b=fc_b)


# ---------------------------------------------------------------------------
# Full forward: x (B, T, input_dim) -> logits (B, T, output_dim)
# ---------------------------------------------------------------------------
def speech_rnn_ctc_forward(x, params, *, output_dim, time_chunk=8):
    B, T, Din = x.shape
    Hp = params["layers"][0]["whh_f"].shape[0]
    Dp = params["layers"][0]["w_in"].shape[0]

    # Single small layout fix-up (raw input only); all inter-layer activations
    # are produced/consumed time-major as separate fwd/rev arrays, so no
    # full-activation transposes or concats ever happen.
    x_tm = jnp.transpose(x, (1, 0, 2)).reshape(T * B, Din)
    if Dp > Din:
        x_tm = jnp.pad(x_tm, ((0, 0), (0, Dp - Din)))   # lane-aligned K
    x_tm = x_tm.astype(jnp.bfloat16)

    hf = hr = None
    for layer in params["layers"]:
        if "w_in" in layer:   # first layer: input is x
            gx = _matmul_bias([x_tm], [layer["w_in"]], layer["bias"],
                              out_dtype=jnp.bfloat16)
        else:                 # deep layers: input is (hf, hr), no concat
            gx = _matmul_bias(
                [hf.reshape(T * B, Hp), hr.reshape(T * B, Hp)],
                [layer["w_in_f"], layer["w_in_r"]],
                layer["bias"], out_dtype=jnp.bfloat16)
        gx = gx.reshape(T, B, 8 * Hp)   # stays in HBM; streamed per time chunk
        hf, hr = _bilstm_layer(gx, layer["whh_f"], layer["whh_r"],
                               B=B, Hp=Hp, tc=time_chunk)

    logits = _matmul_bias(
        [hf.reshape(T * B, Hp), hr.reshape(T * B, Hp)],
        [params["fc_w_f"], params["fc_w_r"]],
        params["fc_b"])                          # (T*B, Op) f32, lane-dense
    Op = logits.shape[-1]
    logits = logits.reshape(T, B, Op)
    # Transpose the 128-aligned padded slab (lane-dense copy), THEN slice.
    return jnp.transpose(logits, (1, 0, 2))[:, :, :output_dim]


# ---------------------------------------------------------------------------
# Pure-JAX f32 reference (mirrors nn.LSTM(bidirectional=True, batch_first=True))
# ---------------------------------------------------------------------------
def reference_forward(x, raw, *, hidden_dim):
    H = hidden_dim

    def run_dir(seq, w_ih, w_hh, b_ih, b_hh):
        def step(carry, x_t):
            h, c = carry
            gates = x_t @ w_ih.T + h @ w_hh.T + b_ih + b_hh
            i_g, f_g, g_g, o_g = jnp.split(gates, 4, axis=-1)
            i_g = jax.nn.sigmoid(i_g)
            f_g = jax.nn.sigmoid(f_g)
            g_g = jnp.tanh(g_g)
            o_g = jax.nn.sigmoid(o_g)
            c = f_g * c + i_g * g_g
            h = o_g * jnp.tanh(c)
            return (h, c), h
        Bn = seq.shape[1]
        init = (jnp.zeros((Bn, H), jnp.float32), jnp.zeros((Bn, H), jnp.float32))
        _, hs = jax.lax.scan(step, init, seq)
        return hs

    h = jnp.transpose(x, (1, 0, 2))
    for fwd, rev in raw["lstm"]:
        hf = run_dir(h, *fwd)
        hr = run_dir(h[::-1], *rev)[::-1]
        h = jnp.concatenate([hf, hr], axis=-1)
    logits = h @ raw["fc_w"].T + raw["fc_b"]
    return jnp.transpose(logits, (1, 0, 2))


# ---------------------------------------------------------------------------
if __name__ == "__main__":
    # Small demo shapes (B >= 8 so the recurrent GEMM fills full sublanes).
    # T=12 with time_chunk=8 deliberately exercises the zero-padded final chunk.
    B, T = 8, 12
    INPUT_DIM, HIDDEN_DIM, OUTPUT_DIM = 16, 32, 12  # OUTPUT_DIM ~ len(CHAR_VOCAB)

    key = jax.random.PRNGKey(0)
    key_x, key_p = jax.random.split(key)
    x = jax.random.normal(key_x, (B, T, INPUT_DIM), jnp.float32)

    raw_params = init_params(key_p, INPUT_DIM, HIDDEN_DIM, OUTPUT_DIM, num_layers=3)
    params = prepare_params(raw_params, INPUT_DIM, HIDDEN_DIM, OUTPUT_DIM)

    fwd = jax.jit(functools.partial(speech_rnn_ctc_forward,
                                    output_dim=OUTPUT_DIM, time_chunk=8))
    out = jax.block_until_ready(fwd(x, params))
    assert out.shape == (B, T, OUTPUT_DIM), out.shape

    # Loose sanity check against the pure-JAX f32 reference (kernel path uses
    # bf16 weights / bf16 gx / streamed bf16 activations, so exact match is
    # not expected).
    ref = jax.block_until_ready(
        jax.jit(functools.partial(reference_forward, hidden_dim=HIDDEN_DIM))(
            x, raw_params))
    max_err = float(jnp.max(jnp.abs(out - ref)))
    assert max_err < 0.1, f"max abs error vs reference too large: {max_err}"

    print("KERNEL_OK")
</pallas_src>

<mosaic_0001>
module attributes {stable_mosaic.version = 11 : i64} {
  func.func @kernel(%arg0: i32, %arg1: i32, %arg2: memref<96x128xbf16, #tpu.memory_space<vmem>>, %arg3: memref<128x1024xbf16, #tpu.memory_space<vmem>>, %arg4: memref<1x1024xf32, #tpu.memory_space<vmem>>, %arg5: memref<96x1024xbf16, #tpu.memory_space<vmem>>) attributes {dimension_semantics = [#tpu.dimension_semantics<parallel>, #tpu.dimension_semantics<parallel>], iteration_bounds = array<i64: 1, 1>, scalar_prefetch = 0 : i64, scratch_operands = 0 : i64, tpu.core_type = #tpu.core_type<tc>, window_params = [{transform_indices = @transform_0, window_bounds = array<i64: 96, 128>}, {transform_indices = @transform_1, window_bounds = array<i64: 128, 1024>}, {transform_indices = @transform_2, window_bounds = array<i64: 1, 1024>}, {transform_indices = @transform_3, window_bounds = array<i64: 96, 1024>}]} {
    %c0 = arith.constant 0 : index
    %c0_0 = arith.constant 0 : index
    %0 = vector.load %arg2[%c0, %c0_0] : memref<96x128xbf16, #tpu.memory_space<vmem>>, vector<96x128xbf16>
    %c0_1 = arith.constant 0 : index
    %c0_2 = arith.constant 0 : index
    %1 = vector.load %arg3[%c0_1, %c0_2] : memref<128x1024xbf16, #tpu.memory_space<vmem>>, vector<128x1024xbf16>
    %cst = arith.constant dense<0.000000e+00> : vector<96x1024xf32>
    %2 = tpu.matmul %0, %1, %cst {dimension_numbers = #tpu.dot_dimension_numbers<[1], [0], [0], [1], [0, 0, 1, 1], [], []>} : vector<96x128xbf16>, vector<128x1024xbf16>, vector<96x1024xf32> -> vector<96x1024xf32>
    %c0_3 = arith.constant 0 : index
    %c0_4 = arith.constant 0 : index
    %3 = vector.load %arg4[%c0_3, %c0_4] : memref<1x1024xf32, #tpu.memory_space<vmem>>, vector<1x1024xf32>
    %4 = vector.broadcast %3 : vector<1x1024xf32> to vector<96x1024xf32>
    %5 = arith.addf %2, %4 : vector<96x1024xf32>
    %6 = arith.truncf %5 : vector<96x1024xf32> to vector<96x1024xbf16>
    %c0_5 = arith.constant 0 : index
    %c0_6 = arith.constant 0 : index
    %7 = vector.load %arg5[%c0_5, %c0_6] : memref<96x1024xbf16, #tpu.memory_space<vmem>>, vector<96x1024xbf16>
    tpu.vector_store %arg5[%c0_5, %c0_6], %6 {strides = array<i32>} : memref<96x1024xbf16, #tpu.memory_space<vmem>>, vector<96x1024xbf16>,
    return
  }
  func.func @transform_0(%arg0: i32, %arg1: i32) -> (i32, i32) {
    %c0_i32 = arith.constant 0 : i32
    %c0_i32_0 = arith.constant 0 : i32
    return %arg1, %c0_i32 : i32, i32
  }
  func.func @transform_1(%arg0: i32, %arg1: i32) -> (i32, i32) {
    %c0_i32 = arith.constant 0 : i32
    %c0_i32_0 = arith.constant 0 : i32
    return %c0_i32, %arg0 : i32, i32
  }
  func.func @transform_2(%arg0: i32, %arg1: i32) -> (i32, i32) {
    %c0_i32 = arith.constant 0 : i32
    %c0_i32_0 = arith.constant 0 : i32
    return %c0_i32, %arg0 : i32, i32
  }
  func.func @transform_3(%arg0: i32, %arg1: i32) -> (i32, i32) {
    %c0_i32 = arith.constant 0 : i32
    return %arg1, %arg0 : i32, i32
  }
}

module attributes {stable_mosaic.version = 11 : i64} {
  func.func @kernel(%arg0: i32, %arg1: i32, %arg2: memref<96x128xbf16, #tpu.memory_space<vmem>>, %arg3: memref<96x128xbf16, #tpu.memory_space<vmem>>, %arg4: memref<128x1024xbf16, #tpu.memory_space<vmem>>, %arg5: memref<128x1024xbf16, #tpu.memory_space<vmem>>, %arg6: memref<1x1024xf32, #tpu.memory_space<vmem>>, %arg7: memref<96x1024xbf16, #tpu.memory_space<vmem>>) attributes {dimension_semantics = [#tpu.dimension_semantics<parallel>, #tpu.dimension_semantics<parallel>], iteration_bounds = array<i64: 1, 1>, scalar_prefetch = 0 : i64, scratch_operands = 0 : i64, tpu.core_type = #tpu.core_type<tc>, window_params = [{transform_indices = @transform_0, window_bounds = array<i64: 96, 128>}, {transform_indices = @transform_1, window_bounds = array<i64: 96, 128>}, {transform_indices = @transform_2, window_bounds = array<i64: 128, 1024>}, {transform_indices = @transform_3, window_bounds = array<i64: 128, 1024>}, {transform_indices = @transform_4, window_bounds = array<i64: 1, 1024>}, {transform_indices = @transform_5, window_bounds = array<i64: 96, 1024>}]} {
    %c0 = arith.constant 0 : index
    %c0_0 = arith.constant 0 : index
    %0 = vector.load %arg2[%c0, %c0_0] : memref<96x128xbf16, #tpu.memory_space<vmem>>, vector<96x128xbf16>
    %c0_1 = arith.constant 0 : index
    %c0_2 = arith.constant 0 : index
    %1 = vector.load %arg4[%c0_1, %c0_2] : memref<128x1024xbf16, #tpu.memory_space<vmem>>, vector<128x1024xbf16>
    %cst = arith.constant dense<0.000000e+00> : vector<96x1024xf32>
    %2 = tpu.matmul %0, %1, %cst {dimension_numbers = #tpu.dot_dimension_numbers<[1], [0], [0], [1], [0, 0, 1, 1], [], []>} : vector<96x128xbf16>, vector<128x1024xbf16>, vector<96x1024xf32> -> vector<96x1024xf32>
    %c0_3 = arith.constant 0 : index
    %c0_4 = arith.constant 0 : index
    %3 = vector.load %arg3[%c0_3, %c0_4] : memref<96x128xbf16, #tpu.memory_space<vmem>>, vector<96x128xbf16>
    %c0_5 = arith.constant 0 : index
    %c0_6 = arith.constant 0 : index
    %4 = vector.load %arg5[%c0_5, %c0_6] : memref<128x1024xbf16, #tpu.memory_space<vmem>>, vector<128x1024xbf16>
    %cst_7 = arith.constant dense<0.000000e+00> : vector<96x1024xf32>
    %5 = tpu.matmul %3, %4, %cst_7 {dimension_numbers = #tpu.dot_dimension_numbers<[1], [0], [0], [1], [0, 0, 1, 1], [], []>} : vector<96x128xbf16>, vector<128x1024xbf16>, vector<96x1024xf32> -> vector<96x1024xf32>
    %6 = arith.addf %2, %5 : vector<96x1024xf32>
    %c0_8 = arith.constant 0 : index
    %c0_9 = arith.constant 0 : index
    %7 = vector.load %arg6[%c0_8, %c0_9] : memref<1x1024xf32, #tpu.memory_space<vmem>>, vector<1x1024xf32>
    %8 = vector.broadcast %7 : vector<1x1024xf32> to vector<96x1024xf32>
    %9 = arith.addf %6, %8 : vector<96x1024xf32>
    %10 = arith.truncf %9 : vector<96x1024xf32> to vector<96x1024xbf16>
    %c0_10 = arith.constant 0 : index
    %c0_11 = arith.constant 0 : index
    %11 = vector.load %arg7[%c0_10, %c0_11] : memref<96x1024xbf16, #tpu.memory_space<vmem>>, vector<96x1024xbf16>
    tpu.vector_store %arg7[%c0_10, %c0_11], %10 {strides = array<i32>} : memref<96x1024xbf16, #tpu.memory_space<vmem>>, vector<96x1024xbf16>,
    return
  }
  func.func @transform_0(%arg0: i32, %arg1: i32) -> (i32, i32) {
    %c0_i32 = arith.constant 0 : i32
    %c0_i32_0 = arith.constant 0 : i32
    return %arg1, %c0_i32 : i32, i32
  }
  func.func @transform_1(%arg0: i32, %arg1: i32) -> (i32, i32) {
    %c0_i32 = arith.constant 0 : i32
    %c0_i32_0 = arith.constant 0 : i32
    return %arg1, %c0_i32 : i32, i32
  }
  func.func @transform_2(%arg0: i32, %arg1: i32) -> (i32, i32) {
    %c0_i32 = arith.constant 0 : i32
    %c0_i32_0 = arith.constant 0 : i32
    return %c0_i32, %arg0 : i32, i32
  }
  func.func @transform_3(%arg0: i32, %arg1: i32) -> (i32, i32) {
    %c0_i32 = arith.constant 0 : i32
    %c0_i32_0 = arith.constant 0 : i32
    return %c0_i32, %arg0 : i32, i32
  }
  func.func @transform_4(%arg0: i32, %arg1: i32) -> (i32, i32) {
    %c0_i32 = arith.constant 0 : i32
    %c0_i32_0 = arith.constant 0 : i32
    return %c0_i32, %arg0 : i32, i32
  }
  func.func @transform_5(%arg0: i32, %arg1: i32) -> (i32, i32) {
    %c0_i32 = arith.constant 0 : i32
    return %arg1, %arg0 : i32, i32
  }
}

module attributes {stable_mosaic.version = 11 : i64} {
  func.func @kernel(%arg0: i32, %arg1: i32, %arg2: memref<96x128xbf16, #tpu.memory_space<vmem>>, %arg3: memref<96x128xbf16, #tpu.memory_space<vmem>>, %arg4: memref<128x128xbf16, #tpu.memory_space<vmem>>, %arg5: memref<128x128xbf16, #tpu.memory_space<vmem>>, %arg6: memref<1x128xf32, #tpu.memory_space<vmem>>, %arg7: memref<96x128xf32, #tpu.memory_space<vmem>>) attributes {dimension_semantics = [#tpu.dimension_semantics<parallel>, #tpu.dimension_semantics<parallel>], iteration_bounds = array<i64: 1, 1>, scalar_prefetch = 0 : i64, scratch_operands = 0 : i64, tpu.core_type = #tpu.core_type<tc>, window_params = [{transform_indices = @transform_0, window_bounds = array<i64: 96, 128>}, {transform_indices = @transform_1, window_bounds = array<i64: 96, 128>}, {transform_indices = @transform_2, window_bounds = array<i64: 128, 128>}, {transform_indices = @transform_3, window_bounds = array<i64: 128, 128>}, {transform_indices = @transform_4, window_bounds = array<i64: 1, 128>}, {transform_indices = @transform_5, window_bounds = array<i64: 96, 128>}]} {
    %c0 = arith.constant 0 : index
    %c0_0 = arith.constant 0 : index
    %0 = vector.load %arg2[%c0, %c0_0] : memref<96x128xbf16, #tpu.memory_space<vmem>>, vector<96x128xbf16>
    %c0_1 = arith.constant 0 : index
    %c0_2 = arith.constant 0 : index
    %1 = vector.load %arg4[%c0_1, %c0_2] : memref<128x128xbf16, #tpu.memory_space<vmem>>, vector<128x128xbf16>
    %cst = arith.constant dense<0.000000e+00> : vector<96x128xf32>
    %2 = tpu.matmul %0, %1, %cst {dimension_numbers = #tpu.dot_dimension_numbers<[1], [0], [0], [1], [0, 0, 1, 1], [], []>} : vector<96x128xbf16>, vector<128x128xbf16>, vector<96x128xf32> -> vector<96x128xf32>
    %c0_3 = arith.constant 0 : index
    %c0_4 = arith.constant 0 : index
    %3 = vector.load %arg3[%c0_3, %c0_4] : memref<96x128xbf16, #tpu.memory_space<vmem>>, vector<96x128xbf16>
    %c0_5 = arith.constant 0 : index
    %c0_6 = arith.constant 0 : index
    %4 = vector.load %arg5[%c0_5, %c0_6] : memref<128x128xbf16, #tpu.memory_space<vmem>>, vector<128x128xbf16>
    %cst_7 = arith.constant dense<0.000000e+00> : vector<96x128xf32>
    %5 = tpu.matmul %3, %4, %cst_7 {dimension_numbers = #tpu.dot_dimension_numbers<[1], [0], [0], [1], [0, 0, 1, 1], [], []>} : vector<96x128xbf16>, vector<128x128xbf16>, vector<96x128xf32> -> vector<96x128xf32>
    %6 = arith.addf %2, %5 : vector<96x128xf32>
    %c0_8 = arith.constant 0 : index
    %c0_9 = arith.constant 0 : index
    %7 = vector.load %arg6[%c0_8, %c0_9] : memref<1x128xf32, #tpu.memory_space<vmem>>, vector<1x128xf32>
    %8 = vector.broadcast %7 : vector<1x128xf32> to vector<96x128xf32>
    %9 = arith.addf %6, %8 : vector<96x128xf32>
    %c0_10 = arith.constant 0 : index
    %c0_11 = arith.constant 0 : index
    %10 = vector.load %arg7[%c0_10, %c0_11] : memref<96x128xf32, #tpu.memory_space<vmem>>, vector<96x128xf32>
    tpu.vector_store %arg7[%c0_10, %c0_11], %9 {strides = array<i32>} : memref<96x128xf32, #tpu.memory_space<vmem>>, vector<96x128xf32>,
    return
  }
  func.func @transform_0(%arg0: i32, %arg1: i32) -> (i32, i32) {
    %c0_i32 = arith.constant 0 : i32
    %c0_i32_0 = arith.constant 0 : i32
    return %arg1, %c0_i32 : i32, i32
  }
  func.func @transform_1(%arg0: i32, %arg1: i32) -> (i32, i32) {
    %c0_i32 = arith.constant 0 : i32
    %c0_i32_0 = arith.constant 0 : i32
    return %arg1, %c0_i32 : i32, i32
  }
  func.func @transform_2(%arg0: i32, %arg1: i32) -> (i32, i32) {
    %c0_i32 = arith.constant 0 : i32
    %c0_i32_0 = arith.constant 0 : i32
    return %c0_i32, %arg0 : i32, i32
  }
  func.func @transform_3(%arg0: i32, %arg1: i32) -> (i32, i32) {
    %c0_i32 = arith.constant 0 : i32
    %c0_i32_0 = arith.constant 0 : i32
    return %c0_i32, %arg0 : i32, i32
  }
  func.func @transform_4(%arg0: i32, %arg1: i32) -> (i32, i32) {
    %c0_i32 = arith.constant 0 : i32
    %c0_i32_0 = arith.constant 0 : i32
    return %c0_i32, %arg0 : i32, i32
  }
  func.func @transform_5(%arg0: i32, %arg1: i32) -> (i32, i32) {
    %c0_i32 = arith.constant 0 : i32
    return %arg1, %arg0 : i32, i32
  }
}

module attributes {stable_mosaic.version = 11 : i64} {
  func.func @_bilstm_chunk_kernel(%arg0: i32, %arg1: memref<8x8x512xbf16, #tpu.memory_space<vmem>>, %arg2: memref<8x8x512xbf16, #tpu.memory_space<vmem>>, %arg3: memref<128x512xbf16, #tpu.memory_space<vmem>>, %arg4: memref<128x512xbf16, #tpu.memory_space<vmem>>, %arg5: memref<8x8x128xbf16, #tpu.memory_space<vmem>>, %arg6: memref<8x8x128xbf16, #tpu.memory_space<vmem>>, %arg7: memref<8x128xf32, #tpu.memory_space<vmem>>, %arg8: memref<8x128xf32, #tpu.memory_space<vmem>>, %arg9: memref<8x128xf32, #tpu.memory_space<vmem>>, %arg10: memref<8x128xf32, #tpu.memory_space<vmem>>, %arg11: memref<8x8x128xf32, #tpu.memory_space<vmem>>, %arg12: memref<8x8x128xf32, #tpu.memory_space<vmem>>) attributes {dimension_semantics = [#tpu.dimension_semantics<arbitrary>], iteration_bounds = array<i64: 2>, scalar_prefetch = 0 : i64, scratch_operands = 6 : i64, tpu.core_type = #tpu.core_type<tc>, window_params = [{transform_indices = @transform_0, window_bounds = array<i64: 8, 8, 512>}, {transform_indices = @transform_1, window_bounds = array<i64: 8, 8, 512>}, {pipeline_mode = #tpu.pipeline_mode<synchronous>, transform_indices = @transform_2, window_bounds = array<i64: 128, 512>}, {pipeline_mode = #tpu.pipeline_mode<synchronous>, transform_indices = @transform_3, window_bounds = array<i64: 128, 512>}, {transform_indices = @transform_4, window_bounds = array<i64: 8, 8, 128>}, {transform_indices = @transform_5, window_bounds = array<i64: 8, 8, 128>}]} {
    %c0_i32 = arith.constant 0 : i32
    %0 = arith.cmpi eq, %arg0, %c0_i32 : i32
    %1 = arith.extui %0 : i1 to i32
    %c0_i32_0 = arith.constant 0 : i32
    %2 = arith.cmpi ne, %1, %c0_i32_0 : i32
    scf.if %2 {
      %cst_176 = arith.constant 0.000000e+00 : f32
      %611 = vector.broadcast %cst_176 : f32 to vector<8x128xf32>
      %c0_177 = arith.constant 0 : index
      %c0_178 = arith.constant 0 : index
      %612 = vector.load %arg7[%c0_177, %c0_178] : memref<8x128xf32, #tpu.memory_space<vmem>>, vector<8x128xf32>
      tpu.vector_store %arg7[%c0_177, %c0_178], %611 {strides = array<i32>} : memref<8x128xf32, #tpu.memory_space<vmem>>, vector<8x128xf32>,
      %cst_179 = arith.constant 0.000000e+00 : f32
      %613 = vector.broadcast %cst_179 : f32 to vector<8x128xf32>
      %c0_180 = arith.constant 0 : index
      %c0_181 = arith.constant 0 : index
      %614 = vector.load %arg8[%c0_180, %c0_181] : memref<8x128xf32, #tpu.memory_space<vmem>>, vector<8x128xf32>
      tpu.vector_store %arg8[%c0_180, %c0_181], %613 {strides = array<i32>} : memref<8x128xf32, #tpu.memory_space<vmem>>, vector<8x128xf32>,
      %cst_182 = arith.constant 0.000000e+00 : f32
      %615 = vector.broadcast %cst_182 : f32 to vector<8x128xf32>
      %c0_183 = arith.constant 0 : index
      %c0_184 = arith.constant 0 : index
      %616 = vector.load %arg9[%c0_183, %c0_184] : memref<8x128xf32, #tpu.memory_space<vmem>>, vector<8x128xf32>
      tpu.vector_store %arg9[%c0_183, %c0_184], %615 {strides = array<i32>} : memref<8x128xf32, #tpu.memory_space<vmem>>, vector<8x128xf32>,
      %cst_185 = arith.constant 0.000000e+00 : f32
      %617 = vector.broadcast %cst_185 : f32 to vector<8x128xf32>
      %c0_186 = arith.constant 0 : index
      %c0_187 = arith.constant 0 : index
      %618 = vector.load %arg10[%c0_186, %c0_187] : memref<8x128xf32, #tpu.memory_space<vmem>>, vector<8x128xf32>
      tpu.vector_store %arg10[%c0_186, %c0_187], %617 {strides = array<i32>} : memref<8x128xf32, #tpu.memory_space<vmem>>, vector<8x128xf32>,
    } else {
    }
    %c0 = arith.constant 0 : index
    %c0_1 = arith.constant 0 : index
    %3 = vector.load %arg3[%c0, %c0_1] : memref<128x512xbf16, #tpu.memory_space<vmem>>, vector<128x512xbf16>
    %c0_2 = arith.constant 0 : index
    %c0_3 = arith.constant 0 : index
    %4 = vector.load %arg4[%c0_2, %c0_3] : memref<128x512xbf16, #tpu.memory_space<vmem>>, vector<128x512xbf16>
    %c0_4 = arith.constant 0 : index
    %c0_5 = arith.constant 0 : index
    %5 = vector.load %arg7[%c0_4, %c0_5] : memref<8x128xf32, #tpu.memory_space<vmem>>, vector<8x128xf32>
    %c0_6 = arith.constant 0 : index
    %c0_7 = arith.constant 0 : index
    %6 = vector.load %arg8[%c0_6, %c0_7] : memref<8x128xf32, #tpu.memory_space<vmem>>, vector<8x128xf32>
    %c0_8 = arith.constant 0 : index
    %c0_9 = arith.constant 0 : index
    %7 = vector.load %arg9[%c0_8, %c0_9] : memref<8x128xf32, #tpu.memory_space<vmem>>, vector<8x128xf32>
    %c0_10 = arith.constant 0 : index
    %c0_11 = arith.constant 0 : index
    %8 = vector.load %arg10[%c0_10, %c0_11] : memref<8x128xf32, #tpu.memory_space<vmem>>, vector<8x128xf32>
    %c0_i32_12 = arith.constant 0 : i32
    %9 = arith.index_cast %c0_i32_12 : i32 to index
    %c0_13 = arith.constant 0 : index
    %c0_14 = arith.constant 0 : index
    %10 = vector.load %arg1[%9, %c0_13, %c0_14] : memref<8x8x512xbf16, #tpu.memory_space<vmem>>, vector<1x8x512xbf16>
    %11 = vector.shape_cast %10 : vector<1x8x512xbf16> to vector<8x512xbf16>
    %12 = arith.extf %11 : vector<8x512xbf16> to vector<8x512xf32>
    %13 = arith.truncf %5 : vector<8x128xf32> to vector<8x128xbf16>
    %cst = arith.constant dense<0.000000e+00> : vector<8x512xf32>
    %14 = tpu.matmul %13, %3, %cst {dimension_numbers = #tpu.dot_dimension_numbers<[1], [0], [0], [1], [0, 0, 1, 1], [], []>} : vector<8x128xbf16>, vector<128x512xbf16>, vector<8x512xf32> -> vector<8x512xf32>
    %15 = arith.addf %12, %14 : vector<8x512xf32>
    %16 = vector.extract_strided_slice %15 {offsets = [0, 0], sizes = [8, 128], strides = [1, 1]} : vector<8x512xf32> to vector<8x128xf32>
    %17 = arith.negf %16 : vector<8x128xf32>
    %18 = math.exp %17 : vector<8x128xf32>
    %cst_15 = arith.constant 1.000000e+00 : f32
    %19 = vector.broadcast %cst_15 : f32 to vector<8x128xf32>
    %20 = arith.addf %19, %18 : vector<8x128xf32>
    %21 = arith.divf %19, %20 : vector<8x128xf32>
    %22 = vector.extract_strided_slice %15 {offsets = [0, 128], sizes = [8, 128], strides = [1, 1]} : vector<8x512xf32> to vector<8x128xf32>
    %23 = arith.negf %22 : vector<8x128xf32>
    %24 = math.exp %23 : vector<8x128xf32>
    %cst_16 = arith.constant 1.000000e+00 : f32
    %25 = vector.broadcast %cst_16 : f32 to vector<8x128xf32>
    %26 = arith.addf %25, %24 : vector<8x128xf32>
    %27 = arith.divf %25, %26 : vector<8x128xf32>
    %28 = vector.extract_strided_slice %15 {offsets = [0, 256], sizes = [8, 128], strides = [1, 1]} : vector<8x512xf32> to vector<8x128xf32>
    %29 = math.tanh %28 : vector<8x128xf32>
    %30 = vector.extract_strided_slice %15 {offsets = [0, 384], sizes = [8, 128], strides = [1, 1]} : vector<8x512xf32> to vector<8x128xf32>
    %31 = arith.negf %30 : vector<8x128xf32>
    %32 = math.exp %31 : vector<8x128xf32>
    %cst_17 = arith.constant 1.000000e+00 : f32
    %33 = vector.broadcast %cst_17 : f32 to vector<8x128xf32>
    %34 = arith.addf %33, %32 : vector<8x128xf32>
    %35 = arith.divf %33, %34 : vector<8x128xf32>
    %36 = arith.mulf %27, %6 : vector<8x128xf32>
    %37 = arith.mulf %21, %29 : vector<8x128xf32>
    %38 = arith.addf %36, %37 : vector<8x128xf32>
    %39 = math.tanh %38 : vector<8x128xf32>
    %40 = arith.mulf %35, %39 : vector<8x128xf32>
    %41 = arith.index_cast %c0_i32_12 : i32 to index
    %c0_18 = arith.constant 0 : index
    %c0_19 = arith.constant 0 : index
    %42 = vector.load %arg11[%41, %c0_18, %c0_19] : memref<8x8x128xf32, #tpu.memory_space<vmem>>, vector<1x8x128xf32>
    %43 = vector.shape_cast %42 : vector<1x8x128xf32> to vector<8x128xf32>
    %44 = vector.shape_cast %40 : vector<8x128xf32> to vector<1x8x128xf32>
    tpu.vector_store %arg11[%41, %c0_18, %c0_19], %44 {strides = array<i32>} : memref<8x8x128xf32, #tpu.memory_space<vmem>>, vector<1x8x128xf32>,
    %c7_i32 = arith.constant 7 : i32
    %45 = arith.subi %c7_i32, %c0_i32_12 : i32
    %46 = arith.index_cast %45 : i32 to index
    %c0_20 = arith.constant 0 : index
    %c0_21 = arith.constant 0 : index
    %47 = vector.load %arg2[%46, %c0_20, %c0_21] : memref<8x8x512xbf16, #tpu.memory_space<vmem>>, vector<1x8x512xbf16>
    %48 = vector.shape_cast %47 : vector<1x8x512xbf16> to vector<8x512xbf16>
    %49 = arith.extf %48 : vector<8x512xbf16> to vector<8x512xf32>
    %50 = arith.truncf %7 : vector<8x128xf32> to vector<8x128xbf16>
    %cst_22 = arith.constant dense<0.000000e+00> : vector<8x512xf32>
    %51 = tpu.matmul %50, %4, %cst_22 {dimension_numbers = #tpu.dot_dimension_numbers<[1], [0], [0], [1], [0, 0, 1, 1], [], []>} : vector<8x128xbf16>, vector<128x512xbf16>, vector<8x512xf32> -> vector<8x512xf32>
    %52 = arith.addf %49, %51 : vector<8x512xf32>
    %53 = vector.extract_strided_slice %52 {offsets = [0, 0], sizes = [8, 128], strides = [1, 1]} : vector<8x512xf32> to vector<8x128xf32>
    %54 = arith.negf %53 : vector<8x128xf32>
    %55 = math.exp %54 : vector<8x128xf32>
    %cst_23 = arith.constant 1.000000e+00 : f32
    %56 = vector.broadcast %cst_23 : f32 to vector<8x128xf32>
    %57 = arith.addf %56, %55 : vector<8x128xf32>
    %58 = arith.divf %56, %57 : vector<8x128xf32>
    %59 = vector.extract_strided_slice %52 {offsets = [0, 128], sizes = [8, 128], strides = [1, 1]} : vector<8x512xf32> to vector<8x128xf32>
    %60 = arith.negf %59 : vector<8x128xf32>
    %61 = math.exp %60 : vector<8x128xf32>
    %cst_24 = arith.constant 1.000000e+00 : f32
    %62 = vector.broadcast %cst_24 : f32 to vector<8x128xf32>
    %63 = arith.addf %62, %61 : vector<8x128xf32>
    %64 = arith.divf %62, %63 : vector<8x128xf32>
    %65 = vector.extract_strided_slice %52 {offsets = [0, 256], sizes = [8, 128], strides = [1, 1]} : vector<8x512xf32> to vector<8x128xf32>
    %66 = math.tanh %65 : vector<8x128xf32>
    %67 = vector.extract_strided_slice %52 {offsets = [0, 384], sizes = [8, 128], strides = [1, 1]} : vector<8x512xf32> to vector<8x128xf32>
    %68 = arith.negf %67 : vector<8x128xf32>
    %69 = math.exp %68 : vector<8x128xf32>
    %cst_25 = arith.constant 1.000000e+00 : f32
    %70 = vector.broadcast %cst_25 : f32 to vector<8x128xf32>
    %71 = arith.addf %70, %69 : vector<8x128xf32>
    %72 = arith.divf %70, %71 : vector<8x128xf32>
    %73 = arith.mulf %64, %8 : vector<8x128xf32>
    %74 = arith.mulf %58, %66 : vector<8x128xf32>
    %75 = arith.addf %73, %74 : vector<8x128xf32>
    %76 = math.tanh %75 : vector<8x128xf32>
    %77 = arith.mulf %72, %76 : vector<8x128xf32>
    %c7_i32_26 = arith.constant 7 : i32
    %78 = arith.subi %c7_i32_26, %c0_i32_12 : i32
    %79 = arith.index_cast %78 : i32 to index
    %c0_27 = arith.constant 0 : index
    %c0_28 = arith.constant 0 : index
    %80 = vector.load %arg12[%79, %c0_27, %c0_28] : memref<8x8x128xf32, #tpu.memory_space<vmem>>, vector<1x8x128xf32>
    %81 = vector.shape_cast %80 : vector<1x8x128xf32> to vector<8x128xf32>
    %82 = vector.shape_cast %77 : vector<8x128xf32> to vector<1x8x128xf32>
    tpu.vector_store %arg12[%79, %c0_27, %c0_28], %82 {strides = array<i32>} : memref<8x8x128xf32, #tpu.memory_space<vmem>>, vector<1x8x128xf32>,
    %c1_i32 = arith.constant 1 : i32
    %83 = arith.index_cast %c1_i32 : i32 to index
    %c0_29 = arith.constant 0 : index
    %c0_30 = arith.constant 0 : index
    %84 = vector.load %arg1[%83, %c0_29, %c0_30] : memref<8x8x512xbf16, #tpu.memory_space<vmem>>, vector<1x8x512xbf16>
    %85 = vector.shape_cast %84 : vector<1x8x512xbf16> to vector<8x512xbf16>
    %86 = arith.extf %85 : vector<8x512xbf16> to vector<8x512xf32>
    %87 = arith.truncf %40 : vector<8x128xf32> to vector<8x128xbf16>
    %cst_31 = arith.constant dense<0.000000e+00> : vector<8x512xf32>
    %88 = tpu.matmul %87, %3, %cst_31 {dimension_numbers = #tpu.dot_dimension_numbers<[1], [0], [0], [1], [0, 0, 1, 1], [], []>} : vector<8x128xbf16>, vector<128x512xbf16>, vector<8x512xf32> -> vector<8x512xf32>
    %89 = arith.addf %86, %88 : vector<8x512xf32>
    %90 = vector.extract_strided_slice %89 {offsets = [0, 0], sizes = [8, 128], strides = [1, 1]} : vector<8x512xf32> to vector<8x128xf32>
    %91 = arith.negf %90 : vector<8x128xf32>
    %92 = math.exp %91 : vector<8x128xf32>
    %cst_32 = arith.constant 1.000000e+00 : f32
    %93 = vector.broadcast %cst_32 : f32 to vector<8x128xf32>
    %94 = arith.addf %93, %92 : vector<8x128xf32>
    %95 = arith.divf %93, %94 : vector<8x128xf32>
    %96 = vector.extract_strided_slice %89 {offsets = [0, 128], sizes = [8, 128], strides = [1, 1]} : vector<8x512xf32> to vector<8x128xf32>
    %97 = arith.negf %96 : vector<8x128xf32>
    %98 = math.exp %97 : vector<8x128xf32>
    %cst_33 = arith.constant 1.000000e+00 : f32
    %99 = vector.broadcast %cst_33 : f32 to vector<8x128xf32>
    %100 = arith.addf %99, %98 : vector<8x128xf32>
    %101 = arith.divf %99, %100 : vector<8x128xf32>
    %102 = vector.extract_strided_slice %89 {offsets = [0, 256], sizes = [8, 128], strides = [1, 1]} : vector<8x512xf32> to vector<8x128xf32>
    %103 = math.tanh %102 : vector<8x128xf32>
    %104 = vector.extract_strided_slice %89 {offsets = [0, 384], sizes = [8, 128], strides = [1, 1]} : vector<8x512xf32> to vector<8x128xf32>
    %105 = arith.negf %104 : vector<8x128xf32>
    %106 = math.exp %105 : vector<8x128xf32>
    %cst_34 = arith.constant 1.000000e+00 : f32
    %107 = vector.broadcast %cst_34 : f32 to vector<8x128xf32>
    %108 = arith.addf %107, %106 : vector<8x128xf32>
    %109 = arith.divf %107, %108 : vector<8x128xf32>
    %110 = arith.mulf %101, %38 : vector<8x128xf32>
    %111 = arith.mulf %95, %103 : vector<8x128xf32>
    %112 = arith.addf %110, %111 : vector<8x128xf32>
    %113 = math.tanh %112 : vector<8x128xf32>
    %114 = arith.mulf %109, %113 : vector<8x128xf32>
    %115 = arith.index_cast %c1_i32 : i32 to index
    %c0_35 = arith.constant 0 : index
    %c0_36 = arith.constant 0 : index
    %116 = vector.load %arg11[%115, %c0_35, %c0_36] : memref<8x8x128xf32, #tpu.memory_space<vmem>>, vector<1x8x128xf32>
    %117 = vector.shape_cast %116 : vector<1x8x128xf32> to vector<8x128xf32>
    %118 = vector.shape_cast %114 : vector<8x128xf32> to vector<1x8x128xf32>
    tpu.vector_store %arg11[%115, %c0_35, %c0_36], %118 {strides = array<i32>} : memref<8x8x128xf32, #tpu.memory_space<vmem>>, vector<1x8x128xf32>,
    %c7_i32_37 = arith.constant 7 : i32
    %119 = arith.subi %c7_i32_37, %c1_i32 : i32
    %120 = arith.index_cast %119 : i32 to index
    %c0_38 = arith.constant 0 : index
    %c0_39 = arith.constant 0 : index
    %121 = vector.load %arg2[%120, %c0_38, %c0_39] : memref<8x8x512xbf16, #tpu.memory_space<vmem>>, vector<1x8x512xbf16>
    %122 = vector.shape_cast %121 : vector<1x8x512xbf16> to vector<8x512xbf16>
    %123 = arith.extf %122 : vector<8x512xbf16> to vector<8x512xf32>
    %124 = arith.truncf %77 : vector<8x128xf32> to vector<8x128xbf16>
    %cst_40 = arith.constant dense<0.000000e+00> : vector<8x512xf32>
    %125 = tpu.matmul %124, %4, %cst_40 {dimension_numbers = #tpu.dot_dimension_numbers<[1], [0], [0], [1], [0, 0, 1, 1], [], []>} : vector<8x128xbf16>, vector<128x512xbf16>, vector<8x512xf32> -> vector<8x512xf32>
    %126 = arith.addf %123, %125 : vector<8x512xf32>
    %127 = vector.extract_strided_slice %126 {offsets = [0, 0], sizes = [8, 128], strides = [1, 1]} : vector<8x512xf32> to vector<8x128xf32>
    %128 = arith.negf %127 : vector<8x128xf32>
    %129 = math.exp %128 : vector<8x128xf32>
    %cst_41 = arith.constant 1.000000e+00 : f32
    %130 = vector.broadcast %cst_41 : f32 to vector<8x128xf32>
    %131 = arith.addf %130, %129 : vector<8x128xf32>
    %132 = arith.divf %130, %131 : vector<8x128xf32>
    %133 = vector.extract_strided_slice %126 {offsets = [0, 128], sizes = [8, 128], strides = [1, 1]} : vector<8x512xf32> to vector<8x128xf32>
    %134 = arith.negf %133 : vector<8x128xf32>
    %135 = math.exp %134 : vector<8x128xf32>
    %cst_42 = arith.constant 1.000000e+00 : f32
    %136 = vector.broadcast %cst_42 : f32 to vector<8x128xf32>
    %137 = arith.addf %136, %135 : vector<8x128xf32>
    %138 = arith.divf %136, %137 : vector<8x128xf32>
    %139 = vector.extract_strided_slice %126 {offsets = [0, 256], sizes = [8, 128], strides = [1, 1]} : vector<8x512xf32> to vector<8x128xf32>
    %140 = math.tanh %139 : vector<8x128xf32>
    %141 = vector.extract_strided_slice %126 {offsets = [0, 384], sizes = [8, 128], strides = [1, 1]} : vector<8x512xf32> to vector<8x128xf32>
    %142 = arith.negf %141 : vector<8x128xf32>
    %143 = math.exp %142 : vector<8x128xf32>
    %cst_43 = arith.constant 1.000000e+00 : f32
    %144 = vector.broadcast %cst_43 : f32 to vector<8x128xf32>
    %145 = arith.addf %144, %143 : vector<8x128xf32>
    %146 = arith.divf %144, %145 : vector<8x128xf32>
    %147 = arith.mulf %138, %75 : vector<8x128xf32>
    %148 = arith.mulf %132, %140 : vector<8x128xf32>
    %149 = arith.addf %147, %148 : vector<8x128xf32>
    %150 = math.tanh %149 : vector<8x128xf32>
    %151 = arith.mulf %146, %150 : vector<8x128xf32>
    %c7_i32_44 = arith.constant 7 : i32
    %152 = arith.subi %c7_i32_44, %c1_i32 : i32
    %153 = arith.index_cast %152 : i32 to index
    %c0_45 = arith.constant 0 : index
    %c0_46 = arith.constant 0 : index
    %154 = vector.load %arg12[%153, %c0_45, %c0_46] : memref<8x8x128xf32, #tpu.memory_space<vmem>>, vector<1x8x128xf32>
    %155 = vector.shape_cast %154 : vector<1x8x128xf32> to vector<8x128xf32>
    %156 = vector.shape_cast %151 : vector<8x128xf32> to vector<1x8x128xf32>
    tpu.vector_store %arg12[%153, %c0_45, %c0_46], %156 {strides = array<i32>} : memref<8x8x128xf32, #tpu.memory_space<vmem>>, vector<1x8x128xf32>,
    %c2_i32 = arith.constant 2 : i32
    %157 = arith.index_cast %c2_i32 : i32 to index
    %c0_47 = arith.constant 0 : index
    %c0_48 = arith.constant 0 : index
    %158 = vector.load %arg1[%157, %c0_47, %c0_48] : memref<8x8x512xbf16, #tpu.memory_space<vmem>>, vector<1x8x512xbf16>
    %159 = vector.shape_cast %158 : vector<1x8x512xbf16> to vector<8x512xbf16>
    %160 = arith.extf %159 : vector<8x512xbf16> to vector<8x512xf32>
    %161 = arith.truncf %114 : vector<8x128xf32> to vector<8x128xbf16>
    %cst_49 = arith.constant dense<0.000000e+00> : vector<8x512xf32>
    %162 = tpu.matmul %161, %3, %cst_49 {dimension_numbers = #tpu.dot_dimension_numbers<[1], [0], [0], [1], [0, 0, 1, 1], [], []>} : vector<8x128xbf16>, vector<128x512xbf16>, vector<8x512xf32> -> vector<8x512xf32>
    %163 = arith.addf %160, %162 : vector<8x512xf32>
    %164 = vector.extract_strided_slice %163 {offsets = [0, 0], sizes = [8, 128], strides = [1, 1]} : vector<8x512xf32> to vector<8x128xf32>
    %165 = arith.negf %164 : vector<8x128xf32>
    %166 = math.exp %165 : vector<8x128xf32>
    %cst_50 = arith.constant 1.000000e+00 : f32
    %167 = vector.broadcast %cst_50 : f32 to vector<8x128xf32>
    %168 = arith.addf %167, %166 : vector<8x128xf32>
    %169 = arith.divf %167, %168 : vector<8x128xf32>
    %170 = vector.extract_strided_slice %163 {offsets = [0, 128], sizes = [8, 128], strides = [1, 1]} : vector<8x512xf32> to vector<8x128xf32>
    %171 = arith.negf %170 : vector<8x128xf32>
    %172 = math.exp %171 : vector<8x128xf32>
    %cst_51 = arith.constant 1.000000e+00 : f32
    %173 = vector.broadcast %cst_51 : f32 to vector<8x128xf32>
    %174 = arith.addf %173, %172 : vector<8x128xf32>
    %175 = arith.divf %173, %174 : vector<8x128xf32>
    %176 = vector.extract_strided_slice %163 {offsets = [0, 256], sizes = [8, 128], strides = [1, 1]} : vector<8x512xf32> to vector<8x128xf32>
    %177 = math.tanh %176 : vector<8x128xf32>
    %178 = vector.extract_strided_slice %163 {offsets = [0, 384], sizes = [8, 128], strides = [1, 1]} : vector<8x512xf32> to vector<8x128xf32>
    %179 = arith.negf %178 : vector<8x128xf32>
    %180 = math.exp %179 : vector<8x128xf32>
    %cst_52 = arith.constant 1.000000e+00 : f32
    %181 = vector.broadcast %cst_52 : f32 to vector<8x128xf32>
    %182 = arith.addf %181, %180 : vector<8x128xf32>
    %183 = arith.divf %181, %182 : vector<8x128xf32>
    %184 = arith.mulf %175, %112 : vector<8x128xf32>
    %185 = arith.mulf %169, %177 : vector<8x128xf32>
    %186 = arith.addf %184, %185 : vector<8x128xf32>
    %187 = math.tanh %186 : vector<8x128xf32>
    %188 = arith.mulf %183, %187 : vector<8x128xf32>
    %189 = arith.index_cast %c2_i32 : i32 to index
    %c0_53 = arith.constant 0 : index
    %c0_54 = arith.constant 0 : index
    %190 = vector.load %arg11[%189, %c0_53, %c0_54] : memref<8x8x128xf32, #tpu.memory_space<vmem>>, vector<1x8x128xf32>
    %191 = vector.shape_cast %190 : vector<1x8x128xf32> to vector<8x128xf32>
    %192 = vector.shape_cast %188 : vector<8x128xf32> to vector<1x8x128xf32>
    tpu.vector_store %arg11[%189, %c0_53, %c0_54], %192 {strides = array<i32>} : memref<8x8x128xf32, #tpu.memory_space<vmem>>, vector<1x8x128xf32>,
    %c7_i32_55 = arith.constant 7 : i32
    %193 = arith.subi %c7_i32_55, %c2_i32 : i32
    %194 = arith.index_cast %193 : i32 to index
    %c0_56 = arith.constant 0 : index
    %c0_57 = arith.constant 0 : index
    %195 = vector.load %arg2[%194, %c0_56, %c0_57] : memref<8x8x512xbf16, #tpu.memory_space<vmem>>, vector<1x8x512xbf16>
    %196 = vector.shape_cast %195 : vector<1x8x512xbf16> to vector<8x512xbf16>
    %197 = arith.extf %196 : vector<8x512xbf16> to vector<8x512xf32>
    %198 = arith.truncf %151 : vector<8x128xf32> to vector<8x128xbf16>
    %cst_58 = arith.constant dense<0.000000e+00> : vector<8x512xf32>
    %199 = tpu.matmul %198, %4, %cst_58 {dimension_numbers = #tpu.dot_dimension_numbers<[1], [0], [0], [1], [0, 0, 1, 1], [], []>} : vector<8x128xbf16>, vector<128x512xbf16>, vector<8x512xf32> -> vector<8x512xf32>
    %200 = arith.addf %197, %199 : vector<8x512xf32>
    %201 = vector.extract_strided_slice %200 {offsets = [0, 0], sizes = [8, 128], strides = [1, 1]} : vector<8x512xf32> to vector<8x128xf32>
    %202 = arith.negf %201 : vector<8x128xf32>
    %203 = math.exp %202 : vector<8x128xf32>
    %cst_59 = arith.constant 1.000000e+00 : f32
    %204 = vector.broadcast %cst_59 : f32 to vector<8x128xf32>
    %205 = arith.addf %204, %203 : vector<8x128xf32>
    %206 = arith.divf %204, %205 : vector<8x128xf32>
    %207 = vector.extract_strided_slice %200 {offsets = [0, 128], sizes = [8, 128], strides = [1, 1]} : vector<8x512xf32> to vector<8x128xf32>
    %208 = arith.negf %207 : vector<8x128xf32>
    %209 = math.exp %208 : vector<8x128xf32>
    %cst_60 = arith.constant 1.000000e+00 : f32
    %210 = vector.broadcast %cst_60 : f32 to vector<8x128xf32>
    %211 = arith.addf %210, %209 : vector<8x128xf32>
    %212 = arith.divf %210, %211 : vector<8x128xf32>
    %213 = vector.extract_strided_slice %200 {offsets = [0, 256], sizes = [8, 128], strides = [1, 1]} : vector<8x512xf32> to vector<8x128xf32>
    %214 = math.tanh %213 : vector<8x128xf32>
    %215 = vector.extract_strided_slice %200 {offsets = [0, 384], sizes = [8, 128], strides = [1, 1]} : vector<8x512xf32> to vector<8x128xf32>
    %216 = arith.negf %215 : vector<8x128xf32>
    %217 = math.exp %216 : vector<8x128xf32>
    %cst_61 = arith.constant 1.000000e+00 : f32
    %218 = vector.broadcast %cst_61 : f32 to vector<8x128xf32>
    %219 = arith.addf %218, %217 : vector<8x128xf32>
    %220 = arith.divf %218, %219 : vector<8x128xf32>
    %221 = arith.mulf %212, %149 : vector<8x128xf32>
    %222 = arith.mulf %206, %214 : vector<8x128xf32>
    %223 = arith.addf %221, %222 : vector<8x128xf32>
    %224 = math.tanh %223 : vector<8x128xf32>
    %225 = arith.mulf %220, %224 : vector<8x128xf32>
    %c7_i32_62 = arith.constant 7 : i32
    %226 = arith.subi %c7_i32_62, %c2_i32 : i32
    %227 = arith.index_cast %226 : i32 to index
    %c0_63 = arith.constant 0 : index
    %c0_64 = arith.constant 0 : index
    %228 = vector.load %arg12[%227, %c0_63, %c0_64] : memref<8x8x128xf32, #tpu.memory_space<vmem>>, vector<1x8x128xf32>
    %229 = vector.shape_cast %228 : vector<1x8x128xf32> to vector<8x128xf32>
    %230 = vector.shape_cast %225 : vector<8x128xf32> to vector<1x8x128xf32>
    tpu.vector_store %arg12[%227, %c0_63, %c0_64], %230 {strides = array<i32>} : memref<8x8x128xf32, #tpu.memory_space<vmem>>, vector<1x8x128xf32>,
    %c3_i32 = arith.constant 3 : i32
    %231 = arith.index_cast %c3_i32 : i32 to index
    %c0_65 = arith.constant 0 : index
    %c0_66 = arith.constant 0 : index
    %232 = vector.load %arg1[%231, %c0_65, %c0_66] : memref<8x8x512xbf16, #tpu.memory_space<vmem>>, vector<1x8x512xbf16>
    %233 = vector.shape_cast %232 : vector<1x8x512xbf16> to vector<8x512xbf16>
    %234 = arith.extf %233 : vector<8x512xbf16> to vector<8x512xf32>
    %235 = arith.truncf %188 : vector<8x128xf32> to vector<8x128xbf16>
    %cst_67 = arith.constant dense<0.000000e+00> : vector<8x512xf32>
    %236 = tpu.matmul %235, %3, %cst_67 {dimension_numbers = #tpu.dot_dimension_numbers<[1], [0], [0], [1], [0, 0, 1, 1], [], []>} : vector<8x128xbf16>, vector<128x512xbf16>, vector<8x512xf32> -> vector<8x512xf32>
    %237 = arith.addf %234, %236 : vector<8x512xf32>
    %238 = vector.extract_strided_slice %237 {offsets = [0, 0], sizes = [8, 128], strides = [1, 1]} : vector<8x512xf32> to vector<8x128xf32>
    %239 = arith.negf %238 : vector<8x128xf32>
    %240 = math.exp %239 : vector<8x128xf32>
    %cst_68 = arith.constant 1.000000e+00 : f32
    %241 = vector.broadcast %cst_68 : f32 to vector<8x128xf32>
    %242 = arith.addf %241, %240 : vector<8x128xf32>
    %243 = arith.divf %241, %242 : vector<8x128xf32>
    %244 = vector.extract_strided_slice %237 {offsets = [0, 128], sizes = [8, 128], strides = [1, 1]} : vector<8x512xf32> to vector<8x128xf32>
    %245 = arith.negf %244 : vector<8x128xf32>
    %246 = math.exp %245 : vector<8x128xf32>
    %cst_69 = arith.constant 1.000000e+00 : f32
    %247 = vector.broadcast %cst_69 : f32 to vector<8x128xf32>
    %248 = arith.addf %247, %246 : vector<8x128xf32>
    %249 = arith.divf %247, %248 : vector<8x128xf32>
    %250 = vector.extract_strided_slice %237 {offsets = [0, 256], sizes = [8, 128], strides = [1, 1]} : vector<8x512xf32> to vector<8x128xf32>
    %251 = math.tanh %250 : vector<8x128xf32>
    %252 = vector.extract_strided_slice %237 {offsets = [0, 384], sizes = [8, 128], strides = [1, 1]} : vector<8x512xf32> to vector<8x128xf32>
    %253 = arith.negf %252 : vector<8x128xf32>
    %254 = math.exp %253 : vector<8x128xf32>
    %cst_70 = arith.constant 1.000000e+00 : f32
    %255 = vector.broadcast %cst_70 : f32 to vector<8x128xf32>
    %256 = arith.addf %255, %254 : vector<8x128xf32>
    %257 = arith.divf %255, %256 : vector<8x128xf32>
    %258 = arith.mulf %249, %186 : vector<8x128xf32>
    %259 = arith.mulf %243, %251 : vector<8x128xf32>
    %260 = arith.addf %258, %259 : vector<8x128xf32>
    %261 = math.tanh %260 : vector<8x128xf32>
    %262 = arith.mulf %257, %261 : vector<8x128xf32>
    %263 = arith.index_cast %c3_i32 : i32 to index
    %c0_71 = arith.constant 0 : index
    %c0_72 = arith.constant 0 : index
    %264 = vector.load %arg11[%263, %c0_71, %c0_72] : memref<8x8x128xf32, #tpu.memory_space<vmem>>, vector<1x8x128xf32>
    %265 = vector.shape_cast %264 : vector<1x8x128xf32> to vector<8x128xf32>
    %266 = vector.shape_cast %262 : vector<8x128xf32> to vector<1x8x128xf32>
    tpu.vector_store %arg11[%263, %c0_71, %c0_72], %266 {strides = array<i32>} : memref<8x8x128xf32, #tpu.memory_space<vmem>>, vector<1x8x128xf32>,
    %c7_i32_73 = arith.constant 7 : i32
    %267 = arith.subi %c7_i32_73, %c3_i32 : i32
    %268 = arith.index_cast %267 : i32 to index
    %c0_74 = arith.constant 0 : index
    %c0_75 = arith.constant 0 : index
    %269 = vector.load %arg2[%268, %c0_74, %c0_75] : memref<8x8x512xbf16, #tpu.memory_space<vmem>>, vector<1x8x512xbf16>
    %270 = vector.shape_cast %269 : vector<1x8x512xbf16> to vector<8x512xbf16>
    %271 = arith.extf %270 : vector<8x512xbf16> to vector<8x512xf32>
    %272 = arith.truncf %225 : vector<8x128xf32> to vector<8x128xbf16>
    %cst_76 = arith.constant dense<0.000000e+00> : vector<8x512xf32>
    %273 = tpu.matmul %272, %4, %cst_76 {dimension_numbers = #tpu.dot_dimension_numbers<[1], [0], [0], [1], [0, 0, 1, 1], [], []>} : vector<8x128xbf16>, vector<128x512xbf16>, vector<8x512xf32> -> vector<8x512xf32>
    %274 = arith.addf %271, %273 : vector<8x512xf32>
    %275 = vector.extract_strided_slice %274 {offsets = [0, 0], sizes = [8, 128], strides = [1, 1]} : vector<8x512xf32> to vector<8x128xf32>
    %276 = arith.negf %275 : vector<8x128xf32>
    %277 = math.exp %276 : vector<8x128xf32>
    %cst_77 = arith.constant 1.000000e+00 : f32
    %278 = vector.broadcast %cst_77 : f32 to vector<8x128xf32>
    %279 = arith.addf %278, %277 : vector<8x128xf32>
    %280 = arith.divf %278, %279 : vector<8x128xf32>
    %281 = vector.extract_strided_slice %274 {offsets = [0, 128], sizes = [8, 128], strides = [1, 1]} : vector<8x512xf32> to vector<8x128xf32>
    %282 = arith.negf %281 : vector<8x128xf32>
    %283 = math.exp %282 : vector<8x128xf32>
    %cst_78 = arith.constant 1.000000e+00 : f32
    %284 = vector.broadcast %cst_78 : f32 to vector<8x128xf32>
    %285 = arith.addf %284, %283 : vector<8x128xf32>
    %286 = arith.divf %284, %285 : vector<8x128xf32>
    %287 = vector.extract_strided_slice %274 {offsets = [0, 256], sizes = [8, 128], strides = [1, 1]} : vector<8x512xf32> to vector<8x128xf32>
    %288 = math.tanh %287 : vector<8x128xf32>
    %289 = vector.extract_strided_slice %274 {offsets = [0, 384], sizes = [8, 128], strides = [1, 1]} : vector<8x512xf32> to vector<8x128xf32>
    %290 = arith.negf %289 : vector<8x128xf32>
    %291 = math.exp %290 : vector<8x128xf32>
    %cst_79 = arith.constant 1.000000e+00 : f32
    %292 = vector.broadcast %cst_79 : f32 to vector<8x128xf32>
    %293 = arith.addf %292, %291 : vector<8x128xf32>
    %294 = arith.divf %292, %293 : vector<8x128xf32>
    %295 = arith.mulf %286, %223 : vector<8x128xf32>
    %296 = arith.mulf %280, %288 : vector<8x128xf32>
    %297 = arith.addf %295, %296 : vector<8x128xf32>
    %298 = math.tanh %297 : vector<8x128xf32>
    %299 = arith.mulf %294, %298 : vector<8x128xf32>
    %c7_i32_80 = arith.constant 7 : i32
    %300 = arith.subi %c7_i32_80, %c3_i32 : i32
    %301 = arith.index_cast %300 : i32 to index
    %c0_81 = arith.constant 0 : index
    %c0_82 = arith.constant 0 : index
    %302 = vector.load %arg12[%301, %c0_81, %c0_82] : memref<8x8x128xf32, #tpu.memory_space<vmem>>, vector<1x8x128xf32>
    %303 = vector.shape_cast %302 : vector<1x8x128xf32> to vector<8x128xf32>
    %304 = vector.shape_cast %299 : vector<8x128xf32> to vector<1x8x128xf32>
    tpu.vector_store %arg12[%301, %c0_81, %c0_82], %304 {strides = array<i32>} : memref<8x8x128xf32, #tpu.memory_space<vmem>>, vector<1x8x128xf32>,
    %c4_i32 = arith.constant 4 : i32
    %305 = arith.index_cast %c4_i32 : i32 to index
    %c0_83 = arith.constant 0 : index
    %c0_84 = arith.constant 0 : index
    %306 = vector.load %arg1[%305, %c0_83, %c0_84] : memref<8x8x512xbf16, #tpu.memory_space<vmem>>, vector<1x8x512xbf16>
    %307 = vector.shape_cast %306 : vector<1x8x512xbf16> to vector<8x512xbf16>
    %308 = arith.extf %307 : vector<8x512xbf16> to vector<8x512xf32>
    %309 = arith.truncf %262 : vector<8x128xf32> to vector<8x128xbf16>
    %cst_85 = arith.constant dense<0.000000e+00> : vector<8x512xf32>
    %310 = tpu.matmul %309, %3, %cst_85 {dimension_numbers = #tpu.dot_dimension_numbers<[1], [0], [0], [1], [0, 0, 1, 1], [], []>} : vector<8x128xbf16>, vector<128x512xbf16>, vector<8x512xf32> -> vector<8x512xf32>
    %311 = arith.addf %308, %310 : vector<8x512xf32>
    %312 = vector.extract_strided_slice %311 {offsets = [0, 0], sizes = [8, 128], strides = [1, 1]} : vector<8x512xf32> to vector<8x128xf32>
    %313 = arith.negf %312 : vector<8x128xf32>
    %314 = math.exp %313 : vector<8x128xf32>
    %cst_86 = arith.constant 1.000000e+00 : f32
    %315 = vector.broadcast %cst_86 : f32 to vector<8x128xf32>
    %316 = arith.addf %315, %314 : vector<8x128xf32>
    %317 = arith.divf %315, %316 : vector<8x128xf32>
    %318 = vector.extract_strided_slice %311 {offsets = [0, 128], sizes = [8, 128], strides = [1, 1]} : vector<8x512xf32> to vector<8x128xf32>
    %319 = arith.negf %318 : vector<8x128xf32>
    %320 = math.exp %319 : vector<8x128xf32>
    %cst_87 = arith.constant 1.000000e+00 : f32
    %321 = vector.broadcast %cst_87 : f32 to vector<8x128xf32>
    %322 = arith.addf %321, %320 : vector<8x128xf32>
    %323 = arith.divf %321, %322 : vector<8x128xf32>
    %324 = vector.extract_strided_slice %311 {offsets = [0, 256], sizes = [8, 128], strides = [1, 1]} : vector<8x512xf32> to vector<8x128xf32>
    %325 = math.tanh %324 : vector<8x128xf32>
    %326 = vector.extract_strided_slice %311 {offsets = [0, 384], sizes = [8, 128], strides = [1, 1]} : vector<8x512xf32> to vector<8x128xf32>
    %327 = arith.negf %326 : vector<8x128xf32>
    %328 = math.exp %327 : vector<8x128xf32>
    %cst_88 = arith.constant 1.000000e+00 : f32
    %329 = vector.broadcast %cst_88 : f32 to vector<8x128xf32>
    %330 = arith.addf %329, %328 : vector<8x128xf32>
    %331 = arith.divf %329, %330 : vector<8x128xf32>
    %332 = arith.mulf %323, %260 : vector<8x128xf32>
    %333 = arith.mulf %317, %325 : vector<8x128xf32>
    %334 = arith.addf %332, %333 : vector<8x128xf32>
    %335 = math.tanh %334 : vector<8x128xf32>
    %336 = arith.mulf %331, %335 : vector<8x128xf32>
    %337 = arith.index_cast %c4_i32 : i32 to index
    %c0_89 = arith.constant 0 : index
    %c0_90 = arith.constant 0 : index
    %338 = vector.load %arg11[%337, %c0_89, %c0_90] : memref<8x8x128xf32, #tpu.memory_space<vmem>>, vector<1x8x128xf32>
    %339 = vector.shape_cast %338 : vector<1x8x128xf32> to vector<8x128xf32>
    %340 = vector.shape_cast %336 : vector<8x128xf32> to vector<1x8x128xf32>
    tpu.vector_store %arg11[%337, %c0_89, %c0_90], %340 {strides = array<i32>} : memref<8x8x128xf32, #tpu.memory_space<vmem>>, vector<1x8x128xf32>,
    %c7_i32_91 = arith.constant 7 : i32
    %341 = arith.subi %c7_i32_91, %c4_i32 : i32
    %342 = arith.index_cast %341 : i32 to index
    %c0_92 = arith.constant 0 : index
    %c0_93 = arith.constant 0 : index
    %343 = vector.load %arg2[%342, %c0_92, %c0_93] : memref<8x8x512xbf16, #tpu.memory_space<vmem>>, vector<1x8x512xbf16>
    %344 = vector.shape_cast %343 : vector<1x8x512xbf16> to vector<8x512xbf16>
    %345 = arith.extf %344 : vector<8x512xbf16> to vector<8x512xf32>
    %346 = arith.truncf %299 : vector<8x128xf32> to vector<8x128xbf16>
    %cst_94 = arith.constant dense<0.000000e+00> : vector<8x512xf32>
    %347 = tpu.matmul %346, %4, %cst_94 {dimension_numbers = #tpu.dot_dimension_numbers<[1], [0], [0], [1], [0, 0, 1, 1], [], []>} : vector<8x128xbf16>, vector<128x512xbf16>, vector<8x512xf32> -> vector<8x512xf32>
    %348 = arith.addf %345, %347 : vector<8x512xf32>
    %349 = vector.extract_strided_slice %348 {offsets = [0, 0], sizes = [8, 128], strides = [1, 1]} : vector<8x512xf32> to vector<8x128xf32>
    %350 = arith.negf %349 : vector<8x128xf32>
    %351 = math.exp %350 : vector<8x128xf32>
    %cst_95 = arith.constant 1.000000e+00 : f32
    %352 = vector.broadcast %cst_95 : f32 to vector<8x128xf32>
    %353 = arith.addf %352, %351 : vector<8x128xf32>
    %354 = arith.divf %352, %353 : vector<8x128xf32>
    %355 = vector.extract_strided_slice %348 {offsets = [0, 128], sizes = [8, 128], strides = [1, 1]} : vector<8x512xf32> to vector<8x128xf32>
    %356 = arith.negf %355 : vector<8x128xf32>
    %357 = math.exp %356 : vector<8x128xf32>
    %cst_96 = arith.constant 1.000000e+00 : f32
    %358 = vector.broadcast %cst_96 : f32 to vector<8x128xf32>
    %359 = arith.addf %358, %357 : vector<8x128xf32>
    %360 = arith.divf %358, %359 : vector<8x128xf32>
    %361 = vector.extract_strided_slice %348 {offsets = [0, 256], sizes = [8, 128], strides = [1, 1]} : vector<8x512xf32> to vector<8x128xf32>
    %362 = math.tanh %361 : vector<8x128xf32>
    %363 = vector.extract_strided_slice %348 {offsets = [0, 384], sizes = [8, 128], strides = [1, 1]} : vector<8x512xf32> to vector<8x128xf32>
    %364 = arith.negf %363 : vector<8x128xf32>
    %365 = math.exp %364 : vector<8x128xf32>
    %cst_97 = arith.constant 1.000000e+00 : f32
    %366 = vector.broadcast %cst_97 : f32 to vector<8x128xf32>
    %367 = arith.addf %366, %365 : vector<8x128xf32>
    %368 = arith.divf %366, %367 : vector<8x128xf32>
    %369 = arith.mulf %360, %297 : vector<8x128xf32>
    %370 = arith.mulf %354, %362 : vector<8x128xf32>
    %371 = arith.addf %369, %370 : vector<8x128xf32>
    %372 = math.tanh %371 : vector<8x128xf32>
    %373 = arith.mulf %368, %372 : vector<8x128xf32>
    %c7_i32_98 = arith.constant 7 : i32
    %374 = arith.subi %c7_i32_98, %c4_i32 : i32
    %375 = arith.index_cast %374 : i32 to index
    %c0_99 = arith.constant 0 : index
    %c0_100 = arith.constant 0 : index
    %376 = vector.load %arg12[%375, %c0_99, %c0_100] : memref<8x8x128xf32, #tpu.memory_space<vmem>>, vector<1x8x128xf32>
    %377 = vector.shape_cast %376 : vector<1x8x128xf32> to vector<8x128xf32>
    %378 = vector.shape_cast %373 : vector<8x128xf32> to vector<1x8x128xf32>
    tpu.vector_store %arg12[%375, %c0_99, %c0_100], %378 {strides = array<i32>} : memref<8x8x128xf32, #tpu.memory_space<vmem>>, vector<1x8x128xf32>,
    %c5_i32 = arith.constant 5 : i32
    %379 = arith.index_cast %c5_i32 : i32 to index
    %c0_101 = arith.constant 0 : index
    %c0_102 = arith.constant 0 : index
    %380 = vector.load %arg1[%379, %c0_101, %c0_102] : memref<8x8x512xbf16, #tpu.memory_space<vmem>>, vector<1x8x512xbf16>
    %381 = vector.shape_cast %380 : vector<1x8x512xbf16> to vector<8x512xbf16>
    %382 = arith.extf %381 : vector<8x512xbf16> to vector<8x512xf32>
    %383 = arith.truncf %336 : vector<8x128xf32> to vector<8x128xbf16>
    %cst_103 = arith.constant dense<0.000000e+00> : vector<8x512xf32>
    %384 = tpu.matmul %383, %3, %cst_103 {dimension_numbers = #tpu.dot_dimension_numbers<[1], [0], [0], [1], [0, 0, 1, 1], [], []>} : vector<8x128xbf16>, vector<128x512xbf16>, vector<8x512xf32> -> vector<8x512xf32>
    %385 = arith.addf %382, %384 : vector<8x512xf32>
    %386 = vector.extract_strided_slice %385 {offsets = [0, 0], sizes = [8, 128], strides = [1, 1]} : vector<8x512xf32> to vector<8x128xf32>
    %387 = arith.negf %386 : vector<8x128xf32>
    %388 = math.exp %387 : vector<8x128xf32>
    %cst_104 = arith.constant 1.000000e+00 : f32
    %389 = vector.broadcast %cst_104 : f32 to vector<8x128xf32>
    %390 = arith.addf %389, %388 : vector<8x128xf32>
    %391 = arith.divf %389, %390 : vector<8x128xf32>
    %392 = vector.extract_strided_slice %385 {offsets = [0, 128], sizes = [8, 128], strides = [1, 1]} : vector<8x512xf32> to vector<8x128xf32>
    %393 = arith.negf %392 : vector<8x128xf32>
    %394 = math.exp %393 : vector<8x128xf32>
    %cst_105 = arith.constant 1.000000e+00 : f32
    %395 = vector.broadcast %cst_105 : f32 to vector<8x128xf32>
    %396 = arith.addf %395, %394 : vector<8x128xf32>
    %397 = arith.divf %395, %396 : vector<8x128xf32>
    %398 = vector.extract_strided_slice %385 {offsets = [0, 256], sizes = [8, 128], strides = [1, 1]} : vector<8x512xf32> to vector<8x128xf32>
    %399 = math.tanh %398 : vector<8x128xf32>
    %400 = vector.extract_strided_slice %385 {offsets = [0, 384], sizes = [8, 128], strides = [1, 1]} : vector<8x512xf32> to vector<8x128xf32>
    %401 = arith.negf %400 : vector<8x128xf32>
    %402 = math.exp %401 : vector<8x128xf32>
    %cst_106 = arith.constant 1.000000e+00 : f32
    %403 = vector.broadcast %cst_106 : f32 to vector<8x128xf32>
    %404 = arith.addf %403, %402 : vector<8x128xf32>
    %405 = arith.divf %403, %404 : vector<8x128xf32>
    %406 = arith.mulf %397, %334 : vector<8x128xf32>
    %407 = arith.mulf %391, %399 : vector<8x128xf32>
    %408 = arith.addf %406, %407 : vector<8x128xf32>
    %409 = math.tanh %408 : vector<8x128xf32>
    %410 = arith.mulf %405, %409 : vector<8x128xf32>
    %411 = arith.index_cast %c5_i32 : i32 to index
    %c0_107 = arith.constant 0 : index
    %c0_108 = arith.constant 0 : index
    %412 = vector.load %arg11[%411, %c0_107, %c0_108] : memref<8x8x128xf32, #tpu.memory_space<vmem>>, vector<1x8x128xf32>
    %413 = vector.shape_cast %412 : vector<1x8x128xf32> to vector<8x128xf32>
    %414 = vector.shape_cast %410 : vector<8x128xf32> to vector<1x8x128xf32>
    tpu.vector_store %arg11[%411, %c0_107, %c0_108], %414 {strides = array<i32>} : memref<8x8x128xf32, #tpu.memory_space<vmem>>, vector<1x8x128xf32>,
    %c7_i32_109 = arith.constant 7 : i32
    %415 = arith.subi %c7_i32_109, %c5_i32 : i32
    %416 = arith.index_cast %415 : i32 to index
    %c0_110 = arith.constant 0 : index
    %c0_111 = arith.constant 0 : index
    %417 = vector.load %arg2[%416, %c0_110, %c0_111] : memref<8x8x512xbf16, #tpu.memory_space<vmem>>, vector<1x8x512xbf16>
    %418 = vector.shape_cast %417 : vector<1x8x512xbf16> to vector<8x512xbf16>
    %419 = arith.extf %418 : vector<8x512xbf16> to vector<8x512xf32>
    %420 = arith.truncf %373 : vector<8x128xf32> to vector<8x128xbf16>
    %cst_112 = arith.constant dense<0.000000e+00> : vector<8x512xf32>
    %421 = tpu.matmul %420, %4, %cst_112 {dimension_numbers = #tpu.dot_dimension_numbers<[1], [0], [0], [1], [0, 0, 1, 1], [], []>} : vector<8x128xbf16>, vector<128x512xbf16>, vector<8x512xf32> -> vector<8x512xf32>
    %422 = arith.addf %419, %421 : vector<8x512xf32>
    %423 = vector.extract_strided_slice %422 {offsets = [0, 0], sizes = [8, 128], strides = [1, 1]} : vector<8x512xf32> to vector<8x128xf32>
    %424 = arith.negf %423 : vector<8x128xf32>
    %425 = math.exp %424 : vector<8x128xf32>
    %cst_113 = arith.constant 1.000000e+00 : f32
    %426 = vector.broadcast %cst_113 : f32 to vector<8x128xf32>
    %427 = arith.addf %426, %425 : vector<8x128xf32>
    %428 = arith.divf %426, %427 : vector<8x128xf32>
    %429 = vector.extract_strided_slice %422 {offsets = [0, 128], sizes = [8, 128], strides = [1, 1]} : vector<8x512xf32> to vector<8x128xf32>
    %430 = arith.negf %429 : vector<8x128xf32>
    %431 = math.exp %430 : vector<8x128xf32>
    %cst_114 = arith.constant 1.000000e+00 : f32
    %432 = vector.broadcast %cst_114 : f32 to vector<8x128xf32>
    %433 = arith.addf %432, %431 : vector<8x128xf32>
    %434 = arith.divf %432, %433 : vector<8x128xf32>
    %435 = vector.extract_strided_slice %422 {offsets = [0, 256], sizes = [8, 128], strides = [1, 1]} : vector<8x512xf32> to vector<8x128xf32>
    %436 = math.tanh %435 : vector<8x128xf32>
    %437 = vector.extract_strided_slice %422 {offsets = [0, 384], sizes = [8, 128], strides = [1, 1]} : vector<8x512xf32> to vector<8x128xf32>
    %438 = arith.negf %437 : vector<8x128xf32>
    %439 = math.exp %438 : vector<8x128xf32>
    %cst_115 = arith.constant 1.000000e+00 : f32
    %440 = vector.broadcast %cst_115 : f32 to vector<8x128xf32>
    %441 = arith.addf %440, %439 : vector<8x128xf32>
    %442 = arith.divf %440, %441 : vector<8x128xf32>
    %443 = arith.mulf %434, %371 : vector<8x128xf32>
    %444 = arith.mulf %428, %436 : vector<8x128xf32>
    %445 = arith.addf %443, %444 : vector<8x128xf32>
    %446 = math.tanh %445 : vector<8x128xf32>
    %447 = arith.mulf %442, %446 : vector<8x128xf32>
    %c7_i32_116 = arith.constant 7 : i32
    %448 = arith.subi %c7_i32_116, %c5_i32 : i32
    %449 = arith.index_cast %448 : i32 to index
    %c0_117 = arith.constant 0 : index
    %c0_118 = arith.constant 0 : index
    %450 = vector.load %arg12[%449, %c0_117, %c0_118] : memref<8x8x128xf32, #tpu.memory_space<vmem>>, vector<1x8x128xf32>
    %451 = vector.shape_cast %450 : vector<1x8x128xf32> to vector<8x128xf32>
    %452 = vector.shape_cast %447 : vector<8x128xf32> to vector<1x8x128xf32>
    tpu.vector_store %arg12[%449, %c0_117, %c0_118], %452 {strides = array<i32>} : memref<8x8x128xf32, #tpu.memory_space<vmem>>, vector<1x8x128xf32>,
    %c6_i32 = arith.constant 6 : i32
    %453 = arith.index_cast %c6_i32 : i32 to index
    %c0_119 = arith.constant 0 : index
    %c0_120 = arith.constant 0 : index
    %454 = vector.load %arg1[%453, %c0_119, %c0_120] : memref<8x8x512xbf16, #tpu.memory_space<vmem>>, vector<1x8x512xbf16>
    %455 = vector.shape_cast %454 : vector<1x8x512xbf16> to vector<8x512xbf16>
    %456 = arith.extf %455 : vector<8x512xbf16> to vector<8x512xf32>
    %457 = arith.truncf %410 : vector<8x128xf32> to vector<8x128xbf16>
    %cst_121 = arith.constant dense<0.000000e+00> : vector<8x512xf32>
    %458 = tpu.matmul %457, %3, %cst_121 {dimension_numbers = #tpu.dot_dimension_numbers<[1], [0], [0], [1], [0, 0, 1, 1], [], []>} : vector<8x128xbf16>, vector<128x512xbf16>, vector<8x512xf32> -> vector<8x512xf32>
    %459 = arith.addf %456, %458 : vector<8x512xf32>
    %460 = vector.extract_strided_slice %459 {offsets = [0, 0], sizes = [8, 128], strides = [1, 1]} : vector<8x512xf32> to vector<8x128xf32>
    %461 = arith.negf %460 : vector<8x128xf32>
    %462 = math.exp %461 : vector<8x128xf32>
    %cst_122 = arith.constant 1.000000e+00 : f32
    %463 = vector.broadcast %cst_122 : f32 to vector<8x128xf32>
    %464 = arith.addf %463, %462 : vector<8x128xf32>
    %465 = arith.divf %463, %464 : vector<8x128xf32>
    %466 = vector.extract_strided_slice %459 {offsets = [0, 128], sizes = [8, 128], strides = [1, 1]} : vector<8x512xf32> to vector<8x128xf32>
    %467 = arith.negf %466 : vector<8x128xf32>
    %468 = math.exp %467 : vector<8x128xf32>
    %cst_123 = arith.constant 1.000000e+00 : f32
    %469 = vector.broadcast %cst_123 : f32 to vector<8x128xf32>
    %470 = arith.addf %469, %468 : vector<8x128xf32>
    %471 = arith.divf %469, %470 : vector<8x128xf32>
    %472 = vector.extract_strided_slice %459 {offsets = [0, 256], sizes = [8, 128], strides = [1, 1]} : vector<8x512xf32> to vector<8x128xf32>
    %473 = math.tanh %472 : vector<8x128xf32>
    %474 = vector.extract_strided_slice %459 {offsets = [0, 384], sizes = [8, 128], strides = [1, 1]} : vector<8x512xf32> to vector<8x128xf32>
    %475 = arith.negf %474 : vector<8x128xf32>
    %476 = math.exp %475 : vector<8x128xf32>
    %cst_124 = arith.constant 1.000000e+00 : f32
    %477 = vector.broadcast %cst_124 : f32 to vector<8x128xf32>
    %478 = arith.addf %477, %476 : vector<8x128xf32>
    %479 = arith.divf %477, %478 : vector<8x128xf32>
    %480 = arith.mulf %471, %408 : vector<8x128xf32>
    %481 = arith.mulf %465, %473 : vector<8x128xf32>
    %482 = arith.addf %480, %481 : vector<8x128xf32>
    %483 = math.tanh %482 : vector<8x128xf32>
    %484 = arith.mulf %479, %483 : vector<8x128xf32>
    %485 = arith.index_cast %c6_i32 : i32 to index
    %c0_125 = arith.constant 0 : index
    %c0_126 = arith.constant 0 : index
    %486 = vector.load %arg11[%485, %c0_125, %c0_126] : memref<8x8x128xf32, #tpu.memory_space<vmem>>, vector<1x8x128xf32>
    %487 = vector.shape_cast %486 : vector<1x8x128xf32> to vector<8x128xf32>
    %488 = vector.shape_cast %484 : vector<8x128xf32> to vector<1x8x128xf32>
    tpu.vector_store %arg11[%485, %c0_125, %c0_126], %488 {strides = array<i32>} : memref<8x8x128xf32, #tpu.memory_space<vmem>>, vector<1x8x128xf32>,
    %c7_i32_127 = arith.constant 7 : i32
    %489 = arith.subi %c7_i32_127, %c6_i32 : i32
    %490 = arith.index_cast %489 : i32 to index
    %c0_128 = arith.constant 0 : index
    %c0_129 = arith.constant 0 : index
    %491 = vector.load %arg2[%490, %c0_128, %c0_129] : memref<8x8x512xbf16, #tpu.memory_space<vmem>>, vector<1x8x512xbf16>
    %492 = vector.shape_cast %491 : vector<1x8x512xbf16> to vector<8x512xbf16>
    %493 = arith.extf %492 : vector<8x512xbf16> to vector<8x512xf32>
    %494 = arith.truncf %447 : vector<8x128xf32> to vector<8x128xbf16>
    %cst_130 = arith.constant dense<0.000000e+00> : vector<8x512xf32>
    %495 = tpu.matmul %494, %4, %cst_130 {dimension_numbers = #tpu.dot_dimension_numbers<[1], [0], [0], [1], [0, 0, 1, 1], [], []>} : vector<8x128xbf16>, vector<128x512xbf16>, vector<8x512xf32> -> vector<8x512xf32>
    %496 = arith.addf %493, %495 : vector<8x512xf32>
    %497 = vector.extract_strided_slice %496 {offsets = [0, 0], sizes = [8, 128], strides = [1, 1]} : vector<8x512xf32> to vector<8x128xf32>
    %498 = arith.negf %497 : vector<8x128xf32>
    %499 = math.exp %498 : vector<8x128xf32>
    %cst_131 = arith.constant 1.000000e+00 : f32
    %500 = vector.broadcast %cst_131 : f32 to vector<8x128xf32>
    %501 = arith.addf %500, %499 : vector<8x128xf32>
    %502 = arith.divf %500, %501 : vector<8x128xf32>
    %503 = vector.extract_strided_slice %496 {offsets = [0, 128], sizes = [8, 128], strides = [1, 1]} : vector<8x512xf32> to vector<8x128xf32>
    %504 = arith.negf %503 : vector<8x128xf32>
    %505 = math.exp %504 : vector<8x128xf32>
    %cst_132 = arith.constant 1.000000e+00 : f32
    %506 = vector.broadcast %cst_132 : f32 to vector<8x128xf32>
    %507 = arith.addf %506, %505 : vector<8x128xf32>
    %508 = arith.divf %506, %507 : vector<8x128xf32>
    %509 = vector.extract_strided_slice %496 {offsets = [0, 256], sizes = [8, 128], strides = [1, 1]} : vector<8x512xf32> to vector<8x128xf32>
    %510 = math.tanh %509 : vector<8x128xf32>
    %511 = vector.extract_strided_slice %496 {offsets = [0, 384], sizes = [8, 128], strides = [1, 1]} : vector<8x512xf32> to vector<8x128xf32>
    %512 = arith.negf %511 : vector<8x128xf32>
    %513 = math.exp %512 : vector<8x128xf32>
    %cst_133 = arith.constant 1.000000e+00 : f32
    %514 = vector.broadcast %cst_133 : f32 to vector<8x128xf32>
    %515 = arith.addf %514, %513 : vector<8x128xf32>
    %516 = arith.divf %514, %515 : vector<8x128xf32>
    %517 = arith.mulf %508, %445 : vector<8x128xf32>
    %518 = arith.mulf %502, %510 : vector<8x128xf32>
    %519 = arith.addf %517, %518 : vector<8x128xf32>
    %520 = math.tanh %519 : vector<8x128xf32>
    %521 = arith.mulf %516, %520 : vector<8x128xf32>
    %c7_i32_134 = arith.constant 7 : i32
    %522 = arith.subi %c7_i32_134, %c6_i32 : i32
    %523 = arith.index_cast %522 : i32 to index
    %c0_135 = arith.constant 0 : index
    %c0_136 = arith.constant 0 : index
    %524 = vector.load %arg12[%523, %c0_135, %c0_136] : memref<8x8x128xf32, #tpu.memory_space<vmem>>, vector<1x8x128xf32>
    %525 = vector.shape_cast %524 : vector<1x8x128xf32> to vector<8x128xf32>
    %526 = vector.shape_cast %521 : vector<8x128xf32> to vector<1x8x128xf32>
    tpu.vector_store %arg12[%523, %c0_135, %c0_136], %526 {strides = array<i32>} : memref<8x8x128xf32, #tpu.memory_space<vmem>>, vector<1x8x128xf32>,
    %c7_i32_137 = arith.constant 7 : i32
    %527 = arith.index_cast %c7_i32_137 : i32 to index
    %c0_138 = arith.constant 0 : index
    %c0_139 = arith.constant 0 : index
    %528 = vector.load %arg1[%527, %c0_138, %c0_139] : memref<8x8x512xbf16, #tpu.memory_space<vmem>>, vector<1x8x512xbf16>
    %529 = vector.shape_cast %528 : vector<1x8x512xbf16> to vector<8x512xbf16>
    %530 = arith.extf %529 : vector<8x512xbf16> to vector<8x512xf32>
    %531 = arith.truncf %484 : vector<8x128xf32> to vector<8x128xbf16>
    %cst_140 = arith.constant dense<0.000000e+00> : vector<8x512xf32>
    %532 = tpu.matmul %531, %3, %cst_140 {dimension_numbers = #tpu.dot_dimension_numbers<[1], [0], [0], [1], [0, 0, 1, 1], [], []>} : vector<8x128xbf16>, vector<128x512xbf16>, vector<8x512xf32> -> vector<8x512xf32>
    %533 = arith.addf %530, %532 : vector<8x512xf32>
    %534 = vector.extract_strided_slice %533 {offsets = [0, 0], sizes = [8, 128], strides = [1, 1]} : vector<8x512xf32> to vector<8x128xf32>
    %535 = arith.negf %534 : vector<8x128xf32>
    %536 = math.exp %535 : vector<8x128xf32>
    %cst_141 = arith.constant 1.000000e+00 : f32
    %537 = vector.broadcast %cst_141 : f32 to vector<8x128xf32>
    %538 = arith.addf %537, %536 : vector<8x128xf32>
    %539 = arith.divf %537, %538 : vector<8x128xf32>
    %540 = vector.extract_strided_slice %533 {offsets = [0, 128], sizes = [8, 128], strides = [1, 1]} : vector<8x512xf32> to vector<8x128xf32>
    %541 = arith.negf %540 : vector<8x128xf32>
    %542 = math.exp %541 : vector<8x128xf32>
    %cst_142 = arith.constant 1.000000e+00 : f32
    %543 = vector.broadcast %cst_142 : f32 to vector<8x128xf32>
    %544 = arith.addf %543, %542 : vector<8x128xf32>
    %545 = arith.divf %543, %544 : vector<8x128xf32>
    %546 = vector.extract_strided_slice %533 {offsets = [0, 256], sizes = [8, 128], strides = [1, 1]} : vector<8x512xf32> to vector<8x128xf32>
    %547 = math.tanh %546 : vector<8x128xf32>
    %548 = vector.extract_strided_slice %533 {offsets = [0, 384], sizes = [8, 128], strides = [1, 1]} : vector<8x512xf32> to vector<8x128xf32>
    %549 = arith.negf %548 : vector<8x128xf32>
    %550 = math.exp %549 : vector<8x128xf32>
    %cst_143 = arith.constant 1.000000e+00 : f32
    %551 = vector.broadcast %cst_143 : f32 to vector<8x128xf32>
    %552 = arith.addf %551, %550 : vector<8x128xf32>
    %553 = arith.divf %551, %552 : vector<8x128xf32>
    %554 = arith.mulf %545, %482 : vector<8x128xf32>
    %555 = arith.mulf %539, %547 : vector<8x128xf32>
    %556 = arith.addf %554, %555 : vector<8x128xf32>
    %557 = math.tanh %556 : vector<8x128xf32>
    %558 = arith.mulf %553, %557 : vector<8x128xf32>
    %559 = arith.index_cast %c7_i32_137 : i32 to index
    %c0_144 = arith.constant 0 : index
    %c0_145 = arith.constant 0 : index
    %560 = vector.load %arg11[%559, %c0_144, %c0_145] : memref<8x8x128xf32, #tpu.memory_space<vmem>>, vector<1x8x128xf32>
    %561 = vector.shape_cast %560 : vector<1x8x128xf32> to vector<8x128xf32>
    %562 = vector.shape_cast %558 : vector<8x128xf32> to vector<1x8x128xf32>
    tpu.vector_store %arg11[%559, %c0_144, %c0_145], %562 {strides = array<i32>} : memref<8x8x128xf32, #tpu.memory_space<vmem>>, vector<1x8x128xf32>,
    %c7_i32_146 = arith.constant 7 : i32
    %563 = arith.subi %c7_i32_146, %c7_i32_137 : i32
    %564 = arith.index_cast %563 : i32 to index
    %c0_147 = arith.constant 0 : index
    %c0_148 = arith.constant 0 : index
    %565 = vector.load %arg2[%564, %c0_147, %c0_148] : memref<8x8x512xbf16, #tpu.memory_space<vmem>>, vector<1x8x512xbf16>
    %566 = vector.shape_cast %565 : vector<1x8x512xbf16> to vector<8x512xbf16>
    %567 = arith.extf %566 : vector<8x512xbf16> to vector<8x512xf32>
    %568 = arith.truncf %521 : vector<8x128xf32> to vector<8x128xbf16>
    %cst_149 = arith.constant dense<0.000000e+00> : vector<8x512xf32>
    %569 = tpu.matmul %568, %4, %cst_149 {dimension_numbers = #tpu.dot_dimension_numbers<[1], [0], [0], [1], [0, 0, 1, 1], [], []>} : vector<8x128xbf16>, vector<128x512xbf16>, vector<8x512xf32> -> vector<8x512xf32>
    %570 = arith.addf %567, %569 : vector<8x512xf32>
    %571 = vector.extract_strided_slice %570 {offsets = [0, 0], sizes = [8, 128], strides = [1, 1]} : vector<8x512xf32> to vector<8x128xf32>
    %572 = arith.negf %571 : vector<8x128xf32>
    %573 = math.exp %572 : vector<8x128xf32>
    %cst_150 = arith.constant 1.000000e+00 : f32
    %574 = vector.broadcast %cst_150 : f32 to vector<8x128xf32>
    %575 = arith.addf %574, %573 : vector<8x128xf32>
    %576 = arith.divf %574, %575 : vector<8x128xf32>
    %577 = vector.extract_strided_slice %570 {offsets = [0, 128], sizes = [8, 128], strides = [1, 1]} : vector<8x512xf32> to vector<8x128xf32>
    %578 = arith.negf %577 : vector<8x128xf32>
    %579 = math.exp %578 : vector<8x128xf32>
    %cst_151 = arith.constant 1.000000e+00 : f32
    %580 = vector.broadcast %cst_151 : f32 to vector<8x128xf32>
    %581 = arith.addf %580, %579 : vector<8x128xf32>
    %582 = arith.divf %580, %581 : vector<8x128xf32>
    %583 = vector.extract_strided_slice %570 {offsets = [0, 256], sizes = [8, 128], strides = [1, 1]} : vector<8x512xf32> to vector<8x128xf32>
    %584 = math.tanh %583 : vector<8x128xf32>
    %585 = vector.extract_strided_slice %570 {offsets = [0, 384], sizes = [8, 128], strides = [1, 1]} : vector<8x512xf32> to vector<8x128xf32>
    %586 = arith.negf %585 : vector<8x128xf32>
    %587 = math.exp %586 : vector<8x128xf32>
    %cst_152 = arith.constant 1.000000e+00 : f32
    %588 = vector.broadcast %cst_152 : f32 to vector<8x128xf32>
    %589 = arith.addf %588, %587 : vector<8x128xf32>
    %590 = arith.divf %588, %589 : vector<8x128xf32>
    %591 = arith.mulf %582, %519 : vector<8x128xf32>
    %592 = arith.mulf %576, %584 : vector<8x128xf32>
    %593 = arith.addf %591, %592 : vector<8x128xf32>
    %594 = math.tanh %593 : vector<8x128xf32>
    %595 = arith.mulf %590, %594 : vector<8x128xf32>
    %c7_i32_153 = arith.constant 7 : i32
    %596 = arith.subi %c7_i32_153, %c7_i32_137 : i32
    %597 = arith.index_cast %596 : i32 to index
    %c0_154 = arith.constant 0 : index
    %c0_155 = arith.constant 0 : index
    %598 = vector.load %arg12[%597, %c0_154, %c0_155] : memref<8x8x128xf32, #tpu.memory_space<vmem>>, vector<1x8x128xf32>
    %599 = vector.shape_cast %598 : vector<1x8x128xf32> to vector<8x128xf32>
    %600 = vector.shape_cast %595 : vector<8x128xf32> to vector<1x8x128xf32>
    tpu.vector_store %arg12[%597, %c0_154, %c0_155], %600 {strides = array<i32>} : memref<8x8x128xf32, #tpu.memory_space<vmem>>, vector<1x8x128xf32>,
    %c8_i32 = arith.constant 8 : i32
    %c0_156 = arith.constant 0 : index
    %c0_157 = arith.constant 0 : index
    %601 = vector.load %arg7[%c0_156, %c0_157] : memref<8x128xf32, #tpu.memory_space<vmem>>, vector<8x128xf32>
    tpu.vector_store %arg7[%c0_156, %c0_157], %558 {strides = array<i32>} : memref<8x128xf32, #tpu.memory_space<vmem>>, vector<8x128xf32>,
    %c0_158 = arith.constant 0 : index
    %c0_159 = arith.constant 0 : index
    %602 = vector.load %arg8[%c0_158, %c0_159] : memref<8x128xf32, #tpu.memory_space<vmem>>, vector<8x128xf32>
    tpu.vector_store %arg8[%c0_158, %c0_159], %556 {strides = array<i32>} : memref<8x128xf32, #tpu.memory_space<vmem>>, vector<8x128xf32>,
    %c0_160 = arith.constant 0 : index
    %c0_161 = arith.constant 0 : index
    %603 = vector.load %arg9[%c0_160, %c0_161] : memref<8x128xf32, #tpu.memory_space<vmem>>, vector<8x128xf32>
    tpu.vector_store %arg9[%c0_160, %c0_161], %595 {strides = array<i32>} : memref<8x128xf32, #tpu.memory_space<vmem>>, vector<8x128xf32>,
    %c0_162 = arith.constant 0 : index
    %c0_163 = arith.constant 0 : index
    %604 = vector.load %arg10[%c0_162, %c0_163] : memref<8x128xf32, #tpu.memory_space<vmem>>, vector<8x128xf32>
    tpu.vector_store %arg10[%c0_162, %c0_163], %593 {strides = array<i32>} : memref<8x128xf32, #tpu.memory_space<vmem>>, vector<8x128xf32>,
    %c0_164 = arith.constant 0 : index
    %c0_165 = arith.constant 0 : index
    %c0_166 = arith.constant 0 : index
    %605 = vector.load %arg11[%c0_164, %c0_165, %c0_166] : memref<8x8x128xf32, #tpu.memory_space<vmem>>, vector<8x8x128xf32>
    %606 = arith.truncf %605 : vector<8x8x128xf32> to vector<8x8x128xbf16>
    %c0_167 = arith.constant 0 : index
    %c0_168 = arith.constant 0 : index
    %c0_169 = arith.constant 0 : index
    %607 = vector.load %arg5[%c0_167, %c0_168, %c0_169] : memref<8x8x128xbf16, #tpu.memory_space<vmem>>, vector<8x8x128xbf16>
    tpu.vector_store %arg5[%c0_167, %c0_168, %c0_169], %606 {strides = array<i32>} : memref<8x8x128xbf16, #tpu.memory_space<vmem>>, vector<8x8x128xbf16>,
    %c0_170 = arith.constant 0 : index
    %c0_171 = arith.constant 0 : index
    %c0_172 = arith.constant 0 : index
    %608 = vector.load %arg12[%c0_170, %c0_171, %c0_172] : memref<8x8x128xf32, #tpu.memory_space<vmem>>, vector<8x8x128xf32>
    %609 = arith.truncf %608 : vector<8x8x128xf32> to vector<8x8x128xbf16>
    %c0_173 = arith.constant 0 : index
    %c0_174 = arith.constant 0 : index
    %c0_175 = arith.constant 0 : index
    %610 = vector.load %arg6[%c0_173, %c0_174, %c0_175] : memref<8x8x128xbf16, #tpu.memory_space<vmem>>, vector<8x8x128xbf16>
    tpu.vector_store %arg6[%c0_173, %c0_174, %c0_175], %609 {strides = array<i32>} : memref<8x8x128xbf16, #tpu.memory_space<vmem>>, vector<8x8x128xbf16>,
    return
  }
  func.func @transform_0(%arg0: i32) -> (i32, i32, i32) {
    %c0_i32 = arith.constant 0 : i32
    %c0_i32_0 = arith.constant 0 : i32
    %c0_i32_1 = arith.constant 0 : i32
    return %arg0, %c0_i32, %c0_i32_0 : i32, i32, i32
  }
  func.func @transform_1(%arg0: i32) -> (i32, i32, i32) {
    %c1_i32 = arith.constant 1 : i32
    %0 = arith.subi %c1_i32, %arg0 : i32
    %c0_i32 = arith.constant 0 : i32
    %c1_i32_0 = arith.constant 1 : i32
    %c0_i32_1 = arith.constant 0 : i32
    return %0, %c0_i32, %c1_i32_0 : i32, i32, i32
  }
  func.func @transform_2(%arg0: i32) -> (i32, i32) {
    %c0_i32 = arith.constant 0 : i32
    %c0_i32_0 = arith.constant 0 : i32
    %c0_i32_1 = arith.constant 0 : i32
    return %c0_i32, %c0_i32_0 : i32, i32
  }
  func.func @transform_3(%arg0: i32) -> (i32, i32) {
    %c0_i32 = arith.constant 0 : i32
    %c0_i32_0 = arith.constant 0 : i32
    %c0_i32_1 = arith.constant 0 : i32
    return %c0_i32, %c0_i32_0 : i32, i32
  }
  func.func @transform_4(%arg0: i32) -> (i32, i32, i32) {
    %c0_i32 = arith.constant 0 : i32
    %c0_i32_0 = arith.constant 0 : i32
    %c0_i32_1 = arith.constant 0 : i32
    return %arg0, %c0_i32, %c0_i32_0 : i32, i32, i32
  }
  func.func @transform_5(%arg0: i32) -> (i32, i32, i32) {
    %c1_i32 = arith.constant 1 : i32
    %0 = arith.subi %c1_i32, %arg0 : i32
    %c0_i32 = arith.constant 0 : i32
    %c0_i32_0 = arith.constant 0 : i32
    %c0_i32_1 = arith.constant 0 : i32
    return %0, %c0_i32, %c0_i32_0 : i32, i32, i32
  }
}

</mosaic_0001>

<llo_original>
// kernel: speech_rnn_ctc_forward.13
$region0: #{speech_rnn_ctc_forward.13}
  #allocation0 [shape = 'u32[]', space=smem, size = 0x4, offset = 0x4, fixed_abs, tag = 'smem constant byte address 0x4 - core index']
  #allocation1 [shape = 'u32[144,128]{1,0:T(1,128)}', space=vmem, size = 0x12000, scoped, tag = 'internal scratch']
  %s0 = inlined_call_operand.vmem [shape: bf16[96,128], index: 0, kind: input, shape index: {}]
  %s1 = inlined_call_operand.vmem [shape: bf16[96,128], index: 1, kind: input, shape index: {}]
  %s2 = inlined_call_operand.vmem [shape: bf16[128,128], index: 2, kind: input, shape index: {}]
  %s3 = inlined_call_operand.vmem [shape: bf16[128,128], index: 3, kind: input, shape index: {}]
  %s4 = inlined_call_operand.vmem [shape: f32[1,128], index: 4, kind: input, shape index: {}]
  %s5 = inlined_call_operand.hbm [shape: f32[96,128], index: 5, kind: output, shape index: {}]
  %s6 = sld [smem:[#allocation0]]
  $region30: #{speech_rnn_ctc_forward.13} parent=0
    _
  %s8 = ssub.s32 1, %s6
  %s9 = scalar_select 0, %s8, %s6
  $region1: #{speech_rnn_ctc_forward.13} parent=0
    #allocation2 [shape = 'u8[49152]{0}', space=vmem, size = 0xc000, scoped, tag = 'output window, operand 0, single buffered']
    #allocation3 [shape = 's32[1]{0}', space=sflag, size = 0x4, scoped, tag = 'scoped memory for speech_rnn_ctc_forward.13']
    %10 = vsyncpa [#allocation3], 0
    // Predicated region
    $region2: #{speech_rnn_ctc_forward.13} parent=1 // pred_check
      _
    $region3: #{speech_rnn_ctc_forward.13} parent=1 // pred_check_branch
      %12 = sbr.rel (0) target = $region5
    $region4: #{speech_rnn_ctc_forward.13} parent=1 // pred_region
      _
    $region5: #{speech_rnn_ctc_forward.13} parent=1 // pred_fallthru
      _
    // Predicated region
    $region6: #{speech_rnn_ctc_forward.13} parent=1 // pred_check
      _
    $region7: #{speech_rnn_ctc_forward.13} parent=1 // pred_check_branch
      %14 = sbr.rel (0) target = $region9
    $region8: #{speech_rnn_ctc_forward.13} parent=1 // pred_region
      _
    $region9: #{speech_rnn_ctc_forward.13} parent=1 // pred_fallthru
      _
    // Predicated region
    $region10: #{speech_rnn_ctc_forward.13} parent=1 // pred_check
      _
    $region11: #{speech_rnn_ctc_forward.13} parent=1 // pred_check_branch
      %16 = sbr.rel (0) target = $region13
    $region12: #{speech_rnn_ctc_forward.13} parent=1 // pred_region
      _
    $region13: #{speech_rnn_ctc_forward.13} parent=1 // pred_fallthru
      _
    // Predicated region
    $region14: #{speech_rnn_ctc_forward.13} parent=1 // pred_check
      _
    $region15: #{speech_rnn_ctc_forward.13} parent=1 // pred_check_branch
      %18 = sbr.rel (0) target = $region17
    $region16: #{speech_rnn_ctc_forward.13} parent=1 // pred_region
      _
    $region17: #{speech_rnn_ctc_forward.13} parent=1 // pred_fallthru
      _
    // Predicated region
    $region18: #{speech_rnn_ctc_forward.13} parent=1 // pred_check
      _
    $region19: #{speech_rnn_ctc_forward.13} parent=1 // pred_check_branch
      %20 = sbr.rel (0) target = $region21
    $region20: #{speech_rnn_ctc_forward.13} parent=1 // pred_region
      _
    $region21: #{speech_rnn_ctc_forward.13} parent=1 // pred_fallthru
      _
    %v22 = vld [vmem:[%s0] sm:$0xf]
    %v23 = vld [vmem:[%s0 + $0x4] sm:$0xf]
    %v24 = vld [vmem:[%s0 + $0x8] sm:$0xf]
    %v25 = vld [vmem:[%s0 + $0xc] sm:$0xf]
    %v26 = vld [vmem:[%s0 + $0x10] sm:$0xf]
    %v27 = vld [vmem:[%s0 + $0x14] sm:$0xf]
    %v28 = vld [vmem:[%s0 + $0x18] sm:$0xf]
    %v29 = vld [vmem:[%s0 + $0x1c] sm:$0xf]
    %v30 = vld [vmem:[%s0 + $0x20] sm:$0xf]
    %v31 = vld [vmem:[%s0 + $0x24] sm:$0xf]
    %v32 = vld [vmem:[%s0 + $0x28] sm:$0xf]
    %v33 = vld [vmem:[%s0 + $0x2c] sm:$0xf]
    %v34 = vld [vmem:[%s2] sm:$0xf]
    %v35 = vld [vmem:[%s2 + $0x4] sm:$0xf]
    %v36 = vld [vmem:[%s2 + $0x8] sm:$0xf]
    %v37 = vld [vmem:[%s2 + $0xc] sm:$0xf]
    %v38 = vld [vmem:[%s2 + $0x10] sm:$0xf]
    %v39 = vld [vmem:[%s2 + $0x14] sm:$0xf]
    %v40 = vld [vmem:[%s2 + $0x18] sm:$0xf]
    %v41 = vld [vmem:[%s2 + $0x1c] sm:$0xf]
    %v42 = vld [vmem:[%s2 + $0x20] sm:$0xf]
    %v43 = vld [vmem:[%s2 + $0x24] sm:$0xf]
    %v44 = vld [vmem:[%s2 + $0x28] sm:$0xf]
    %v45 = vld [vmem:[%s2 + $0x2c] sm:$0xf]
    %v46 = vld [vmem:[%s2 + $0x30] sm:$0xf]
    %v47 = vld [vmem:[%s2 + $0x34] sm:$0xf]
    %v48 = vld [vmem:[%s2 + $0x38] sm:$0xf]
    %v49 = vld [vmem:[%s2 + $0x3c] sm:$0xf]
    %v50 = vld [vmem:[%s1] sm:$0xf]
    %v51 = vld [vmem:[%s1 + $0x4] sm:$0xf]
    %v52 = vld [vmem:[%s1 + $0x8] sm:$0xf]
    %v53 = vld [vmem:[%s1 + $0xc] sm:$0xf]
    %v54 = vld [vmem:[%s1 + $0x10] sm:$0xf]
    %v55 = vld [vmem:[%s1 + $0x14] sm:$0xf]
    %v56 = vld [vmem:[%s1 + $0x18] sm:$0xf]
    %v57 = vld [vmem:[%s1 + $0x1c] sm:$0xf]
    %v58 = vld [vmem:[%s1 + $0x20] sm:$0xf]
    %v59 = vld [vmem:[%s1 + $0x24] sm:$0xf]
    %v60 = vld [vmem:[%s1 + $0x28] sm:$0xf]
    %v61 = vld [vmem:[%s1 + $0x2c] sm:$0xf]
    %v62 = vld [vmem:[%s3] sm:$0xf]
    %v63 = vld [vmem:[%s3 + $0x4] sm:$0xf]
    %v64 = vld [vmem:[%s3 + $0x8] sm:$0xf]
    %v65 = vld [vmem:[%s3 + $0xc] sm:$0xf]
    %v66 = vld [vmem:[%s3 + $0x10] sm:$0xf]
    %v67 = vld [vmem:[%s3 + $0x14] sm:$0xf]
    %v68 = vld [vmem:[%s3 + $0x18] sm:$0xf]
    %v69 = vld [vmem:[%s3 + $0x1c] sm:$0xf]
    %v70 = vld [vmem:[%s3 + $0x20] sm:$0xf]
    %v71 = vld [vmem:[%s3 + $0x24] sm:$0xf]
    %v72 = vld [vmem:[%s3 + $0x28] sm:$0xf]
    %v73 = vld [vmem:[%s3 + $0x2c] sm:$0xf]
    %v74 = vld [vmem:[%s3 + $0x30] sm:$0xf]
    %v75 = vld [vmem:[%s3 + $0x34] sm:$0xf]
    %v76 = vld [vmem:[%s3 + $0x38] sm:$0xf]
    %v77 = vld [vmem:[%s3 + $0x3c] sm:$0xf]
    %v90 = vunpack.c.l.b16 %v50
    %v91 = vunpack.c.l.b16 %v51
    %v92 = vunpack.c.l.b16 %v52
    %v93 = vunpack.c.l.b16 %v53
    %v94 = vunpack.c.l.b16 %v54
    %v95 = vunpack.c.l.b16 %v55
    %v96 = vunpack.c.l.b16 %v56
    %v97 = vunpack.c.l.b16 %v57
    %v98 = vunpack.c.l.b16 %v58
    %v99 = vunpack.c.l.b16 %v59
    %v100 = vunpack.c.l.b16 %v60
    %v101 = vunpack.c.l.b16 %v61
    %v102 = vpack.c.b16 %v91, %v90
    %v103 = vpack.c.b16 %v93, %v92
    %v104 = vpack.c.b16 %v95, %v94
    %v105 = vpack.c.b16 %v97, %v96
    %v106 = vpack.c.b16 %v99, %v98
    %v107 = vpack.c.b16 %v101, %v100
    %v130 = vunpack.c.l.b16 %v62
    %v131 = vunpack.c.l.b16 %v63
    %v132 = vunpack.c.l.b16 %v64
    %v133 = vunpack.c.l.b16 %v65
    %v134 = vunpack.c.l.b16 %v66
    %v135 = vunpack.c.l.b16 %v67
    %v136 = vunpack.c.l.b16 %v68
    %v137 = vunpack.c.l.b16 %v69
    %v138 = vunpack.c.l.b16 %v70
    %v139 = vunpack.c.l.b16 %v71
    %v140 = vunpack.c.l.b16 %v72
    %v141 = vunpack.c.l.b16 %v73
    %v142 = vunpack.c.l.b16 %v74
    %v143 = vunpack.c.l.b16 %v75
    %v144 = vunpack.c.l.b16 %v76
    %v145 = vunpack.c.l.b16 %v77
    %v146 = vpack.c.b16 %v131, %v130
    %v147 = vpack.c.b16 %v133, %v132
    %v148 = vpack.c.b16 %v135, %v134
    %v149 = vpack.c.b16 %v137, %v136
    %v150 = vpack.c.b16 %v139, %v138
    %v151 = vpack.c.b16 %v141, %v140
    %v152 = vpack.c.b16 %v143, %v142
    %v153 = vpack.c.b16 %v145, %v144
    %162 = vmatprep.subr.bf16.mxu0 0
    %163 = vmatpush1.bf16.msra.mxu0 %v153
    %164 = vmatprep.subr.bf16.mxu0 0
    %165 = vmatpush1.bf16.msra.mxu0 %v152
    %166 = vmatprep.subr.bf16.mxu0 0
    %167 = vmatpush1.bf16.msra.mxu0 %v151
    %168 = vmatprep.subr.bf16.mxu0 0
    %169 = vmatpush1.bf16.msra.mxu0 %v150
    %170 = vmatprep.subr.bf16.mxu0 0
    %171 = vmatpush1.bf16.msra.mxu0 %v149
    %172 = vmatprep.subr.bf16.mxu0 0
    %173 = vmatpush1.bf16.msra.mxu0 %v148
    %174 = vmatprep.subr.bf16.mxu0 0
    %175 = vmatpush1.bf16.msra.mxu0 %v147
    %176 = vmatprep.subr.bf16.mxu0 0
    %177 = vmatpush1.bf16.msra.mxu0 %v146
    %178 = vmatprep.subr.bf16.mxu0 0
    %179 = vmatpush2.bf16.msra.mxu0 0
    %180 = vmatprep.subr.bf16.mxu0 0
    %181 = vmatpush2.bf16.msra.mxu0 0
    %182 = vmatprep.subr.bf16.mxu0 0
    %183 = vmatpush2.bf16.msra.mxu0 0
    %184 = vmatprep.subr.bf16.mxu0 0
    %185 = vmatpush2.bf16.msra.mxu0 0
    %186 = vmatprep.subr.bf16.mxu0 0
    %187 = vmatpush2.bf16.msra.mxu0 0
    %188 = vmatprep.subr.bf16.mxu0 0
    %189 = vmatpush2.bf16.msra.mxu0 0
    %190 = vmatprep.subr.bf16.mxu0 0
    %191 = vmatpush2.bf16.msra.mxu0 0
    %192 = vmatprep.subr.bf16.mxu0 0
    %193 = vmatpush2.bf16.msra.mxu0 0
    %194 = vmatprep.mubr.bf16.mxu0 0
    %195 = vmatmul.mubr.bf16.gmra.mxu0 %v102
    %v196 = vpop.f32.mrf.mxu0
    %v197 = vadd.f32 0.0, %v196
    %v198 = vpop.f32.mrf.mxu0
    %v199 = vpop.f32.mrf.mxu0
    %v200 = vadd.f32 0.0, %v199
    %v201 = vpop.f32.mrf.mxu0
    %202 = vmatprep.mubr.bf16.mxu0 0
    %203 = vmatmul.mubr.bf16.gmra.mxu0 %v103
    %v204 = vpop.f32.mrf.mxu0
    %v205 = vadd.f32 0.0, %v204
    %v206 = vpop.f32.mrf.mxu0
    %v207 = vpop.f32.mrf.mxu0
    %v208 = vadd.f32 0.0, %v207
    %v209 = vpop.f32.mrf.mxu0
    %210 = vmatprep.mubr.bf16.mxu0 0
    %211 = vmatmul.mubr.bf16.gmra.mxu0 %v104
    %v212 = vpop.f32.mrf.mxu0
    %v213 = vadd.f32 0.0, %v212
    %v214 = vpop.f32.mrf.mxu0
    %v215 = vpop.f32.mrf.mxu0
    %v216 = vadd.f32 0.0, %v215
    %v217 = vpop.f32.mrf.mxu0
    %218 = vmatprep.mubr.bf16.mxu0 0
    %219 = vmatmul.mubr.bf16.gmra.mxu0 %v105
    %v220 = vpop.f32.mrf.mxu0
    %v221 = vadd.f32 0.0, %v220
    %v222 = vpop.f32.mrf.mxu0
    %v223 = vpop.f32.mrf.mxu0
    %v224 = vadd.f32 0.0, %v223
    %v225 = vpop.f32.mrf.mxu0
    %226 = vmatprep.mubr.bf16.mxu0 0
    %227 = vmatmul.mubr.bf16.gmra.mxu0 %v106
    %v228 = vpop.f32.mrf.mxu0
    %v229 = vadd.f32 0.0, %v228
    %v230 = vpop.f32.mrf.mxu0
    %v231 = vpop.f32.mrf.mxu0
    %v232 = vadd.f32 0.0, %v231
    %v233 = vpop.f32.mrf.mxu0
    %234 = vmatprep.mubr.bf16.mxu0 0
    %235 = vmatmul.mubr.bf16.gmra.mxu0 %v107
    %v236 = vpop.f32.mrf.mxu0
    %v237 = vadd.f32 0.0, %v236
    %v238 = vpop.f32.mrf.mxu0
    %v239 = vpop.f32.mrf.mxu0
    %v240 = vadd.f32 0.0, %v239
    %v241 = vpop.f32.mrf.mxu0
    %242 = vdwg.mxu0
    %v255 = vunpack.c.l.b16 %v22
    %v256 = vunpack.c.l.b16 %v23
    %v257 = vunpack.c.l.b16 %v24
    %v258 = vunpack.c.l.b16 %v25
    %v259 = vunpack.c.l.b16 %v26
    %v260 = vunpack.c.l.b16 %v27
    %v261 = vunpack.c.l.b16 %v28
    %v262 = vunpack.c.l.b16 %v29
    %v263 = vunpack.c.l.b16 %v30
    %v264 = vunpack.c.l.b16 %v31
    %v265 = vunpack.c.l.b16 %v32
    %v266 = vunpack.c.l.b16 %v33
    %v267 = vpack.c.b16 %v256, %v255
    %v268 = vpack.c.b16 %v258, %v257
    %v269 = vpack.c.b16 %v260, %v259
    %v270 = vpack.c.b16 %v262, %v261
    %v271 = vpack.c.b16 %v264, %v263
    %v272 = vpack.c.b16 %v266, %v265
    %v295 = vunpack.c.l.b16 %v34
    %v296 = vunpack.c.l.b16 %v35
    %v297 = vunpack.c.l.b16 %v36
    %v298 = vunpack.c.l.b16 %v37
    %v299 = vunpack.c.l.b16 %v38
    %v300 = vunpack.c.l.b16 %v39
    %v301 = vunpack.c.l.b16 %v40
    %v302 = vunpack.c.l.b16 %v41
    %v303 = vunpack.c.l.b16 %v42
    %v304 = vunpack.c.l.b16 %v43
    %v305 = vunpack.c.l.b16 %v44
    %v306 = vunpack.c.l.b16 %v45
    %v307 = vunpack.c.l.b16 %v46
    %v308 = vunpack.c.l.b16 %v47
    %v309 = vunpack.c.l.b16 %v48
    %v310 = vunpack.c.l.b16 %v49
    %v311 = vpack.c.b16 %v296, %v295
    %v312 = vpack.c.b16 %v298, %v297
    %v313 = vpack.c.b16 %v300, %v299
    %v314 = vpack.c.b16 %v302, %v301
    %v315 = vpack.c.b16 %v304, %v303
    %v316 = vpack.c.b16 %v306, %v305
    %v317 = vpack.c.b16 %v308, %v307
    %v318 = vpack.c.b16 %v310, %v309
    %327 = vmatprep.subr.bf16.mxu0 0
    %328 = vmatpush1.bf16.msra.mxu0 %v318
    %329 = vmatprep.subr.bf16.mxu0 0
    %330 = vmatpush1.bf16.msra.mxu0 %v317
    %331 = vmatprep.subr.bf16.mxu0 0
    %332 = vmatpush1.bf16.msra.mxu0 %v316
    %333 = vmatprep.subr.bf16.mxu0 0
    %334 = vmatpush1.bf16.msra.mxu0 %v315
    %335 = vmatprep.subr.bf16.mxu0 0
    %336 = vmatpush1.bf16.msra.mxu0 %v314
    %337 = vmatprep.subr.bf16.mxu0 0
    %338 = vmatpush1.bf16.msra.mxu0 %v313
    %339 = vmatprep.subr.bf16.mxu0 0
    %340 = vmatpush1.bf16.msra.mxu0 %v312
    %341 = vmatprep.subr.bf16.mxu0 0
    %342 = vmatpush1.bf16.msra.mxu0 %v311
    %343 = vmatprep.subr.bf16.mxu0 0
    %344 = vmatpush2.bf16.msra.mxu0 0
    %345 = vmatprep.subr.bf16.mxu0 0
    %346 = vmatpush2.bf16.msra.mxu0 0
    %347 = vmatprep.subr.bf16.mxu0 0
    %348 = vmatpush2.bf16.msra.mxu0 0
    %349 = vmatprep.subr.bf16.mxu0 0
    %350 = vmatpush2.bf16.msra.mxu0 0
    %351 = vmatprep.subr.bf16.mxu0 0
    %352 = vmatpush2.bf16.msra.mxu0 0
    %353 = vmatprep.subr.bf16.mxu0 0
    %354 = vmatpush2.bf16.msra.mxu0 0
    %355 = vmatprep.subr.bf16.mxu0 0
    %356 = vmatpush2.bf16.msra.mxu0 0
    %357 = vmatprep.subr.bf16.mxu0 0
    %358 = vmatpush2.bf16.msra.mxu0 0
    %359 = vmatprep.mubr.bf16.mxu0 0
    %360 = vmatmul.mubr.bf16.gmra.mxu0 %v267
    %v361 = vpop.f32.mrf.mxu0
    %v362 = vadd.f32 %v197, %v361
    %v363 = vpop.f32.mrf.mxu0
    %v364 = vpop.f32.mrf.mxu0
    %v365 = vadd.f32 %v200, %v364
    %v366 = vpop.f32.mrf.mxu0
    %367 = vmatprep.mubr.bf16.mxu0 0
    %368 = vmatmul.mubr.bf16.gmra.mxu0 %v268
    %v369 = vpop.f32.mrf.mxu0
    %v370 = vadd.f32 %v205, %v369
    %v371 = vpop.f32.mrf.mxu0
    %v372 = vpop.f32.mrf.mxu0
    %v373 = vadd.f32 %v208, %v372
    %v374 = vpop.f32.mrf.mxu0
    %375 = vmatprep.mubr.bf16.mxu0 0
    %376 = vmatmul.mubr.bf16.gmra.mxu0 %v269
    %v377 = vpop.f32.mrf.mxu0
    %v378 = vadd.f32 %v213, %v377
    %v379 = vpop.f32.mrf.mxu0
    %v380 = vpop.f32.mrf.mxu0
    %v381 = vadd.f32 %v216, %v380
    %v382 = vpop.f32.mrf.mxu0
    %383 = vmatprep.mubr.bf16.mxu0 0
    %384 = vmatmul.mubr.bf16.gmra.mxu0 %v270
    %v385 = vpop.f32.mrf.mxu0
    %v386 = vadd.f32 %v221, %v385
    %v387 = vpop.f32.mrf.mxu0
    %v388 = vpop.f32.mrf.mxu0
    %v389 = vadd.f32 %v224, %v388
    %v390 = vpop.f32.mrf.mxu0
    %391 = vmatprep.mubr.bf16.mxu0 0
    %392 = vmatmul.mubr.bf16.gmra.mxu0 %v271
    %v393 = vpop.f32.mrf.mxu0
    %v394 = vadd.f32 %v229, %v393
    %v395 = vpop.f32.mrf.mxu0
    %v396 = vpop.f32.mrf.mxu0
    %v397 = vadd.f32 %v232, %v396
    %v398 = vpop.f32.mrf.mxu0
    %399 = vmatprep.mubr.bf16.mxu0 0
    %400 = vmatmul.mubr.bf16.gmra.mxu0 %v272
    %v401 = vpop.f32.mrf.mxu0
    %v402 = vadd.f32 %v237, %v401
    %v403 = vpop.f32.mrf.mxu0
    %v404 = vpop.f32.mrf.mxu0
    %v405 = vadd.f32 %v240, %v404
    %v406 = vpop.f32.mrf.mxu0
    %407 = vdwg.mxu0
    %v408 = vld [vmem:[%s4] sm:$0x1]
    %v410 = vlaneseq
    %v411 = vshrl.u32 %v410, 7
    %v412 = vsub.s32 0, %v411
    %v413 = vrot.slane %v408, %v412
    %v415 = vadd.f32 %v362, %v413
    %v416 = vadd.f32 %v365, %v413
    %v417 = vadd.f32 %v370, %v413
    %v418 = vadd.f32 %v373, %v413
    %v419 = vadd.f32 %v378, %v413
    %v420 = vadd.f32 %v381, %v413
    %v421 = vadd.f32 %v386, %v413
    %v422 = vadd.f32 %v389, %v413
    %v423 = vadd.f32 %v394, %v413
    %v424 = vadd.f32 %v397, %v413
    %v425 = vadd.f32 %v402, %v413
    %v426 = vadd.f32 %v405, %v413
    %427 = vst [vmem:[#allocation2] sm:$0xff] %v415
    %428 = vst [vmem:[#allocation2 + $0x8] sm:$0xff] %v416
    %429 = vst [vmem:[#allocation2 + $0x10] sm:$0xff] %v417
    %430 = vst [vmem:[#allocation2 + $0x18] sm:$0xff] %v418
    %431 = vst [vmem:[#allocation2 + $0x20] sm:$0xff] %v419
    %432 = vst [vmem:[#allocation2 + $0x28] sm:$0xff] %v420
    %433 = vst [vmem:[#allocation2 + $0x30] sm:$0xff] %v421
    %434 = vst [vmem:[#allocation2 + $0x38] sm:$0xff] %v422
    %435 = vst [vmem:[#allocation2 + $0x40] sm:$0xff] %v423
    %436 = vst [vmem:[#allocation2 + $0x48] sm:$0xff] %v424
    %437 = vst [vmem:[#allocation2 + $0x50] sm:$0xff] %v425
    %438 = vst [vmem:[#allocation2 + $0x58] sm:$0xff] %v426
    // Predicated region
    $region22: #{speech_rnn_ctc_forward.13} parent=1 // pred_check
      _
    $region23: #{speech_rnn_ctc_forward.13} parent=1 // pred_check_branch
      %440 = sbr.rel (0) target = $region25
    $region24: #{speech_rnn_ctc_forward.13} parent=1 // pred_region
      %s442 = ssub.s32 1536, 1536
      %443 = vsyncadd [#allocation3], %s442
      %s444 = sshll.u32 [#allocation2], 4
      %s445 = int_to_ptr.vmem [resolvable:$true] %s444
      %450 = dma.vmem_to_hbm [thread:$0]  %s445, 1536, %s5, [#allocation3], 128, 128, 8
    $region25: #{speech_rnn_ctc_forward.13} parent=1 // pred_fallthru
      _
    // Predicated region
    $region26: #{speech_rnn_ctc_forward.13} parent=1 // pred_check
      _
    $region27: #{speech_rnn_ctc_forward.13} parent=1 // pred_check_branch
      %452 = sbr.rel (0) target = $region29
    $region28: #{speech_rnn_ctc_forward.13} parent=1 // pred_region
      %453 = dma.done [#allocation3], 1536
    $region29: #{speech_rnn_ctc_forward.13} parent=1 // pred_fallthru
      _
    %454 = vsyncpa [#allocation3], 1

// kernel: speech_rnn_ctc_forward.7
$region0: #{speech_rnn_ctc_forward.7}
  #allocation0 [shape = 'u32[]', space=smem, size = 0x4, offset = 0x4, fixed_abs, tag = 'smem constant byte address 0x4 - core index']
  #allocation1 [shape = 'u32[144,128]{1,0:T(1,128)}', space=vmem, size = 0x12000, scoped, tag = 'internal scratch']
  %s0 = inlined_call_operand.vmem [shape: bf16[96,128], index: 0, kind: input, shape index: {}]
  %s1 = inlined_call_operand.hbm [shape: bf16[128,1024], index: 1, kind: input, shape index: {}]
  %s2 = inlined_call_operand.vmem [shape: f32[1,1024], index: 2, kind: input, shape index: {}]
  %s3 = inlined_call_operand.vmem [shape: bf16[96,1024], index: 3, kind: output, shape index: {}]
  %s4 = sld [smem:[#allocation0]]
  $region26: #{speech_rnn_ctc_forward.7} parent=0
    _
  %s6 = ssub.s32 1, %s4
  %s7 = scalar_select 0, %s6, %s4
  $region1: #{speech_rnn_ctc_forward.7} parent=0
    #allocation2 [shape = 'u8[262144]{0}', space=vmem, size = 0x40000, scoped, tag = 'input window, operand 1, single buffered']
    #allocation3 [shape = 's32[1]{0}', space=sflag, size = 0x4, scoped, tag = 'scoped memory for speech_rnn_ctc_forward.7']
    %8 = vsyncpa [#allocation3], 0
    // Predicated region
    $region2: #{speech_rnn_ctc_forward.7} parent=1 // pred_check
      _
    $region3: #{speech_rnn_ctc_forward.7} parent=1 // pred_check_branch
      %10 = sbr.rel (0) target = $region5
    $region4: #{speech_rnn_ctc_forward.7} parent=1 // pred_region
      _
    $region5: #{speech_rnn_ctc_forward.7} parent=1 // pred_fallthru
      _
    // Predicated region
    $region6: #{speech_rnn_ctc_forward.7} parent=1 // pred_check
      _
    $region7: #{speech_rnn_ctc_forward.7} parent=1 // pred_check_branch
      %12 = sbr.rel (0) target = $region9
    $region8: #{speech_rnn_ctc_forward.7} parent=1 // pred_region
      %s14 = ssub.s32 8192, 8192
      %15 = vsyncadd [#allocation3], %s14
      %s16 = sshll.u32 [#allocation2], 4
      %s17 = int_to_ptr.vmem [resolvable:$true] %s16
      %22 = dma.hbm_to_vmem [thread:$0]  %s1, 8192, %s17, [#allocation3], 512, 512, 32
    $region9: #{speech_rnn_ctc_forward.7} parent=1 // pred_fallthru
      _
    // Predicated region
    $region10: #{speech_rnn_ctc_forward.7} parent=1 // pred_check
      _
    $region11: #{speech_rnn_ctc_forward.7} parent=1 // pred_check_branch
      %24 = sbr.rel (0) target = $region13
    $region12: #{speech_rnn_ctc_forward.7} parent=1 // pred_region
      _
    $region13: #{speech_rnn_ctc_forward.7} parent=1 // pred_fallthru
      _
    // Predicated region
    $region14: #{speech_rnn_ctc_forward.7} parent=1 // pred_check
      _
    $region15: #{speech_rnn_ctc_forward.7} parent=1 // pred_check_branch
      %26 = sbr.rel (0) target = $region17
    $region16: #{speech_rnn_ctc_forward.7} parent=1 // pred_region
      %27 = dma.done [#allocation3], 8192
    $region17: #{speech_rnn_ctc_forward.7} parent=1 // pred_fallthru
      _
    %v29 = vld [vmem:[%s0] sm:$0xf]
    %v30 = vld [vmem:[%s0 + $0x4] sm:$0xf]
    %v31 = vld [vmem:[%s0 + $0x8] sm:$0xf]
    %v32 = vld [vmem:[%s0 + $0xc] sm:$0xf]
    %v33 = vld [vmem:[%s0 + $0x10] sm:$0xf]
    %v34 = vld [vmem:[%s0 + $0x14] sm:$0xf]
    %v35 = vld [vmem:[%s0 + $0x18] sm:$0xf]
    %v36 = vld [vmem:[%s0 + $0x1c] sm:$0xf]
    %v37 = vld [vmem:[%s0 + $0x20] sm:$0xf]
    %v38 = vld [vmem:[%s0 + $0x24] sm:$0xf]
    %v39 = vld [vmem:[%s0 + $0x28] sm:$0xf]
    %v40 = vld [vmem:[%s0 + $0x2c] sm:$0xf]
    %v41 = vld [vmem:[#allocation2] sm:$0xff]
    %v42 = vld [vmem:[#allocation2 + $0x8] sm:$0xff]
    %v43 = vld [vmem:[#allocation2 + $0x10] sm:$0xff]
    %v44 = vld [vmem:[#allocation2 + $0x18] sm:$0xff]
    %v45 = vld [vmem:[#allocation2 + $0x20] sm:$0xff]
    %v46 = vld [vmem:[#allocation2 + $0x28] sm:$0xff]
    %v47 = vld [vmem:[#allocation2 + $0x30] sm:$0xff]
    %v48 = vld [vmem:[#allocation2 + $0x38] sm:$0xff]
    %v49 = vld [vmem:[#allocation2 + $0x40] sm:$0xff]
    %v50 = vld [vmem:[#allocation2 + $0x48] sm:$0xff]
    %v51 = vld [vmem:[#allocation2 + $0x50] sm:$0xff]
    %v52 = vld [vmem:[#allocation2 + $0x58] sm:$0xff]
    %v53 = vld [vmem:[#allocation2 + $0x60] sm:$0xff]
    %v54 = vld [vmem:[#allocation2 + $0x68] sm:$0xff]
    %v55 = vld [vmem:[#allocation2 + $0x70] sm:$0xff]
    %v56 = vld [vmem:[#allocation2 + $0x78] sm:$0xff]
    %v57 = vld [vmem:[#allocation2 + $0x80] sm:$0xff]
    %v58 = vld [vmem:[#allocation2 + $0x88] sm:$0xff]
    %v59 = vld [vmem:[#allocation2 + $0x90] sm:$0xff]
    %v60 = vld [vmem:[#allocation2 + $0x98] sm:$0xff]
    %v61 = vld [vmem:[#allocation2 + $0xa0] sm:$0xff]
    %v62 = vld [vmem:[#allocation2 + $0xa8] sm:$0xff]
    %v63 = vld [vmem:[#allocation2 + $0xb0] sm:$0xff]
    %v64 = vld [vmem:[#allocation2 + $0xb8] sm:$0xff]
    %v65 = vld [vmem:[#allocation2 + $0xc0] sm:$0xff]
    %v66 = vld [vmem:[#allocation2 + $0xc8] sm:$0xff]
    %v67 = vld [vmem:[#allocation2 + $0xd0] sm:$0xff]
    %v68 = vld [vmem:[#allocation2 + $0xd8] sm:$0xff]
    %v69 = vld [vmem:[#allocation2 + $0xe0] sm:$0xff]
    %v70 = vld [vmem:[#allocation2 + $0xe8] sm:$0xff]
    %v71 = vld [vmem:[#allocation2 + $0xf0] sm:$0xff]
    %v72 = vld [vmem:[#allocation2 + $0xf8] sm:$0xff]
    %v73 = vld [vmem:[#allocation2 + $0x100] sm:$0xff]
    %v74 = vld [vmem:[#allocation2 + $0x108] sm:$0xff]
    %v75 = vld [vmem:[#allocation2 + $0x110] sm:$0xff]
    %v76 = vld [vmem:[#allocation2 + $0x118] sm:$0xff]
    %v77 = vld [vmem:[#allocation2 + $0x120] sm:$0xff]
    %v78 = vld [vmem:[#allocation2 + $0x128] sm:$0xff]
    %v79 = vld [vmem:[#allocation2 + $0x130] sm:$0xff]
    %v80 = vld [vmem:[#allocation2 + $0x138] sm:$0xff]
    %v81 = vld [vmem:[#allocation2 + $0x140] sm:$0xff]
    %v82 = vld [vmem:[#allocation2 + $0x148] sm:$0xff]
    %v83 = vld [vmem:[#allocation2 + $0x150] sm:$0xff]
    %v84 = vld [vmem:[#allocation2 + $0x158] sm:$0xff]
    %v85 = vld [vmem:[#allocation2 + $0x160] sm:$0xff]
    %v86 = vld [vmem:[#allocation2 + $0x168] sm:$0xff]
    %v87 = vld [vmem:[#allocation2 + $0x170] sm:$0xff]
    %v88 = vld [vmem:[#allocation2 + $0x178] sm:$0xff]
    %v89 = vld [vmem:[#allocation2 + $0x180] sm:$0xff]
    %v90 = vld [vmem:[#allocation2 + $0x188] sm:$0xff]
    %v91 = vld [vmem:[#allocation2 + $0x190] sm:$0xff]
    %v92 = vld [vmem:[#allocation2 + $0x198] sm:$0xff]
    %v93 = vld [vmem:[#allocation2 + $0x1a0] sm:$0xff]
    %v94 = vld [vmem:[#allocation2 + $0x1a8] sm:$0xff]
    %v95 = vld [vmem:[#allocation2 + $0x1b0] sm:$0xff]
    %v96 = vld [vmem:[#allocation2 + $0x1b8] sm:$0xff]
    %v97 = vld [vmem:[#allocation2 + $0x1c0] sm:$0xff]
    %v98 = vld [vmem:[#allocation2 + $0x1c8] sm:$0xff]
    %v99 = vld [vmem:[#allocation2 + $0x1d0] sm:$0xff]
    %v100 = vld [vmem:[#allocation2 + $0x1d8] sm:$0xff]
    %v101 = vld [vmem:[#allocation2 + $0x1e0] sm:$0xff]
    %v102 = vld [vmem:[#allocation2 + $0x1e8] sm:$0xff]
    %v103 = vld [vmem:[#allocation2 + $0x1f0] sm:$0xff]
    %v104 = vld [vmem:[#allocation2 + $0x1f8] sm:$0xff]
    %v105 = vld [vmem:[%s2] sm:$0xff]
    %v107 = vlaneseq
    %v108 = vshrl.u32 %v107, 7
    %v109 = vsub.s32 0, %v108
    %v110 = vrot.slane %v105, %v109
    %v111 = vlaneseq
    %v112 = vshrl.u32 %v111, 7
    %v113 = vsub.s32 1, %v112
    %v114 = vrot.slane %v105, %v113
    %v115 = vlaneseq
    %v116 = vshrl.u32 %v115, 7
    %v117 = vsub.s32 2, %v116
    %v118 = vrot.slane %v105, %v117
    %v119 = vlaneseq
    %v120 = vshrl.u32 %v119, 7
    %v121 = vsub.s32 3, %v120
    %v122 = vrot.slane %v105, %v121
    %v123 = vlaneseq
    %v124 = vshrl.u32 %v123, 7
    %v125 = vsub.s32 4, %v124
    %v126 = vrot.slane %v105, %v125
    %v127 = vlaneseq
    %v128 = vshrl.u32 %v127, 7
    %v129 = vsub.s32 5, %v128
    %v130 = vrot.slane %v105, %v129
    %v131 = vlaneseq
    %v132 = vshrl.u32 %v131, 7
    %v133 = vsub.s32 6, %v132
    %v134 = vrot.slane %v105, %v133
    %v135 = vlaneseq
    %v136 = vshrl.u32 %v135, 7
    %v137 = vsub.s32 7, %v136
    %v138 = vrot.slane %v105, %v137
    %v159 = vunpack.c.l.b16 %v29
    %v160 = vunpack.c.l.b16 %v30
    %v161 = vunpack.c.l.b16 %v31
    %v162 = vunpack.c.l.b16 %v32
    %v163 = vunpack.c.l.b16 %v33
    %v164 = vunpack.c.l.b16 %v34
    %v165 = vunpack.c.l.b16 %v35
    %v166 = vunpack.c.l.b16 %v36
    %v167 = vunpack.c.l.b16 %v37
    %v168 = vunpack.c.l.b16 %v38
    %v169 = vunpack.c.l.b16 %v39
    %v170 = vunpack.c.l.b16 %v40
    %v171 = vpack.c.b16 %v160, %v159
    %v172 = vpack.c.b16 %v162, %v161
    %v173 = vpack.c.b16 %v164, %v163
    %v174 = vpack.c.b16 %v166, %v165
    %v175 = vpack.c.b16 %v168, %v167
    %v176 = vpack.c.b16 %v170, %v169
    %v247 = vunpack.c.l.b16 %v41
    %v248 = vunpack.c.h.b16 %v41
    %v249 = vunpack.c.l.b16 %v42
    %v250 = vunpack.c.h.b16 %v42
    %v251 = vunpack.c.l.b16 %v43
    %v252 = vunpack.c.h.b16 %v43
    %v253 = vunpack.c.l.b16 %v44
    %v254 = vunpack.c.h.b16 %v44
    %v255 = vunpack.c.l.b16 %v45
    %v256 = vunpack.c.h.b16 %v45
    %v257 = vunpack.c.l.b16 %v46
    %v258 = vunpack.c.h.b16 %v46
    %v259 = vunpack.c.l.b16 %v47
    %v260 = vunpack.c.h.b16 %v47
    %v261 = vunpack.c.l.b16 %v48
    %v262 = vunpack.c.h.b16 %v48
    %v263 = vunpack.c.l.b16 %v49
    %v264 = vunpack.c.h.b16 %v49
    %v265 = vunpack.c.l.b16 %v50
    %v266 = vunpack.c.h.b16 %v50
    %v267 = vunpack.c.l.b16 %v51
    %v268 = vunpack.c.h.b16 %v51
    %v269 = vunpack.c.l.b16 %v52
    %v270 = vunpack.c.h.b16 %v52
    %v271 = vunpack.c.l.b16 %v53
    %v272 = vunpack.c.h.b16 %v53
    %v273 = vunpack.c.l.b16 %v54
    %v274 = vunpack.c.h.b16 %v54
    %v275 = vunpack.c.l.b16 %v55
    %v276 = vunpack.c.h.b16 %v55
    %v277 = vunpack.c.l.b16 %v56
    %v278 = vunpack.c.h.b16 %v56
    %v279 = vunpack.c.l.b16 %v57
    %v280 = vunpack.c.h.b16 %v57
    %v281 = vunpack.c.l.b16 %v58
    %v282 = vunpack.c.h.b16 %v58
    %v283 = vunpack.c.l.b16 %v59
    %v284 = vunpack.c.h.b16 %v59
    %v285 = vunpack.c.l.b16 %v60
    %v286 = vunpack.c.h.b16 %v60
    %v287 = vunpack.c.l.b16 %v61
    %v288 = vunpack.c.h.b16 %v61
    %v289 = vunpack.c.l.b16 %v62
    %v290 = vunpack.c.h.b16 %v62
    %v291 = vunpack.c.l.b16 %v63
    %v292 = vunpack.c.h.b16 %v63
    %v293 = vunpack.c.l.b16 %v64
    %v294 = vunpack.c.h.b16 %v64
    %v295 = vunpack.c.l.b16 %v65
    %v296 = vunpack.c.h.b16 %v65
    %v297 = vunpack.c.l.b16 %v66
    %v298 = vunpack.c.h.b16 %v66
    %v299 = vunpack.c.l.b16 %v67
    %v300 = vunpack.c.h.b16 %v67
    %v301 = vunpack.c.l.b16 %v68
    %v302 = vunpack.c.h.b16 %v68
    %v303 = vunpack.c.l.b16 %v69
    %v304 = vunpack.c.h.b16 %v69
    %v305 = vunpack.c.l.b16 %v70
    %v306 = vunpack.c.h.b16 %v70
    %v307 = vunpack.c.l.b16 %v71
    %v308 = vunpack.c.h.b16 %v71
    %v309 = vunpack.c.l.b16 %v72
    %v310 = vunpack.c.h.b16 %v72
    %v311 = vunpack.c.l.b16 %v73
    %v312 = vunpack.c.h.b16 %v73
    %v313 = vunpack.c.l.b16 %v74
    %v314 = vunpack.c.h.b16 %v74
    %v315 = vunpack.c.l.b16 %v75
    %v316 = vunpack.c.h.b16 %v75
    %v317 = vunpack.c.l.b16 %v76
    %v318 = vunpack.c.h.b16 %v76
    %v319 = vunpack.c.l.b16 %v77
    %v320 = vunpack.c.h.b16 %v77
    %v321 = vunpack.c.l.b16 %v78
    %v322 = vunpack.c.h.b16 %v78
    %v323 = vunpack.c.l.b16 %v79
    %v324 = vunpack.c.h.b16 %v79
    %v325 = vunpack.c.l.b16 %v80
    %v326 = vunpack.c.h.b16 %v80
    %v327 = vunpack.c.l.b16 %v81
    %v328 = vunpack.c.h.b16 %v81
    %v329 = vunpack.c.l.b16 %v82
    %v330 = vunpack.c.h.b16 %v82
    %v331 = vunpack.c.l.b16 %v83
    %v332 = vunpack.c.h.b16 %v83
    %v333 = vunpack.c.l.b16 %v84
    %v334 = vunpack.c.h.b16 %v84
    %v335 = vunpack.c.l.b16 %v85
    %v336 = vunpack.c.h.b16 %v85
    %v337 = vunpack.c.l.b16 %v86
    %v338 = vunpack.c.h.b16 %v86
    %v339 = vunpack.c.l.b16 %v87
    %v340 = vunpack.c.h.b16 %v87
    %v341 = vunpack.c.l.b16 %v88
    %v342 = vunpack.c.h.b16 %v88
    %v343 = vunpack.c.l.b16 %v89
    %v344 = vunpack.c.h.b16 %v89
    %v345 = vunpack.c.l.b16 %v90
    %v346 = vunpack.c.h.b16 %v90
    %v347 = vunpack.c.l.b16 %v91
    %v348 = vunpack.c.h.b16 %v91
    %v349 = vunpack.c.l.b16 %v92
    %v350 = vunpack.c.h.b16 %v92
    %v351 = vunpack.c.l.b16 %v93
    %v352 = vunpack.c.h.b16 %v93
    %v353 = vunpack.c.l.b16 %v94
    %v354 = vunpack.c.h.b16 %v94
    %v355 = vunpack.c.l.b16 %v95
    %v356 = vunpack.c.h.b16 %v95
    %v357 = vunpack.c.l.b16 %v96
    %v358 = vunpack.c.h.b16 %v96
    %v359 = vunpack.c.l.b16 %v97
    %v360 = vunpack.c.h.b16 %v97
    %v361 = vunpack.c.l.b16 %v98
    %v362 = vunpack.c.h.b16 %v98
    %v363 = vunpack.c.l.b16 %v99
    %v364 = vunpack.c.h.b16 %v99
    %v365 = vunpack.c.l.b16 %v100
    %v366 = vunpack.c.h.b16 %v100
    %v367 = vunpack.c.l.b16 %v101
    %v368 = vunpack.c.h.b16 %v101
    %v369 = vunpack.c.l.b16 %v102
    %v370 = vunpack.c.h.b16 %v102
    %v371 = vunpack.c.l.b16 %v103
    %v372 = vunpack.c.h.b16 %v103
    %v373 = vunpack.c.l.b16 %v104
    %v374 = vunpack.c.h.b16 %v104
    %v375 = vpack.c.b16 %v255, %v247
    %v376 = vpack.c.b16 %v256, %v248
    %v377 = vpack.c.b16 %v257, %v249
    %v378 = vpack.c.b16 %v258, %v250
    %v379 = vpack.c.b16 %v259, %v251
    %v380 = vpack.c.b16 %v260, %v252
    %v381 = vpack.c.b16 %v261, %v253
    %v382 = vpack.c.b16 %v262, %v254
    %v383 = vpack.c.b16 %v271, %v263
    %v384 = vpack.c.b16 %v272, %v264
    %v385 = vpack.c.b16 %v273, %v265
    %v386 = vpack.c.b16 %v274, %v266
    %v387 = vpack.c.b16 %v275, %v267
    %v388 = vpack.c.b16 %v276, %v268
    %v389 = vpack.c.b16 %v277, %v269
    %v390 = vpack.c.b16 %v278, %v270
    %v391 = vpack.c.b16 %v287, %v279
    %v392 = vpack.c.b16 %v288, %v280
    %v393 = vpack.c.b16 %v289, %v281
    %v394 = vpack.c.b16 %v290, %v282
    %v395 = vpack.c.b16 %v291, %v283
    %v396 = vpack.c.b16 %v292, %v284
    %v397 = vpack.c.b16 %v293, %v285
    %v398 = vpack.c.b16 %v294, %v286
    %v399 = vpack.c.b16 %v303, %v295
    %v400 = vpack.c.b16 %v304, %v296
    %v401 = vpack.c.b16 %v305, %v297
    %v402 = vpack.c.b16 %v306, %v298
    %v403 = vpack.c.b16 %v307, %v299
    %v404 = vpack.c.b16 %v308, %v300
    %v405 = vpack.c.b16 %v309, %v301
    %v406 = vpack.c.b16 %v310, %v302
    %v407 = vpack.c.b16 %v319, %v311
    %v408 = vpack.c.b16 %v320, %v312
    %v409 = vpack.c.b16 %v321, %v313
    %v410 = vpack.c.b16 %v322, %v314
    %v411 = vpack.c.b16 %v323, %v315
    %v412 = vpack.c.b16 %v324, %v316
    %v413 = vpack.c.b16 %v325, %v317
    %v414 = vpack.c.b16 %v326, %v318
    %v415 = vpack.c.b16 %v335, %v327
    %v416 = vpack.c.b16 %v336, %v328
    %v417 = vpack.c.b16 %v337, %v329
    %v418 = vpack.c.b16 %v338, %v330
    %v419 = vpack.c.b16 %v339, %v331
    %v420 = vpack.c.b16 %v340, %v332
    %v421 = vpack.c.b16 %v341, %v333
    %v422 = vpack.c.b16 %v342, %v334
    %v423 = vpack.c.b16 %v351, %v343
    %v424 = vpack.c.b16 %v352, %v344
    %v425 = vpack.c.b16 %v353, %v345
    %v426 = vpack.c.b16 %v354, %v346
    %v427 = vpack.c.b16 %v355, %v347
    %v428 = vpack.c.b16 %v356, %v348
    %v429 = vpack.c.b16 %v357, %v349
    %v430 = vpack.c.b16 %v358, %v350
    %v431 = vpack.c.b16 %v367, %v359
    %v432 = vpack.c.b16 %v368, %v360
    %v433 = vpack.c.b16 %v369, %v361
    %v434 = vpack.c.b16 %v370, %v362
    %v435 = vpack.c.b16 %v371, %v363
    %v436 = vpack.c.b16 %v372, %v364
    %v437 = vpack.c.b16 %v373, %v365
    %v438 = vpack.c.b16 %v374, %v366
    %503 = vmatprep.subr.bf16.mxu0 %v432
    %504 = vmatpush1.bf16.msra.mxu0 %v431
    %505 = vmatprep.subr.bf16.mxu0 %v424
    %506 = vmatpush1.bf16.msra.mxu0 %v423
    %507 = vmatprep.subr.bf16.mxu0 %v416
    %508 = vmatpush1.bf16.msra.mxu0 %v415
    %509 = vmatprep.subr.bf16.mxu0 %v408
    %510 = vmatpush1.bf16.msra.mxu0 %v407
    %511 = vmatprep.subr.bf16.mxu0 %v400
    %512 = vmatpush1.bf16.msra.mxu0 %v399
    %513 = vmatprep.subr.bf16.mxu0 %v392
    %514 = vmatpush1.bf16.msra.mxu0 %v391
    %515 = vmatprep.subr.bf16.mxu0 %v384
    %516 = vmatpush1.bf16.msra.mxu0 %v383
    %517 = vmatprep.subr.bf16.mxu0 %v376
    %518 = vmatpush1.bf16.msra.mxu0 %v375
    %519 = vmatprep.subr.bf16.mxu0 0
    %520 = vmatpush2.bf16.msra.mxu0 0
    %521 = vmatprep.subr.bf16.mxu0 0
    %522 = vmatpush2.bf16.msra.mxu0 0
    %523 = vmatprep.subr.bf16.mxu0 0
    %524 = vmatpush2.bf16.msra.mxu0 0
    %525 = vmatprep.subr.bf16.mxu0 0
    %526 = vmatpush2.bf16.msra.mxu0 0
    %527 = vmatprep.subr.bf16.mxu0 0
    %528 = vmatpush2.bf16.msra.mxu0 0
    %529 = vmatprep.subr.bf16.mxu0 0
    %530 = vmatpush2.bf16.msra.mxu0 0
    %531 = vmatprep.subr.bf16.mxu0 0
    %532 = vmatpush2.bf16.msra.mxu0 0
    %533 = vmatprep.subr.bf16.mxu0 0
    %534 = vmatpush2.bf16.msra.mxu0 0
    %535 = vmatprep.mubr.bf16.mxu0 0
    %536 = vmatmul.mubr.bf16.gmra.mxu0 %v171
    %v537 = vpop.f32.mrf.mxu0
    %v538 = vadd.f32 %v110, %v537
    %v539 = vpop.f32.mrf.mxu0
    %v540 = vadd.f32 %v114, %v539
    %v541 = vpop.f32.mrf.mxu0
    %v542 = vadd.f32 %v110, %v541
    %v543 = vpop.f32.mrf.mxu0
    %v544 = vadd.f32 %v114, %v543
    %545 = vmatprep.mubr.bf16.mxu0 0
    %546 = vmatmul.mubr.bf16.gmra.mxu0 %v172
    %v547 = vpop.f32.mrf.mxu0
    %v548 = vadd.f32 %v110, %v547
    %v549 = vpop.f32.mrf.mxu0
    %v550 = vadd.f32 %v114, %v549
    %v551 = vpop.f32.mrf.mxu0
    %v552 = vadd.f32 %v110, %v551
    %v553 = vpop.f32.mrf.mxu0
    %v554 = vadd.f32 %v114, %v553
    %555 = vmatprep.mubr.bf16.mxu0 0
    %556 = vmatmul.mubr.bf16.gmra.mxu0 %v173
    %v557 = vpop.f32.mrf.mxu0
    %v558 = vadd.f32 %v110, %v557
    %v559 = vpop.f32.mrf.mxu0
    %v560 = vadd.f32 %v114, %v559
    %v561 = vpop.f32.mrf.mxu0
    %v562 = vadd.f32 %v110, %v561
    %v563 = vpop.f32.mrf.mxu0
    %v564 = vadd.f32 %v114, %v563
    %565 = vmatprep.mubr.bf16.mxu0 0
    %566 = vmatmul.mubr.bf16.gmra.mxu0 %v174
    %v567 = vpop.f32.mrf.mxu0
    %v568 = vadd.f32 %v110, %v567
    %v569 = vpop.f32.mrf.mxu0
    %v570 = vadd.f32 %v114, %v569
    %v571 = vpop.f32.mrf.mxu0
    %v572 = vadd.f32 %v110, %v571
    %v573 = vpop.f32.mrf.mxu0
    %v574 = vadd.f32 %v114, %v573
    %575 = vmatprep.mubr.bf16.mxu0 0
    %576 = vmatmul.mubr.bf16.gmra.mxu0 %v175
    %v577 = vpop.f32.mrf.mxu0
    %v578 = vadd.f32 %v110, %v577
    %v579 = vpop.f32.mrf.mxu0
    %v580 = vadd.f32 %v114, %v579
    %v581 = vpop.f32.mrf.mxu0
    %v582 = vadd.f32 %v110, %v581
    %v583 = vpop.f32.mrf.mxu0
    %v584 = vadd.f32 %v114, %v583
    %585 = vmatprep.mubr.bf16.mxu0 0
    %586 = vmatmul.mubr.bf16.gmra.mxu0 %v176
    %v587 = vpop.f32.mrf.mxu0
    %v588 = vadd.f32 %v110, %v587
    %v589 = vpop.f32.mrf.mxu0
    %v590 = vadd.f32 %v114, %v589
    %v591 = vpop.f32.mrf.mxu0
    %v592 = vadd.f32 %v110, %v591
    %v593 = vpop.f32.mrf.mxu0
    %v594 = vadd.f32 %v114, %v593
    %595 = vdwg.mxu0
    %596 = vmatprep.subr.bf16.mxu0 %v434
    %597 = vmatpush1.bf16.msra.mxu0 %v433
    %598 = vmatprep.subr.bf16.mxu0 %v426
    %599 = vmatpush1.bf16.msra.mxu0 %v425
    %600 = vmatprep.subr.bf16.mxu0 %v418
    %601 = vmatpush1.bf16.msra.mxu0 %v417
    %602 = vmatprep.subr.bf16.mxu0 %v410
    %603 = vmatpush1.bf16.msra.mxu0 %v409
    %604 = vmatprep.subr.bf16.mxu0 %v402
    %605 = vmatpush1.bf16.msra.mxu0 %v401
    %606 = vmatprep.subr.bf16.mxu0 %v394
    %607 = vmatpush1.bf16.msra.mxu0 %v393
    %608 = vmatprep.subr.bf16.mxu0 %v386
    %609 = vmatpush1.bf16.msra.mxu0 %v385
    %610 = vmatprep.subr.bf16.mxu0 %v378
    %611 = vmatpush1.bf16.msra.mxu0 %v377
    %612 = vmatprep.subr.bf16.mxu0 0
    %613 = vmatpush2.bf16.msra.mxu0 0
    %614 = vmatprep.subr.bf16.mxu0 0
    %615 = vmatpush2.bf16.msra.mxu0 0
    %616 = vmatprep.subr.bf16.mxu0 0
    %617 = vmatpush2.bf16.msra.mxu0 0
    %618 = vmatprep.subr.bf16.mxu0 0
    %619 = vmatpush2.bf16.msra.mxu0 0
    %620 = vmatprep.subr.bf16.mxu0 0
    %621 = vmatpush2.bf16.msra.mxu0 0
    %622 = vmatprep.subr.bf16.mxu0 0
    %623 = vmatpush2.bf16.msra.mxu0 0
    %624 = vmatprep.subr.bf16.mxu0 0
    %625 = vmatpush2.bf16.msra.mxu0 0
    %626 = vmatprep.subr.bf16.mxu0 0
    %627 = vmatpush2.bf16.msra.mxu0 0
    %628 = vmatprep.mubr.bf16.mxu0 0
    %629 = vmatmul.mubr.bf16.gmra.mxu0 %v171
    %v630 = vpop.f32.mrf.mxu0
    %v631 = vadd.f32 %v118, %v630
    %v632 = vpop.f32.mrf.mxu0
    %v633 = vadd.f32 %v122, %v632
    %v634 = vpop.f32.mrf.mxu0
    %v635 = vadd.f32 %v118, %v634
    %v636 = vpop.f32.mrf.mxu0
    %v637 = vadd.f32 %v122, %v636
    %638 = vmatprep.mubr.bf16.mxu0 0
    %639 = vmatmul.mubr.bf16.gmra.mxu0 %v172
    %v640 = vpop.f32.mrf.mxu0
    %v641 = vadd.f32 %v118, %v640
    %v642 = vpop.f32.mrf.mxu0
    %v643 = vadd.f32 %v122, %v642
    %v644 = vpop.f32.mrf.mxu0
    %v645 = vadd.f32 %v118, %v644
    %v646 = vpop.f32.mrf.mxu0
    %v647 = vadd.f32 %v122, %v646
    %648 = vmatprep.mubr.bf16.mxu0 0
    %649 = vmatmul.mubr.bf16.gmra.mxu0 %v173
    %v650 = vpop.f32.mrf.mxu0
    %v651 = vadd.f32 %v118, %v650
    %v652 = vpop.f32.mrf.mxu0
    %v653 = vadd.f32 %v122, %v652
    %v654 = vpop.f32.mrf.mxu0
    %v655 = vadd.f32 %v118, %v654
    %v656 = vpop.f32.mrf.mxu0
    %v657 = vadd.f32 %v122, %v656
    %658 = vmatprep.mubr.bf16.mxu0 0
    %659 = vmatmul.mubr.bf16.gmra.mxu0 %v174
    %v660 = vpop.f32.mrf.mxu0
    %v661 = vadd.f32 %v118, %v660
    %v662 = vpop.f32.mrf.mxu0
    %v663 = vadd.f32 %v122, %v662
    %v664 = vpop.f32.mrf.mxu0
    %v665 = vadd.f32 %v118, %v664
    %v666 = vpop.f32.mrf.mxu0
    %v667 = vadd.f32 %v122, %v666
    %668 = vmatprep.mubr.bf16.mxu0 0
    %669 = vmatmul.mubr.bf16.gmra.mxu0 %v175
    %v670 = vpop.f32.mrf.mxu0
    %v671 = vadd.f32 %v118, %v670
    %v672 = vpop.f32.mrf.mxu0
    %v673 = vadd.f32 %v122, %v672
    %v674 = vpop.f32.mrf.mxu0
    %v675 = vadd.f32 %v118, %v674
    %v676 = vpop.f32.mrf.mxu0
    %v677 = vadd.f32 %v122, %v676
    %678 = vmatprep.mubr.bf16.mxu0 0
    %679 = vmatmul.mubr.bf16.gmra.mxu0 %v176
    %v680 = vpop.f32.mrf.mxu0
    %v681 = vadd.f32 %v118, %v680
    %v682 = vpop.f32.mrf.mxu0
    %v683 = vadd.f32 %v122, %v682
    %v684 = vpop.f32.mrf.mxu0
    %v685 = vadd.f32 %v118, %v684
    %v686 = vpop.f32.mrf.mxu0
    %v687 = vadd.f32 %v122, %v686
    %688 = vdwg.mxu0
    %689 = vmatprep.subr.bf16.mxu0 %v436
    %690 = vmatpush1.bf16.msra.mxu0 %v435
    %691 = vmatprep.subr.bf16.mxu0 %v428
    %692 = vmatpush1.bf16.msra.mxu0 %v427
    %693 = vmatprep.subr.bf16.mxu0 %v420
    %694 = vmatpush1.bf16.msra.mxu0 %v419
    %695 = vmatprep.subr.bf16.mxu0 %v412
    %696 = vmatpush1.bf16.msra.mxu0 %v411
    %697 = vmatprep.subr.bf16.mxu0 %v404
    %698 = vmatpush1.bf16.msra.mxu0 %v403
    %699 = vmatprep.subr.bf16.mxu0 %v396
    %700 = vmatpush1.bf16.msra.mxu0 %v395
    %701 = vmatprep.subr.bf16.mxu0 %v388
    %702 = vmatpush1.bf16.msra.mxu0 %v387
    %703 = vmatprep.subr.bf16.mxu0 %v380
    %704 = vmatpush1.bf16.msra.mxu0 %v379
    %705 = vmatprep.subr.bf16.mxu0 0
    %706 = vmatpush2.bf16.msra.mxu0 0
    %707 = vmatprep.subr.bf16.mxu0 0
    %708 = vmatpush2.bf16.msra.mxu0 0
    %709 = vmatprep.subr.bf16.mxu0 0
    %710 = vmatpush2.bf16.msra.mxu0 0
    %711 = vmatprep.subr.bf16.mxu0 0
    %712 = vmatpush2.bf16.msra.mxu0 0
    %713 = vmatprep.subr.bf16.mxu0 0
    %714 = vmatpush2.bf16.msra.mxu0 0
    %715 = vmatprep.subr.bf16.mxu0 0
    %716 = vmatpush2.bf16.msra.mxu0 0
    %717 = vmatprep.subr.bf16.mxu0 0
    %718 = vmatpush2.bf16.msra.mxu0 0
    %719 = vmatprep.subr.bf16.mxu0 0
    %720 = vmatpush2.bf16.msra.mxu0 0
    %721 = vmatprep.mubr.bf16.mxu0 0
    %722 = vmatmul.mubr.bf16.gmra.mxu0 %v171
    %v723 = vpop.f32.mrf.mxu0
    %v724 = vadd.f32 %v126, %v723
    %v725 = vpop.f32.mrf.mxu0
    %v726 = vadd.f32 %v130, %v725
    %v727 = vpop.f32.mrf.mxu0
    %v728 = vadd.f32 %v126, %v727
    %v729 = vpop.f32.mrf.mxu0
    %v730 = vadd.f32 %v130, %v729
    %731 = vmatprep.mubr.bf16.mxu0 0
    %732 = vmatmul.mubr.bf16.gmra.mxu0 %v172
    %v733 = vpop.f32.mrf.mxu0
    %v734 = vadd.f32 %v126, %v733
    %v735 = vpop.f32.mrf.mxu0
    %v736 = vadd.f32 %v130, %v735
    %v737 = vpop.f32.mrf.mxu0
    %v738 = vadd.f32 %v126, %v737
    %v739 = vpop.f32.mrf.mxu0
    %v740 = vadd.f32 %v130, %v739
    %741 = vmatprep.mubr.bf16.mxu0 0
    %742 = vmatmul.mubr.bf16.gmra.mxu0 %v173
    %v743 = vpop.f32.mrf.mxu0
    %v744 = vadd.f32 %v126, %v743
    %v745 = vpop.f32.mrf.mxu0
    %v746 = vadd.f32 %v130, %v745
    %v747 = vpop.f32.mrf.mxu0
    %v748 = vadd.f32 %v126, %v747
    %v749 = vpop.f32.mrf.mxu0
    %v750 = vadd.f32 %v130, %v749
    %751 = vmatprep.mubr.bf16.mxu0 0
    %752 = vmatmul.mubr.bf16.gmra.mxu0 %v174
    %v753 = vpop.f32.mrf.mxu0
    %v754 = vadd.f32 %v126, %v753
    %v755 = vpop.f32.mrf.mxu0
    %v756 = vadd.f32 %v130, %v755
    %v757 = vpop.f32.mrf.mxu0
    %v758 = vadd.f32 %v126, %v757
    %v759 = vpop.f32.mrf.mxu0
    %v760 = vadd.f32 %v130, %v759
    %761 = vmatprep.mubr.bf16.mxu0 0
    %762 = vmatmul.mubr.bf16.gmra.mxu0 %v175
    %v763 = vpop.f32.mrf.mxu0
    %v764 = vadd.f32 %v126, %v763
    %v765 = vpop.f32.mrf.mxu0
    %v766 = vadd.f32 %v130, %v765
    %v767 = vpop.f32.mrf.mxu0
    %v768 = vadd.f32 %v126, %v767
    %v769 = vpop.f32.mrf.mxu0
    %v770 = vadd.f32 %v130, %v769
    %771 = vmatprep.mubr.bf16.mxu0 0
    %772 = vmatmul.mubr.bf16.gmra.mxu0 %v176
    %v773 = vpop.f32.mrf.mxu0
    %v774 = vadd.f32 %v126, %v773
    %v775 = vpop.f32.mrf.mxu0
    %v776 = vadd.f32 %v130, %v775
    %v777 = vpop.f32.mrf.mxu0
    %v778 = vadd.f32 %v126, %v777
    %v779 = vpop.f32.mrf.mxu0
    %v780 = vadd.f32 %v130, %v779
    %781 = vdwg.mxu0
    %782 = vmatprep.subr.bf16.mxu0 %v438
    %783 = vmatpush1.bf16.msra.mxu0 %v437
    %784 = vmatprep.subr.bf16.mxu0 %v430
    %785 = vmatpush1.bf16.msra.mxu0 %v429
    %786 = vmatprep.subr.bf16.mxu0 %v422
    %787 = vmatpush1.bf16.msra.mxu0 %v421
    %788 = vmatprep.subr.bf16.mxu0 %v414
    %789 = vmatpush1.bf16.msra.mxu0 %v413
    %790 = vmatprep.subr.bf16.mxu0 %v406
    %791 = vmatpush1.bf16.msra.mxu0 %v405
    %792 = vmatprep.subr.bf16.mxu0 %v398
    %793 = vmatpush1.bf16.msra.mxu0 %v397
    %794 = vmatprep.subr.bf16.mxu0 %v390
    %795 = vmatpush1.bf16.msra.mxu0 %v389
    %796 = vmatprep.subr.bf16.mxu0 %v382
    %797 = vmatpush1.bf16.msra.mxu0 %v381
    %798 = vmatprep.subr.bf16.mxu0 0
    %799 = vmatpush2.bf16.msra.mxu0 0
    %800 = vmatprep.subr.bf16.mxu0 0
    %801 = vmatpush2.bf16.msra.mxu0 0
    %802 = vmatprep.subr.bf16.mxu0 0
    %803 = vmatpush2.bf16.msra.mxu0 0
    %804 = vmatprep.subr.bf16.mxu0 0
    %805 = vmatpush2.bf16.msra.mxu0 0
    %806 = vmatprep.subr.bf16.mxu0 0
    %807 = vmatpush2.bf16.msra.mxu0 0
    %808 = vmatprep.subr.bf16.mxu0 0
    %809 = vmatpush2.bf16.msra.mxu0 0
    %810 = vmatprep.subr.bf16.mxu0 0
    %811 = vmatpush2.bf16.msra.mxu0 0
    %812 = vmatprep.subr.bf16.mxu0 0
    %813 = vmatpush2.bf16.msra.mxu0 0
    %814 = vmatprep.mubr.bf16.mxu0 0
    %815 = vmatmul.mubr.bf16.gmra.mxu0 %v171
    %v816 = vpop.f32.mrf.mxu0
    %v817 = vadd.f32 %v134, %v816
    %v818 = vpop.f32.mrf.mxu0
    %v819 = vadd.f32 %v138, %v818
    %v820 = vpop.f32.mrf.mxu0
    %v821 = vadd.f32 %v134, %v820
    %v822 = vpop.f32.mrf.mxu0
    %v823 = vadd.f32 %v138, %v822
    %824 = vmatprep.mubr.bf16.mxu0 0
    %825 = vmatmul.mubr.bf16.gmra.mxu0 %v172
    %v826 = vpop.f32.mrf.mxu0
    %v827 = vadd.f32 %v134, %v826
    %v828 = vpop.f32.mrf.mxu0
    %v829 = vadd.f32 %v138, %v828
    %v830 = vpop.f32.mrf.mxu0
    %v831 = vadd.f32 %v134, %v830
    %v832 = vpop.f32.mrf.mxu0
    %v833 = vadd.f32 %v138, %v832
    %834 = vmatprep.mubr.bf16.mxu0 0
    %835 = vmatmul.mubr.bf16.gmra.mxu0 %v173
    %v836 = vpop.f32.mrf.mxu0
    %v837 = vadd.f32 %v134, %v836
    %v838 = vpop.f32.mrf.mxu0
    %v839 = vadd.f32 %v138, %v838
    %v840 = vpop.f32.mrf.mxu0
    %v841 = vadd.f32 %v134, %v840
    %v842 = vpop.f32.mrf.mxu0
    %v843 = vadd.f32 %v138, %v842
    %844 = vmatprep.mubr.bf16.mxu0 0
    %845 = vmatmul.mubr.bf16.gmra.mxu0 %v174
    %v846 = vpop.f32.mrf.mxu0
    %v847 = vadd.f32 %v134, %v846
    %v848 = vpop.f32.mrf.mxu0
    %v849 = vadd.f32 %v138, %v848
    %v850 = vpop.f32.mrf.mxu0
    %v851 = vadd.f32 %v134, %v850
    %v852 = vpop.f32.mrf.mxu0
    %v853 = vadd.f32 %v138, %v852
    %854 = vmatprep.mubr.bf16.mxu0 0
    %855 = vmatmul.mubr.bf16.gmra.mxu0 %v175
    %v856 = vpop.f32.mrf.mxu0
    %v857 = vadd.f32 %v134, %v856
    %v858 = vpop.f32.mrf.mxu0
    %v859 = vadd.f32 %v138, %v858
    %v860 = vpop.f32.mrf.mxu0
    %v861 = vadd.f32 %v134, %v860
    %v862 = vpop.f32.mrf.mxu0
    %v863 = vadd.f32 %v138, %v862
    %864 = vmatprep.mubr.bf16.mxu0 0
    %865 = vmatmul.mubr.bf16.gmra.mxu0 %v176
    %v866 = vpop.f32.mrf.mxu0
    %v867 = vadd.f32 %v134, %v866
    %v868 = vpop.f32.mrf.mxu0
    %v869 = vadd.f32 %v138, %v868
    %v870 = vpop.f32.mrf.mxu0
    %v871 = vadd.f32 %v134, %v870
    %v872 = vpop.f32.mrf.mxu0
    %v873 = vadd.f32 %v138, %v872
    %874 = vdwg.mxu0
    %v875 = vpack.c.bf16 %v542, %v538
    %v876 = vpack.c.bf16 %v544, %v540
    %v877 = vpack.c.bf16 %v635, %v631
    %v878 = vpack.c.bf16 %v637, %v633
    %v879 = vpack.c.bf16 %v728, %v724
    %v880 = vpack.c.bf16 %v730, %v726
    %v881 = vpack.c.bf16 %v821, %v817
    %v882 = vpack.c.bf16 %v823, %v819
    %v883 = vpack.c.bf16 %v552, %v548
    %v884 = vpack.c.bf16 %v554, %v550
    %v885 = vpack.c.bf16 %v645, %v641
    %v886 = vpack.c.bf16 %v647, %v643
    %v887 = vpack.c.bf16 %v738, %v734
    %v888 = vpack.c.bf16 %v740, %v736
    %v889 = vpack.c.bf16 %v831, %v827
    %v890 = vpack.c.bf16 %v833, %v829
    %v891 = vpack.c.bf16 %v562, %v558
    %v892 = vpack.c.bf16 %v564, %v560
    %v893 = vpack.c.bf16 %v655, %v651
    %v894 = vpack.c.bf16 %v657, %v653
    %v895 = vpack.c.bf16 %v748, %v744
    %v896 = vpack.c.bf16 %v750, %v746
    %v897 = vpack.c.bf16 %v841, %v837
    %v898 = vpack.c.bf16 %v843, %v839
    %v899 = vpack.c.bf16 %v572, %v568
    %v900 = vpack.c.bf16 %v574, %v570
    %v901 = vpack.c.bf16 %v665, %v661
    %v902 = vpack.c.bf16 %v667, %v663
    %v903 = vpack.c.bf16 %v758, %v754
    %v904 = vpack.c.bf16 %v760, %v756
    %v905 = vpack.c.bf16 %v851, %v847
    %v906 = vpack.c.bf16 %v853, %v849
    %v907 = vpack.c.bf16 %v582, %v578
    %v908 = vpack.c.bf16 %v584, %v580
    %v909 = vpack.c.bf16 %v675, %v671
    %v910 = vpack.c.bf16 %v677, %v673
    %v911 = vpack.c.bf16 %v768, %v764
    %v912 = vpack.c.bf16 %v770, %v766
    %v913 = vpack.c.bf16 %v861, %v857
    %v914 = vpack.c.bf16 %v863, %v859
    %v915 = vpack.c.bf16 %v592, %v588
    %v916 = vpack.c.bf16 %v594, %v590
    %v917 = vpack.c.bf16 %v685, %v681
    %v918 = vpack.c.bf16 %v687, %v683
    %v919 = vpack.c.bf16 %v778, %v774
    %v920 = vpack.c.bf16 %v780, %v776
    %v921 = vpack.c.bf16 %v871, %v867
    %v922 = vpack.c.bf16 %v873, %v869
    %v971 = vunpack.c.l.b16 %v875
    %v972 = vunpack.c.l.b16 %v876
    %v973 = vunpack.c.l.b16 %v877
    %v974 = vunpack.c.l.b16 %v878
    %v975 = vunpack.c.l.b16 %v879
    %v976 = vunpack.c.l.b16 %v880
    %v977 = vunpack.c.l.b16 %v881
    %v978 = vunpack.c.l.b16 %v882
    %v979 = vunpack.c.h.b16 %v875
    %v980 = vunpack.c.h.b16 %v876
    %v981 = vunpack.c.h.b16 %v877
    %v982 = vunpack.c.h.b16 %v878
    %v983 = vunpack.c.h.b16 %v879
    %v984 = vunpack.c.h.b16 %v880
    %v985 = vunpack.c.h.b16 %v881
    %v986 = vunpack.c.h.b16 %v882
    %v987 = vunpack.c.l.b16 %v883
    %v988 = vunpack.c.l.b16 %v884
    %v989 = vunpack.c.l.b16 %v885
    %v990 = vunpack.c.l.b16 %v886
    %v991 = vunpack.c.l.b16 %v887
    %v992 = vunpack.c.l.b16 %v888
    %v993 = vunpack.c.l.b16 %v889
    %v994 = vunpack.c.l.b16 %v890
    %v995 = vunpack.c.h.b16 %v883
    %v996 = vunpack.c.h.b16 %v884
    %v997 = vunpack.c.h.b16 %v885
    %v998 = vunpack.c.h.b16 %v886
    %v999 = vunpack.c.h.b16 %v887
    %v1000 = vunpack.c.h.b16 %v888
    %v1001 = vunpack.c.h.b16 %v889
    %v1002 = vunpack.c.h.b16 %v890
    %v1003 = vunpack.c.l.b16 %v891
    %v1004 = vunpack.c.l.b16 %v892
    %v1005 = vunpack.c.l.b16 %v893
    %v1006 = vunpack.c.l.b16 %v894
    %v1007 = vunpack.c.l.b16 %v895
    %v1008 = vunpack.c.l.b16 %v896
    %v1009 = vunpack.c.l.b16 %v897
    %v1010 = vunpack.c.l.b16 %v898
    %v1011 = vunpack.c.h.b16 %v891
    %v1012 = vunpack.c.h.b16 %v892
    %v1013 = vunpack.c.h.b16 %v893
    %v1014 = vunpack.c.h.b16 %v894
    %v1015 = vunpack.c.h.b16 %v895
    %v1016 = vunpack.c.h.b16 %v896
    %v1017 = vunpack.c.h.b16 %v897
    %v1018 = vunpack.c.h.b16 %v898
    %v1019 = vunpack.c.l.b16 %v899
    %v1020 = vunpack.c.l.b16 %v900
    %v1021 = vunpack.c.l.b16 %v901
    %v1022 = vunpack.c.l.b16 %v902
    %v1023 = vunpack.c.l.b16 %v903
    %v1024 = vunpack.c.l.b16 %v904
    %v1025 = vunpack.c.l.b16 %v905
    %v1026 = vunpack.c.l.b16 %v906
    %v1027 = vunpack.c.h.b16 %v899
    %v1028 = vunpack.c.h.b16 %v900
    %v1029 = vunpack.c.h.b16 %v901
    %v1030 = vunpack.c.h.b16 %v902
    %v1031 = vunpack.c.h.b16 %v903
    %v1032 = vunpack.c.h.b16 %v904
    %v1033 = vunpack.c.h.b16 %v905
    %v1034 = vunpack.c.h.b16 %v906
    %v1035 = vunpack.c.l.b16 %v907
    %v1036 = vunpack.c.l.b16 %v908
    %v1037 = vunpack.c.l.b16 %v909
    %v1038 = vunpack.c.l.b16 %v910
    %v1039 = vunpack.c.l.b16 %v911
    %v1040 = vunpack.c.l.b16 %v912
    %v1041 = vunpack.c.l.b16 %v913
    %v1042 = vunpack.c.l.b16 %v914
    %v1043 = vunpack.c.h.b16 %v907
    %v1044 = vunpack.c.h.b16 %v908
    %v1045 = vunpack.c.h.b16 %v909
    %v1046 = vunpack.c.h.b16 %v910
    %v1047 = vunpack.c.h.b16 %v911
    %v1048 = vunpack.c.h.b16 %v912
    %v1049 = vunpack.c.h.b16 %v913
    %v1050 = vunpack.c.h.b16 %v914
    %v1051 = vunpack.c.l.b16 %v915
    %v1052 = vunpack.c.l.b16 %v916
    %v1053 = vunpack.c.l.b16 %v917
    %v1054 = vunpack.c.l.b16 %v918
    %v1055 = vunpack.c.l.b16 %v919
    %v1056 = vunpack.c.l.b16 %v920
    %v1057 = vunpack.c.l.b16 %v921
    %v1058 = vunpack.c.l.b16 %v922
    %v1059 = vunpack.c.h.b16 %v915
    %v1060 = vunpack.c.h.b16 %v916
    %v1061 = vunpack.c.h.b16 %v917
    %v1062 = vunpack.c.h.b16 %v918
    %v1063 = vunpack.c.h.b16 %v919
    %v1064 = vunpack.c.h.b16 %v920
    %v1065 = vunpack.c.h.b16 %v921
    %v1066 = vunpack.c.h.b16 %v922
    %v1067 = vpack.c.b16 %v972, %v971
    %v1068 = vpack.c.b16 %v974, %v973
    %v1069 = vpack.c.b16 %v976, %v975
    %v1070 = vpack.c.b16 %v978, %v977
    %v1071 = vpack.c.b16 %v980, %v979
    %v1072 = vpack.c.b16 %v982, %v981
    %v1073 = vpack.c.b16 %v984, %v983
    %v1074 = vpack.c.b16 %v986, %v985
    %v1075 = vpack.c.b16 %v988, %v987
    %v1076 = vpack.c.b16 %v990, %v989
    %v1077 = vpack.c.b16 %v992, %v991
    %v1078 = vpack.c.b16 %v994, %v993
    %v1079 = vpack.c.b16 %v996, %v995
    %v1080 = vpack.c.b16 %v998, %v997
    %v1081 = vpack.c.b16 %v1000, %v999
    %v1082 = vpack.c.b16 %v1002, %v1001
    %v1083 = vpack.c.b16 %v1004, %v1003
    %v1084 = vpack.c.b16 %v1006, %v1005
    %v1085 = vpack.c.b16 %v1008, %v1007
    %v1086 = vpack.c.b16 %v1010, %v1009
    %v1087 = vpack.c.b16 %v1012, %v1011
    %v1088 = vpack.c.b16 %v1014, %v1013
    %v1089 = vpack.c.b16 %v1016, %v1015
    %v1090 = vpack.c.b16 %v1018, %v1017
    %v1091 = vpack.c.b16 %v1020, %v1019
    %v1092 = vpack.c.b16 %v1022, %v1021
    %v1093 = vpack.c.b16 %v1024, %v1023
    %v1094 = vpack.c.b16 %v1026, %v1025
    %v1095 = vpack.c.b16 %v1028, %v1027
    %v1096 = vpack.c.b16 %v1030, %v1029
    %v1097 = vpack.c.b16 %v1032, %v1031
    %v1098 = vpack.c.b16 %v1034, %v1033
    %v1099 = vpack.c.b16 %v1036, %v1035
    %v1100 = vpack.c.b16 %v1038, %v1037
    %v1101 = vpack.c.b16 %v1040, %v1039
    %v1102 = vpack.c.b16 %v1042, %v1041
    %v1103 = vpack.c.b16 %v1044, %v1043
    %v1104 = vpack.c.b16 %v1046, %v1045
    %v1105 = vpack.c.b16 %v1048, %v1047
    %v1106 = vpack.c.b16 %v1050, %v1049
    %v1107 = vpack.c.b16 %v1052, %v1051
    %v1108 = vpack.c.b16 %v1054, %v1053
    %v1109 = vpack.c.b16 %v1056, %v1055
    %v1110 = vpack.c.b16 %v1058, %v1057
    %v1111 = vpack.c.b16 %v1060, %v1059
    %v1112 = vpack.c.b16 %v1062, %v1061
    %v1113 = vpack.c.b16 %v1064, %v1063
    %v1114 = vpack.c.b16 %v1066, %v1065
    %1163 = vst [vmem:[%s3] sm:$0xff] %v1067
    %1164 = vst [vmem:[%s3 + $0x8] sm:$0xff] %v1068
    %1165 = vst [vmem:[%s3 + $0x10] sm:$0xff] %v1069
    %1166 = vst [vmem:[%s3 + $0x18] sm:$0xff] %v1070
    %1167 = vst [vmem:[%s3 + $0x20] sm:$0xff] %v1071
    %1168 = vst [vmem:[%s3 + $0x28] sm:$0xff] %v1072
    %1169 = vst [vmem:[%s3 + $0x30] sm:$0xff] %v1073
    %1170 = vst [vmem:[%s3 + $0x38] sm:$0xff] %v1074
    %1171 = vst [vmem:[%s3 + $0x40] sm:$0xff] %v1075
    %1172 = vst [vmem:[%s3 + $0x48] sm:$0xff] %v1076
    %1173 = vst [vmem:[%s3 + $0x50] sm:$0xff] %v1077
    %1174 = vst [vmem:[%s3 + $0x58] sm:$0xff] %v1078
    %1175 = vst [vmem:[%s3 + $0x60] sm:$0xff] %v1079
    %1176 = vst [vmem:[%s3 + $0x68] sm:$0xff] %v1080
    %1177 = vst [vmem:[%s3 + $0x70] sm:$0xff] %v1081
    %1178 = vst [vmem:[%s3 + $0x78] sm:$0xff] %v1082
    %1179 = vst [vmem:[%s3 + $0x80] sm:$0xff] %v1083
    %1180 = vst [vmem:[%s3 + $0x88] sm:$0xff] %v1084
    %1181 = vst [vmem:[%s3 + $0x90] sm:$0xff] %v1085
    %1182 = vst [vmem:[%s3 + $0x98] sm:$0xff] %v1086
    %1183 = vst [vmem:[%s3 + $0xa0] sm:$0xff] %v1087
    %1184 = vst [vmem:[%s3 + $0xa8] sm:$0xff] %v1088
    %1185 = vst [vmem:[%s3 + $0xb0] sm:$0xff] %v1089
    %1186 = vst [vmem:[%s3 + $0xb8] sm:$0xff] %v1090
    %1187 = vst [vmem:[%s3 + $0xc0] sm:$0xff] %v1091
    %1188 = vst [vmem:[%s3 + $0xc8] sm:$0xff] %v1092
    %1189 = vst [vmem:[%s3 + $0xd0] sm:$0xff] %v1093
    %1190 = vst [vmem:[%s3 + $0xd8] sm:$0xff] %v1094
    %1191 = vst [vmem:[%s3 + $0xe0] sm:$0xff] %v1095
    %1192 = vst [vmem:[%s3 + $0xe8] sm:$0xff] %v1096
    %1193 = vst [vmem:[%s3 + $0xf0] sm:$0xff] %v1097
    %1194 = vst [vmem:[%s3 + $0xf8] sm:$0xff] %v1098
    %1195 = vst [vmem:[%s3 + $0x100] sm:$0xff] %v1099
    %1196 = vst [vmem:[%s3 + $0x108] sm:$0xff] %v1100
    %1197 = vst [vmem:[%s3 + $0x110] sm:$0xff] %v1101
    %1198 = vst [vmem:[%s3 + $0x118] sm:$0xff] %v1102
    %1199 = vst [vmem:[%s3 + $0x120] sm:$0xff] %v1103
    %1200 = vst [vmem:[%s3 + $0x128] sm:$0xff] %v1104
    %1201 = vst [vmem:[%s3 + $0x130] sm:$0xff] %v1105
    %1202 = vst [vmem:[%s3 + $0x138] sm:$0xff] %v1106
    %1203 = vst [vmem:[%s3 + $0x140] sm:$0xff] %v1107
    %1204 = vst [vmem:[%s3 + $0x148] sm:$0xff] %v1108
    %1205 = vst [vmem:[%s3 + $0x150] sm:$0xff] %v1109
    %1206 = vst [vmem:[%s3 + $0x158] sm:$0xff] %v1110
    %1207 = vst [vmem:[%s3 + $0x160] sm:$0xff] %v1111
    %1208 = vst [vmem:[%s3 + $0x168] sm:$0xff] %v1112
    %1209 = vst [vmem:[%s3 + $0x170] sm:$0xff] %v1113
    %1210 = vst [vmem:[%s3 + $0x178] sm:$0xff] %v1114
    // Predicated region
    $region18: #{speech_rnn_ctc_forward.7} parent=1 // pred_check
      _
    $region19: #{speech_rnn_ctc_forward.7} parent=1 // pred_check_branch
      %1212 = sbr.rel (0) target = $region21
    $region20: #{speech_rnn_ctc_forward.7} parent=1 // pred_region
      _
    $region21: #{speech_rnn_ctc_forward.7} parent=1 // pred_fallthru
      _
    // Predicated region
    $region22: #{speech_rnn_ctc_forward.7} parent=1 // pred_check
      _
    $region23: #{speech_rnn_ctc_forward.7} parent=1 // pred_check_branch
      %1214 = sbr.rel (0) target = $region25
    $region24: #{speech_rnn_ctc_forward.7} parent=1 // pred_region
      _
    $region25: #{speech_rnn_ctc_forward.7} parent=1 // pred_fallthru
      _
    %1215 = vsyncpa [#allocation3], 1

// kernel: speech_rnn_ctc_forward.9
$region0: #{speech_rnn_ctc_forward.9}
  #allocation0 [shape = 'u32[]', space=smem, size = 0x4, offset = 0x4, fixed_abs, tag = 'smem constant byte address 0x4 - core index']
  #allocation1 [shape = 'u32[144,128]{1,0:T(1,128)}', space=vmem, size = 0x12000, scoped, tag = 'internal scratch']
  %s0 = inlined_call_operand.vmem [shape: bf16[96,128], index: 0, kind: input, shape index: {}]
  %s1 = inlined_call_operand.vmem [shape: bf16[96,128], index: 1, kind: input, shape index: {}]
  %s2 = inlined_call_operand.vmem [shape: bf16[128,1024], index: 2, kind: input, shape index: {}]
  %s3 = inlined_call_operand.vmem [shape: bf16[128,1024], index: 3, kind: input, shape index: {}]
  %s4 = inlined_call_operand.vmem [shape: f32[1,1024], index: 4, kind: input, shape index: {}]
  %s5 = inlined_call_operand.vmem [shape: bf16[96,1024], index: 5, kind: output, shape index: {}]
  %s6 = sld [smem:[#allocation0]]
  $region30: #{speech_rnn_ctc_forward.9} parent=0
    _
  %s8 = ssub.s32 1, %s6
  %s9 = scalar_select 0, %s8, %s6
  // Predicated region
  $region2: #{speech_rnn_ctc_forward.9} parent=0 // pred_check
    _
  $region3: #{speech_rnn_ctc_forward.9} parent=0 // pred_check_branch
    %11 = sbr.rel (0) target = $region5
  $region4: #{speech_rnn_ctc_forward.9} parent=0 // pred_region
    _
  $region5: #{speech_rnn_ctc_forward.9} parent=0 // pred_fallthru
    _
  // Predicated region
  $region6: #{speech_rnn_ctc_forward.9} parent=0 // pred_check
    _
  $region7: #{speech_rnn_ctc_forward.9} parent=0 // pred_check_branch
    %13 = sbr.rel (0) target = $region9
  $region8: #{speech_rnn_ctc_forward.9} parent=0 // pred_region
    _
  $region9: #{speech_rnn_ctc_forward.9} parent=0 // pred_fallthru
    _
  // Predicated region
  $region10: #{speech_rnn_ctc_forward.9} parent=0 // pred_check
    _
  $region11: #{speech_rnn_ctc_forward.9} parent=0 // pred_check_branch
    %15 = sbr.rel (0) target = $region13
  $region12: #{speech_rnn_ctc_forward.9} parent=0 // pred_region
    _
  $region13: #{speech_rnn_ctc_forward.9} parent=0 // pred_fallthru
    _
  // Predicated region
  $region14: #{speech_rnn_ctc_forward.9} parent=0 // pred_check
    _
  $region15: #{speech_rnn_ctc_forward.9} parent=0 // pred_check_branch
    %17 = sbr.rel (0) target = $region17
  $region16: #{speech_rnn_ctc_forward.9} parent=0 // pred_region
    _
  $region17: #{speech_rnn_ctc_forward.9} parent=0 // pred_fallthru
    _
  // Predicated region
  $region18: #{speech_rnn_ctc_forward.9} parent=0 // pred_check
    _
  $region19: #{speech_rnn_ctc_forward.9} parent=0 // pred_check_branch
    %19 = sbr.rel (0) target = $region21
  $region20: #{speech_rnn_ctc_forward.9} parent=0 // pred_region
    _
  $region21: #{speech_rnn_ctc_forward.9} parent=0 // pred_fallthru
    _
  %v21 = vld [vmem:[%s0] sm:$0xf]
  %v22 = vld [vmem:[%s0 + $0x4] sm:$0xf]
  %v23 = vld [vmem:[%s0 + $0x8] sm:$0xf]
  %v24 = vld [vmem:[%s0 + $0xc] sm:$0xf]
  %v25 = vld [vmem:[%s0 + $0x10] sm:$0xf]
  %v26 = vld [vmem:[%s0 + $0x14] sm:$0xf]
  %v27 = vld [vmem:[%s0 + $0x18] sm:$0xf]
  %v28 = vld [vmem:[%s0 + $0x1c] sm:$0xf]
  %v29 = vld [vmem:[%s0 + $0x20] sm:$0xf]
  %v30 = vld [vmem:[%s0 + $0x24] sm:$0xf]
  %v31 = vld [vmem:[%s0 + $0x28] sm:$0xf]
  %v32 = vld [vmem:[%s0 + $0x2c] sm:$0xf]
  %v33 = vld [vmem:[%s2] sm:$0xff]
  %v34 = vld [vmem:[%s2 + $0x8] sm:$0xff]
  %v35 = vld [vmem:[%s2 + $0x10] sm:$0xff]
  %v36 = vld [vmem:[%s2 + $0x18] sm:$0xff]
  %v37 = vld [vmem:[%s2 + $0x20] sm:$0xff]
  %v38 = vld [vmem:[%s2 + $0x28] sm:$0xff]
  %v39 = vld [vmem:[%s2 + $0x30] sm:$0xff]
  %v40 = vld [vmem:[%s2 + $0x38] sm:$0xff]
  %v41 = vld [vmem:[%s2 + $0x40] sm:$0xff]
  %v42 = vld [vmem:[%s2 + $0x48] sm:$0xff]
  %v43 = vld [vmem:[%s2 + $0x50] sm:$0xff]
  %v44 = vld [vmem:[%s2 + $0x58] sm:$0xff]
  %v45 = vld [vmem:[%s2 + $0x60] sm:$0xff]
  %v46 = vld [vmem:[%s2 + $0x68] sm:$0xff]
  %v47 = vld [vmem:[%s2 + $0x70] sm:$0xff]
  %v48 = vld [vmem:[%s2 + $0x78] sm:$0xff]
  %v49 = vld [vmem:[%s2 + $0x80] sm:$0xff]
  %v50 = vld [vmem:[%s2 + $0x88] sm:$0xff]
  %v51 = vld [vmem:[%s2 + $0x90] sm:$0xff]
  %v52 = vld [vmem:[%s2 + $0x98] sm:$0xff]
  %v53 = vld [vmem:[%s2 + $0xa0] sm:$0xff]
  %v54 = vld [vmem:[%s2 + $0xa8] sm:$0xff]
  %v55 = vld [vmem:[%s2 + $0xb0] sm:$0xff]
  %v56 = vld [vmem:[%s2 + $0xb8] sm:$0xff]
  %v57 = vld [vmem:[%s2 + $0xc0] sm:$0xff]
  %v58 = vld [vmem:[%s2 + $0xc8] sm:$0xff]
  %v59 = vld [vmem:[%s2 + $0xd0] sm:$0xff]
  %v60 = vld [vmem:[%s2 + $0xd8] sm:$0xff]
  %v61 = vld [vmem:[%s2 + $0xe0] sm:$0xff]
  %v62 = vld [vmem:[%s2 + $0xe8] sm:$0xff]
  %v63 = vld [vmem:[%s2 + $0xf0] sm:$0xff]
  %v64 = vld [vmem:[%s2 + $0xf8] sm:$0xff]
  %v65 = vld [vmem:[%s2 + $0x100] sm:$0xff]
  %v66 = vld [vmem:[%s2 + $0x108] sm:$0xff]
  %v67 = vld [vmem:[%s2 + $0x110] sm:$0xff]
  %v68 = vld [vmem:[%s2 + $0x118] sm:$0xff]
  %v69 = vld [vmem:[%s2 + $0x120] sm:$0xff]
  %v70 = vld [vmem:[%s2 + $0x128] sm:$0xff]
  %v71 = vld [vmem:[%s2 + $0x130] sm:$0xff]
  %v72 = vld [vmem:[%s2 + $0x138] sm:$0xff]
  %v73 = vld [vmem:[%s2 + $0x140] sm:$0xff]
  %v74 = vld [vmem:[%s2 + $0x148] sm:$0xff]
  %v75 = vld [vmem:[%s2 + $0x150] sm:$0xff]
  %v76 = vld [vmem:[%s2 + $0x158] sm:$0xff]
  %v77 = vld [vmem:[%s2 + $0x160] sm:$0xff]
  %v78 = vld [vmem:[%s2 + $0x168] sm:$0xff]
  %v79 = vld [vmem:[%s2 + $0x170] sm:$0xff]
  %v80 = vld [vmem:[%s2 + $0x178] sm:$0xff]
  %v81 = vld [vmem:[%s2 + $0x180] sm:$0xff]
  %v82 = vld [vmem:[%s2 + $0x188] sm:$0xff]
  %v83 = vld [vmem:[%s2 + $0x190] sm:$0xff]
  %v84 = vld [vmem:[%s2 + $0x198] sm:$0xff]
  %v85 = vld [vmem:[%s2 + $0x1a0] sm:$0xff]
  %v86 = vld [vmem:[%s2 + $0x1a8] sm:$0xff]
  %v87 = vld [vmem:[%s2 + $0x1b0] sm:$0xff]
  %v88 = vld [vmem:[%s2 + $0x1b8] sm:$0xff]
  %v89 = vld [vmem:[%s2 + $0x1c0] sm:$0xff]
  %v90 = vld [vmem:[%s2 + $0x1c8] sm:$0xff]
  %v91 = vld [vmem:[%s2 + $0x1d0] sm:$0xff]
  %v92 = vld [vmem:[%s2 + $0x1d8] sm:$0xff]
  %v93 = vld [vmem:[%s2 + $0x1e0] sm:$0xff]
  %v94 = vld [vmem:[%s2 + $0x1e8] sm:$0xff]
  %v95 = vld [vmem:[%s2 + $0x1f0] sm:$0xff]
  %v96 = vld [vmem:[%s2 + $0x1f8] sm:$0xff]
  %v97 = vld [vmem:[%s1] sm:$0xf]
  %v98 = vld [vmem:[%s1 + $0x4] sm:$0xf]
  %v99 = vld [vmem:[%s1 + $0x8] sm:$0xf]
  %v100 = vld [vmem:[%s1 + $0xc] sm:$0xf]
  %v101 = vld [vmem:[%s1 + $0x10] sm:$0xf]
  %v102 = vld [vmem:[%s1 + $0x14] sm:$0xf]
  %v103 = vld [vmem:[%s1 + $0x18] sm:$0xf]
  %v104 = vld [vmem:[%s1 + $0x1c] sm:$0xf]
  %v105 = vld [vmem:[%s1 + $0x20] sm:$0xf]
  %v106 = vld [vmem:[%s1 + $0x24] sm:$0xf]
  %v107 = vld [vmem:[%s1 + $0x28] sm:$0xf]
  %v108 = vld [vmem:[%s1 + $0x2c] sm:$0xf]
  %v109 = vld [vmem:[%s3] sm:$0xff]
  %v110 = vld [vmem:[%s3 + $0x8] sm:$0xff]
  %v111 = vld [vmem:[%s3 + $0x10] sm:$0xff]
  %v112 = vld [vmem:[%s3 + $0x18] sm:$0xff]
  %v113 = vld [vmem:[%s3 + $0x20] sm:$0xff]
  %v114 = vld [vmem:[%s3 + $0x28] sm:$0xff]
  %v115 = vld [vmem:[%s3 + $0x30] sm:$0xff]
  %v116 = vld [vmem:[%s3 + $0x38] sm:$0xff]
  %v117 = vld [vmem:[%s3 + $0x40] sm:$0xff]
  %v118 = vld [vmem:[%s3 + $0x48] sm:$0xff]
  %v119 = vld [vmem:[%s3 + $0x50] sm:$0xff]
  %v120 = vld [vmem:[%s3 + $0x58] sm:$0xff]
  %v121 = vld [vmem:[%s3 + $0x60] sm:$0xff]
  %v122 = vld [vmem:[%s3 + $0x68] sm:$0xff]
  %v123 = vld [vmem:[%s3 + $0x70] sm:$0xff]
  %v124 = vld [vmem:[%s3 + $0x78] sm:$0xff]
  %v125 = vld [vmem:[%s3 + $0x80] sm:$0xff]
  %v126 = vld [vmem:[%s3 + $0x88] sm:$0xff]
  %v127 = vld [vmem:[%s3 + $0x90] sm:$0xff]
  %v128 = vld [vmem:[%s3 + $0x98] sm:$0xff]
  %v129 = vld [vmem:[%s3 + $0xa0] sm:$0xff]
  %v130 = vld [vmem:[%s3 + $0xa8] sm:$0xff]
  %v131 = vld [vmem:[%s3 + $0xb0] sm:$0xff]
  %v132 = vld [vmem:[%s3 + $0xb8] sm:$0xff]
  %v133 = vld [vmem:[%s3 + $0xc0] sm:$0xff]
  %v134 = vld [vmem:[%s3 + $0xc8] sm:$0xff]
  %v135 = vld [vmem:[%s3 + $0xd0] sm:$0xff]
  %v136 = vld [vmem:[%s3 + $0xd8] sm:$0xff]
  %v137 = vld [vmem:[%s3 + $0xe0] sm:$0xff]
  %v138 = vld [vmem:[%s3 + $0xe8] sm:$0xff]
  %v139 = vld [vmem:[%s3 + $0xf0] sm:$0xff]
  %v140 = vld [vmem:[%s3 + $0xf8] sm:$0xff]
  %v141 = vld [vmem:[%s3 + $0x100] sm:$0xff]
  %v142 = vld [vmem:[%s3 + $0x108] sm:$0xff]
  %v143 = vld [vmem:[%s3 + $0x110] sm:$0xff]
  %v144 = vld [vmem:[%s3 + $0x118] sm:$0xff]
  %v145 = vld [vmem:[%s3 + $0x120] sm:$0xff]
  %v146 = vld [vmem:[%s3 + $0x128] sm:$0xff]
  %v147 = vld [vmem:[%s3 + $0x130] sm:$0xff]
  %v148 = vld [vmem:[%s3 + $0x138] sm:$0xff]
  %v149 = vld [vmem:[%s3 + $0x140] sm:$0xff]
  %v150 = vld [vmem:[%s3 + $0x148] sm:$0xff]
  %v151 = vld [vmem:[%s3 + $0x150] sm:$0xff]
  %v152 = vld [vmem:[%s3 + $0x158] sm:$0xff]
  %v153 = vld [vmem:[%s3 + $0x160] sm:$0xff]
  %v154 = vld [vmem:[%s3 + $0x168] sm:$0xff]
  %v155 = vld [vmem:[%s3 + $0x170] sm:$0xff]
  %v156 = vld [vmem:[%s3 + $0x178] sm:$0xff]
  %v157 = vld [vmem:[%s3 + $0x180] sm:$0xff]
  %v158 = vld [vmem:[%s3 + $0x188] sm:$0xff]
  %v159 = vld [vmem:[%s3 + $0x190] sm:$0xff]
  %v160 = vld [vmem:[%s3 + $0x198] sm:$0xff]
  %v161 = vld [vmem:[%s3 + $0x1a0] sm:$0xff]
  %v162 = vld [vmem:[%s3 + $0x1a8] sm:$0xff]
  %v163 = vld [vmem:[%s3 + $0x1b0] sm:$0xff]
  %v164 = vld [vmem:[%s3 + $0x1b8] sm:$0xff]
  %v165 = vld [vmem:[%s3 + $0x1c0] sm:$0xff]
  %v166 = vld [vmem:[%s3 + $0x1c8] sm:$0xff]
  %v167 = vld [vmem:[%s3 + $0x1d0] sm:$0xff]
  %v168 = vld [vmem:[%s3 + $0x1d8] sm:$0xff]
  %v169 = vld [vmem:[%s3 + $0x1e0] sm:$0xff]
  %v170 = vld [vmem:[%s3 + $0x1e8] sm:$0xff]
  %v171 = vld [vmem:[%s3 + $0x1f0] sm:$0xff]
  %v172 = vld [vmem:[%s3 + $0x1f8] sm:$0xff]
  %v185 = vunpack.c.l.b16 %v97
  %v186 = vunpack.c.l.b16 %v98
  %v187 = vunpack.c.l.b16 %v99
  %v188 = vunpack.c.l.b16 %v100
  %v189 = vunpack.c.l.b16 %v101
  %v190 = vunpack.c.l.b16 %v102
  %v191 = vunpack.c.l.b16 %v103
  %v192 = vunpack.c.l.b16 %v104
  %v193 = vunpack.c.l.b16 %v105
  %v194 = vunpack.c.l.b16 %v106
  %v195 = vunpack.c.l.b16 %v107
  %v196 = vunpack.c.l.b16 %v108
  %v197 = vpack.c.b16 %v186, %v185
  %v198 = vpack.c.b16 %v188, %v187
  %v199 = vpack.c.b16 %v190, %v189
  %v200 = vpack.c.b16 %v192, %v191
  %v201 = vpack.c.b16 %v194, %v193
  %v202 = vpack.c.b16 %v196, %v195
  %v273 = vunpack.c.l.b16 %v109
  %v274 = vunpack.c.h.b16 %v109
  %v275 = vunpack.c.l.b16 %v110
  %v276 = vunpack.c.h.b16 %v110
  %v277 = vunpack.c.l.b16 %v111
  %v278 = vunpack.c.h.b16 %v111
  %v279 = vunpack.c.l.b16 %v112
  %v280 = vunpack.c.h.b16 %v112
  %v281 = vunpack.c.l.b16 %v113
  %v282 = vunpack.c.h.b16 %v113
  %v283 = vunpack.c.l.b16 %v114
  %v284 = vunpack.c.h.b16 %v114
  %v285 = vunpack.c.l.b16 %v115
  %v286 = vunpack.c.h.b16 %v115
  %v287 = vunpack.c.l.b16 %v116
  %v288 = vunpack.c.h.b16 %v116
  %v289 = vunpack.c.l.b16 %v117
  %v290 = vunpack.c.h.b16 %v117
  %v291 = vunpack.c.l.b16 %v118
  %v292 = vunpack.c.h.b16 %v118
  %v293 = vunpack.c.l.b16 %v119
  %v294 = vunpack.c.h.b16 %v119
  %v295 = vunpack.c.l.b16 %v120
  %v296 = vunpack.c.h.b16 %v120
  %v297 = vunpack.c.l.b16 %v121
  %v298 = vunpack.c.h.b16 %v121
  %v299 = vunpack.c.l.b16 %v122
  %v300 = vunpack.c.h.b16 %v122
  %v301 = vunpack.c.l.b16 %v123
  %v302 = vunpack.c.h.b16 %v123
  %v303 = vunpack.c.l.b16 %v124
  %v304 = vunpack.c.h.b16 %v124
  %v305 = vunpack.c.l.b16 %v125
  %v306 = vunpack.c.h.b16 %v125
  %v307 = vunpack.c.l.b16 %v126
  %v308 = vunpack.c.h.b16 %v126
  %v309 = vunpack.c.l.b16 %v127
  %v310 = vunpack.c.h.b16 %v127
  %v311 = vunpack.c.l.b16 %v128
  %v312 = vunpack.c.h.b16 %v128
  %v313 = vunpack.c.l.b16 %v129
  %v314 = vunpack.c.h.b16 %v129
  %v315 = vunpack.c.l.b16 %v130
  %v316 = vunpack.c.h.b16 %v130
  %v317 = vunpack.c.l.b16 %v131
  %v318 = vunpack.c.h.b16 %v131
  %v319 = vunpack.c.l.b16 %v132
  %v320 = vunpack.c.h.b16 %v132
  %v321 = vunpack.c.l.b16 %v133
  %v322 = vunpack.c.h.b16 %v133
  %v323 = vunpack.c.l.b16 %v134
  %v324 = vunpack.c.h.b16 %v134
  %v325 = vunpack.c.l.b16 %v135
  %v326 = vunpack.c.h.b16 %v135
  %v327 = vunpack.c.l.b16 %v136
  %v328 = vunpack.c.h.b16 %v136
  %v329 = vunpack.c.l.b16 %v137
  %v330 = vunpack.c.h.b16 %v137
  %v331 = vunpack.c.l.b16 %v138
  %v332 = vunpack.c.h.b16 %v138
  %v333 = vunpack.c.l.b16 %v139
  %v334 = vunpack.c.h.b16 %v139
  %v335 = vunpack.c.l.b16 %v140
  %v336 = vunpack.c.h.b16 %v140
  %v337 = vunpack.c.l.b16 %v141
  %v338 = vunpack.c.h.b16 %v141
  %v339 = vunpack.c.l.b16 %v142
  %v340 = vunpack.c.h.b16 %v142
  %v341 = vunpack.c.l.b16 %v143
  %v342 = vunpack.c.h.b16 %v143
  %v343 = vunpack.c.l.b16 %v144
  %v344 = vunpack.c.h.b16 %v144
  %v345 = vunpack.c.l.b16 %v145
  %v346 = vunpack.c.h.b16 %v145
  %v347 = vunpack.c.l.b16 %v146
  %v348 = vunpack.c.h.b16 %v146
  %v349 = vunpack.c.l.b16 %v147
  %v350 = vunpack.c.h.b16 %v147
  %v351 = vunpack.c.l.b16 %v148
  %v352 = vunpack.c.h.b16 %v148
  %v353 = vunpack.c.l.b16 %v149
  %v354 = vunpack.c.h.b16 %v149
  %v355 = vunpack.c.l.b16 %v150
  %v356 = vunpack.c.h.b16 %v150
  %v357 = vunpack.c.l.b16 %v151
  %v358 = vunpack.c.h.b16 %v151
  %v359 = vunpack.c.l.b16 %v152
  %v360 = vunpack.c.h.b16 %v152
  %v361 = vunpack.c.l.b16 %v153
  %v362 = vunpack.c.h.b16 %v153
  %v363 = vunpack.c.l.b16 %v154
  %v364 = vunpack.c.h.b16 %v154
  %v365 = vunpack.c.l.b16 %v155
  %v366 = vunpack.c.h.b16 %v155
  %v367 = vunpack.c.l.b16 %v156
  %v368 = vunpack.c.h.b16 %v156
  %v369 = vunpack.c.l.b16 %v157
  %v370 = vunpack.c.h.b16 %v157
  %v371 = vunpack.c.l.b16 %v158
  %v372 = vunpack.c.h.b16 %v158
  %v373 = vunpack.c.l.b16 %v159
  %v374 = vunpack.c.h.b16 %v159
  %v375 = vunpack.c.l.b16 %v160
  %v376 = vunpack.c.h.b16 %v160
  %v377 = vunpack.c.l.b16 %v161
  %v378 = vunpack.c.h.b16 %v161
  %v379 = vunpack.c.l.b16 %v162
  %v380 = vunpack.c.h.b16 %v162
  %v381 = vunpack.c.l.b16 %v163
  %v382 = vunpack.c.h.b16 %v163
  %v383 = vunpack.c.l.b16 %v164
  %v384 = vunpack.c.h.b16 %v164
  %v385 = vunpack.c.l.b16 %v165
  %v386 = vunpack.c.h.b16 %v165
  %v387 = vunpack.c.l.b16 %v166
  %v388 = vunpack.c.h.b16 %v166
  %v389 = vunpack.c.l.b16 %v167
  %v390 = vunpack.c.h.b16 %v167
  %v391 = vunpack.c.l.b16 %v168
  %v392 = vunpack.c.h.b16 %v168
  %v393 = vunpack.c.l.b16 %v169
  %v394 = vunpack.c.h.b16 %v169
  %v395 = vunpack.c.l.b16 %v170
  %v396 = vunpack.c.h.b16 %v170
  %v397 = vunpack.c.l.b16 %v171
  %v398 = vunpack.c.h.b16 %v171
  %v399 = vunpack.c.l.b16 %v172
  %v400 = vunpack.c.h.b16 %v172
  %v401 = vpack.c.b16 %v281, %v273
  %v402 = vpack.c.b16 %v282, %v274
  %v403 = vpack.c.b16 %v283, %v275
  %v404 = vpack.c.b16 %v284, %v276
  %v405 = vpack.c.b16 %v285, %v277
  %v406 = vpack.c.b16 %v286, %v278
  %v407 = vpack.c.b16 %v287, %v279
  %v408 = vpack.c.b16 %v288, %v280
  %v409 = vpack.c.b16 %v297, %v289
  %v410 = vpack.c.b16 %v298, %v290
  %v411 = vpack.c.b16 %v299, %v291
  %v412 = vpack.c.b16 %v300, %v292
  %v413 = vpack.c.b16 %v301, %v293
  %v414 = vpack.c.b16 %v302, %v294
  %v415 = vpack.c.b16 %v303, %v295
  %v416 = vpack.c.b16 %v304, %v296
  %v417 = vpack.c.b16 %v313, %v305
  %v418 = vpack.c.b16 %v314, %v306
  %v419 = vpack.c.b16 %v315, %v307
  %v420 = vpack.c.b16 %v316, %v308
  %v421 = vpack.c.b16 %v317, %v309
  %v422 = vpack.c.b16 %v318, %v310
  %v423 = vpack.c.b16 %v319, %v311
  %v424 = vpack.c.b16 %v320, %v312
  %v425 = vpack.c.b16 %v329, %v321
  %v426 = vpack.c.b16 %v330, %v322
  %v427 = vpack.c.b16 %v331, %v323
  %v428 = vpack.c.b16 %v332, %v324
  %v429 = vpack.c.b16 %v333, %v325
  %v430 = vpack.c.b16 %v334, %v326
  %v431 = vpack.c.b16 %v335, %v327
  %v432 = vpack.c.b16 %v336, %v328
  %v433 = vpack.c.b16 %v345, %v337
  %v434 = vpack.c.b16 %v346, %v338
  %v435 = vpack.c.b16 %v347, %v339
  %v436 = vpack.c.b16 %v348, %v340
  %v437 = vpack.c.b16 %v349, %v341
  %v438 = vpack.c.b16 %v350, %v342
  %v439 = vpack.c.b16 %v351, %v343
  %v440 = vpack.c.b16 %v352, %v344
  %v441 = vpack.c.b16 %v361, %v353
  %v442 = vpack.c.b16 %v362, %v354
  %v443 = vpack.c.b16 %v363, %v355
  %v444 = vpack.c.b16 %v364, %v356
  %v445 = vpack.c.b16 %v365, %v357
  %v446 = vpack.c.b16 %v366, %v358
  %v447 = vpack.c.b16 %v367, %v359
  %v448 = vpack.c.b16 %v368, %v360
  %v449 = vpack.c.b16 %v377, %v369
  %v450 = vpack.c.b16 %v378, %v370
  %v451 = vpack.c.b16 %v379, %v371
  %v452 = vpack.c.b16 %v380, %v372
  %v453 = vpack.c.b16 %v381, %v373
  %v454 = vpack.c.b16 %v382, %v374
  %v455 = vpack.c.b16 %v383, %v375
  %v456 = vpack.c.b16 %v384, %v376
  %v457 = vpack.c.b16 %v393, %v385
  %v458 = vpack.c.b16 %v394, %v386
  %v459 = vpack.c.b16 %v395, %v387
  %v460 = vpack.c.b16 %v396, %v388
  %v461 = vpack.c.b16 %v397, %v389
  %v462 = vpack.c.b16 %v398, %v390
  %v463 = vpack.c.b16 %v399, %v391
  %v464 = vpack.c.b16 %v400, %v392
  %529 = vmatprep.subr.bf16.mxu0 %v458
  %530 = vmatpush1.bf16.msra.mxu0 %v457
  %531 = vmatprep.subr.bf16.mxu0 %v450
  %532 = vmatpush1.bf16.msra.mxu0 %v449
  %533 = vmatprep.subr.bf16.mxu0 %v442
  %534 = vmatpush1.bf16.msra.mxu0 %v441
  %535 = vmatprep.subr.bf16.mxu0 %v434
  %536 = vmatpush1.bf16.msra.mxu0 %v433
  %537 = vmatprep.subr.bf16.mxu0 %v426
  %538 = vmatpush1.bf16.msra.mxu0 %v425
  %539 = vmatprep.subr.bf16.mxu0 %v418
  %540 = vmatpush1.bf16.msra.mxu0 %v417
  %541 = vmatprep.subr.bf16.mxu0 %v410
  %542 = vmatpush1.bf16.msra.mxu0 %v409
  %543 = vmatprep.subr.bf16.mxu0 %v402
  %544 = vmatpush1.bf16.msra.mxu0 %v401
  %545 = vmatprep.subr.bf16.mxu0 0
  %546 = vmatpush2.bf16.msra.mxu0 0
  %547 = vmatprep.subr.bf16.mxu0 0
  %548 = vmatpush2.bf16.msra.mxu0 0
  %549 = vmatprep.subr.bf16.mxu0 0
  %550 = vmatpush2.bf16.msra.mxu0 0
  %551 = vmatprep.subr.bf16.mxu0 0
  %552 = vmatpush2.bf16.msra.mxu0 0
  %553 = vmatprep.subr.bf16.mxu0 0
  %554 = vmatpush2.bf16.msra.mxu0 0
  %555 = vmatprep.subr.bf16.mxu0 0
  %556 = vmatpush2.bf16.msra.mxu0 0
  %557 = vmatprep.subr.bf16.mxu0 0
  %558 = vmatpush2.bf16.msra.mxu0 0
  %559 = vmatprep.subr.bf16.mxu0 0
  %560 = vmatpush2.bf16.msra.mxu0 0
  %561 = vmatprep.mubr.bf16.mxu0 0
  %562 = vmatmul.mubr.bf16.gmra.mxu0 %v197
  %v563 = vpop.f32.mrf.mxu0
  %v564 = vadd.f32 0.0, %v563
  %v565 = vpop.f32.mrf.mxu0
  %v566 = vadd.f32 0.0, %v565
  %v567 = vpop.f32.mrf.mxu0
  %v568 = vadd.f32 0.0, %v567
  %v569 = vpop.f32.mrf.mxu0
  %v570 = vadd.f32 0.0, %v569
  %571 = vmatprep.mubr.bf16.mxu0 0
  %572 = vmatmul.mubr.bf16.gmra.mxu0 %v198
  %v573 = vpop.f32.mrf.mxu0
  %v574 = vadd.f32 0.0, %v573
  %v575 = vpop.f32.mrf.mxu0
  %v576 = vadd.f32 0.0, %v575
  %v577 = vpop.f32.mrf.mxu0
  %v578 = vadd.f32 0.0, %v577
  %v579 = vpop.f32.mrf.mxu0
  %v580 = vadd.f32 0.0, %v579
  %581 = vmatprep.mubr.bf16.mxu0 0
  %582 = vmatmul.mubr.bf16.gmra.mxu0 %v199
  %v583 = vpop.f32.mrf.mxu0
  %v584 = vadd.f32 0.0, %v583
  %v585 = vpop.f32.mrf.mxu0
  %v586 = vadd.f32 0.0, %v585
  %v587 = vpop.f32.mrf.mxu0
  %v588 = vadd.f32 0.0, %v587
  %v589 = vpop.f32.mrf.mxu0
  %v590 = vadd.f32 0.0, %v589
  %591 = vmatprep.mubr.bf16.mxu0 0
  %592 = vmatmul.mubr.bf16.gmra.mxu0 %v200
  %v593 = vpop.f32.mrf.mxu0
  %v594 = vadd.f32 0.0, %v593
  %v595 = vpop.f32.mrf.mxu0
  %v596 = vadd.f32 0.0, %v595
  %v597 = vpop.f32.mrf.mxu0
  %v598 = vadd.f32 0.0, %v597
  %v599 = vpop.f32.mrf.mxu0
  %v600 = vadd.f32 0.0, %v599
  %601 = vmatprep.mubr.bf16.mxu0 0
  %602 = vmatmul.mubr.bf16.gmra.mxu0 %v201
  %v603 = vpop.f32.mrf.mxu0
  %v604 = vadd.f32 0.0, %v603
  %v605 = vpop.f32.mrf.mxu0
  %v606 = vadd.f32 0.0, %v605
  %v607 = vpop.f32.mrf.mxu0
  %v608 = vadd.f32 0.0, %v607
  %v609 = vpop.f32.mrf.mxu0
  %v610 = vadd.f32 0.0, %v609
  %611 = vmatprep.mubr.bf16.mxu0 0
  %612 = vmatmul.mubr.bf16.gmra.mxu0 %v202
  %v613 = vpop.f32.mrf.mxu0
  %v614 = vadd.f32 0.0, %v613
  %v615 = vpop.f32.mrf.mxu0
  %v616 = vadd.f32 0.0, %v615
  %v617 = vpop.f32.mrf.mxu0
  %v618 = vadd.f32 0.0, %v617
  %v619 = vpop.f32.mrf.mxu0
  %v620 = vadd.f32 0.0, %v619
  %621 = vdwg.mxu0
  %622 = vmatprep.subr.bf16.mxu0 %v460
  %623 = vmatpush1.bf16.msra.mxu0 %v459
  %624 = vmatprep.subr.bf16.mxu0 %v452
  %625 = vmatpush1.bf16.msra.mxu0 %v451
  %626 = vmatprep.subr.bf16.mxu0 %v444
  %627 = vmatpush1.bf16.msra.mxu0 %v443
  %628 = vmatprep.subr.bf16.mxu0 %v436
  %629 = vmatpush1.bf16.msra.mxu0 %v435
  %630 = vmatprep.subr.bf16.mxu0 %v428
  %631 = vmatpush1.bf16.msra.mxu0 %v427
  %632 = vmatprep.subr.bf16.mxu0 %v420
  %633 = vmatpush1.bf16.msra.mxu0 %v419
  %634 = vmatprep.subr.bf16.mxu0 %v412
  %635 = vmatpush1.bf16.msra.mxu0 %v411
  %636 = vmatprep.subr.bf16.mxu0 %v404
  %637 = vmatpush1.bf16.msra.mxu0 %v403
  %638 = vmatprep.subr.bf16.mxu0 0
  %639 = vmatpush2.bf16.msra.mxu0 0
  %640 = vmatprep.subr.bf16.mxu0 0
  %641 = vmatpush2.bf16.msra.mxu0 0
  %642 = vmatprep.subr.bf16.mxu0 0
  %643 = vmatpush2.bf16.msra.mxu0 0
  %644 = vmatprep.subr.bf16.mxu0 0
  %645 = vmatpush2.bf16.msra.mxu0 0
  %646 = vmatprep.subr.bf16.mxu0 0
  %647 = vmatpush2.bf16.msra.mxu0 0
  %648 = vmatprep.subr.bf16.mxu0 0
  %649 = vmatpush2.bf16.msra.mxu0 0
  %650 = vmatprep.subr.bf16.mxu0 0
  %651 = vmatpush2.bf16.msra.mxu0 0
  %652 = vmatprep.subr.bf16.mxu0 0
  %653 = vmatpush2.bf16.msra.mxu0 0
  %654 = vmatprep.mubr.bf16.mxu0 0
  %655 = vmatmul.mubr.bf16.gmra.mxu0 %v197
  %v656 = vpop.f32.mrf.mxu0
  %v657 = vadd.f32 0.0, %v656
  %v658 = vpop.f32.mrf.mxu0
  %v659 = vadd.f32 0.0, %v658
  %v660 = vpop.f32.mrf.mxu0
  %v661 = vadd.f32 0.0, %v660
  %v662 = vpop.f32.mrf.mxu0
  %v663 = vadd.f32 0.0, %v662
  %664 = vmatprep.mubr.bf16.mxu0 0
  %665 = vmatmul.mubr.bf16.gmra.mxu0 %v198
  %v666 = vpop.f32.mrf.mxu0
  %v667 = vadd.f32 0.0, %v666
  %v668 = vpop.f32.mrf.mxu0
  %v669 = vadd.f32 0.0, %v668
  %v670 = vpop.f32.mrf.mxu0
  %v671 = vadd.f32 0.0, %v670
  %v672 = vpop.f32.mrf.mxu0
  %v673 = vadd.f32 0.0, %v672
  %674 = vmatprep.mubr.bf16.mxu0 0
  %675 = vmatmul.mubr.bf16.gmra.mxu0 %v199
  %v676 = vpop.f32.mrf.mxu0
  %v677 = vadd.f32 0.0, %v676
  %v678 = vpop.f32.mrf.mxu0
  %v679 = vadd.f32 0.0, %v678
  %v680 = vpop.f32.mrf.mxu0
  %v681 = vadd.f32 0.0, %v680
  %v682 = vpop.f32.mrf.mxu0
  %v683 = vadd.f32 0.0, %v682
  %684 = vmatprep.mubr.bf16.mxu0 0
  %685 = vmatmul.mubr.bf16.gmra.mxu0 %v200
  %v686 = vpop.f32.mrf.mxu0
  %v687 = vadd.f32 0.0, %v686
  %v688 = vpop.f32.mrf.mxu0
  %v689 = vadd.f32 0.0, %v688
  %v690 = vpop.f32.mrf.mxu0
  %v691 = vadd.f32 0.0, %v690
  %v692 = vpop.f32.mrf.mxu0
  %v693 = vadd.f32 0.0, %v692
  %694 = vmatprep.mubr.bf16.mxu0 0
  %695 = vmatmul.mubr.bf16.gmra.mxu0 %v201
  %v696 = vpop.f32.mrf.mxu0
  %v697 = vadd.f32 0.0, %v696
  %v698 = vpop.f32.mrf.mxu0
  %v699 = vadd.f32 0.0, %v698
  %v700 = vpop.f32.mrf.mxu0
  %v701 = vadd.f32 0.0, %v700
  %v702 = vpop.f32.mrf.mxu0
  %v703 = vadd.f32 0.0, %v702
  %704 = vmatprep.mubr.bf16.mxu0 0
  %705 = vmatmul.mubr.bf16.gmra.mxu0 %v202
  %v706 = vpop.f32.mrf.mxu0
  %v707 = vadd.f32 0.0, %v706
  %v708 = vpop.f32.mrf.mxu0
  %v709 = vadd.f32 0.0, %v708
  %v710 = vpop.f32.mrf.mxu0
  %v711 = vadd.f32 0.0, %v710
  %v712 = vpop.f32.mrf.mxu0
  %v713 = vadd.f32 0.0, %v712
  %714 = vdwg.mxu0
  %715 = vmatprep.subr.bf16.mxu0 %v462
  %716 = vmatpush1.bf16.msra.mxu0 %v461
  %717 = vmatprep.subr.bf16.mxu0 %v454
  %718 = vmatpush1.bf16.msra.mxu0 %v453
  %719 = vmatprep.subr.bf16.mxu0 %v446
  %720 = vmatpush1.bf16.msra.mxu0 %v445
  %721 = vmatprep.subr.bf16.mxu0 %v438
  %722 = vmatpush1.bf16.msra.mxu0 %v437
  %723 = vmatprep.subr.bf16.mxu0 %v430
  %724 = vmatpush1.bf16.msra.mxu0 %v429
  %725 = vmatprep.subr.bf16.mxu0 %v422
  %726 = vmatpush1.bf16.msra.mxu0 %v421
  %727 = vmatprep.subr.bf16.mxu0 %v414
  %728 = vmatpush1.bf16.msra.mxu0 %v413
  %729 = vmatprep.subr.bf16.mxu0 %v406
  %730 = vmatpush1.bf16.msra.mxu0 %v405
  %731 = vmatprep.subr.bf16.mxu0 0
  %732 = vmatpush2.bf16.msra.mxu0 0
  %733 = vmatprep.subr.bf16.mxu0 0
  %734 = vmatpush2.bf16.msra.mxu0 0
  %735 = vmatprep.subr.bf16.mxu0 0
  %736 = vmatpush2.bf16.msra.mxu0 0
  %737 = vmatprep.subr.bf16.mxu0 0
  %738 = vmatpush2.bf16.msra.mxu0 0
  %739 = vmatprep.subr.bf16.mxu0 0
  %740 = vmatpush2.bf16.msra.mxu0 0
  %741 = vmatprep.subr.bf16.mxu0 0
  %742 = vmatpush2.bf16.msra.mxu0 0
  %743 = vmatprep.subr.bf16.mxu0 0
  %744 = vmatpush2.bf16.msra.mxu0 0
  %745 = vmatprep.subr.bf16.mxu0 0
  %746 = vmatpush2.bf16.msra.mxu0 0
  %747 = vmatprep.mubr.bf16.mxu0 0
  %748 = vmatmul.mubr.bf16.gmra.mxu0 %v197
  %v749 = vpop.f32.mrf.mxu0
  %v750 = vadd.f32 0.0, %v749
  %v751 = vpop.f32.mrf.mxu0
  %v752 = vadd.f32 0.0, %v751
  %v753 = vpop.f32.mrf.mxu0
  %v754 = vadd.f32 0.0, %v753
  %v755 = vpop.f32.mrf.mxu0
  %v756 = vadd.f32 0.0, %v755
  %757 = vmatprep.mubr.bf16.mxu0 0
  %758 = vmatmul.mubr.bf16.gmra.mxu0 %v198
  %v759 = vpop.f32.mrf.mxu0
  %v760 = vadd.f32 0.0, %v759
  %v761 = vpop.f32.mrf.mxu0
  %v762 = vadd.f32 0.0, %v761
  %v763 = vpop.f32.mrf.mxu0
  %v764 = vadd.f32 0.0, %v763
  %v765 = vpop.f32.mrf.mxu0
  %v766 = vadd.f32 0.0, %v765
  %767 = vmatprep.mubr.bf16.mxu0 0
  %768 = vmatmul.mubr.bf16.gmra.mxu0 %v199
  %v769 = vpop.f32.mrf.mxu0
  %v770 = vadd.f32 0.0, %v769
  %v771 = vpop.f32.mrf.mxu0
  %v772 = vadd.f32 0.0, %v771
  %v773 = vpop.f32.mrf.mxu0
  %v774 = vadd.f32 0.0, %v773
  %v775 = vpop.f32.mrf.mxu0
  %v776 = vadd.f32 0.0, %v775
  %777 = vmatprep.mubr.bf16.mxu0 0
  %778 = vmatmul.mubr.bf16.gmra.mxu0 %v200
  %v779 = vpop.f32.mrf.mxu0
  %v780 = vadd.f32 0.0, %v779
  %v781 = vpop.f32.mrf.mxu0
  %v782 = vadd.f32 0.0, %v781
  %v783 = vpop.f32.mrf.mxu0
  %v784 = vadd.f32 0.0, %v783
  %v785 = vpop.f32.mrf.mxu0
  %v786 = vadd.f32 0.0, %v785
  %787 = vmatprep.mubr.bf16.mxu0 0
  %788 = vmatmul.mubr.bf16.gmra.mxu0 %v201
  %v789 = vpop.f32.mrf.mxu0
  %v790 = vadd.f32 0.0, %v789
  %v791 = vpop.f32.mrf.mxu0
  %v792 = vadd.f32 0.0, %v791
  %v793 = vpop.f32.mrf.mxu0
  %v794 = vadd.f32 0.0, %v793
  %v795 = vpop.f32.mrf.mxu0
  %v796 = vadd.f32 0.0, %v795
  %797 = vmatprep.mubr.bf16.mxu0 0
  %798 = vmatmul.mubr.bf16.gmra.mxu0 %v202
  %v799 = vpop.f32.mrf.mxu0
  %v800 = vadd.f32 0.0, %v799
  %v801 = vpop.f32.mrf.mxu0
  %v802 = vadd.f32 0.0, %v801
  %v803 = vpop.f32.mrf.mxu0
  %v804 = vadd.f32 0.0, %v803
  %v805 = vpop.f32.mrf.mxu0
  %v806 = vadd.f32 0.0, %v805
  %807 = vdwg.mxu0
  %808 = vmatprep.subr.bf16.mxu0 %v464
  %809 = vmatpush1.bf16.msra.mxu0 %v463
  %810 = vmatprep.subr.bf16.mxu0 %v456
  %811 = vmatpush1.bf16.msra.mxu0 %v455
  %812 = vmatprep.subr.bf16.mxu0 %v448
  %813 = vmatpush1.bf16.msra.mxu0 %v447
  %814 = vmatprep.subr.bf16.mxu0 %v440
  %815 = vmatpush1.bf16.msra.mxu0 %v439
  %816 = vmatprep.subr.bf16.mxu0 %v432
  %817 = vmatpush1.bf16.msra.mxu0 %v431
  %818 = vmatprep.subr.bf16.mxu0 %v424
  %819 = vmatpush1.bf16.msra.mxu0 %v423
  %820 = vmatprep.subr.bf16.mxu0 %v416
  %821 = vmatpush1.bf16.msra.mxu0 %v415
  %822 = vmatprep.subr.bf16.mxu0 %v408
  %823 = vmatpush1.bf16.msra.mxu0 %v407
  %824 = vmatprep.subr.bf16.mxu0 0
  %825 = vmatpush2.bf16.msra.mxu0 0
  %826 = vmatprep.subr.bf16.mxu0 0
  %827 = vmatpush2.bf16.msra.mxu0 0
  %828 = vmatprep.subr.bf16.mxu0 0
  %829 = vmatpush2.bf16.msra.mxu0 0
  %830 = vmatprep.subr.bf16.mxu0 0
  %831 = vmatpush2.bf16.msra.mxu0 0
  %832 = vmatprep.subr.bf16.mxu0 0
  %833 = vmatpush2.bf16.msra.mxu0 0
  %834 = vmatprep.subr.bf16.mxu0 0
  %835 = vmatpush2.bf16.msra.mxu0 0
  %836 = vmatprep.subr.bf16.mxu0 0
  %837 = vmatpush2.bf16.msra.mxu0 0
  %838 = vmatprep.subr.bf16.mxu0 0
  %839 = vmatpush2.bf16.msra.mxu0 0
  %840 = vmatprep.mubr.bf16.mxu0 0
  %841 = vmatmul.mubr.bf16.gmra.mxu0 %v197
  %v842 = vpop.f32.mrf.mxu0
  %v843 = vadd.f32 0.0, %v842
  %v844 = vpop.f32.mrf.mxu0
  %v845 = vadd.f32 0.0, %v844
  %v846 = vpop.f32.mrf.mxu0
  %v847 = vadd.f32 0.0, %v846
  %v848 = vpop.f32.mrf.mxu0
  %v849 = vadd.f32 0.0, %v848
  %850 = vmatprep.mubr.bf16.mxu0 0
  %851 = vmatmul.mubr.bf16.gmra.mxu0 %v198
  %v852 = vpop.f32.mrf.mxu0
  %v853 = vadd.f32 0.0, %v852
  %v854 = vpop.f32.mrf.mxu0
  %v855 = vadd.f32 0.0, %v854
  %v856 = vpop.f32.mrf.mxu0
  %v857 = vadd.f32 0.0, %v856
  %v858 = vpop.f32.mrf.mxu0
  %v859 = vadd.f32 0.0, %v858
  %860 = vmatprep.mubr.bf16.mxu0 0
  %861 = vmatmul.mubr.bf16.gmra.mxu0 %v199
  %v862 = vpop.f32.mrf.mxu0
  %v863 = vadd.f32 0.0, %v862
  %v864 = vpop.f32.mrf.mxu0
  %v865 = vadd.f32 0.0, %v864
  %v866 = vpop.f32.mrf.mxu0
  %v867 = vadd.f32 0.0, %v866
  %v868 = vpop.f32.mrf.mxu0
  %v869 = vadd.f32 0.0, %v868
  %870 = vmatprep.mubr.bf16.mxu0 0
  %871 = vmatmul.mubr.bf16.gmra.mxu0 %v200
  %v872 = vpop.f32.mrf.mxu0
  %v873 = vadd.f32 0.0, %v872
  %v874 = vpop.f32.mrf.mxu0
  %v875 = vadd.f32 0.0, %v874
  %v876 = vpop.f32.mrf.mxu0
  %v877 = vadd.f32 0.0, %v876
  %v878 = vpop.f32.mrf.mxu0
  %v879 = vadd.f32 0.0, %v878
  %880 = vmatprep.mubr.bf16.mxu0 0
  %881 = vmatmul.mubr.bf16.gmra.mxu0 %v201
  %v882 = vpop.f32.mrf.mxu0
  %v883 = vadd.f32 0.0, %v882
  %v884 = vpop.f32.mrf.mxu0
  %v885 = vadd.f32 0.0, %v884
  %v886 = vpop.f32.mrf.mxu0
  %v887 = vadd.f32 0.0, %v886
  %v888 = vpop.f32.mrf.mxu0
  %v889 = vadd.f32 0.0, %v888
  %890 = vmatprep.mubr.bf16.mxu0 0
  %891 = vmatmul.mubr.bf16.gmra.mxu0 %v202
  %v892 = vpop.f32.mrf.mxu0
  %v893 = vadd.f32 0.0, %v892
  %v894 = vpop.f32.mrf.mxu0
  %v895 = vadd.f32 0.0, %v894
  %v896 = vpop.f32.mrf.mxu0
  %v897 = vadd.f32 0.0, %v896
  %v898 = vpop.f32.mrf.mxu0
  %v899 = vadd.f32 0.0, %v898
  %900 = vdwg.mxu0
  %v913 = vunpack.c.l.b16 %v21
  %v914 = vunpack.c.l.b16 %v22
  %v915 = vunpack.c.l.b16 %v23
  %v916 = vunpack.c.l.b16 %v24
  %v917 = vunpack.c.l.b16 %v25
  %v918 = vunpack.c.l.b16 %v26
  %v919 = vunpack.c.l.b16 %v27
  %v920 = vunpack.c.l.b16 %v28
  %v921 = vunpack.c.l.b16 %v29
  %v922 = vunpack.c.l.b16 %v30
  %v923 = vunpack.c.l.b16 %v31
  %v924 = vunpack.c.l.b16 %v32
  %v925 = vpack.c.b16 %v914, %v913
  %v926 = vpack.c.b16 %v916, %v915
  %v927 = vpack.c.b16 %v918, %v917
  %v928 = vpack.c.b16 %v920, %v919
  %v929 = vpack.c.b16 %v922, %v921
  %v930 = vpack.c.b16 %v924, %v923
  %v1001 = vunpack.c.l.b16 %v33
  %v1002 = vunpack.c.h.b16 %v33
  %v1003 = vunpack.c.l.b16 %v34
  %v1004 = vunpack.c.h.b16 %v34
  %v1005 = vunpack.c.l.b16 %v35
  %v1006 = vunpack.c.h.b16 %v35
  %v1007 = vunpack.c.l.b16 %v36
  %v1008 = vunpack.c.h.b16 %v36
  %v1009 = vunpack.c.l.b16 %v37
  %v1010 = vunpack.c.h.b16 %v37
  %v1011 = vunpack.c.l.b16 %v38
  %v1012 = vunpack.c.h.b16 %v38
  %v1013 = vunpack.c.l.b16 %v39
  %v1014 = vunpack.c.h.b16 %v39
  %v1015 = vunpack.c.l.b16 %v40
  %v1016 = vunpack.c.h.b16 %v40
  %v1017 = vunpack.c.l.b16 %v41
  %v1018 = vunpack.c.h.b16 %v41
  %v1019 = vunpack.c.l.b16 %v42
  %v1020 = vunpack.c.h.b16 %v42
  %v1021 = vunpack.c.l.b16 %v43
  %v1022 = vunpack.c.h.b16 %v43
  %v1023 = vunpack.c.l.b16 %v44
  %v1024 = vunpack.c.h.b16 %v44
  %v1025 = vunpack.c.l.b16 %v45
  %v1026 = vunpack.c.h.b16 %v45
  %v1027 = vunpack.c.l.b16 %v46
  %v1028 = vunpack.c.h.b16 %v46
  %v1029 = vunpack.c.l.b16 %v47
  %v1030 = vunpack.c.h.b16 %v47
  %v1031 = vunpack.c.l.b16 %v48
  %v1032 = vunpack.c.h.b16 %v48
  %v1033 = vunpack.c.l.b16 %v49
  %v1034 = vunpack.c.h.b16 %v49
  %v1035 = vunpack.c.l.b16 %v50
  %v1036 = vunpack.c.h.b16 %v50
  %v1037 = vunpack.c.l.b16 %v51
  %v1038 = vunpack.c.h.b16 %v51
  %v1039 = vunpack.c.l.b16 %v52
  %v1040 = vunpack.c.h.b16 %v52
  %v1041 = vunpack.c.l.b16 %v53
  %v1042 = vunpack.c.h.b16 %v53
  %v1043 = vunpack.c.l.b16 %v54
  %v1044 = vunpack.c.h.b16 %v54
  %v1045 = vunpack.c.l.b16 %v55
  %v1046 = vunpack.c.h.b16 %v55
  %v1047 = vunpack.c.l.b16 %v56
  %v1048 = vunpack.c.h.b16 %v56
  %v1049 = vunpack.c.l.b16 %v57
  %v1050 = vunpack.c.h.b16 %v57
  %v1051 = vunpack.c.l.b16 %v58
  %v1052 = vunpack.c.h.b16 %v58
  %v1053 = vunpack.c.l.b16 %v59
  %v1054 = vunpack.c.h.b16 %v59
  %v1055 = vunpack.c.l.b16 %v60
  %v1056 = vunpack.c.h.b16 %v60
  %v1057 = vunpack.c.l.b16 %v61
  %v1058 = vunpack.c.h.b16 %v61
  %v1059 = vunpack.c.l.b16 %v62
  %v1060 = vunpack.c.h.b16 %v62
  %v1061 = vunpack.c.l.b16 %v63
  %v1062 = vunpack.c.h.b16 %v63
  %v1063 = vunpack.c.l.b16 %v64
  %v1064 = vunpack.c.h.b16 %v64
  %v1065 = vunpack.c.l.b16 %v65
  %v1066 = vunpack.c.h.b16 %v65
  %v1067 = vunpack.c.l.b16 %v66
  %v1068 = vunpack.c.h.b16 %v66
  %v1069 = vunpack.c.l.b16 %v67
  %v1070 = vunpack.c.h.b16 %v67
  %v1071 = vunpack.c.l.b16 %v68
  %v1072 = vunpack.c.h.b16 %v68
  %v1073 = vunpack.c.l.b16 %v69
  %v1074 = vunpack.c.h.b16 %v69
  %v1075 = vunpack.c.l.b16 %v70
  %v1076 = vunpack.c.h.b16 %v70
  %v1077 = vunpack.c.l.b16 %v71
  %v1078 = vunpack.c.h.b16 %v71
  %v1079 = vunpack.c.l.b16 %v72
  %v1080 = vunpack.c.h.b16 %v72
  %v1081 = vunpack.c.l.b16 %v73
  %v1082 = vunpack.c.h.b16 %v73
  %v1083 = vunpack.c.l.b16 %v74
  %v1084 = vunpack.c.h.b16 %v74
  %v1085 = vunpack.c.l.b16 %v75
  %v1086 = vunpack.c.h.b16 %v75
  %v1087 = vunpack.c.l.b16 %v76
  %v1088 = vunpack.c.h.b16 %v76
  %v1089 = vunpack.c.l.b16 %v77
  %v1090 = vunpack.c.h.b16 %v77
  %v1091 = vunpack.c.l.b16 %v78
  %v1092 = vunpack.c.h.b16 %v78
  %v1093 = vunpack.c.l.b16 %v79
  %v1094 = vunpack.c.h.b16 %v79
  %v1095 = vunpack.c.l.b16 %v80
  %v1096 = vunpack.c.h.b16 %v80
  %v1097 = vunpack.c.l.b16 %v81
  %v1098 = vunpack.c.h.b16 %v81
  %v1099 = vunpack.c.l.b16 %v82
  %v1100 = vunpack.c.h.b16 %v82
  %v1101 = vunpack.c.l.b16 %v83
  %v1102 = vunpack.c.h.b16 %v83
  %v1103 = vunpack.c.l.b16 %v84
  %v1104 = vunpack.c.h.b16 %v84
  %v1105 = vunpack.c.l.b16 %v85
  %v1106 = vunpack.c.h.b16 %v85
  %v1107 = vunpack.c.l.b16 %v86
  %v1108 = vunpack.c.h.b16 %v86
  %v1109 = vunpack.c.l.b16 %v87
  %v1110 = vunpack.c.h.b16 %v87
  %v1111 = vunpack.c.l.b16 %v88
  %v1112 = vunpack.c.h.b16 %v88
  %v1113 = vunpack.c.l.b16 %v89
  %v1114 = vunpack.c.h.b16 %v89
  %v1115 = vunpack.c.l.b16 %v90
  %v1116 = vunpack.c.h.b16 %v90
  %v1117 = vunpack.c.l.b16 %v91
  %v1118 = vunpack.c.h.b16 %v91
  %v1119 = vunpack.c.l.b16 %v92
  %v1120 = vunpack.c.h.b16 %v92
  %v1121 = vunpack.c.l.b16 %v93
  %v1122 = vunpack.c.h.b16 %v93
  %v1123 = vunpack.c.l.b16 %v94
  %v1124 = vunpack.c.h.b16 %v94
  %v1125 = vunpack.c.l.b16 %v95
  %v1126 = vunpack.c.h.b16 %v95
  %v1127 = vunpack.c.l.b16 %v96
  %v1128 = vunpack.c.h.b16 %v96
  %v1129 = vpack.c.b16 %v1009, %v1001
  %v1130 = vpack.c.b16 %v1010, %v1002
  %v1131 = vpack.c.b16 %v1011, %v1003
  %v1132 = vpack.c.b16 %v1012, %v1004
  %v1133 = vpack.c.b16 %v1013, %v1005
  %v1134 = vpack.c.b16 %v1014, %v1006
  %v1135 = vpack.c.b16 %v1015, %v1007
  %v1136 = vpack.c.b16 %v1016, %v1008
  %v1137 = vpack.c.b16 %v1025, %v1017
  %v1138 = vpack.c.b16 %v1026, %v1018
  %v1139 = vpack.c.b16 %v1027, %v1019
  %v1140 = vpack.c.b16 %v1028, %v1020
  %v1141 = vpack.c.b16 %v1029, %v1021
  %v1142 = vpack.c.b16 %v1030, %v1022
  %v1143 = vpack.c.b16 %v1031, %v1023
  %v1144 = vpack.c.b16 %v1032, %v1024
  %v1145 = vpack.c.b16 %v1041, %v1033
  %v1146 = vpack.c.b16 %v1042, %v1034
  %v1147 = vpack.c.b16 %v1043, %v1035
  %v1148 = vpack.c.b16 %v1044, %v1036
  %v1149 = vpack.c.b16 %v1045, %v1037
  %v1150 = vpack.c.b16 %v1046, %v1038
  %v1151 = vpack.c.b16 %v1047, %v1039
  %v1152 = vpack.c.b16 %v1048, %v1040
  %v1153 = vpack.c.b16 %v1057, %v1049
  %v1154 = vpack.c.b16 %v1058, %v1050
  %v1155 = vpack.c.b16 %v1059, %v1051
  %v1156 = vpack.c.b16 %v1060, %v1052
  %v1157 = vpack.c.b16 %v1061, %v1053
  %v1158 = vpack.c.b16 %v1062, %v1054
  %v1159 = vpack.c.b16 %v1063, %v1055
  %v1160 = vpack.c.b16 %v1064, %v1056
  %v1161 = vpack.c.b16 %v1073, %v1065
  %v1162 = vpack.c.b16 %v1074, %v1066
  %v1163 = vpack.c.b16 %v1075, %v1067
  %v1164 = vpack.c.b16 %v1076, %v1068
  %v1165 = vpack.c.b16 %v1077, %v1069
  %v1166 = vpack.c.b16 %v1078, %v1070
  %v1167 = vpack.c.b16 %v1079, %v1071
  %v1168 = vpack.c.b16 %v1080, %v1072
  %v1169 = vpack.c.b16 %v1089, %v1081
  %v1170 = vpack.c.b16 %v1090, %v1082
  %v1171 = vpack.c.b16 %v1091, %v1083
  %v1172 = vpack.c.b16 %v1092, %v1084
  %v1173 = vpack.c.b16 %v1093, %v1085
  %v1174 = vpack.c.b16 %v1094, %v1086
  %v1175 = vpack.c.b16 %v1095, %v1087
  %v1176 = vpack.c.b16 %v1096, %v1088
  %v1177 = vpack.c.b16 %v1105, %v1097
  %v1178 = vpack.c.b16 %v1106, %v1098
  %v1179 = vpack.c.b16 %v1107, %v1099
  %v1180 = vpack.c.b16 %v1108, %v1100
  %v1181 = vpack.c.b16 %v1109, %v1101
  %v1182 = vpack.c.b16 %v1110, %v1102
  %v1183 = vpack.c.b16 %v1111, %v1103
  %v1184 = vpack.c.b16 %v1112, %v1104
  %v1185 = vpack.c.b16 %v1121, %v1113
  %v1186 = vpack.c.b16 %v1122, %v1114
  %v1187 = vpack.c.b16 %v1123, %v1115
  %v1188 = vpack.c.b16 %v1124, %v1116
  %v1189 = vpack.c.b16 %v1125, %v1117
  %v1190 = vpack.c.b16 %v1126, %v1118
  %v1191 = vpack.c.b16 %v1127, %v1119
  %v1192 = vpack.c.b16 %v1128, %v1120
  %1257 = vmatprep.subr.bf16.mxu0 %v1186
  %1258 = vmatpush1.bf16.msra.mxu0 %v1185
  %1259 = vmatprep.subr.bf16.mxu0 %v1178
  %1260 = vmatpush1.bf16.msra.mxu0 %v1177
  %1261 = vmatprep.subr.bf16.mxu0 %v1170
  %1262 = vmatpush1.bf16.msra.mxu0 %v1169
  %1263 = vmatprep.subr.bf16.mxu0 %v1162
  %1264 = vmatpush1.bf16.msra.mxu0 %v1161
  %1265 = vmatprep.subr.bf16.mxu0 %v1154
  %1266 = vmatpush1.bf16.msra.mxu0 %v1153
  %1267 = vmatprep.subr.bf16.mxu0 %v1146
  %1268 = vmatpush1.bf16.msra.mxu0 %v1145
  %1269 = vmatprep.subr.bf16.mxu0 %v1138
  %1270 = vmatpush1.bf16.msra.mxu0 %v1137
  %1271 = vmatprep.subr.bf16.mxu0 %v1130
  %1272 = vmatpush1.bf16.msra.mxu0 %v1129
  %1273 = vmatprep.subr.bf16.mxu0 0
  %1274 = vmatpush2.bf16.msra.mxu0 0
  %1275 = vmatprep.subr.bf16.mxu0 0
  %1276 = vmatpush2.bf16.msra.mxu0 0
  %1277 = vmatprep.subr.bf16.mxu0 0
  %1278 = vmatpush2.bf16.msra.mxu0 0
  %1279 = vmatprep.subr.bf16.mxu0 0
  %1280 = vmatpush2.bf16.msra.mxu0 0
  %1281 = vmatprep.subr.bf16.mxu0 0
  %1282 = vmatpush2.bf16.msra.mxu0 0
  %1283 = vmatprep.subr.bf16.mxu0 0
  %1284 = vmatpush2.bf16.msra.mxu0 0
  %1285 = vmatprep.subr.bf16.mxu0 0
  %1286 = vmatpush2.bf16.msra.mxu0 0
  %1287 = vmatprep.subr.bf16.mxu0 0
  %1288 = vmatpush2.bf16.msra.mxu0 0
  %1289 = vmatprep.mubr.bf16.mxu0 0
  %1290 = vmatmul.mubr.bf16.gmra.mxu0 %v925
  %v1291 = vpop.f32.mrf.mxu0
  %v1292 = vadd.f32 %v564, %v1291
  %v1293 = vpop.f32.mrf.mxu0
  %v1294 = vadd.f32 %v566, %v1293
  %v1295 = vpop.f32.mrf.mxu0
  %v1296 = vadd.f32 %v568, %v1295
  %v1297 = vpop.f32.mrf.mxu0
  %v1298 = vadd.f32 %v570, %v1297
  %1299 = vmatprep.mubr.bf16.mxu0 0
  %1300 = vmatmul.mubr.bf16.gmra.mxu0 %v926
  %v1301 = vpop.f32.mrf.mxu0
  %v1302 = vadd.f32 %v574, %v1301
  %v1303 = vpop.f32.mrf.mxu0
  %v1304 = vadd.f32 %v576, %v1303
  %v1305 = vpop.f32.mrf.mxu0
  %v1306 = vadd.f32 %v578, %v1305
  %v1307 = vpop.f32.mrf.mxu0
  %v1308 = vadd.f32 %v580, %v1307
  %1309 = vmatprep.mubr.bf16.mxu0 0
  %1310 = vmatmul.mubr.bf16.gmra.mxu0 %v927
  %v1311 = vpop.f32.mrf.mxu0
  %v1312 = vadd.f32 %v584, %v1311
  %v1313 = vpop.f32.mrf.mxu0
  %v1314 = vadd.f32 %v586, %v1313
  %v1315 = vpop.f32.mrf.mxu0
  %v1316 = vadd.f32 %v588, %v1315
  %v1317 = vpop.f32.mrf.mxu0
  %v1318 = vadd.f32 %v590, %v1317
  %1319 = vmatprep.mubr.bf16.mxu0 0
  %1320 = vmatmul.mubr.bf16.gmra.mxu0 %v928
  %v1321 = vpop.f32.mrf.mxu0
  %v1322 = vadd.f32 %v594, %v1321
  %v1323 = vpop.f32.mrf.mxu0
  %v1324 = vadd.f32 %v596, %v1323
  %v1325 = vpop.f32.mrf.mxu0
  %v1326 = vadd.f32 %v598, %v1325
  %v1327 = vpop.f32.mrf.mxu0
  %v1328 = vadd.f32 %v600, %v1327
  %1329 = vmatprep.mubr.bf16.mxu0 0
  %1330 = vmatmul.mubr.bf16.gmra.mxu0 %v929
  %v1331 = vpop.f32.mrf.mxu0
  %v1332 = vadd.f32 %v604, %v1331
  %v1333 = vpop.f32.mrf.mxu0
  %v1334 = vadd.f32 %v606, %v1333
  %v1335 = vpop.f32.mrf.mxu0
  %v1336 = vadd.f32 %v608, %v1335
  %v1337 = vpop.f32.mrf.mxu0
  %v1338 = vadd.f32 %v610, %v1337
  %1339 = vmatprep.mubr.bf16.mxu0 0
  %1340 = vmatmul.mubr.bf16.gmra.mxu0 %v930
  %v1341 = vpop.f32.mrf.mxu0
  %v1342 = vadd.f32 %v614, %v1341
  %v1343 = vpop.f32.mrf.mxu0
  %v1344 = vadd.f32 %v616, %v1343
  %v1345 = vpop.f32.mrf.mxu0
  %v1346 = vadd.f32 %v618, %v1345
  %v1347 = vpop.f32.mrf.mxu0
  %v1348 = vadd.f32 %v620, %v1347
  %1349 = vdwg.mxu0
  %1350 = vmatprep.subr.bf16.mxu0 %v1188
  %1351 = vmatpush1.bf16.msra.mxu0 %v1187
  %1352 = vmatprep.subr.bf16.mxu0 %v1180
  %1353 = vmatpush1.bf16.msra.mxu0 %v1179
  %1354 = vmatprep.subr.bf16.mxu0 %v1172
  %1355 = vmatpush1.bf16.msra.mxu0 %v1171
  %1356 = vmatprep.subr.bf16.mxu0 %v1164
  %1357 = vmatpush1.bf16.msra.mxu0 %v1163
  %1358 = vmatprep.subr.bf16.mxu0 %v1156
  %1359 = vmatpush1.bf16.msra.mxu0 %v1155
  %1360 = vmatprep.subr.bf16.mxu0 %v1148
  %1361 = vmatpush1.bf16.msra.mxu0 %v1147
  %1362 = vmatprep.subr.bf16.mxu0 %v1140
  %1363 = vmatpush1.bf16.msra.mxu0 %v1139
  %1364 = vmatprep.subr.bf16.mxu0 %v1132
  %1365 = vmatpush1.bf16.msra.mxu0 %v1131
  %1366 = vmatprep.subr.bf16.mxu0 0
  %1367 = vmatpush2.bf16.msra.mxu0 0
  %1368 = vmatprep.subr.bf16.mxu0 0
  %1369 = vmatpush2.bf16.msra.mxu0 0
  %1370 = vmatprep.subr.bf16.mxu0 0
  %1371 = vmatpush2.bf16.msra.mxu0 0
  %1372 = vmatprep.subr.bf16.mxu0 0
  %1373 = vmatpush2.bf16.msra.mxu0 0
  %1374 = vmatprep.subr.bf16.mxu0 0
  %1375 = vmatpush2.bf16.msra.mxu0 0
  %1376 = vmatprep.subr.bf16.mxu0 0
  %1377 = vmatpush2.bf16.msra.mxu0 0
  %1378 = vmatprep.subr.bf16.mxu0 0
  %1379 = vmatpush2.bf16.msra.mxu0 0
  %1380 = vmatprep.subr.bf16.mxu0 0
  %1381 = vmatpush2.bf16.msra.mxu0 0
  %1382 = vmatprep.mubr.bf16.mxu0 0
  %1383 = vmatmul.mubr.bf16.gmra.mxu0 %v925
  %v1384 = vpop.f32.mrf.mxu0
  %v1385 = vadd.f32 %v657, %v1384
  %v1386 = vpop.f32.mrf.mxu0
  %v1387 = vadd.f32 %v659, %v1386
  %v1388 = vpop.f32.mrf.mxu0
  %v1389 = vadd.f32 %v661, %v1388
  %v1390 = vpop.f32.mrf.mxu0
  %v1391 = vadd.f32 %v663, %v1390
  %1392 = vmatprep.mubr.bf16.mxu0 0
  %1393 = vmatmul.mubr.bf16.gmra.mxu0 %v926
  %v1394 = vpop.f32.mrf.mxu0
  %v1395 = vadd.f32 %v667, %v1394
  %v1396 = vpop.f32.mrf.mxu0
  %v1397 = vadd.f32 %v669, %v1396
  %v1398 = vpop.f32.mrf.mxu0
  %v1399 = vadd.f32 %v671, %v1398
  %v1400 = vpop.f32.mrf.mxu0
  %v1401 = vadd.f32 %v673, %v1400
  %1402 = vmatprep.mubr.bf16.mxu0 0
  %1403 = vmatmul.mubr.bf16.gmra.mxu0 %v927
  %v1404 = vpop.f32.mrf.mxu0
  %v1405 = vadd.f32 %v677, %v1404
  %v1406 = vpop.f32.mrf.mxu0
  %v1407 = vadd.f32 %v679, %v1406
  %v1408 = vpop.f32.mrf.mxu0
  %v1409 = vadd.f32 %v681, %v1408
  %v1410 = vpop.f32.mrf.mxu0
  %v1411 = vadd.f32 %v683, %v1410
  %1412 = vmatprep.mubr.bf16.mxu0 0
  %1413 = vmatmul.mubr.bf16.gmra.mxu0 %v928
  %v1414 = vpop.f32.mrf.mxu0
  %v1415 = vadd.f32 %v687, %v1414
  %v1416 = vpop.f32.mrf.mxu0
  %v1417 = vadd.f32 %v689, %v1416
  %v1418 = vpop.f32.mrf.mxu0
  %v1419 = vadd.f32 %v691, %v1418
  %v1420 = vpop.f32.mrf.mxu0
  %v1421 = vadd.f32 %v693, %v1420
  %1422 = vmatprep.mubr.bf16.mxu0 0
  %1423 = vmatmul.mubr.bf16.gmra.mxu0 %v929
  %v1424 = vpop.f32.mrf.mxu0
  %v1425 = vadd.f32 %v697, %v1424
  %v1426 = vpop.f32.mrf.mxu0
  %v1427 = vadd.f32 %v699, %v1426
  %v1428 = vpop.f32.mrf.mxu0
  %v1429 = vadd.f32 %v701, %v1428
  %v1430 = vpop.f32.mrf.mxu0
  %v1431 = vadd.f32 %v703, %v1430
  %1432 = vmatprep.mubr.bf16.mxu0 0
  %1433 = vmatmul.mubr.bf16.gmra.mxu0 %v930
  %v1434 = vpop.f32.mrf.mxu0
  %v1435 = vadd.f32 %v707, %v1434
  %v1436 = vpop.f32.mrf.mxu0
  %v1437 = vadd.f32 %v709, %v1436
  %v1438 = vpop.f32.mrf.mxu0
  %v1439 = vadd.f32 %v711, %v1438
  %v1440 = vpop.f32.mrf.mxu0
  %v1441 = vadd.f32 %v713, %v1440
  %1442 = vdwg.mxu0
  %1443 = vmatprep.subr.bf16.mxu0 %v1190
  %1444 = vmatpush1.bf16.msra.mxu0 %v1189
  %1445 = vmatprep.subr.bf16.mxu0 %v1182
  %1446 = vmatpush1.bf16.msra.mxu0 %v1181
  %1447 = vmatprep.subr.bf16.mxu0 %v1174
  %1448 = vmatpush1.bf16.msra.mxu0 %v1173
  %1449 = vmatprep.subr.bf16.mxu0 %v1166
  %1450 = vmatpush1.bf16.msra.mxu0 %v1165
  %1451 = vmatprep.subr.bf16.mxu0 %v1158
  %1452 = vmatpush1.bf16.msra.mxu0 %v1157
  %1453 = vmatprep.subr.bf16.mxu0 %v1150
  %1454 = vmatpush1.bf16.msra.mxu0 %v1149
  %1455 = vmatprep.subr.bf16.mxu0 %v1142
  %1456 = vmatpush1.bf16.msra.mxu0 %v1141
  %1457 = vmatprep.subr.bf16.mxu0 %v1134
  %1458 = vmatpush1.bf16.msra.mxu0 %v1133
  %1459 = vmatprep.subr.bf16.mxu0 0
  %1460 = vmatpush2.bf16.msra.mxu0 0
  %1461 = vmatprep.subr.bf16.mxu0 0
  %1462 = vmatpush2.bf16.msra.mxu0 0
  %1463 = vmatprep.subr.bf16.mxu0 0
  %1464 = vmatpush2.bf16.msra.mxu0 0
  %1465 = vmatprep.subr.bf16.mxu0 0
  %1466 = vmatpush2.bf16.msra.mxu0 0
  %1467 = vmatprep.subr.bf16.mxu0 0
  %1468 = vmatpush2.bf16.msra.mxu0 0
  %1469 = vmatprep.subr.bf16.mxu0 0
  %1470 = vmatpush2.bf16.msra.mxu0 0
  %1471 = vmatprep.subr.bf16.mxu0 0
  %1472 = vmatpush2.bf16.msra.mxu0 0
  %1473 = vmatprep.subr.bf16.mxu0 0
  %1474 = vmatpush2.bf16.msra.mxu0 0
  %1475 = vmatprep.mubr.bf16.mxu0 0
  %1476 = vmatmul.mubr.bf16.gmra.mxu0 %v925
  %v1477 = vpop.f32.mrf.mxu0
  %v1478 = vadd.f32 %v750, %v1477
  %v1479 = vpop.f32.mrf.mxu0
  %v1480 = vadd.f32 %v752, %v1479
  %v1481 = vpop.f32.mrf.mxu0
  %v1482 = vadd.f32 %v754, %v1481
  %v1483 = vpop.f32.mrf.mxu0
  %v1484 = vadd.f32 %v756, %v1483
  %1485 = vmatprep.mubr.bf16.mxu0 0
  %1486 = vmatmul.mubr.bf16.gmra.mxu0 %v926
  %v1487 = vpop.f32.mrf.mxu0
  %v1488 = vadd.f32 %v760, %v1487
  %v1489 = vpop.f32.mrf.mxu0
  %v1490 = vadd.f32 %v762, %v1489
  %v1491 = vpop.f32.mrf.mxu0
  %v1492 = vadd.f32 %v764, %v1491
  %v1493 = vpop.f32.mrf.mxu0
  %v1494 = vadd.f32 %v766, %v1493
  %1495 = vmatprep.mubr.bf16.mxu0 0
  %1496 = vmatmul.mubr.bf16.gmra.mxu0 %v927
  %v1497 = vpop.f32.mrf.mxu0
  %v1498 = vadd.f32 %v770, %v1497
  %v1499 = vpop.f32.mrf.mxu0
  %v1500 = vadd.f32 %v772, %v1499
  %v1501 = vpop.f32.mrf.mxu0
  %v1502 = vadd.f32 %v774, %v1501
  %v1503 = vpop.f32.mrf.mxu0
  %v1504 = vadd.f32 %v776, %v1503
  %1505 = vmatprep.mubr.bf16.mxu0 0
  %1506 = vmatmul.mubr.bf16.gmra.mxu0 %v928
  %v1507 = vpop.f32.mrf.mxu0
  %v1508 = vadd.f32 %v780, %v1507
  %v1509 = vpop.f32.mrf.mxu0
  %v1510 = vadd.f32 %v782, %v1509
  %v1511 = vpop.f32.mrf.mxu0
  %v1512 = vadd.f32 %v784, %v1511
  %v1513 = vpop.f32.mrf.mxu0
  %v1514 = vadd.f32 %v786, %v1513
  %1515 = vmatprep.mubr.bf16.mxu0 0
  %1516 = vmatmul.mubr.bf16.gmra.mxu0 %v929
  %v1517 = vpop.f32.mrf.mxu0
  %v1518 = vadd.f32 %v790, %v1517
  %v1519 = vpop.f32.mrf.mxu0
  %v1520 = vadd.f32 %v792, %v1519
  %v1521 = vpop.f32.mrf.mxu0
  %v1522 = vadd.f32 %v794, %v1521
  %v1523 = vpop.f32.mrf.mxu0
  %v1524 = vadd.f32 %v796, %v1523
  %1525 = vmatprep.mubr.bf16.mxu0 0
  %1526 = vmatmul.mubr.bf16.gmra.mxu0 %v930
  %v1527 = vpop.f32.mrf.mxu0
  %v1528 = vadd.f32 %v800, %v1527
  %v1529 = vpop.f32.mrf.mxu0
  %v1530 = vadd.f32 %v802, %v1529
  %v1531 = vpop.f32.mrf.mxu0
  %v1532 = vadd.f32 %v804, %v1531
  %v1533 = vpop.f32.mrf.mxu0
  %v1534 = vadd.f32 %v806, %v1533
  %1535 = vdwg.mxu0
  %1536 = vmatprep.subr.bf16.mxu0 %v1192
  %1537 = vmatpush1.bf16.msra.mxu0 %v1191
  %1538 = vmatprep.subr.bf16.mxu0 %v1184
  %1539 = vmatpush1.bf16.msra.mxu0 %v1183
  %1540 = vmatprep.subr.bf16.mxu0 %v1176
  %1541 = vmatpush1.bf16.msra.mxu0 %v1175
  %1542 = vmatprep.subr.bf16.mxu0 %v1168
  %1543 = vmatpush1.bf16.msra.mxu0 %v1167
  %1544 = vmatprep.subr.bf16.mxu0 %v1160
  %1545 = vmatpush1.bf16.msra.mxu0 %v1159
  %1546 = vmatprep.subr.bf16.mxu0 %v1152
  %1547 = vmatpush1.bf16.msra.mxu0 %v1151
  %1548 = vmatprep.subr.bf16.mxu0 %v1144
  %1549 = vmatpush1.bf16.msra.mxu0 %v1143
  %1550 = vmatprep.subr.bf16.mxu0 %v1136
  %1551 = vmatpush1.bf16.msra.mxu0 %v1135
  %1552 = vmatprep.subr.bf16.mxu0 0
  %1553 = vmatpush2.bf16.msra.mxu0 0
  %1554 = vmatprep.subr.bf16.mxu0 0
  %1555 = vmatpush2.bf16.msra.mxu0 0
  %1556 = vmatprep.subr.bf16.mxu0 0
  %1557 = vmatpush2.bf16.msra.mxu0 0
  %1558 = vmatprep.subr.bf16.mxu0 0
  %1559 = vmatpush2.bf16.msra.mxu0 0
  %1560 = vmatprep.subr.bf16.mxu0 0
  %1561 = vmatpush2.bf16.msra.mxu0 0
  %1562 = vmatprep.subr.bf16.mxu0 0
  %1563 = vmatpush2.bf16.msra.mxu0 0
  %1564 = vmatprep.subr.bf16.mxu0 0
  %1565 = vmatpush2.bf16.msra.mxu0 0
  %1566 = vmatprep.subr.bf16.mxu0 0
  %1567 = vmatpush2.bf16.msra.mxu0 0
  %1568 = vmatprep.mubr.bf16.mxu0 0
  %1569 = vmatmul.mubr.bf16.gmra.mxu0 %v925
  %v1570 = vpop.f32.mrf.mxu0
  %v1571 = vadd.f32 %v843, %v1570
  %v1572 = vpop.f32.mrf.mxu0
  %v1573 = vadd.f32 %v845, %v1572
  %v1574 = vpop.f32.mrf.mxu0
  %v1575 = vadd.f32 %v847, %v1574
  %v1576 = vpop.f32.mrf.mxu0
  %v1577 = vadd.f32 %v849, %v1576
  %1578 = vmatprep.mubr.bf16.mxu0 0
  %1579 = vmatmul.mubr.bf16.gmra.mxu0 %v926
  %v1580 = vpop.f32.mrf.mxu0
  %v1581 = vadd.f32 %v853, %v1580
  %v1582 = vpop.f32.mrf.mxu0
  %v1583 = vadd.f32 %v855, %v1582
  %v1584 = vpop.f32.mrf.mxu0
  %v1585 = vadd.f32 %v857, %v1584
  %v1586 = vpop.f32.mrf.mxu0
  %v1587 = vadd.f32 %v859, %v1586
  %1588 = vmatprep.mubr.bf16.mxu0 0
  %1589 = vmatmul.mubr.bf16.gmra.mxu0 %v927
  %v1590 = vpop.f32.mrf.mxu0
  %v1591 = vadd.f32 %v863, %v1590
  %v1592 = vpop.f32.mrf.mxu0
  %v1593 = vadd.f32 %v865, %v1592
  %v1594 = vpop.f32.mrf.mxu0
  %v1595 = vadd.f32 %v867, %v1594
  %v1596 = vpop.f32.mrf.mxu0
  %v1597 = vadd.f32 %v869, %v1596
  %1598 = vmatprep.mubr.bf16.mxu0 0
  %1599 = vmatmul.mubr.bf16.gmra.mxu0 %v928
  %v1600 = vpop.f32.mrf.mxu0
  %v1601 = vadd.f32 %v873, %v1600
  %v1602 = vpop.f32.mrf.mxu0
  %v1603 = vadd.f32 %v875, %v1602
  %v1604 = vpop.f32.mrf.mxu0
  %v1605 = vadd.f32 %v877, %v1604
  %v1606 = vpop.f32.mrf.mxu0
  %v1607 = vadd.f32 %v879, %v1606
  %1608 = vmatprep.mubr.bf16.mxu0 0
  %1609 = vmatmul.mubr.bf16.gmra.mxu0 %v929
  %v1610 = vpop.f32.mrf.mxu0
  %v1611 = vadd.f32 %v883, %v1610
  %v1612 = vpop.f32.mrf.mxu0
  %v1613 = vadd.f32 %v885, %v1612
  %v1614 = vpop.f32.mrf.mxu0
  %v1615 = vadd.f32 %v887, %v1614
  %v1616 = vpop.f32.mrf.mxu0
  %v1617 = vadd.f32 %v889, %v1616
  %1618 = vmatprep.mubr.bf16.mxu0 0
  %1619 = vmatmul.mubr.bf16.gmra.mxu0 %v930
  %v1620 = vpop.f32.mrf.mxu0
  %v1621 = vadd.f32 %v893, %v1620
  %v1622 = vpop.f32.mrf.mxu0
  %v1623 = vadd.f32 %v895, %v1622
  %v1624 = vpop.f32.mrf.mxu0
  %v1625 = vadd.f32 %v897, %v1624
  %v1626 = vpop.f32.mrf.mxu0
  %v1627 = vadd.f32 %v899, %v1626
  %1628 = vdwg.mxu0
  %v1629 = vld [vmem:[%s4] sm:$0xff]
  %v1631 = vlaneseq
  %v1632 = vshrl.u32 %v1631, 7
  %v1633 = vsub.s32 0, %v1632
  %v1634 = vrot.slane %v1629, %v1633
  %v1635 = vlaneseq
  %v1636 = vshrl.u32 %v1635, 7
  %v1637 = vsub.s32 1, %v1636
  %v1638 = vrot.slane %v1629, %v1637
  %v1639 = vlaneseq
  %v1640 = vshrl.u32 %v1639, 7
  %v1641 = vsub.s32 2, %v1640
  %v1642 = vrot.slane %v1629, %v1641
  %v1643 = vlaneseq
  %v1644 = vshrl.u32 %v1643, 7
  %v1645 = vsub.s32 3, %v1644
  %v1646 = vrot.slane %v1629, %v1645
  %v1647 = vlaneseq
  %v1648 = vshrl.u32 %v1647, 7
  %v1649 = vsub.s32 4, %v1648
  %v1650 = vrot.slane %v1629, %v1649
  %v1651 = vlaneseq
  %v1652 = vshrl.u32 %v1651, 7
  %v1653 = vsub.s32 5, %v1652
  %v1654 = vrot.slane %v1629, %v1653
  %v1655 = vlaneseq
  %v1656 = vshrl.u32 %v1655, 7
  %v1657 = vsub.s32 6, %v1656
  %v1658 = vrot.slane %v1629, %v1657
  %v1659 = vlaneseq
  %v1660 = vshrl.u32 %v1659, 7
  %v1661 = vsub.s32 7, %v1660
  %v1662 = vrot.slane %v1629, %v1661
  %v1671 = vadd.f32 %v1292, %v1634
  %v1672 = vadd.f32 %v1294, %v1638
  %v1673 = vadd.f32 %v1385, %v1642
  %v1674 = vadd.f32 %v1387, %v1646
  %v1675 = vadd.f32 %v1478, %v1650
  %v1676 = vadd.f32 %v1480, %v1654
  %v1677 = vadd.f32 %v1571, %v1658
  %v1678 = vadd.f32 %v1573, %v1662
  %v1679 = vadd.f32 %v1296, %v1634
  %v1680 = vadd.f32 %v1298, %v1638
  %v1681 = vadd.f32 %v1389, %v1642
  %v1682 = vadd.f32 %v1391, %v1646
  %v1683 = vadd.f32 %v1482, %v1650
  %v1684 = vadd.f32 %v1484, %v1654
  %v1685 = vadd.f32 %v1575, %v1658
  %v1686 = vadd.f32 %v1577, %v1662
  %v1687 = vadd.f32 %v1302, %v1634
  %v1688 = vadd.f32 %v1304, %v1638
  %v1689 = vadd.f32 %v1395, %v1642
  %v1690 = vadd.f32 %v1397, %v1646
  %v1691 = vadd.f32 %v1488, %v1650
  %v1692 = vadd.f32 %v1490, %v1654
  %v1693 = vadd.f32 %v1581, %v1658
  %v1694 = vadd.f32 %v1583, %v1662
  %v1695 = vadd.f32 %v1306, %v1634
  %v1696 = vadd.f32 %v1308, %v1638
  %v1697 = vadd.f32 %v1399, %v1642
  %v1698 = vadd.f32 %v1401, %v1646
  %v1699 = vadd.f32 %v1492, %v1650
  %v1700 = vadd.f32 %v1494, %v1654
  %v1701 = vadd.f32 %v1585, %v1658
  %v1702 = vadd.f32 %v1587, %v1662
  %v1703 = vadd.f32 %v1312, %v1634
  %v1704 = vadd.f32 %v1314, %v1638
  %v1705 = vadd.f32 %v1405, %v1642
  %v1706 = vadd.f32 %v1407, %v1646
  %v1707 = vadd.f32 %v1498, %v1650
  %v1708 = vadd.f32 %v1500, %v1654
  %v1709 = vadd.f32 %v1591, %v1658
  %v1710 = vadd.f32 %v1593, %v1662
  %v1711 = vadd.f32 %v1316, %v1634
  %v1712 = vadd.f32 %v1318, %v1638
  %v1713 = vadd.f32 %v1409, %v1642
  %v1714 = vadd.f32 %v1411, %v1646
  %v1715 = vadd.f32 %v1502, %v1650
  %v1716 = vadd.f32 %v1504, %v1654
  %v1717 = vadd.f32 %v1595, %v1658
  %v1718 = vadd.f32 %v1597, %v1662
  %v1719 = vadd.f32 %v1322, %v1634
  %v1720 = vadd.f32 %v1324, %v1638
  %v1721 = vadd.f32 %v1415, %v1642
  %v1722 = vadd.f32 %v1417, %v1646
  %v1723 = vadd.f32 %v1508, %v1650
  %v1724 = vadd.f32 %v1510, %v1654
  %v1725 = vadd.f32 %v1601, %v1658
  %v1726 = vadd.f32 %v1603, %v1662
  %v1727 = vadd.f32 %v1326, %v1634
  %v1728 = vadd.f32 %v1328, %v1638
  %v1729 = vadd.f32 %v1419, %v1642
  %v1730 = vadd.f32 %v1421, %v1646
  %v1731 = vadd.f32 %v1512, %v1650
  %v1732 = vadd.f32 %v1514, %v1654
  %v1733 = vadd.f32 %v1605, %v1658
  %v1734 = vadd.f32 %v1607, %v1662
  %v1735 = vadd.f32 %v1332, %v1634
  %v1736 = vadd.f32 %v1334, %v1638
  %v1737 = vadd.f32 %v1425, %v1642
  %v1738 = vadd.f32 %v1427, %v1646
  %v1739 = vadd.f32 %v1518, %v1650
  %v1740 = vadd.f32 %v1520, %v1654
  %v1741 = vadd.f32 %v1611, %v1658
  %v1742 = vadd.f32 %v1613, %v1662
  %v1743 = vadd.f32 %v1336, %v1634
  %v1744 = vadd.f32 %v1338, %v1638
  %v1745 = vadd.f32 %v1429, %v1642
  %v1746 = vadd.f32 %v1431, %v1646
  %v1747 = vadd.f32 %v1522, %v1650
  %v1748 = vadd.f32 %v1524, %v1654
  %v1749 = vadd.f32 %v1615, %v1658
  %v1750 = vadd.f32 %v1617, %v1662
  %v1751 = vadd.f32 %v1342, %v1634
  %v1752 = vadd.f32 %v1344, %v1638
  %v1753 = vadd.f32 %v1435, %v1642
  %v1754 = vadd.f32 %v1437, %v1646
  %v1755 = vadd.f32 %v1528, %v1650
  %v1756 = vadd.f32 %v1530, %v1654
  %v1757 = vadd.f32 %v1621, %v1658
  %v1758 = vadd.f32 %v1623, %v1662
  %v1759 = vadd.f32 %v1346, %v1634
  %v1760 = vadd.f32 %v1348, %v1638
  %v1761 = vadd.f32 %v1439, %v1642
  %v1762 = vadd.f32 %v1441, %v1646
  %v1763 = vadd.f32 %v1532, %v1650
  %v1764 = vadd.f32 %v1534, %v1654
  %v1765 = vadd.f32 %v1625, %v1658
  %v1766 = vadd.f32 %v1627, %v1662
  %v1767 = vpack.c.bf16 %v1679, %v1671
  %v1768 = vpack.c.bf16 %v1680, %v1672
  %v1769 = vpack.c.bf16 %v1681, %v1673
  %v1770 = vpack.c.bf16 %v1682, %v1674
  %v1771 = vpack.c.bf16 %v1683, %v1675
  %v1772 = vpack.c.bf16 %v1684, %v1676
  %v1773 = vpack.c.bf16 %v1685, %v1677
  %v1774 = vpack.c.bf16 %v1686, %v1678
  %v1775 = vpack.c.bf16 %v1695, %v1687
  %v1776 = vpack.c.bf16 %v1696, %v1688
  %v1777 = vpack.c.bf16 %v1697, %v1689
  %v1778 = vpack.c.bf16 %v1698, %v1690
  %v1779 = vpack.c.bf16 %v1699, %v1691
  %v1780 = vpack.c.bf16 %v1700, %v1692
  %v1781 = vpack.c.bf16 %v1701, %v1693
  %v1782 = vpack.c.bf16 %v1702, %v1694
  %v1783 = vpack.c.bf16 %v1711, %v1703
  %v1784 = vpack.c.bf16 %v1712, %v1704
  %v1785 = vpack.c.bf16 %v1713, %v1705
  %v1786 = vpack.c.bf16 %v1714, %v1706
  %v1787 = vpack.c.bf16 %v1715, %v1707
  %v1788 = vpack.c.bf16 %v1716, %v1708
  %v1789 = vpack.c.bf16 %v1717, %v1709
  %v1790 = vpack.c.bf16 %v1718, %v1710
  %v1791 = vpack.c.bf16 %v1727, %v1719
  %v1792 = vpack.c.bf16 %v1728, %v1720
  %v1793 = vpack.c.bf16 %v1729, %v1721
  %v1794 = vpack.c.bf16 %v1730, %v1722
  %v1795 = vpack.c.bf16 %v1731, %v1723
  %v1796 = vpack.c.bf16 %v1732, %v1724
  %v1797 = vpack.c.bf16 %v1733, %v1725
  %v1798 = vpack.c.bf16 %v1734, %v1726
  %v1799 = vpack.c.bf16 %v1743, %v1735
  %v1800 = vpack.c.bf16 %v1744, %v1736
  %v1801 = vpack.c.bf16 %v1745, %v1737
  %v1802 = vpack.c.bf16 %v1746, %v1738
  %v1803 = vpack.c.bf16 %v1747, %v1739
  %v1804 = vpack.c.bf16 %v1748, %v1740
  %v1805 = vpack.c.bf16 %v1749, %v1741
  %v1806 = vpack.c.bf16 %v1750, %v1742
  %v1807 = vpack.c.bf16 %v1759, %v1751
  %v1808 = vpack.c.bf16 %v1760, %v1752
  %v1809 = vpack.c.bf16 %v1761, %v1753
  %v1810 = vpack.c.bf16 %v1762, %v1754
  %v1811 = vpack.c.bf16 %v1763, %v1755
  %v1812 = vpack.c.bf16 %v1764, %v1756
  %v1813 = vpack.c.bf16 %v1765, %v1757
  %v1814 = vpack.c.bf16 %v1766, %v1758
  %v1863 = vunpack.c.l.b16 %v1767
  %v1864 = vunpack.c.l.b16 %v1768
  %v1865 = vunpack.c.l.b16 %v1769
  %v1866 = vunpack.c.l.b16 %v1770
  %v1867 = vunpack.c.l.b16 %v1771
  %v1868 = vunpack.c.l.b16 %v1772
  %v1869 = vunpack.c.l.b16 %v1773
  %v1870 = vunpack.c.l.b16 %v1774
  %v1871 = vunpack.c.h.b16 %v1767
  %v1872 = vunpack.c.h.b16 %v1768
  %v1873 = vunpack.c.h.b16 %v1769
  %v1874 = vunpack.c.h.b16 %v1770
  %v1875 = vunpack.c.h.b16 %v1771
  %v1876 = vunpack.c.h.b16 %v1772
  %v1877 = vunpack.c.h.b16 %v1773
  %v1878 = vunpack.c.h.b16 %v1774
  %v1879 = vunpack.c.l.b16 %v1775
  %v1880 = vunpack.c.l.b16 %v1776
  %v1881 = vunpack.c.l.b16 %v1777
  %v1882 = vunpack.c.l.b16 %v1778
  %v1883 = vunpack.c.l.b16 %v1779
  %v1884 = vunpack.c.l.b16 %v1780
  %v1885 = vunpack.c.l.b16 %v1781
  %v1886 = vunpack.c.l.b16 %v1782
  %v1887 = vunpack.c.h.b16 %v1775
  %v1888 = vunpack.c.h.b16 %v1776
  %v1889 = vunpack.c.h.b16 %v1777
  %v1890 = vunpack.c.h.b16 %v1778
  %v1891 = vunpack.c.h.b16 %v1779
  %v1892 = vunpack.c.h.b16 %v1780
  %v1893 = vunpack.c.h.b16 %v1781
  %v1894 = vunpack.c.h.b16 %v1782
  %v1895 = vunpack.c.l.b16 %v1783
  %v1896 = vunpack.c.l.b16 %v1784
  %v1897 = vunpack.c.l.b16 %v1785
  %v1898 = vunpack.c.l.b16 %v1786
  %v1899 = vunpack.c.l.b16 %v1787
  %v1900 = vunpack.c.l.b16 %v1788
  %v1901 = vunpack.c.l.b16 %v1789
  %v1902 = vunpack.c.l.b16 %v1790
  %v1903 = vunpack.c.h.b16 %v1783
  %v1904 = vunpack.c.h.b16 %v1784
  %v1905 = vunpack.c.h.b16 %v1785
  %v1906 = vunpack.c.h.b16 %v1786
  %v1907 = vunpack.c.h.b16 %v1787
  %v1908 = vunpack.c.h.b16 %v1788
  %v1909 = vunpack.c.h.b16 %v1789
  %v1910 = vunpack.c.h.b16 %v1790
  %v1911 = vunpack.c.l.b16 %v1791
  %v1912 = vunpack.c.l.b16 %v1792
  %v1913 = vunpack.c.l.b16 %v1793
  %v1914 = vunpack.c.l.b16 %v1794
  %v1915 = vunpack.c.l.b16 %v1795
  %v1916 = vunpack.c.l.b16 %v1796
  %v1917 = vunpack.c.l.b16 %v1797
  %v1918 = vunpack.c.l.b16 %v1798
  %v1919 = vunpack.c.h.b16 %v1791
  %v1920 = vunpack.c.h.b16 %v1792
  %v1921 = vunpack.c.h.b16 %v1793
  %v1922 = vunpack.c.h.b16 %v1794
  %v1923 = vunpack.c.h.b16 %v1795
  %v1924 = vunpack.c.h.b16 %v1796
  %v1925 = vunpack.c.h.b16 %v1797
  %v1926 = vunpack.c.h.b16 %v1798
  %v1927 = vunpack.c.l.b16 %v1799
  %v1928 = vunpack.c.l.b16 %v1800
  %v1929 = vunpack.c.l.b16 %v1801
  %v1930 = vunpack.c.l.b16 %v1802
  %v1931 = vunpack.c.l.b16 %v1803
  %v1932 = vunpack.c.l.b16 %v1804
  %v1933 = vunpack.c.l.b16 %v1805
  %v1934 = vunpack.c.l.b16 %v1806
  %v1935 = vunpack.c.h.b16 %v1799
  %v1936 = vunpack.c.h.b16 %v1800
  %v1937 = vunpack.c.h.b16 %v1801
  %v1938 = vunpack.c.h.b16 %v1802
  %v1939 = vunpack.c.h.b16 %v1803
  %v1940 = vunpack.c.h.b16 %v1804
  %v1941 = vunpack.c.h.b16 %v1805
  %v1942 = vunpack.c.h.b16 %v1806
  %v1943 = vunpack.c.l.b16 %v1807
  %v1944 = vunpack.c.l.b16 %v1808
  %v1945 = vunpack.c.l.b16 %v1809
  %v1946 = vunpack.c.l.b16 %v1810
  %v1947 = vunpack.c.l.b16 %v1811
  %v1948 = vunpack.c.l.b16 %v1812
  %v1949 = vunpack.c.l.b16 %v1813
  %v1950 = vunpack.c.l.b16 %v1814
  %v1951 = vunpack.c.h.b16 %v1807
  %v1952 = vunpack.c.h.b16 %v1808
  %v1953 = vunpack.c.h.b16 %v1809
  %v1954 = vunpack.c.h.b16 %v1810
  %v1955 = vunpack.c.h.b16 %v1811
  %v1956 = vunpack.c.h.b16 %v1812
  %v1957 = vunpack.c.h.b16 %v1813
  %v1958 = vunpack.c.h.b16 %v1814
  %v1959 = vpack.c.b16 %v1864, %v1863
  %v1960 = vpack.c.b16 %v1866, %v1865
  %v1961 = vpack.c.b16 %v1868, %v1867
  %v1962 = vpack.c.b16 %v1870, %v1869
  %v1963 = vpack.c.b16 %v1872, %v1871
  %v1964 = vpack.c.b16 %v1874, %v1873
  %v1965 = vpack.c.b16 %v1876, %v1875
  %v1966 = vpack.c.b16 %v1878, %v1877
  %v1967 = vpack.c.b16 %v1880, %v1879
  %v1968 = vpack.c.b16 %v1882, %v1881
  %v1969 = vpack.c.b16 %v1884, %v1883
  %v1970 = vpack.c.b16 %v1886, %v1885
  %v1971 = vpack.c.b16 %v1888, %v1887
  %v1972 = vpack.c.b16 %v1890, %v1889
  %v1973 = vpack.c.b16 %v1892, %v1891
  %v1974 = vpack.c.b16 %v1894, %v1893
  %v1975 = vpack.c.b16 %v1896, %v1895
  %v1976 = vpack.c.b16 %v1898, %v1897
  %v1977 = vpack.c.b16 %v1900, %v1899
  %v1978 = vpack.c.b16 %v1902, %v1901
  %v1979 = vpack.c.b16 %v1904, %v1903
  %v1980 = vpack.c.b16 %v1906, %v1905
  %v1981 = vpack.c.b16 %v1908, %v1907
  %v1982 = vpack.c.b16 %v1910, %v1909
  %v1983 = vpack.c.b16 %v1912, %v1911
  %v1984 = vpack.c.b16 %v1914, %v1913
  %v1985 = vpack.c.b16 %v1916, %v1915
  %v1986 = vpack.c.b16 %v1918, %v1917
  %v1987 = vpack.c.b16 %v1920, %v1919
  %v1988 = vpack.c.b16 %v1922, %v1921
  %v1989 = vpack.c.b16 %v1924, %v1923
  %v1990 = vpack.c.b16 %v1926, %v1925
  %v1991 = vpack.c.b16 %v1928, %v1927
  %v1992 = vpack.c.b16 %v1930, %v1929
  %v1993 = vpack.c.b16 %v1932, %v1931
  %v1994 = vpack.c.b16 %v1934, %v1933
  %v1995 = vpack.c.b16 %v1936, %v1935
  %v1996 = vpack.c.b16 %v1938, %v1937
  %v1997 = vpack.c.b16 %v1940, %v1939
  %v1998 = vpack.c.b16 %v1942, %v1941
  %v1999 = vpack.c.b16 %v1944, %v1943
  %v2000 = vpack.c.b16 %v1946, %v1945
  %v2001 = vpack.c.b16 %v1948, %v1947
  %v2002 = vpack.c.b16 %v1950, %v1949
  %v2003 = vpack.c.b16 %v1952, %v1951
  %v2004 = vpack.c.b16 %v1954, %v1953
  %v2005 = vpack.c.b16 %v1956, %v1955
  %v2006 = vpack.c.b16 %v1958, %v1957
  %2055 = vst [vmem:[%s5] sm:$0xff] %v1959
  %2056 = vst [vmem:[%s5 + $0x8] sm:$0xff] %v1960
  %2057 = vst [vmem:[%s5 + $0x10] sm:$0xff] %v1961
  %2058 = vst [vmem:[%s5 + $0x18] sm:$0xff] %v1962
  %2059 = vst [vmem:[%s5 + $0x20] sm:$0xff] %v1963
  %2060 = vst [vmem:[%s5 + $0x28] sm:$0xff] %v1964
  %2061 = vst [vmem:[%s5 + $0x30] sm:$0xff] %v1965
  %2062 = vst [vmem:[%s5 + $0x38] sm:$0xff] %v1966
  %2063 = vst [vmem:[%s5 + $0x40] sm:$0xff] %v1967
  %2064 = vst [vmem:[%s5 + $0x48] sm:$0xff] %v1968
  %2065 = vst [vmem:[%s5 + $0x50] sm:$0xff] %v1969
  %2066 = vst [vmem:[%s5 + $0x58] sm:$0xff] %v1970
  %2067 = vst [vmem:[%s5 + $0x60] sm:$0xff] %v1971
  %2068 = vst [vmem:[%s5 + $0x68] sm:$0xff] %v1972
  %2069 = vst [vmem:[%s5 + $0x70] sm:$0xff] %v1973
  %2070 = vst [vmem:[%s5 + $0x78] sm:$0xff] %v1974
  %2071 = vst [vmem:[%s5 + $0x80] sm:$0xff] %v1975
  %2072 = vst [vmem:[%s5 + $0x88] sm:$0xff] %v1976
  %2073 = vst [vmem:[%s5 + $0x90] sm:$0xff] %v1977
  %2074 = vst [vmem:[%s5 + $0x98] sm:$0xff] %v1978
  %2075 = vst [vmem:[%s5 + $0xa0] sm:$0xff] %v1979
  %2076 = vst [vmem:[%s5 + $0xa8] sm:$0xff] %v1980
  %2077 = vst [vmem:[%s5 + $0xb0] sm:$0xff] %v1981
  %2078 = vst [vmem:[%s5 + $0xb8] sm:$0xff] %v1982
  %2079 = vst [vmem:[%s5 + $0xc0] sm:$0xff] %v1983
  %2080 = vst [vmem:[%s5 + $0xc8] sm:$0xff] %v1984
  %2081 = vst [vmem:[%s5 + $0xd0] sm:$0xff] %v1985
  %2082 = vst [vmem:[%s5 + $0xd8] sm:$0xff] %v1986
  %2083 = vst [vmem:[%s5 + $0xe0] sm:$0xff] %v1987
  %2084 = vst [vmem:[%s5 + $0xe8] sm:$0xff] %v1988
  %2085 = vst [vmem:[%s5 + $0xf0] sm:$0xff] %v1989
  %2086 = vst [vmem:[%s5 + $0xf8] sm:$0xff] %v1990
  %2087 = vst [vmem:[%s5 + $0x100] sm:$0xff] %v1991
  %2088 = vst [vmem:[%s5 + $0x108] sm:$0xff] %v1992
  %2089 = vst [vmem:[%s5 + $0x110] sm:$0xff] %v1993
  %2090 = vst [vmem:[%s5 + $0x118] sm:$0xff] %v1994
  %2091 = vst [vmem:[%s5 + $0x120] sm:$0xff] %v1995
  %2092 = vst [vmem:[%s5 + $0x128] sm:$0xff] %v1996
  %2093 = vst [vmem:[%s5 + $0x130] sm:$0xff] %v1997
  %2094 = vst [vmem:[%s5 + $0x138] sm:$0xff] %v1998
  %2095 = vst [vmem:[%s5 + $0x140] sm:$0xff] %v1999
  %2096 = vst [vmem:[%s5 + $0x148] sm:$0xff] %v2000
  %2097 = vst [vmem:[%s5 + $0x150] sm:$0xff] %v2001
  %2098 = vst [vmem:[%s5 + $0x158] sm:$0xff] %v2002
  %2099 = vst [vmem:[%s5 + $0x160] sm:$0xff] %v2003
  %2100 = vst [vmem:[%s5 + $0x168] sm:$0xff] %v2004
  %2101 = vst [vmem:[%s5 + $0x170] sm:$0xff] %v2005
  %2102 = vst [vmem:[%s5 + $0x178] sm:$0xff] %v2006
  // Predicated region
  $region22: #{speech_rnn_ctc_forward.9} parent=0 // pred_check
    _
  $region23: #{speech_rnn_ctc_forward.9} parent=0 // pred_check_branch
    %2104 = sbr.rel (0) target = $region25
  $region24: #{speech_rnn_ctc_forward.9} parent=0 // pred_region
    _
  $region25: #{speech_rnn_ctc_forward.9} parent=0 // pred_fallthru
    _
  // Predicated region
  $region26: #{speech_rnn_ctc_forward.9} parent=0 // pred_check
    _
  $region27: #{speech_rnn_ctc_forward.9} parent=0 // pred_check_branch
    %2106 = sbr.rel (0) target = $region29
  $region28: #{speech_rnn_ctc_forward.9} parent=0 // pred_region
    _
  $region29: #{speech_rnn_ctc_forward.9} parent=0 // pred_fallthru
    _

// kernel: speech_rnn_ctc_forward.8
$region0: #{speech_rnn_ctc_forward.8}
  #allocation0 [shape = 'u32[]', space=smem, size = 0x4, offset = 0x4, fixed_abs, tag = 'smem constant byte address 0x4 - core index']
  #allocation1 [shape = 'u32[144,128]{1,0:T(1,128)}', space=vmem, size = 0x12000, scoped, tag = 'internal scratch']
  #allocation2 [shape = 'f32[8,128]{1,0:T(8,128)}', space=vmem, size = 0x1000, scoped, tag = 'scratch operand']
  #allocation3 [shape = 'f32[8,128]{1,0:T(8,128)}', space=vmem, size = 0x1000, scoped, tag = 'scratch operand']
  #allocation4 [shape = 'f32[8,128]{1,0:T(8,128)}', space=vmem, size = 0x1000, scoped, tag = 'scratch operand']
  #allocation5 [shape = 'f32[8,128]{1,0:T(8,128)}', space=vmem, size = 0x1000, scoped, tag = 'scratch operand']
  #allocation6 [shape = 'f32[8,8,128]{2,1,0:T(8,128)}', space=vmem, size = 0x8000, scoped, tag = 'scratch operand']
  #allocation7 [shape = 'f32[8,8,128]{2,1,0:T(8,128)}', space=vmem, size = 0x8000, scoped, tag = 'scratch operand']
  %s0 = inlined_call_operand.vmem [shape: bf16[16,8,1024], index: 0, kind: input, shape index: {}, may-alias: {0,1}]
  %s1 = inlined_call_operand.vmem [shape: bf16[16,8,1024], index: 1, kind: input, shape index: {}, may-alias: {0,1}]
  %s2 = inlined_call_operand.vmem [shape: bf16[128,512], index: 2, kind: input, shape index: {}]
  %s3 = inlined_call_operand.vmem [shape: bf16[128,512], index: 3, kind: input, shape index: {}]
  %s4 = inlined_call_operand.vmem [shape: bf16[16,8,128], index: 4, kind: output, shape index: {0}]
  %s5 = inlined_call_operand.vmem [shape: bf16[16,8,128], index: 5, kind: output, shape index: {1}]
  %6 = xla_tuple %s4, %s5
  %s7 = sld [smem:[#allocation0]]
  $region107: #{speech_rnn_ctc_forward.8} parent=0
    _
  %s9 = ssub.s32 1, %s7
  %s10 = scalar_select 0, %s9, %s7
  $region1: #{speech_rnn_ctc_forward.8} parent=0
    #allocation8 [shape = 'u8[131072]{0}', space=vmem, size = 0x20000, scoped, tag = 'input window, operand 0']
    #allocation9 [shape = 'u8[131072]{0}', space=vmem, size = 0x20000, scoped, tag = 'input window, operand 1']
    loop: start=0, step=1, limit=4
    $region2: #{speech_rnn_ctc_forward.8} parent=1 // loop_pre_header
      _
    $region3: #{speech_rnn_ctc_forward.8} parent=1 // loop_header
      %s12 = sphi 0, %s16
      %p13 = scmp.ge.s32.totalorder %s12, 4
      %s22 = sphi 0, %s24
      %s25 = sphi 0, %s22
      %s26 = sphi 0, %s25
      %s42 = sphi 0, %s26
      %s50 = sphi 0, %s52
      %s53 = sphi 0, %s50
      %s54 = sphi 0, %s53
      %s70 = sphi 0, %s54
      %s74 = sphi 0, %s74
      %s76 = sphi 0, %s74
      %s77 = sphi 0, %s76
      %s91 = sphi 0, %s77
      %s95 = sphi 0, %s95
      %s97 = sphi 0, %s95
      %s98 = sphi 0, %s97
      %s112 = sphi 0, %s98
      %s118 = sphi 0, %s120
      %s121 = sphi 0, %s118
      %s122 = sphi 0, %s121
      %s138 = sphi 0, %s122
      %s146 = sphi 0, %s148
      %s149 = sphi 0, %s146
      %s150 = sphi 0, %s149
      %s166 = sphi 0, %s150
    $region4: #{speech_rnn_ctc_forward.8} parent=1 // loop_header_branch
      %15 = sbr.rel (%p13) target = $region8
    $region5: #{speech_rnn_ctc_forward.8} parent=1 // loop_body
      %s17 = ssub.s32 %s12, 1
      %s18 = ssub.s32 %s12, 2
      %s19 = sadd.s32 %s12, 1
      %s20 = ssub.s32 %s12, %s19
      %p21 = scmp.eq.s32.totalorder %s20, 0
      %s23 = sadd.s32 %s22, 1
      %s24 = scalar_select %p21, %s22, %s23
      %p27 = pneg %p21
      %p28 = scmp.eq.s32.totalorder %s12, 1
      %p29 = por %p27, %p28
      %p30 = scmp.ne.s32.totalorder %s22, %s25
      %p31 = scmp.eq.s32.totalorder %s12, 0
      %p32 = por %p30, %p31
      %p33 = scmp.ne.s32.totalorder %s22, %s25
      %p34 = scmp.eq.s32.totalorder %s17, 1
      %p35 = por %p33, %p34
      %p36 = scmp.ne.s32.totalorder %s25, %s26
      %p37 = scmp.eq.s32.totalorder %s17, 0
      %p38 = por %p36, %p37
      %p39 = scmp.ne.s32.totalorder %s25, %s26
      %p40 = scmp.eq.s32.totalorder %s18, 1
      %p41 = por %p39, %p40
      %p43 = scmp.ne.s32.totalorder %s26, %s42
      %p44 = scmp.eq.s32.totalorder %s18, 0
      %p45 = por %p43, %p44
      %s46 = ssub.s32 1, %s12
      %s47 = ssub.s32 1, %s19
      %s48 = ssub.s32 %s46, %s47
      %p49 = scmp.eq.s32.totalorder %s48, 0
      %s51 = sadd.s32 %s50, 1
      %s52 = scalar_select %p49, %s50, %s51
      %p55 = pneg %p49
      %p56 = scmp.eq.s32.totalorder %s12, 1
      %p57 = por %p55, %p56
      %p58 = scmp.ne.s32.totalorder %s50, %s53
      %p59 = scmp.eq.s32.totalorder %s12, 0
      %p60 = por %p58, %p59
      %p61 = scmp.ne.s32.totalorder %s50, %s53
      %p62 = scmp.eq.s32.totalorder %s17, 1
      %p63 = por %p61, %p62
      %p64 = scmp.ne.s32.totalorder %s53, %s54
      %p65 = scmp.eq.s32.totalorder %s17, 0
      %p66 = por %p64, %p65
      %p67 = scmp.ne.s32.totalorder %s53, %s54
      %p68 = scmp.eq.s32.totalorder %s18, 1
      %p69 = por %p67, %p68
      %p71 = scmp.ne.s32.totalorder %s54, %s70
      %p72 = scmp.eq.s32.totalorder %s18, 0
      %p73 = por %p71, %p72
      %s75 = sadd.s32 %s74, 1
      %p78 = scmp.eq.s32.totalorder %s12, 1
      %p79 = scmp.ne.s32.totalorder %s74, %s76
      %p80 = scmp.eq.s32.totalorder %s12, 0
      %p81 = por %p79, %p80
      %p82 = scmp.ne.s32.totalorder %s74, %s76
      %p83 = scmp.eq.s32.totalorder %s17, 1
      %p84 = por %p82, %p83
      %p85 = scmp.ne.s32.totalorder %s76, %s77
      %p86 = scmp.eq.s32.totalorder %s17, 0
      %p87 = por %p85, %p86
      %p88 = scmp.ne.s32.totalorder %s76, %s77
      %p89 = scmp.eq.s32.totalorder %s18, 1
      %p90 = por %p88, %p89
      %p92 = scmp.ne.s32.totalorder %s77, %s91
      %p93 = scmp.eq.s32.totalorder %s18, 0
      %p94 = por %p92, %p93
      %s96 = sadd.s32 %s95, 1
      %p99 = scmp.eq.s32.totalorder %s12, 1
      %p100 = scmp.ne.s32.totalorder %s95, %s97
      %p101 = scmp.eq.s32.totalorder %s12, 0
      %p102 = por %p100, %p101
      %p103 = scmp.ne.s32.totalorder %s95, %s97
      %p104 = scmp.eq.s32.totalorder %s17, 1
      %p105 = por %p103, %p104
      %p106 = scmp.ne.s32.totalorder %s97, %s98
      %p107 = scmp.eq.s32.totalorder %s17, 0
      %p108 = por %p106, %p107
      %p109 = scmp.ne.s32.totalorder %s97, %s98
      %p110 = scmp.eq.s32.totalorder %s18, 1
      %p111 = por %p109, %p110
      %p113 = scmp.ne.s32.totalorder %s98, %s112
      %p114 = scmp.eq.s32.totalorder %s18, 0
      %p115 = por %p113, %p114
      %s116 = ssub.s32 %s12, %s19
      %p117 = scmp.eq.s32.totalorder %s116, 0
      %s119 = sadd.s32 %s118, 1
      %s120 = scalar_select %p117, %s118, %s119
      %p123 = pneg %p117
      %p124 = scmp.eq.s32.totalorder %s12, 1
      %p125 = por %p123, %p124
      %p126 = scmp.ne.s32.totalorder %s118, %s121
      %p127 = scmp.eq.s32.totalorder %s12, 0
      %p128 = por %p126, %p127
      %p129 = scmp.ne.s32.totalorder %s118, %s121
      %p130 = scmp.eq.s32.totalorder %s17, 1
      %p131 = por %p129, %p130
      %p132 = scmp.ne.s32.totalorder %s121, %s122
      %p133 = scmp.eq.s32.totalorder %s17, 0
      %p134 = por %p132, %p133
      %p135 = scmp.ne.s32.totalorder %s121, %s122
      %p136 = scmp.eq.s32.totalorder %s18, 1
      %p137 = por %p135, %p136
      %p139 = scmp.ne.s32.totalorder %s122, %s138
      %p140 = scmp.eq.s32.totalorder %s18, 0
      %p141 = por %p139, %p140
      %s142 = ssub.s32 1, %s12
      %s143 = ssub.s32 1, %s19
      %s144 = ssub.s32 %s142, %s143
      %p145 = scmp.eq.s32.totalorder %s144, 0
      %s147 = sadd.s32 %s146, 1
      %s148 = scalar_select %p145, %s146, %s147
      %p151 = pneg %p145
      %p152 = scmp.eq.s32.totalorder %s12, 1
      %p153 = por %p151, %p152
      %p154 = scmp.ne.s32.totalorder %s146, %s149
      %p155 = scmp.eq.s32.totalorder %s12, 0
      %p156 = por %p154, %p155
      %p157 = scmp.ne.s32.totalorder %s146, %s149
      %p158 = scmp.eq.s32.totalorder %s17, 1
      %p159 = por %p157, %p158
      %p160 = scmp.ne.s32.totalorder %s149, %s150
      %p161 = scmp.eq.s32.totalorder %s17, 0
      %p162 = por %p160, %p161
      %p163 = scmp.ne.s32.totalorder %s149, %s150
      %p164 = scmp.eq.s32.totalorder %s18, 1
      %p165 = por %p163, %p164
      %p167 = scmp.ne.s32.totalorder %s150, %s166
      %p168 = scmp.eq.s32.totalorder %s18, 0
      %p169 = por %p167, %p168
      %p170 = scmp.le.s32.totalorder 1, %s12
      %p171 = scmp.lt.s32.totalorder %s12, 3
      %p172 = pnand %p170, %p171
      %p173 = pneg %p172
      // Predicated region
      $region9: #{speech_rnn_ctc_forward.8} parent=5 // pred_check
        _
      $region10: #{speech_rnn_ctc_forward.8} parent=5 // pred_check_branch
        %175 = sbr.rel (%p172) target = $region12
      $region11: #{speech_rnn_ctc_forward.8} parent=5 // pred_region
        %s176 = ssub.s32 %s12, 1
        // Predicated region
        $region13: #{speech_rnn_ctc_forward.8} parent=11 // pred_check
          %p177 = pneg %p87
        $region14: #{speech_rnn_ctc_forward.8} parent=11 // pred_check_branch
          %179 = sbr.rel (%p177) target = $region16
        $region15: #{speech_rnn_ctc_forward.8} parent=11 // pred_region
          _
        $region16: #{speech_rnn_ctc_forward.8} parent=11 // pred_fallthru
          _
        // Predicated region
        $region17: #{speech_rnn_ctc_forward.8} parent=11 // pred_check
          %p180 = pneg %p108
        $region18: #{speech_rnn_ctc_forward.8} parent=11 // pred_check_branch
          %182 = sbr.rel (%p180) target = $region20
        $region19: #{speech_rnn_ctc_forward.8} parent=11 // pred_region
          _
        $region20: #{speech_rnn_ctc_forward.8} parent=11 // pred_fallthru
          _
      $region12: #{speech_rnn_ctc_forward.8} parent=5 // pred_fallthru
        _
      %p183 = scmp.lt.s32.totalorder %s12, 2
      // Predicated region
      $region21: #{speech_rnn_ctc_forward.8} parent=5 // pred_check
        %p184 = pneg %p183
      $region22: #{speech_rnn_ctc_forward.8} parent=5 // pred_check_branch
        %186 = sbr.rel (%p184) target = $region24
      $region23: #{speech_rnn_ctc_forward.8} parent=5 // pred_region
        // Predicated region
        $region25: #{speech_rnn_ctc_forward.8} parent=23 // pred_check
          %p187 = pneg %p32
        $region26: #{speech_rnn_ctc_forward.8} parent=23 // pred_check_branch
          %189 = sbr.rel (%p187) target = $region28
        $region27: #{speech_rnn_ctc_forward.8} parent=23 // pred_region
          %s190 = sand.u32 %s22, 1
          %s191 = sand.u32 %s22, 1
          %s192 = smul.addr %s191, 128
          %s193 = scalar_lea.vmem [#allocation8], %s192
          %s194 = smul.u32 8, %s12
          %s195 = smul.addr %s194, 8
          %s196 = smul.addr %s195, 4
          %s197 = scalar_lea.vmem %s0, %s196
          // Predicated region
          $region29: #{speech_rnn_ctc_forward.8} parent=27 // pred_check
            _
          $region30: #{speech_rnn_ctc_forward.8} parent=27 // pred_check_branch
            %199 = sbr.rel (0) target = $region32
          $region31: #{speech_rnn_ctc_forward.8} parent=27 // pred_region
            // Predicated region
            $region33: #{speech_rnn_ctc_forward.8} parent=31 // pred_check
              _
            $region34: #{speech_rnn_ctc_forward.8} parent=31 // pred_check_branch
              %201 = sbr.rel (0) target = $region36
            $region35: #{speech_rnn_ctc_forward.8} parent=31 // pred_region
              loop: start=0, step=1, limit=1
              $region37: #{speech_rnn_ctc_forward.8} parent=35 // loop_pre_header
                _
              $region38: #{speech_rnn_ctc_forward.8} parent=35 // loop_header
                %s203 = sphi 0, %s207
                %p204 = scmp.ge.s32.totalorder %s203, 1
                %s208 = sphi %s197, %s197
                %s209 = sphi %s193, %s193
              $region39: #{speech_rnn_ctc_forward.8} parent=35 // loop_header_branch
                %206 = sbr.rel (%p204) target = $region43
              $region40: #{speech_rnn_ctc_forward.8} parent=35 // loop_body
                %v210 = vld [vmem:[%s208] sm:$0xff]
                %211 = vst [vmem:[%s209] sm:$0xff] %v210
                %v212 = vld [vmem:[%s208 + $0x8] sm:$0xff]
                %213 = vst [vmem:[%s209 + $0x8] sm:$0xff] %v212
                %v214 = vld [vmem:[%s208 + $0x20] sm:$0xff]
                %215 = vst [vmem:[%s209 + $0x10] sm:$0xff] %v214
                %v216 = vld [vmem:[%s208 + $0x28] sm:$0xff]
                %217 = vst [vmem:[%s209 + $0x18] sm:$0xff] %v216
                %v218 = vld [vmem:[%s208 + $0x40] sm:$0xff]
                %219 = vst [vmem:[%s209 + $0x20] sm:$0xff] %v218
                %v220 = vld [vmem:[%s208 + $0x48] sm:$0xff]
                %221 = vst [vmem:[%s209 + $0x28] sm:$0xff] %v220
                %v222 = vld [vmem:[%s208 + $0x60] sm:$0xff]
                %223 = vst [vmem:[%s209 + $0x30] sm:$0xff] %v222
                %v224 = vld [vmem:[%s208 + $0x68] sm:$0xff]
                %225 = vst [vmem:[%s209 + $0x38] sm:$0xff] %v224
                %v226 = vld [vmem:[%s208 + $0x80] sm:$0xff]
                %227 = vst [vmem:[%s209 + $0x40] sm:$0xff] %v226
                %v228 = vld [vmem:[%s208 + $0x88] sm:$0xff]
                %229 = vst [vmem:[%s209 + $0x48] sm:$0xff] %v228
                %v230 = vld [vmem:[%s208 + $0xa0] sm:$0xff]
                %231 = vst [vmem:[%s209 + $0x50] sm:$0xff] %v230
                %v232 = vld [vmem:[%s208 + $0xa8] sm:$0xff]
                %233 = vst [vmem:[%s209 + $0x58] sm:$0xff] %v232
                %v234 = vld [vmem:[%s208 + $0xc0] sm:$0xff]
                %235 = vst [vmem:[%s209 + $0x60] sm:$0xff] %v234
                %v236 = vld [vmem:[%s208 + $0xc8] sm:$0xff]
                %237 = vst [vmem:[%s209 + $0x68] sm:$0xff] %v236
                %v238 = vld [vmem:[%s208 + $0xe0] sm:$0xff]
                %239 = vst [vmem:[%s209 + $0x70] sm:$0xff] %v238
                %v240 = vld [vmem:[%s208 + $0xe8] sm:$0xff]
                %241 = vst [vmem:[%s209 + $0x78] sm:$0xff] %v240
              $region41: #{speech_rnn_ctc_forward.8} parent=35 // loop_footer
                %s207 = sadd.s32 1, %s203
              $region42: #{speech_rnn_ctc_forward.8} parent=35 // loop_footer_branch
                %202 = sbr.rel target = $region38
              $region43: #{speech_rnn_ctc_forward.8} parent=35 // loop_exit
                _
            $region36: #{speech_rnn_ctc_forward.8} parent=31 // pred_fallthru
              _
            // Predicated region
            $region44: #{speech_rnn_ctc_forward.8} parent=31 // pred_check
              _
            $region45: #{speech_rnn_ctc_forward.8} parent=31 // pred_check_branch
              %243 = sbr.rel target = $region47
            $region46: #{speech_rnn_ctc_forward.8} parent=31 // pred_region
              _
            $region47: #{speech_rnn_ctc_forward.8} parent=31 // pred_fallthru
              _
          $region32: #{speech_rnn_ctc_forward.8} parent=27 // pred_fallthru
            _
          %244 = vnop
        $region28: #{speech_rnn_ctc_forward.8} parent=23 // pred_fallthru
          _
        // Predicated region
        $region48: #{speech_rnn_ctc_forward.8} parent=23 // pred_check
          %p245 = pneg %p60
        $region49: #{speech_rnn_ctc_forward.8} parent=23 // pred_check_branch
          %247 = sbr.rel (%p245) target = $region51
        $region50: #{speech_rnn_ctc_forward.8} parent=23 // pred_region
          %s248 = sand.u32 %s50, 1
          %s249 = sand.u32 %s50, 1
          %s250 = smul.addr %s249, 128
          %s251 = scalar_lea.vmem [#allocation9], %s250
          %s252 = ssub.s32 1, %s12
          %s253 = smul.u32 8, %s252
          %s254 = smul.addr %s253, 8
          %s255 = sadd.s32 4, %s254
          %s256 = smul.addr %s255, 4
          %s257 = scalar_lea.vmem %s1, %s256
          // Predicated region
          $region52: #{speech_rnn_ctc_forward.8} parent=50 // pred_check
            _
          $region53: #{speech_rnn_ctc_forward.8} parent=50 // pred_check_branch
            %259 = sbr.rel (0) target = $region55
          $region54: #{speech_rnn_ctc_forward.8} parent=50 // pred_region
            // Predicated region
            $region56: #{speech_rnn_ctc_forward.8} parent=54 // pred_check
              _
            $region57: #{speech_rnn_ctc_forward.8} parent=54 // pred_check_branch
              %261 = sbr.rel (0) target = $region59
            $region58: #{speech_rnn_ctc_forward.8} parent=54 // pred_region
              loop: start=0, step=1, limit=1
              $region60: #{speech_rnn_ctc_forward.8} parent=58 // loop_pre_header
                _
              $region61: #{speech_rnn_ctc_forward.8} parent=58 // loop_header
                %s263 = sphi 0, %s267
                %p264 = scmp.ge.s32.totalorder %s263, 1
                %s268 = sphi %s257, %s257
                %s269 = sphi %s251, %s251
              $region62: #{speech_rnn_ctc_forward.8} parent=58 // loop_header_branch
                %266 = sbr.rel (%p264) target = $region66
              $region63: #{speech_rnn_ctc_forward.8} parent=58 // loop_body
                %v270 = vld [vmem:[%s268] sm:$0xff]
                %271 = vst [vmem:[%s269] sm:$0xff] %v270
                %v272 = vld [vmem:[%s268 + $0x8] sm:$0xff]
                %273 = vst [vmem:[%s269 + $0x8] sm:$0xff] %v272
                %v274 = vld [vmem:[%s268 + $0x20] sm:$0xff]
                %275 = vst [vmem:[%s269 + $0x10] sm:$0xff] %v274
                %v276 = vld [vmem:[%s268 + $0x28] sm:$0xff]
                %277 = vst [vmem:[%s269 + $0x18] sm:$0xff] %v276
                %v278 = vld [vmem:[%s268 + $0x40] sm:$0xff]
                %279 = vst [vmem:[%s269 + $0x20] sm:$0xff] %v278
                %v280 = vld [vmem:[%s268 + $0x48] sm:$0xff]
                %281 = vst [vmem:[%s269 + $0x28] sm:$0xff] %v280
                %v282 = vld [vmem:[%s268 + $0x60] sm:$0xff]
                %283 = vst [vmem:[%s269 + $0x30] sm:$0xff] %v282
                %v284 = vld [vmem:[%s268 + $0x68] sm:$0xff]
                %285 = vst [vmem:[%s269 + $0x38] sm:$0xff] %v284
                %v286 = vld [vmem:[%s268 + $0x80] sm:$0xff]
                %287 = vst [vmem:[%s269 + $0x40] sm:$0xff] %v286
                %v288 = vld [vmem:[%s268 + $0x88] sm:$0xff]
                %289 = vst [vmem:[%s269 + $0x48] sm:$0xff] %v288
                %v290 = vld [vmem:[%s268 + $0xa0] sm:$0xff]
                %291 = vst [vmem:[%s269 + $0x50] sm:$0xff] %v290
                %v292 = vld [vmem:[%s268 + $0xa8] sm:$0xff]
                %293 = vst [vmem:[%s269 + $0x58] sm:$0xff] %v292
                %v294 = vld [vmem:[%s268 + $0xc0] sm:$0xff]
                %295 = vst [vmem:[%s269 + $0x60] sm:$0xff] %v294
                %v296 = vld [vmem:[%s268 + $0xc8] sm:$0xff]
                %297 = vst [vmem:[%s269 + $0x68] sm:$0xff] %v296
                %v298 = vld [vmem:[%s268 + $0xe0] sm:$0xff]
                %299 = vst [vmem:[%s269 + $0x70] sm:$0xff] %v298
                %v300 = vld [vmem:[%s268 + $0xe8] sm:$0xff]
                %301 = vst [vmem:[%s269 + $0x78] sm:$0xff] %v300
              $region64: #{speech_rnn_ctc_forward.8} parent=58 // loop_footer
                %s267 = sadd.s32 1, %s263
              $region65: #{speech_rnn_ctc_forward.8} parent=58 // loop_footer_branch
                %262 = sbr.rel target = $region61
              $region66: #{speech_rnn_ctc_forward.8} parent=58 // loop_exit
                _
            $region59: #{speech_rnn_ctc_forward.8} parent=54 // pred_fallthru
              _
            // Predicated region
            $region67: #{speech_rnn_ctc_forward.8} parent=54 // pred_check
              _
            $region68: #{speech_rnn_ctc_forward.8} parent=54 // pred_check_branch
              %303 = sbr.rel target = $region70
            $region69: #{speech_rnn_ctc_forward.8} parent=54 // pred_region
              _
            $region70: #{speech_rnn_ctc_forward.8} parent=54 // pred_fallthru
              _
          $region55: #{speech_rnn_ctc_forward.8} parent=50 // pred_fallthru
            _
          %304 = vnop
        $region51: #{speech_rnn_ctc_forward.8} parent=23 // pred_fallthru
          _
      $region24: #{speech_rnn_ctc_forward.8} parent=5 // pred_fallthru
        _
      %p305 = scmp.le.s32.totalorder 1, %s12
      %p306 = scmp.lt.s32.totalorder %s12, 3
      %p307 = pnand %p305, %p306
      %p308 = pneg %p307
      // Predicated region
      $region71: #{speech_rnn_ctc_forward.8} parent=5 // pred_check
        _
      $region72: #{speech_rnn_ctc_forward.8} parent=5 // pred_check_branch
        %310 = sbr.rel (%p307) target = $region74
      $region73: #{speech_rnn_ctc_forward.8} parent=5 // pred_region
        %s311 = ssub.s32 %s12, 1
        %s312 = sand.u32 %s25, 1
        %s313 = sand.u32 %s25, 1
        %s314 = smul.addr %s313, 128
        %s315 = scalar_lea.vmem [#allocation8], %s314
        // Predicated region
        $region75: #{speech_rnn_ctc_forward.8} parent=73 // pred_check
          %p316 = pneg %p38
        $region76: #{speech_rnn_ctc_forward.8} parent=73 // pred_check_branch
          %318 = sbr.rel (%p316) target = $region78
        $region77: #{speech_rnn_ctc_forward.8} parent=73 // pred_region
          _
        $region78: #{speech_rnn_ctc_forward.8} parent=73 // pred_fallthru
          _
        %s319 = sand.u32 %s53, 1
        %s320 = sand.u32 %s53, 1
        %s321 = smul.addr %s320, 128
        %s322 = scalar_lea.vmem [#allocation9], %s321
        // Predicated region
        $region79: #{speech_rnn_ctc_forward.8} parent=73 // pred_check
          %p323 = pneg %p66
        $region80: #{speech_rnn_ctc_forward.8} parent=73 // pred_check_branch
          %325 = sbr.rel (%p323) target = $region82
        $region81: #{speech_rnn_ctc_forward.8} parent=73 // pred_region
          _
        $region82: #{speech_rnn_ctc_forward.8} parent=73 // pred_fallthru
          _
        %s326 = sand.u32 %s25, 1
        %s327 = sand.u32 %s25, 1
        %s328 = smul.addr %s327, 128
        %s329 = scalar_lea.vmem [#allocation8], %s328
        %p330 = pneg %p38
        %p331 = pneg %p35
        %s332 = sand.u32 %s53, 1
        %s333 = sand.u32 %s53, 1
        %s334 = smul.addr %s333, 128
        %s335 = scalar_lea.vmem [#allocation9], %s334
        %p336 = pneg %p66
        %p337 = pneg %p63
        %p338 = pneg %p87
        %p339 = pneg %p84
        %p340 = pneg %p108
        %p341 = pneg %p105
        %p342 = pneg %p134
        %p343 = pneg %p131
        %s344 = smul.u32 8, %s17
        %p345 = scmp.lt.s32.totalorder %s344, 15
        %s346 = scalar_select %p345, %s344, 15
        %s347 = smul.addr %s346, 4
        %s348 = scalar_lea.vmem %s4, %s347
        %p349 = pneg %p162
        %p350 = pneg %p159
        %s351 = ssub.s32 1, %s17
        %s352 = smul.u32 8, %s351
        %p353 = scmp.lt.s32.totalorder %s352, 15
        %s354 = scalar_select %p353, %s352, 15
        %s355 = smul.addr %s354, 4
        %s356 = scalar_lea.vmem %s5, %s355
        %s357 = smul.u32 8, %s17
        %s358 = ssub.s32 1, %s17
        %s359 = smul.u32 8, %s358
        %s360 = smul.u32 8, %s17
        %p361 = scmp.lt.s32.totalorder %s360, 15
        %s362 = scalar_select %p361, %s360, 15
        %s363 = smul.addr %s362, 4
        %s364 = scalar_lea.vmem %s4, %s363
        %s365 = smul.u32 8, %s17
        %s366 = ssub.s32 1, %s17
        %s367 = smul.u32 8, %s366
        %p368 = scmp.lt.s32.totalorder %s367, 15
        %s369 = scalar_select %p368, %s367, 15
        %s370 = smul.addr %s369, 4
        %s371 = scalar_lea.vmem %s5, %s370
        %s372 = ssub.s32 1, %s17
        %s373 = smul.u32 8, %s372
        %p375 = scmp.eq.s32.totalorder %s17, 0
        // Predicated region
        $region83: #{speech_rnn_ctc_forward.8} parent=73 // pred_check
          %p376 = pneg %p375
        $region84: #{speech_rnn_ctc_forward.8} parent=73 // pred_check_branch
          %378 = sbr.rel (%p376) target = $region86
        $region85: #{speech_rnn_ctc_forward.8} parent=73 // pred_region
          %379 = vst [vmem:[#allocation2] sm:$0xff] 0.0
          %380 = vst [vmem:[#allocation3] sm:$0xff] 0.0
          %381 = vst [vmem:[#allocation4] sm:$0xff] 0.0
          %382 = vst [vmem:[#allocation5] sm:$0xff] 0.0
        $region86: #{speech_rnn_ctc_forward.8} parent=73 // pred_fallthru
          _
        %v383 = vld [vmem:[%s2] sm:$0xff]
        %v384 = vld [vmem:[%s2 + $0x8] sm:$0xff]
        %v385 = vld [vmem:[%s2 + $0x10] sm:$0xff]
        %v386 = vld [vmem:[%s2 + $0x18] sm:$0xff]
        %v387 = vld [vmem:[%s2 + $0x20] sm:$0xff]
        %v388 = vld [vmem:[%s2 + $0x28] sm:$0xff]
        %v389 = vld [vmem:[%s2 + $0x30] sm:$0xff]
        %v390 = vld [vmem:[%s2 + $0x38] sm:$0xff]
        %v391 = vld [vmem:[%s2 + $0x40] sm:$0xff]
        %v392 = vld [vmem:[%s2 + $0x48] sm:$0xff]
        %v393 = vld [vmem:[%s2 + $0x50] sm:$0xff]
        %v394 = vld [vmem:[%s2 + $0x58] sm:$0xff]
        %v395 = vld [vmem:[%s2 + $0x60] sm:$0xff]
        %v396 = vld [vmem:[%s2 + $0x68] sm:$0xff]
        %v397 = vld [vmem:[%s2 + $0x70] sm:$0xff]
        %v398 = vld [vmem:[%s2 + $0x78] sm:$0xff]
        %v399 = vld [vmem:[%s2 + $0x80] sm:$0xff]
        %v400 = vld [vmem:[%s2 + $0x88] sm:$0xff]
        %v401 = vld [vmem:[%s2 + $0x90] sm:$0xff]
        %v402 = vld [vmem:[%s2 + $0x98] sm:$0xff]
        %v403 = vld [vmem:[%s2 + $0xa0] sm:$0xff]
        %v404 = vld [vmem:[%s2 + $0xa8] sm:$0xff]
        %v405 = vld [vmem:[%s2 + $0xb0] sm:$0xff]
        %v406 = vld [vmem:[%s2 + $0xb8] sm:$0xff]
        %v407 = vld [vmem:[%s2 + $0xc0] sm:$0xff]
        %v408 = vld [vmem:[%s2 + $0xc8] sm:$0xff]
        %v409 = vld [vmem:[%s2 + $0xd0] sm:$0xff]
        %v410 = vld [vmem:[%s2 + $0xd8] sm:$0xff]
        %v411 = vld [vmem:[%s2 + $0xe0] sm:$0xff]
        %v412 = vld [vmem:[%s2 + $0xe8] sm:$0xff]
        %v413 = vld [vmem:[%s2 + $0xf0] sm:$0xff]
        %v414 = vld [vmem:[%s2 + $0xf8] sm:$0xff]
        %v415 = vld [vmem:[%s3] sm:$0xff]
        %v416 = vld [vmem:[%s3 + $0x8] sm:$0xff]
        %v417 = vld [vmem:[%s3 + $0x10] sm:$0xff]
        %v418 = vld [vmem:[%s3 + $0x18] sm:$0xff]
        %v419 = vld [vmem:[%s3 + $0x20] sm:$0xff]
        %v420 = vld [vmem:[%s3 + $0x28] sm:$0xff]
        %v421 = vld [vmem:[%s3 + $0x30] sm:$0xff]
        %v422 = vld [vmem:[%s3 + $0x38] sm:$0xff]
        %v423 = vld [vmem:[%s3 + $0x40] sm:$0xff]
        %v424 = vld [vmem:[%s3 + $0x48] sm:$0xff]
        %v425 = vld [vmem:[%s3 + $0x50] sm:$0xff]
        %v426 = vld [vmem:[%s3 + $0x58] sm:$0xff]
        %v427 = vld [vmem:[%s3 + $0x60] sm:$0xff]
        %v428 = vld [vmem:[%s3 + $0x68] sm:$0xff]
        %v429 = vld [vmem:[%s3 + $0x70] sm:$0xff]
        %v430 = vld [vmem:[%s3 + $0x78] sm:$0xff]
        %v431 = vld [vmem:[%s3 + $0x80] sm:$0xff]
        %v432 = vld [vmem:[%s3 + $0x88] sm:$0xff]
        %v433 = vld [vmem:[%s3 + $0x90] sm:$0xff]
        %v434 = vld [vmem:[%s3 + $0x98] sm:$0xff]
        %v435 = vld [vmem:[%s3 + $0xa0] sm:$0xff]
        %v436 = vld [vmem:[%s3 + $0xa8] sm:$0xff]
        %v437 = vld [vmem:[%s3 + $0xb0] sm:$0xff]
        %v438 = vld [vmem:[%s3 + $0xb8] sm:$0xff]
        %v439 = vld [vmem:[%s3 + $0xc0] sm:$0xff]
        %v440 = vld [vmem:[%s3 + $0xc8] sm:$0xff]
        %v441 = vld [vmem:[%s3 + $0xd0] sm:$0xff]
        %v442 = vld [vmem:[%s3 + $0xd8] sm:$0xff]
        %v443 = vld [vmem:[%s3 + $0xe0] sm:$0xff]
        %v444 = vld [vmem:[%s3 + $0xe8] sm:$0xff]
        %v445 = vld [vmem:[%s3 + $0xf0] sm:$0xff]
        %v446 = vld [vmem:[%s3 + $0xf8] sm:$0xff]
        %v447 = vld [vmem:[#allocation2] sm:$0xff]
        %v448 = vld [vmem:[#allocation3] sm:$0xff]
        %v449 = vld [vmem:[#allocation4] sm:$0xff]
        %v450 = vld [vmem:[#allocation5] sm:$0xff]
        %v451 = vld [vmem:[%s315] sm:$0xff]
        %v452 = vld [vmem:[%s315 + $0x8] sm:$0xff]
        %v453 = vunpack.c.l.bf16 %v451
        %v454 = vunpack.c.h.bf16 %v451
        %v455 = vunpack.c.l.bf16 %v452
        %v456 = vunpack.c.h.bf16 %v452
        %v457 = vpack.c.bf16 %v447, %v447
        %v490 = vunpack.c.l.b16 %v383
        %v491 = vunpack.c.h.b16 %v383
        %v492 = vunpack.c.l.b16 %v384
        %v493 = vunpack.c.h.b16 %v384
        %v494 = vunpack.c.l.b16 %v385
        %v495 = vunpack.c.h.b16 %v385
        %v496 = vunpack.c.l.b16 %v386
        %v497 = vunpack.c.h.b16 %v386
        %v498 = vunpack.c.l.b16 %v387
        %v499 = vunpack.c.h.b16 %v387
        %v500 = vunpack.c.l.b16 %v388
        %v501 = vunpack.c.h.b16 %v388
        %v502 = vunpack.c.l.b16 %v389
        %v503 = vunpack.c.h.b16 %v389
        %v504 = vunpack.c.l.b16 %v390
        %v505 = vunpack.c.h.b16 %v390
        %v506 = vunpack.c.l.b16 %v391
        %v507 = vunpack.c.h.b16 %v391
        %v508 = vunpack.c.l.b16 %v392
        %v509 = vunpack.c.h.b16 %v392
        %v510 = vunpack.c.l.b16 %v393
        %v511 = vunpack.c.h.b16 %v393
        %v512 = vunpack.c.l.b16 %v394
        %v513 = vunpack.c.h.b16 %v394
        %v514 = vunpack.c.l.b16 %v395
        %v515 = vunpack.c.h.b16 %v395
        %v516 = vunpack.c.l.b16 %v396
        %v517 = vunpack.c.h.b16 %v396
        %v518 = vunpack.c.l.b16 %v397
        %v519 = vunpack.c.h.b16 %v397
        %v520 = vunpack.c.l.b16 %v398
        %v521 = vunpack.c.h.b16 %v398
        %v522 = vunpack.c.l.b16 %v399
        %v523 = vunpack.c.h.b16 %v399
        %v524 = vunpack.c.l.b16 %v400
        %v525 = vunpack.c.h.b16 %v400
        %v526 = vunpack.c.l.b16 %v401
        %v527 = vunpack.c.h.b16 %v401
        %v528 = vunpack.c.l.b16 %v402
        %v529 = vunpack.c.h.b16 %v402
        %v530 = vunpack.c.l.b16 %v403
        %v531 = vunpack.c.h.b16 %v403
        %v532 = vunpack.c.l.b16 %v404
        %v533 = vunpack.c.h.b16 %v404
        %v534 = vunpack.c.l.b16 %v405
        %v535 = vunpack.c.h.b16 %v405
        %v536 = vunpack.c.l.b16 %v406
        %v537 = vunpack.c.h.b16 %v406
        %v538 = vunpack.c.l.b16 %v407
        %v539 = vunpack.c.h.b16 %v407
        %v540 = vunpack.c.l.b16 %v408
        %v541 = vunpack.c.h.b16 %v408
        %v542 = vunpack.c.l.b16 %v409
        %v543 = vunpack.c.h.b16 %v409
        %v544 = vunpack.c.l.b16 %v410
        %v545 = vunpack.c.h.b16 %v410
        %v546 = vunpack.c.l.b16 %v411
        %v547 = vunpack.c.h.b16 %v411
        %v548 = vunpack.c.l.b16 %v412
        %v549 = vunpack.c.h.b16 %v412
        %v550 = vunpack.c.l.b16 %v413
        %v551 = vunpack.c.h.b16 %v413
        %v552 = vunpack.c.l.b16 %v414
        %v553 = vunpack.c.h.b16 %v414
        %v554 = vpack.c.b16 %v494, %v490
        %v555 = vpack.c.b16 %v495, %v491
        %v556 = vpack.c.b16 %v496, %v492
        %v557 = vpack.c.b16 %v497, %v493
        %v558 = vpack.c.b16 %v502, %v498
        %v559 = vpack.c.b16 %v503, %v499
        %v560 = vpack.c.b16 %v504, %v500
        %v561 = vpack.c.b16 %v505, %v501
        %v562 = vpack.c.b16 %v510, %v506
        %v563 = vpack.c.b16 %v511, %v507
        %v564 = vpack.c.b16 %v512, %v508
        %v565 = vpack.c.b16 %v513, %v509
        %v566 = vpack.c.b16 %v518, %v514
        %v567 = vpack.c.b16 %v519, %v515
        %v568 = vpack.c.b16 %v520, %v516
        %v569 = vpack.c.b16 %v521, %v517
        %v570 = vpack.c.b16 %v526, %v522
        %v571 = vpack.c.b16 %v527, %v523
        %v572 = vpack.c.b16 %v528, %v524
        %v573 = vpack.c.b16 %v529, %v525
        %v574 = vpack.c.b16 %v534, %v530
        %v575 = vpack.c.b16 %v535, %v531
        %v576 = vpack.c.b16 %v536, %v532
        %v577 = vpack.c.b16 %v537, %v533
        %v578 = vpack.c.b16 %v542, %v538
        %v579 = vpack.c.b16 %v543, %v539
        %v580 = vpack.c.b16 %v544, %v540
        %v581 = vpack.c.b16 %v545, %v541
        %v582 = vpack.c.b16 %v550, %v546
        %v583 = vpack.c.b16 %v551, %v547
        %v584 = vpack.c.b16 %v552, %v548
        %v585 = vpack.c.b16 %v553, %v549
        %618 = vmatprep.subr.bf16.mxu0 %v583
        %619 = vmatpush1.bf16.msra.mxu0 %v582
        %620 = vmatprep.subr.bf16.mxu0 %v579
        %621 = vmatpush1.bf16.msra.mxu0 %v578
        %622 = vmatprep.subr.bf16.mxu0 %v575
        %623 = vmatpush1.bf16.msra.mxu0 %v574
        %624 = vmatprep.subr.bf16.mxu0 %v571
        %625 = vmatpush1.bf16.msra.mxu0 %v570
        %626 = vmatprep.subr.bf16.mxu0 %v567
        %627 = vmatpush1.bf16.msra.mxu0 %v566
        %628 = vmatprep.subr.bf16.mxu0 %v563
        %629 = vmatpush1.bf16.msra.mxu0 %v562
        %630 = vmatprep.subr.bf16.mxu0 %v559
        %631 = vmatpush1.bf16.msra.mxu0 %v558
        %632 = vmatprep.subr.bf16.mxu0 %v555
        %633 = vmatpush1.bf16.msra.mxu0 %v554
        %634 = vmatprep.subr.bf16.mxu0 0
        %635 = vmatpush2.bf16.msra.mxu0 0
        %636 = vmatprep.subr.bf16.mxu0 0
        %637 = vmatpush2.bf16.msra.mxu0 0
        %638 = vmatprep.subr.bf16.mxu0 0
        %639 = vmatpush2.bf16.msra.mxu0 0
        %640 = vmatprep.subr.bf16.mxu0 0
        %641 = vmatpush2.bf16.msra.mxu0 0
        %642 = vmatprep.subr.bf16.mxu0 0
        %643 = vmatpush2.bf16.msra.mxu0 0
        %644 = vmatprep.subr.bf16.mxu0 0
        %645 = vmatpush2.bf16.msra.mxu0 0
        %646 = vmatprep.subr.bf16.mxu0 0
        %647 = vmatpush2.bf16.msra.mxu0 0
        %648 = vmatprep.subr.bf16.mxu0 0
        %649 = vmatpush2.bf16.msra.mxu0 0
        %650 = vmatprep.mubr.bf16.mxu0 0
        %651 = vmatmul.mubr.bf16.gmra.mxu0 %v457
        %v652 = vpop.f32.mrf.mxu0
        %v653 = vadd.f32 0.0, %v652
        %v654 = vpop.f32.mrf.mxu0
        %v655 = vadd.f32 0.0, %v654
        %v656 = vpop.f32.mrf.mxu0
        %v657 = vpop.f32.mrf.mxu0
        %658 = vdwg.mxu0
        %659 = vmatprep.subr.bf16.mxu0 %v585
        %660 = vmatpush1.bf16.msra.mxu0 %v584
        %661 = vmatprep.subr.bf16.mxu0 %v581
        %662 = vmatpush1.bf16.msra.mxu0 %v580
        %663 = vmatprep.subr.bf16.mxu0 %v577
        %664 = vmatpush1.bf16.msra.mxu0 %v576
        %665 = vmatprep.subr.bf16.mxu0 %v573
        %666 = vmatpush1.bf16.msra.mxu0 %v572
        %667 = vmatprep.subr.bf16.mxu0 %v569
        %668 = vmatpush1.bf16.msra.mxu0 %v568
        %669 = vmatprep.subr.bf16.mxu0 %v565
        %670 = vmatpush1.bf16.msra.mxu0 %v564
        %671 = vmatprep.subr.bf16.mxu0 %v561
        %672 = vmatpush1.bf16.msra.mxu0 %v560
        %673 = vmatprep.subr.bf16.mxu0 %v557
        %674 = vmatpush1.bf16.msra.mxu0 %v556
        %675 = vmatprep.subr.bf16.mxu0 0
        %676 = vmatpush2.bf16.msra.mxu0 0
        %677 = vmatprep.subr.bf16.mxu0 0
        %678 = vmatpush2.bf16.msra.mxu0 0
        %679 = vmatprep.subr.bf16.mxu0 0
        %680 = vmatpush2.bf16.msra.mxu0 0
        %681 = vmatprep.subr.bf16.mxu0 0
        %682 = vmatpush2.bf16.msra.mxu0 0
        %683 = vmatprep.subr.bf16.mxu0 0
        %684 = vmatpush2.bf16.msra.mxu0 0
        %685 = vmatprep.subr.bf16.mxu0 0
        %686 = vmatpush2.bf16.msra.mxu0 0
        %687 = vmatprep.subr.bf16.mxu0 0
        %688 = vmatpush2.bf16.msra.mxu0 0
        %689 = vmatprep.subr.bf16.mxu0 0
        %690 = vmatpush2.bf16.msra.mxu0 0
        %691 = vmatprep.mubr.bf16.mxu0 0
        %692 = vmatmul.mubr.bf16.gmra.mxu0 %v457
        %v693 = vpop.f32.mrf.mxu0
        %v694 = vadd.f32 0.0, %v693
        %v695 = vpop.f32.mrf.mxu0
        %v696 = vadd.f32 0.0, %v695
        %v697 = vpop.f32.mrf.mxu0
        %v698 = vpop.f32.mrf.mxu0
        %699 = vdwg.mxu0
        %v700 = vadd.f32 %v453, %v653
        %v701 = vadd.f32 %v454, %v655
        %v702 = vadd.f32 %v455, %v694
        %v703 = vadd.f32 %v456, %v696
        %v704 = vxor.u32 %v700, 2147483648
        %v705 = vmul.f32 %v704, 1.442695
        %v706 = vpow.pop %v705
        %v707 = vadd.f32 %v706, 1.0
        %v708 = vrcp.pop %v707
        %v709 = vmul.f32 1.0, %v708
        %v710 = vxor.u32 %v701, 2147483648
        %v711 = vmul.f32 %v710, 1.442695
        %v712 = vpow.pop %v711
        %v713 = vadd.f32 %v712, 1.0
        %v714 = vrcp.pop %v713
        %v715 = vmul.f32 1.0, %v714
        %v716 = vtanh.pop %v702
        %v717 = vxor.u32 %v703, 2147483648
        %v718 = vmul.f32 %v717, 1.442695
        %v719 = vpow.pop %v718
        %v720 = vadd.f32 %v719, 1.0
        %v721 = vrcp.pop %v720
        %v722 = vmul.f32 1.0, %v721
        %v723 = vmul.f32 %v715, %v448
        %v724 = vmul.f32 %v709, %v716
        %v725 = vadd.f32 %v723, %v724
        %v726 = vtanh.pop %v725
        %v727 = vmul.f32 %v722, %v726
        %728 = vst [vmem:[#allocation6] sm:$0xff] %v727
        %s729 = scalar_lea.vmem %s322, 112 [#allocation9]
        %v730 = vld [vmem:[%s729] sm:$0xff]
        %v731 = vld [vmem:[%s729 + $0x8] sm:$0xff]
        %v732 = vunpack.c.l.bf16 %v730
        %v733 = vunpack.c.h.bf16 %v730
        %v734 = vunpack.c.l.bf16 %v731
        %v735 = vunpack.c.h.bf16 %v731
        %v736 = vpack.c.bf16 %v449, %v449
        %v769 = vunpack.c.l.b16 %v415
        %v770 = vunpack.c.h.b16 %v415
        %v771 = vunpack.c.l.b16 %v416
        %v772 = vunpack.c.h.b16 %v416
        %v773 = vunpack.c.l.b16 %v417
        %v774 = vunpack.c.h.b16 %v417
        %v775 = vunpack.c.l.b16 %v418
        %v776 = vunpack.c.h.b16 %v418
        %v777 = vunpack.c.l.b16 %v419
        %v778 = vunpack.c.h.b16 %v419
        %v779 = vunpack.c.l.b16 %v420
        %v780 = vunpack.c.h.b16 %v420
        %v781 = vunpack.c.l.b16 %v421
        %v782 = vunpack.c.h.b16 %v421
        %v783 = vunpack.c.l.b16 %v422
        %v784 = vunpack.c.h.b16 %v422
        %v785 = vunpack.c.l.b16 %v423
        %v786 = vunpack.c.h.b16 %v423
        %v787 = vunpack.c.l.b16 %v424
        %v788 = vunpack.c.h.b16 %v424
        %v789 = vunpack.c.l.b16 %v425
        %v790 = vunpack.c.h.b16 %v425
        %v791 = vunpack.c.l.b16 %v426
        %v792 = vunpack.c.h.b16 %v426
        %v793 = vunpack.c.l.b16 %v427
        %v794 = vunpack.c.h.b16 %v427
        %v795 = vunpack.c.l.b16 %v428
        %v796 = vunpack.c.h.b16 %v428
        %v797 = vunpack.c.l.b16 %v429
        %v798 = vunpack.c.h.b16 %v429
        %v799 = vunpack.c.l.b16 %v430
        %v800 = vunpack.c.h.b16 %v430
        %v801 = vunpack.c.l.b16 %v431
        %v802 = vunpack.c.h.b16 %v431
        %v803 = vunpack.c.l.b16 %v432
        %v804 = vunpack.c.h.b16 %v432
        %v805 = vunpack.c.l.b16 %v433
        %v806 = vunpack.c.h.b16 %v433
        %v807 = vunpack.c.l.b16 %v434
        %v808 = vunpack.c.h.b16 %v434
        %v809 = vunpack.c.l.b16 %v435
        %v810 = vunpack.c.h.b16 %v435
        %v811 = vunpack.c.l.b16 %v436
        %v812 = vunpack.c.h.b16 %v436
        %v813 = vunpack.c.l.b16 %v437
        %v814 = vunpack.c.h.b16 %v437
        %v815 = vunpack.c.l.b16 %v438
        %v816 = vunpack.c.h.b16 %v438
        %v817 = vunpack.c.l.b16 %v439
        %v818 = vunpack.c.h.b16 %v439
        %v819 = vunpack.c.l.b16 %v440
        %v820 = vunpack.c.h.b16 %v440
        %v821 = vunpack.c.l.b16 %v441
        %v822 = vunpack.c.h.b16 %v441
        %v823 = vunpack.c.l.b16 %v442
        %v824 = vunpack.c.h.b16 %v442
        %v825 = vunpack.c.l.b16 %v443
        %v826 = vunpack.c.h.b16 %v443
        %v827 = vunpack.c.l.b16 %v444
        %v828 = vunpack.c.h.b16 %v444
        %v829 = vunpack.c.l.b16 %v445
        %v830 = vunpack.c.h.b16 %v445
        %v831 = vunpack.c.l.b16 %v446
        %v832 = vunpack.c.h.b16 %v446
        %v833 = vpack.c.b16 %v773, %v769
        %v834 = vpack.c.b16 %v774, %v770
        %v835 = vpack.c.b16 %v775, %v771
        %v836 = vpack.c.b16 %v776, %v772
        %v837 = vpack.c.b16 %v781, %v777
        %v838 = vpack.c.b16 %v782, %v778
        %v839 = vpack.c.b16 %v783, %v779
        %v840 = vpack.c.b16 %v784, %v780
        %v841 = vpack.c.b16 %v789, %v785
        %v842 = vpack.c.b16 %v790, %v786
        %v843 = vpack.c.b16 %v791, %v787
        %v844 = vpack.c.b16 %v792, %v788
        %v845 = vpack.c.b16 %v797, %v793
        %v846 = vpack.c.b16 %v798, %v794
        %v847 = vpack.c.b16 %v799, %v795
        %v848 = vpack.c.b16 %v800, %v796
        %v849 = vpack.c.b16 %v805, %v801
        %v850 = vpack.c.b16 %v806, %v802
        %v851 = vpack.c.b16 %v807, %v803
        %v852 = vpack.c.b16 %v808, %v804
        %v853 = vpack.c.b16 %v813, %v809
        %v854 = vpack.c.b16 %v814, %v810
        %v855 = vpack.c.b16 %v815, %v811
        %v856 = vpack.c.b16 %v816, %v812
        %v857 = vpack.c.b16 %v821, %v817
        %v858 = vpack.c.b16 %v822, %v818
        %v859 = vpack.c.b16 %v823, %v819
        %v860 = vpack.c.b16 %v824, %v820
        %v861 = vpack.c.b16 %v829, %v825
        %v862 = vpack.c.b16 %v830, %v826
        %v863 = vpack.c.b16 %v831, %v827
        %v864 = vpack.c.b16 %v832, %v828
        %897 = vmatprep.subr.bf16.mxu0 %v862
        %898 = vmatpush1.bf16.msra.mxu0 %v861
        %899 = vmatprep.subr.bf16.mxu0 %v858
        %900 = vmatpush1.bf16.msra.mxu0 %v857
        %901 = vmatprep.subr.bf16.mxu0 %v854
        %902 = vmatpush1.bf16.msra.mxu0 %v853
        %903 = vmatprep.subr.bf16.mxu0 %v850
        %904 = vmatpush1.bf16.msra.mxu0 %v849
        %905 = vmatprep.subr.bf16.mxu0 %v846
        %906 = vmatpush1.bf16.msra.mxu0 %v845
        %907 = vmatprep.subr.bf16.mxu0 %v842
        %908 = vmatpush1.bf16.msra.mxu0 %v841
        %909 = vmatprep.subr.bf16.mxu0 %v838
        %910 = vmatpush1.bf16.msra.mxu0 %v837
        %911 = vmatprep.subr.bf16.mxu0 %v834
        %912 = vmatpush1.bf16.msra.mxu0 %v833
        %913 = vmatprep.subr.bf16.mxu0 0
        %914 = vmatpush2.bf16.msra.mxu0 0
        %915 = vmatprep.subr.bf16.mxu0 0
        %916 = vmatpush2.bf16.msra.mxu0 0
        %917 = vmatprep.subr.bf16.mxu0 0
        %918 = vmatpush2.bf16.msra.mxu0 0
        %919 = vmatprep.subr.bf16.mxu0 0
        %920 = vmatpush2.bf16.msra.mxu0 0
        %921 = vmatprep.subr.bf16.mxu0 0
        %922 = vmatpush2.bf16.msra.mxu0 0
        %923 = vmatprep.subr.bf16.mxu0 0
        %924 = vmatpush2.bf16.msra.mxu0 0
        %925 = vmatprep.subr.bf16.mxu0 0
        %926 = vmatpush2.bf16.msra.mxu0 0
        %927 = vmatprep.subr.bf16.mxu0 0
        %928 = vmatpush2.bf16.msra.mxu0 0
        %929 = vmatprep.mubr.bf16.mxu0 0
        %930 = vmatmul.mubr.bf16.gmra.mxu0 %v736
        %v931 = vpop.f32.mrf.mxu0
        %v932 = vadd.f32 0.0, %v931
        %v933 = vpop.f32.mrf.mxu0
        %v934 = vadd.f32 0.0, %v933
        %v935 = vpop.f32.mrf.mxu0
        %v936 = vpop.f32.mrf.mxu0
        %937 = vdwg.mxu0
        %938 = vmatprep.subr.bf16.mxu0 %v864
        %939 = vmatpush1.bf16.msra.mxu0 %v863
        %940 = vmatprep.subr.bf16.mxu0 %v860
        %941 = vmatpush1.bf16.msra.mxu0 %v859
        %942 = vmatprep.subr.bf16.mxu0 %v856
        %943 = vmatpush1.bf16.msra.mxu0 %v855
        %944 = vmatprep.subr.bf16.mxu0 %v852
        %945 = vmatpush1.bf16.msra.mxu0 %v851
        %946 = vmatprep.subr.bf16.mxu0 %v848
        %947 = vmatpush1.bf16.msra.mxu0 %v847
        %948 = vmatprep.subr.bf16.mxu0 %v844
        %949 = vmatpush1.bf16.msra.mxu0 %v843
        %950 = vmatprep.subr.bf16.mxu0 %v840
        %951 = vmatpush1.bf16.msra.mxu0 %v839
        %952 = vmatprep.subr.bf16.mxu0 %v836
        %953 = vmatpush1.bf16.msra.mxu0 %v835
        %954 = vmatprep.subr.bf16.mxu0 0
        %955 = vmatpush2.bf16.msra.mxu0 0
        %956 = vmatprep.subr.bf16.mxu0 0
        %957 = vmatpush2.bf16.msra.mxu0 0
        %958 = vmatprep.subr.bf16.mxu0 0
        %959 = vmatpush2.bf16.msra.mxu0 0
        %960 = vmatprep.subr.bf16.mxu0 0
        %961 = vmatpush2.bf16.msra.mxu0 0
        %962 = vmatprep.subr.bf16.mxu0 0
        %963 = vmatpush2.bf16.msra.mxu0 0
        %964 = vmatprep.subr.bf16.mxu0 0
        %965 = vmatpush2.bf16.msra.mxu0 0
        %966 = vmatprep.subr.bf16.mxu0 0
        %967 = vmatpush2.bf16.msra.mxu0 0
        %968 = vmatprep.subr.bf16.mxu0 0
        %969 = vmatpush2.bf16.msra.mxu0 0
        %970 = vmatprep.mubr.bf16.mxu0 0
        %971 = vmatmul.mubr.bf16.gmra.mxu0 %v736
        %v972 = vpop.f32.mrf.mxu0
        %v973 = vadd.f32 0.0, %v972
        %v974 = vpop.f32.mrf.mxu0
        %v975 = vadd.f32 0.0, %v974
        %v976 = vpop.f32.mrf.mxu0
        %v977 = vpop.f32.mrf.mxu0
        %978 = vdwg.mxu0
        %v979 = vadd.f32 %v732, %v932
        %v980 = vadd.f32 %v733, %v934
        %v981 = vadd.f32 %v734, %v973
        %v982 = vadd.f32 %v735, %v975
        %v983 = vxor.u32 %v979, 2147483648
        %v984 = vmul.f32 %v983, 1.442695
        %v985 = vpow.pop %v984
        %v986 = vadd.f32 %v985, 1.0
        %v987 = vrcp.pop %v986
        %v988 = vmul.f32 1.0, %v987
        %v989 = vxor.u32 %v980, 2147483648
        %v990 = vmul.f32 %v989, 1.442695
        %v991 = vpow.pop %v990
        %v992 = vadd.f32 %v991, 1.0
        %v993 = vrcp.pop %v992
        %v994 = vmul.f32 1.0, %v993
        %v995 = vtanh.pop %v981
        %v996 = vxor.u32 %v982, 2147483648
        %v997 = vmul.f32 %v996, 1.442695
        %v998 = vpow.pop %v997
        %v999 = vadd.f32 %v998, 1.0
        %v1000 = vrcp.pop %v999
        %v1001 = vmul.f32 1.0, %v1000
        %v1002 = vmul.f32 %v994, %v450
        %v1003 = vmul.f32 %v988, %v995
        %v1004 = vadd.f32 %v1002, %v1003
        %v1005 = vtanh.pop %v1004
        %v1006 = vmul.f32 %v1001, %v1005
        %s1007 = scalar_lea.vmem [#allocation7], 56
        %1008 = vst [vmem:[%s1007] sm:$0xff] %v1006
        %s1009 = scalar_lea.vmem %s315, 16 [#allocation8]
        %v1010 = vld [vmem:[%s1009] sm:$0xff]
        %v1011 = vld [vmem:[%s1009 + $0x8] sm:$0xff]
        %v1012 = vunpack.c.l.bf16 %v1010
        %v1013 = vunpack.c.h.bf16 %v1010
        %v1014 = vunpack.c.l.bf16 %v1011
        %v1015 = vunpack.c.h.bf16 %v1011
        %v1016 = vpack.c.bf16 %v727, %v727
        %1017 = vmatprep.subr.bf16.mxu0 %v583
        %1018 = vmatpush1.bf16.msra.mxu0 %v582
        %1019 = vmatprep.subr.bf16.mxu0 %v579
        %1020 = vmatpush1.bf16.msra.mxu0 %v578
        %1021 = vmatprep.subr.bf16.mxu0 %v575
        %1022 = vmatpush1.bf16.msra.mxu0 %v574
        %1023 = vmatprep.subr.bf16.mxu0 %v571
        %1024 = vmatpush1.bf16.msra.mxu0 %v570
        %1025 = vmatprep.subr.bf16.mxu0 %v567
        %1026 = vmatpush1.bf16.msra.mxu0 %v566
        %1027 = vmatprep.subr.bf16.mxu0 %v563
        %1028 = vmatpush1.bf16.msra.mxu0 %v562
        %1029 = vmatprep.subr.bf16.mxu0 %v559
        %1030 = vmatpush1.bf16.msra.mxu0 %v558
        %1031 = vmatprep.subr.bf16.mxu0 %v555
        %1032 = vmatpush1.bf16.msra.mxu0 %v554
        %1033 = vmatprep.subr.bf16.mxu0 0
        %1034 = vmatpush2.bf16.msra.mxu0 0
        %1035 = vmatprep.subr.bf16.mxu0 0
        %1036 = vmatpush2.bf16.msra.mxu0 0
        %1037 = vmatprep.subr.bf16.mxu0 0
        %1038 = vmatpush2.bf16.msra.mxu0 0
        %1039 = vmatprep.subr.bf16.mxu0 0
        %1040 = vmatpush2.bf16.msra.mxu0 0
        %1041 = vmatprep.subr.bf16.mxu0 0
        %1042 = vmatpush2.bf16.msra.mxu0 0
        %1043 = vmatprep.subr.bf16.mxu0 0
        %1044 = vmatpush2.bf16.msra.mxu0 0
        %1045 = vmatprep.subr.bf16.mxu0 0
        %1046 = vmatpush2.bf16.msra.mxu0 0
        %1047 = vmatprep.subr.bf16.mxu0 0
        %1048 = vmatpush2.bf16.msra.mxu0 0
        %1049 = vmatprep.mubr.bf16.mxu0 0
        %1050 = vmatmul.mubr.bf16.gmra.mxu0 %v1016
        %v1051 = vpop.f32.mrf.mxu0
        %v1052 = vadd.f32 0.0, %v1051
        %v1053 = vpop.f32.mrf.mxu0
        %v1054 = vadd.f32 0.0, %v1053
        %v1055 = vpop.f32.mrf.mxu0
        %v1056 = vpop.f32.mrf.mxu0
        %1057 = vdwg.mxu0
        %1058 = vmatprep.subr.bf16.mxu0 %v585
        %1059 = vmatpush1.bf16.msra.mxu0 %v584
        %1060 = vmatprep.subr.bf16.mxu0 %v581
        %1061 = vmatpush1.bf16.msra.mxu0 %v580
        %1062 = vmatprep.subr.bf16.mxu0 %v577
        %1063 = vmatpush1.bf16.msra.mxu0 %v576
        %1064 = vmatprep.subr.bf16.mxu0 %v573
        %1065 = vmatpush1.bf16.msra.mxu0 %v572
        %1066 = vmatprep.subr.bf16.mxu0 %v569
        %1067 = vmatpush1.bf16.msra.mxu0 %v568
        %1068 = vmatprep.subr.bf16.mxu0 %v565
        %1069 = vmatpush1.bf16.msra.mxu0 %v564
        %1070 = vmatprep.subr.bf16.mxu0 %v561
        %1071 = vmatpush1.bf16.msra.mxu0 %v560
        %1072 = vmatprep.subr.bf16.mxu0 %v557
        %1073 = vmatpush1.bf16.msra.mxu0 %v556
        %1074 = vmatprep.subr.bf16.mxu0 0
        %1075 = vmatpush2.bf16.msra.mxu0 0
        %1076 = vmatprep.subr.bf16.mxu0 0
        %1077 = vmatpush2.bf16.msra.mxu0 0
        %1078 = vmatprep.subr.bf16.mxu0 0
        %1079 = vmatpush2.bf16.msra.mxu0 0
        %1080 = vmatprep.subr.bf16.mxu0 0
        %1081 = vmatpush2.bf16.msra.mxu0 0
        %1082 = vmatprep.subr.bf16.mxu0 0
        %1083 = vmatpush2.bf16.msra.mxu0 0
        %1084 = vmatprep.subr.bf16.mxu0 0
        %1085 = vmatpush2.bf16.msra.mxu0 0
        %1086 = vmatprep.subr.bf16.mxu0 0
        %1087 = vmatpush2.bf16.msra.mxu0 0
        %1088 = vmatprep.subr.bf16.mxu0 0
        %1089 = vmatpush2.bf16.msra.mxu0 0
        %1090 = vmatprep.mubr.bf16.mxu0 0
        %1091 = vmatmul.mubr.bf16.gmra.mxu0 %v1016
        %v1092 = vpop.f32.mrf.mxu0
        %v1093 = vadd.f32 0.0, %v1092
        %v1094 = vpop.f32.mrf.mxu0
        %v1095 = vadd.f32 0.0, %v1094
        %v1096 = vpop.f32.mrf.mxu0
        %v1097 = vpop.f32.mrf.mxu0
        %1098 = vdwg.mxu0
        %v1099 = vadd.f32 %v1012, %v1052
        %v1100 = vadd.f32 %v1013, %v1054
        %v1101 = vadd.f32 %v1014, %v1093
        %v1102 = vadd.f32 %v1015, %v1095
        %v1103 = vxor.u32 %v1099, 2147483648
        %v1104 = vmul.f32 %v1103, 1.442695
        %v1105 = vpow.pop %v1104
        %v1106 = vadd.f32 %v1105, 1.0
        %v1107 = vrcp.pop %v1106
        %v1108 = vmul.f32 1.0, %v1107
        %v1109 = vxor.u32 %v1100, 2147483648
        %v1110 = vmul.f32 %v1109, 1.442695
        %v1111 = vpow.pop %v1110
        %v1112 = vadd.f32 %v1111, 1.0
        %v1113 = vrcp.pop %v1112
        %v1114 = vmul.f32 1.0, %v1113
        %v1115 = vtanh.pop %v1101
        %v1116 = vxor.u32 %v1102, 2147483648
        %v1117 = vmul.f32 %v1116, 1.442695
        %v1118 = vpow.pop %v1117
        %v1119 = vadd.f32 %v1118, 1.0
        %v1120 = vrcp.pop %v1119
        %v1121 = vmul.f32 1.0, %v1120
        %v1122 = vmul.f32 %v1114, %v725
        %v1123 = vmul.f32 %v1108, %v1115
        %v1124 = vadd.f32 %v1122, %v1123
        %v1125 = vtanh.pop %v1124
        %v1126 = vmul.f32 %v1121, %v1125
        %s1127 = scalar_lea.vmem [#allocation6], 8
        %1128 = vst [vmem:[%s1127] sm:$0xff] %v1126
        %s1129 = scalar_lea.vmem %s322, 96 [#allocation9]
        %v1130 = vld [vmem:[%s1129] sm:$0xff]
        %v1131 = vld [vmem:[%s1129 + $0x8] sm:$0xff]
        %v1132 = vunpack.c.l.bf16 %v1130
        %v1133 = vunpack.c.h.bf16 %v1130
        %v1134 = vunpack.c.l.bf16 %v1131
        %v1135 = vunpack.c.h.bf16 %v1131
        %v1136 = vpack.c.bf16 %v1006, %v1006
        %1137 = vmatprep.subr.bf16.mxu0 %v862
        %1138 = vmatpush1.bf16.msra.mxu0 %v861
        %1139 = vmatprep.subr.bf16.mxu0 %v858
        %1140 = vmatpush1.bf16.msra.mxu0 %v857
        %1141 = vmatprep.subr.bf16.mxu0 %v854
        %1142 = vmatpush1.bf16.msra.mxu0 %v853
        %1143 = vmatprep.subr.bf16.mxu0 %v850
        %1144 = vmatpush1.bf16.msra.mxu0 %v849
        %1145 = vmatprep.subr.bf16.mxu0 %v846
        %1146 = vmatpush1.bf16.msra.mxu0 %v845
        %1147 = vmatprep.subr.bf16.mxu0 %v842
        %1148 = vmatpush1.bf16.msra.mxu0 %v841
        %1149 = vmatprep.subr.bf16.mxu0 %v838
        %1150 = vmatpush1.bf16.msra.mxu0 %v837
        %1151 = vmatprep.subr.bf16.mxu0 %v834
        %1152 = vmatpush1.bf16.msra.mxu0 %v833
        %1153 = vmatprep.subr.bf16.mxu0 0
        %1154 = vmatpush2.bf16.msra.mxu0 0
        %1155 = vmatprep.subr.bf16.mxu0 0
        %1156 = vmatpush2.bf16.msra.mxu0 0
        %1157 = vmatprep.subr.bf16.mxu0 0
        %1158 = vmatpush2.bf16.msra.mxu0 0
        %1159 = vmatprep.subr.bf16.mxu0 0
        %1160 = vmatpush2.bf16.msra.mxu0 0
        %1161 = vmatprep.subr.bf16.mxu0 0
        %1162 = vmatpush2.bf16.msra.mxu0 0
        %1163 = vmatprep.subr.bf16.mxu0 0
        %1164 = vmatpush2.bf16.msra.mxu0 0
        %1165 = vmatprep.subr.bf16.mxu0 0
        %1166 = vmatpush2.bf16.msra.mxu0 0
        %1167 = vmatprep.subr.bf16.mxu0 0
        %1168 = vmatpush2.bf16.msra.mxu0 0
        %1169 = vmatprep.mubr.bf16.mxu0 0
        %1170 = vmatmul.mubr.bf16.gmra.mxu0 %v1136
        %v1171 = vpop.f32.mrf.mxu0
        %v1172 = vadd.f32 0.0, %v1171
        %v1173 = vpop.f32.mrf.mxu0
        %v1174 = vadd.f32 0.0, %v1173
        %v1175 = vpop.f32.mrf.mxu0
        %v1176 = vpop.f32.mrf.mxu0
        %1177 = vdwg.mxu0
        %1178 = vmatprep.subr.bf16.mxu0 %v864
        %1179 = vmatpush1.bf16.msra.mxu0 %v863
        %1180 = vmatprep.subr.bf16.mxu0 %v860
        %1181 = vmatpush1.bf16.msra.mxu0 %v859
        %1182 = vmatprep.subr.bf16.mxu0 %v856
        %1183 = vmatpush1.bf16.msra.mxu0 %v855
        %1184 = vmatprep.subr.bf16.mxu0 %v852
        %1185 = vmatpush1.bf16.msra.mxu0 %v851
        %1186 = vmatprep.subr.bf16.mxu0 %v848
        %1187 = vmatpush1.bf16.msra.mxu0 %v847
        %1188 = vmatprep.subr.bf16.mxu0 %v844
        %1189 = vmatpush1.bf16.msra.mxu0 %v843
        %1190 = vmatprep.subr.bf16.mxu0 %v840
        %1191 = vmatpush1.bf16.msra.mxu0 %v839
        %1192 = vmatprep.subr.bf16.mxu0 %v836
        %1193 = vmatpush1.bf16.msra.mxu0 %v835
        %1194 = vmatprep.subr.bf16.mxu0 0
        %1195 = vmatpush2.bf16.msra.mxu0 0
        %1196 = vmatprep.subr.bf16.mxu0 0
        %1197 = vmatpush2.bf16.msra.mxu0 0
        %1198 = vmatprep.subr.bf16.mxu0 0
        %1199 = vmatpush2.bf16.msra.mxu0 0
        %1200 = vmatprep.subr.bf16.mxu0 0
        %1201 = vmatpush2.bf16.msra.mxu0 0
        %1202 = vmatprep.subr.bf16.mxu0 0
        %1203 = vmatpush2.bf16.msra.mxu0 0
        %1204 = vmatprep.subr.bf16.mxu0 0
        %1205 = vmatpush2.bf16.msra.mxu0 0
        %1206 = vmatprep.subr.bf16.mxu0 0
        %1207 = vmatpush2.bf16.msra.mxu0 0
        %1208 = vmatprep.subr.bf16.mxu0 0
        %1209 = vmatpush2.bf16.msra.mxu0 0
        %1210 = vmatprep.mubr.bf16.mxu0 0
        %1211 = vmatmul.mubr.bf16.gmra.mxu0 %v1136
        %v1212 = vpop.f32.mrf.mxu0
        %v1213 = vadd.f32 0.0, %v1212
        %v1214 = vpop.f32.mrf.mxu0
        %v1215 = vadd.f32 0.0, %v1214
        %v1216 = vpop.f32.mrf.mxu0
        %v1217 = vpop.f32.mrf.mxu0
        %1218 = vdwg.mxu0
        %v1219 = vadd.f32 %v1132, %v1172
        %v1220 = vadd.f32 %v1133, %v1174
        %v1221 = vadd.f32 %v1134, %v1213
        %v1222 = vadd.f32 %v1135, %v1215
        %v1223 = vxor.u32 %v1219, 2147483648
        %v1224 = vmul.f32 %v1223, 1.442695
        %v1225 = vpow.pop %v1224
        %v1226 = vadd.f32 %v1225, 1.0
        %v1227 = vrcp.pop %v1226
        %v1228 = vmul.f32 1.0, %v1227
        %v1229 = vxor.u32 %v1220, 2147483648
        %v1230 = vmul.f32 %v1229, 1.442695
        %v1231 = vpow.pop %v1230
        %v1232 = vadd.f32 %v1231, 1.0
        %v1233 = vrcp.pop %v1232
        %v1234 = vmul.f32 1.0, %v1233
        %v1235 = vtanh.pop %v1221
        %v1236 = vxor.u32 %v1222, 2147483648
        %v1237 = vmul.f32 %v1236, 1.442695
        %v1238 = vpow.pop %v1237
        %v1239 = vadd.f32 %v1238, 1.0
        %v1240 = vrcp.pop %v1239
        %v1241 = vmul.f32 1.0, %v1240
        %v1242 = vmul.f32 %v1234, %v1004
        %v1243 = vmul.f32 %v1228, %v1235
        %v1244 = vadd.f32 %v1242, %v1243
        %v1245 = vtanh.pop %v1244
        %v1246 = vmul.f32 %v1241, %v1245
        %s1247 = scalar_lea.vmem [#allocation7], 48
        %1248 = vst [vmem:[%s1247] sm:$0xff] %v1246
        %s1249 = scalar_lea.vmem %s315, 32 [#allocation8]
        %v1250 = vld [vmem:[%s1249] sm:$0xff]
        %v1251 = vld [vmem:[%s1249 + $0x8] sm:$0xff]
        %v1252 = vunpack.c.l.bf16 %v1250
        %v1253 = vunpack.c.h.bf16 %v1250
        %v1254 = vunpack.c.l.bf16 %v1251
        %v1255 = vunpack.c.h.bf16 %v1251
        %v1256 = vpack.c.bf16 %v1126, %v1126
        %1257 = vmatprep.subr.bf16.mxu0 %v583
        %1258 = vmatpush1.bf16.msra.mxu0 %v582
        %1259 = vmatprep.subr.bf16.mxu0 %v579
        %1260 = vmatpush1.bf16.msra.mxu0 %v578
        %1261 = vmatprep.subr.bf16.mxu0 %v575
        %1262 = vmatpush1.bf16.msra.mxu0 %v574
        %1263 = vmatprep.subr.bf16.mxu0 %v571
        %1264 = vmatpush1.bf16.msra.mxu0 %v570
        %1265 = vmatprep.subr.bf16.mxu0 %v567
        %1266 = vmatpush1.bf16.msra.mxu0 %v566
        %1267 = vmatprep.subr.bf16.mxu0 %v563
        %1268 = vmatpush1.bf16.msra.mxu0 %v562
        %1269 = vmatprep.subr.bf16.mxu0 %v559
        %1270 = vmatpush1.bf16.msra.mxu0 %v558
        %1271 = vmatprep.subr.bf16.mxu0 %v555
        %1272 = vmatpush1.bf16.msra.mxu0 %v554
        %1273 = vmatprep.subr.bf16.mxu0 0
        %1274 = vmatpush2.bf16.msra.mxu0 0
        %1275 = vmatprep.subr.bf16.mxu0 0
        %1276 = vmatpush2.bf16.msra.mxu0 0
        %1277 = vmatprep.subr.bf16.mxu0 0
        %1278 = vmatpush2.bf16.msra.mxu0 0
        %1279 = vmatprep.subr.bf16.mxu0 0
        %1280 = vmatpush2.bf16.msra.mxu0 0
        %1281 = vmatprep.subr.bf16.mxu0 0
        %1282 = vmatpush2.bf16.msra.mxu0 0
        %1283 = vmatprep.subr.bf16.mxu0 0
        %1284 = vmatpush2.bf16.msra.mxu0 0
        %1285 = vmatprep.subr.bf16.mxu0 0
        %1286 = vmatpush2.bf16.msra.mxu0 0
        %1287 = vmatprep.subr.bf16.mxu0 0
        %1288 = vmatpush2.bf16.msra.mxu0 0
        %1289 = vmatprep.mubr.bf16.mxu0 0
        %1290 = vmatmul.mubr.bf16.gmra.mxu0 %v1256
        %v1291 = vpop.f32.mrf.mxu0
        %v1292 = vadd.f32 0.0, %v1291
        %v1293 = vpop.f32.mrf.mxu0
        %v1294 = vadd.f32 0.0, %v1293
        %v1295 = vpop.f32.mrf.mxu0
        %v1296 = vpop.f32.mrf.mxu0
        %1297 = vdwg.mxu0
        %1298 = vmatprep.subr.bf16.mxu0 %v585
        %1299 = vmatpush1.bf16.msra.mxu0 %v584
        %1300 = vmatprep.subr.bf16.mxu0 %v581
        %1301 = vmatpush1.bf16.msra.mxu0 %v580
        %1302 = vmatprep.subr.bf16.mxu0 %v577
        %1303 = vmatpush1.bf16.msra.mxu0 %v576
        %1304 = vmatprep.subr.bf16.mxu0 %v573
        %1305 = vmatpush1.bf16.msra.mxu0 %v572
        %1306 = vmatprep.subr.bf16.mxu0 %v569
        %1307 = vmatpush1.bf16.msra.mxu0 %v568
        %1308 = vmatprep.subr.bf16.mxu0 %v565
        %1309 = vmatpush1.bf16.msra.mxu0 %v564
        %1310 = vmatprep.subr.bf16.mxu0 %v561
        %1311 = vmatpush1.bf16.msra.mxu0 %v560
        %1312 = vmatprep.subr.bf16.mxu0 %v557
        %1313 = vmatpush1.bf16.msra.mxu0 %v556
        %1314 = vmatprep.subr.bf16.mxu0 0
        %1315 = vmatpush2.bf16.msra.mxu0 0
        %1316 = vmatprep.subr.bf16.mxu0 0
        %1317 = vmatpush2.bf16.msra.mxu0 0
        %1318 = vmatprep.subr.bf16.mxu0 0
        %1319 = vmatpush2.bf16.msra.mxu0 0
        %1320 = vmatprep.subr.bf16.mxu0 0
        %1321 = vmatpush2.bf16.msra.mxu0 0
        %1322 = vmatprep.subr.bf16.mxu0 0
        %1323 = vmatpush2.bf16.msra.mxu0 0
        %1324 = vmatprep.subr.bf16.mxu0 0
        %1325 = vmatpush2.bf16.msra.mxu0 0
        %1326 = vmatprep.subr.bf16.mxu0 0
        %1327 = vmatpush2.bf16.msra.mxu0 0
        %1328 = vmatprep.subr.bf16.mxu0 0
        %1329 = vmatpush2.bf16.msra.mxu0 0
        %1330 = vmatprep.mubr.bf16.mxu0 0
        %1331 = vmatmul.mubr.bf16.gmra.mxu0 %v1256
        %v1332 = vpop.f32.mrf.mxu0
        %v1333 = vadd.f32 0.0, %v1332
        %v1334 = vpop.f32.mrf.mxu0
        %v1335 = vadd.f32 0.0, %v1334
        %v1336 = vpop.f32.mrf.mxu0
        %v1337 = vpop.f32.mrf.mxu0
        %1338 = vdwg.mxu0
        %v1339 = vadd.f32 %v1252, %v1292
        %v1340 = vadd.f32 %v1253, %v1294
        %v1341 = vadd.f32 %v1254, %v1333
        %v1342 = vadd.f32 %v1255, %v1335
        %v1343 = vxor.u32 %v1339, 2147483648
        %v1344 = vmul.f32 %v1343, 1.442695
        %v1345 = vpow.pop %v1344
        %v1346 = vadd.f32 %v1345, 1.0
        %v1347 = vrcp.pop %v1346
        %v1348 = vmul.f32 1.0, %v1347
        %v1349 = vxor.u32 %v1340, 2147483648
        %v1350 = vmul.f32 %v1349, 1.442695
        %v1351 = vpow.pop %v1350
        %v1352 = vadd.f32 %v1351, 1.0
        %v1353 = vrcp.pop %v1352
        %v1354 = vmul.f32 1.0, %v1353
        %v1355 = vtanh.pop %v1341
        %v1356 = vxor.u32 %v1342, 2147483648
        %v1357 = vmul.f32 %v1356, 1.442695
        %v1358 = vpow.pop %v1357
        %v1359 = vadd.f32 %v1358, 1.0
        %v1360 = vrcp.pop %v1359
        %v1361 = vmul.f32 1.0, %v1360
        %v1362 = vmul.f32 %v1354, %v1124
        %v1363 = vmul.f32 %v1348, %v1355
        %v1364 = vadd.f32 %v1362, %v1363
        %v1365 = vtanh.pop %v1364
        %v1366 = vmul.f32 %v1361, %v1365
        %s1367 = scalar_lea.vmem [#allocation6], 16
        %1368 = vst [vmem:[%s1367] sm:$0xff] %v1366
        %s1369 = scalar_lea.vmem %s322, 80 [#allocation9]
        %v1370 = vld [vmem:[%s1369] sm:$0xff]
        %v1371 = vld [vmem:[%s1369 + $0x8] sm:$0xff]
        %v1372 = vunpack.c.l.bf16 %v1370
        %v1373 = vunpack.c.h.bf16 %v1370
        %v1374 = vunpack.c.l.bf16 %v1371
        %v1375 = vunpack.c.h.bf16 %v1371
        %v1376 = vpack.c.bf16 %v1246, %v1246
        %1377 = vmatprep.subr.bf16.mxu0 %v862
        %1378 = vmatpush1.bf16.msra.mxu0 %v861
        %1379 = vmatprep.subr.bf16.mxu0 %v858
        %1380 = vmatpush1.bf16.msra.mxu0 %v857
        %1381 = vmatprep.subr.bf16.mxu0 %v854
        %1382 = vmatpush1.bf16.msra.mxu0 %v853
        %1383 = vmatprep.subr.bf16.mxu0 %v850
        %1384 = vmatpush1.bf16.msra.mxu0 %v849
        %1385 = vmatprep.subr.bf16.mxu0 %v846
        %1386 = vmatpush1.bf16.msra.mxu0 %v845
        %1387 = vmatprep.subr.bf16.mxu0 %v842
        %1388 = vmatpush1.bf16.msra.mxu0 %v841
        %1389 = vmatprep.subr.bf16.mxu0 %v838
        %1390 = vmatpush1.bf16.msra.mxu0 %v837
        %1391 = vmatprep.subr.bf16.mxu0 %v834
        %1392 = vmatpush1.bf16.msra.mxu0 %v833
        %1393 = vmatprep.subr.bf16.mxu0 0
        %1394 = vmatpush2.bf16.msra.mxu0 0
        %1395 = vmatprep.subr.bf16.mxu0 0
        %1396 = vmatpush2.bf16.msra.mxu0 0
        %1397 = vmatprep.subr.bf16.mxu0 0
        %1398 = vmatpush2.bf16.msra.mxu0 0
        %1399 = vmatprep.subr.bf16.mxu0 0
        %1400 = vmatpush2.bf16.msra.mxu0 0
        %1401 = vmatprep.subr.bf16.mxu0 0
        %1402 = vmatpush2.bf16.msra.mxu0 0
        %1403 = vmatprep.subr.bf16.mxu0 0
        %1404 = vmatpush2.bf16.msra.mxu0 0
        %1405 = vmatprep.subr.bf16.mxu0 0
        %1406 = vmatpush2.bf16.msra.mxu0 0
        %1407 = vmatprep.subr.bf16.mxu0 0
        %1408 = vmatpush2.bf16.msra.mxu0 0
        %1409 = vmatprep.mubr.bf16.mxu0 0
        %1410 = vmatmul.mubr.bf16.gmra.mxu0 %v1376
        %v1411 = vpop.f32.mrf.mxu0
        %v1412 = vadd.f32 0.0, %v1411
        %v1413 = vpop.f32.mrf.mxu0
        %v1414 = vadd.f32 0.0, %v1413
        %v1415 = vpop.f32.mrf.mxu0
        %v1416 = vpop.f32.mrf.mxu0
        %1417 = vdwg.mxu0
        %1418 = vmatprep.subr.bf16.mxu0 %v864
        %1419 = vmatpush1.bf16.msra.mxu0 %v863
        %1420 = vmatprep.subr.bf16.mxu0 %v860
        %1421 = vmatpush1.bf16.msra.mxu0 %v859
        %1422 = vmatprep.subr.bf16.mxu0 %v856
        %1423 = vmatpush1.bf16.msra.mxu0 %v855
        %1424 = vmatprep.subr.bf16.mxu0 %v852
        %1425 = vmatpush1.bf16.msra.mxu0 %v851
        %1426 = vmatprep.subr.bf16.mxu0 %v848
        %1427 = vmatpush1.bf16.msra.mxu0 %v847
        %1428 = vmatprep.subr.bf16.mxu0 %v844
        %1429 = vmatpush1.bf16.msra.mxu0 %v843
        %1430 = vmatprep.subr.bf16.mxu0 %v840
        %1431 = vmatpush1.bf16.msra.mxu0 %v839
        %1432 = vmatprep.subr.bf16.mxu0 %v836
        %1433 = vmatpush1.bf16.msra.mxu0 %v835
        %1434 = vmatprep.subr.bf16.mxu0 0
        %1435 = vmatpush2.bf16.msra.mxu0 0
        %1436 = vmatprep.subr.bf16.mxu0 0
        %1437 = vmatpush2.bf16.msra.mxu0 0
        %1438 = vmatprep.subr.bf16.mxu0 0
        %1439 = vmatpush2.bf16.msra.mxu0 0
        %1440 = vmatprep.subr.bf16.mxu0 0
        %1441 = vmatpush2.bf16.msra.mxu0 0
        %1442 = vmatprep.subr.bf16.mxu0 0
        %1443 = vmatpush2.bf16.msra.mxu0 0
        %1444 = vmatprep.subr.bf16.mxu0 0
        %1445 = vmatpush2.bf16.msra.mxu0 0
        %1446 = vmatprep.subr.bf16.mxu0 0
        %1447 = vmatpush2.bf16.msra.mxu0 0
        %1448 = vmatprep.subr.bf16.mxu0 0
        %1449 = vmatpush2.bf16.msra.mxu0 0
        %1450 = vmatprep.mubr.bf16.mxu0 0
        %1451 = vmatmul.mubr.bf16.gmra.mxu0 %v1376
        %v1452 = vpop.f32.mrf.mxu0
        %v1453 = vadd.f32 0.0, %v1452
        %v1454 = vpop.f32.mrf.mxu0
        %v1455 = vadd.f32 0.0, %v1454
        %v1456 = vpop.f32.mrf.mxu0
        %v1457 = vpop.f32.mrf.mxu0
        %1458 = vdwg.mxu0
        %v1459 = vadd.f32 %v1372, %v1412
        %v1460 = vadd.f32 %v1373, %v1414
        %v1461 = vadd.f32 %v1374, %v1453
        %v1462 = vadd.f32 %v1375, %v1455
        %v1463 = vxor.u32 %v1459, 2147483648
        %v1464 = vmul.f32 %v1463, 1.442695
        %v1465 = vpow.pop %v1464
        %v1466 = vadd.f32 %v1465, 1.0
        %v1467 = vrcp.pop %v1466
        %v1468 = vmul.f32 1.0, %v1467
        %v1469 = vxor.u32 %v1460, 2147483648
        %v1470 = vmul.f32 %v1469, 1.442695
        %v1471 = vpow.pop %v1470
        %v1472 = vadd.f32 %v1471, 1.0
        %v1473 = vrcp.pop %v1472
        %v1474 = vmul.f32 1.0, %v1473
        %v1475 = vtanh.pop %v1461
        %v1476 = vxor.u32 %v1462, 2147483648
        %v1477 = vmul.f32 %v1476, 1.442695
        %v1478 = vpow.pop %v1477
        %v1479 = vadd.f32 %v1478, 1.0
        %v1480 = vrcp.pop %v1479
        %v1481 = vmul.f32 1.0, %v1480
        %v1482 = vmul.f32 %v1474, %v1244
        %v1483 = vmul.f32 %v1468, %v1475
        %v1484 = vadd.f32 %v1482, %v1483
        %v1485 = vtanh.pop %v1484
        %v1486 = vmul.f32 %v1481, %v1485
        %s1487 = scalar_lea.vmem [#allocation7], 40
        %1488 = vst [vmem:[%s1487] sm:$0xff] %v1486
        %s1489 = scalar_lea.vmem %s315, 48 [#allocation8]
        %v1490 = vld [vmem:[%s1489] sm:$0xff]
        %v1491 = vld [vmem:[%s1489 + $0x8] sm:$0xff]
        %v1492 = vunpack.c.l.bf16 %v1490
        %v1493 = vunpack.c.h.bf16 %v1490
        %v1494 = vunpack.c.l.bf16 %v1491
        %v1495 = vunpack.c.h.bf16 %v1491
        %v1496 = vpack.c.bf16 %v1366, %v1366
        %1497 = vmatprep.subr.bf16.mxu0 %v583
        %1498 = vmatpush1.bf16.msra.mxu0 %v582
        %1499 = vmatprep.subr.bf16.mxu0 %v579
        %1500 = vmatpush1.bf16.msra.mxu0 %v578
        %1501 = vmatprep.subr.bf16.mxu0 %v575
        %1502 = vmatpush1.bf16.msra.mxu0 %v574
        %1503 = vmatprep.subr.bf16.mxu0 %v571
        %1504 = vmatpush1.bf16.msra.mxu0 %v570
        %1505 = vmatprep.subr.bf16.mxu0 %v567
        %1506 = vmatpush1.bf16.msra.mxu0 %v566
        %1507 = vmatprep.subr.bf16.mxu0 %v563
        %1508 = vmatpush1.bf16.msra.mxu0 %v562
        %1509 = vmatprep.subr.bf16.mxu0 %v559
        %1510 = vmatpush1.bf16.msra.mxu0 %v558
        %1511 = vmatprep.subr.bf16.mxu0 %v555
        %1512 = vmatpush1.bf16.msra.mxu0 %v554
        %1513 = vmatprep.subr.bf16.mxu0 0
        %1514 = vmatpush2.bf16.msra.mxu0 0
        %1515 = vmatprep.subr.bf16.mxu0 0
        %1516 = vmatpush2.bf16.msra.mxu0 0
        %1517 = vmatprep.subr.bf16.mxu0 0
        %1518 = vmatpush2.bf16.msra.mxu0 0
        %1519 = vmatprep.subr.bf16.mxu0 0
        %1520 = vmatpush2.bf16.msra.mxu0 0
        %1521 = vmatprep.subr.bf16.mxu0 0
        %1522 = vmatpush2.bf16.msra.mxu0 0
        %1523 = vmatprep.subr.bf16.mxu0 0
        %1524 = vmatpush2.bf16.msra.mxu0 0
        %1525 = vmatprep.subr.bf16.mxu0 0
        %1526 = vmatpush2.bf16.msra.mxu0 0
        %1527 = vmatprep.subr.bf16.mxu0 0
        %1528 = vmatpush2.bf16.msra.mxu0 0
        %1529 = vmatprep.mubr.bf16.mxu0 0
        %1530 = vmatmul.mubr.bf16.gmra.mxu0 %v1496
        %v1531 = vpop.f32.mrf.mxu0
        %v1532 = vadd.f32 0.0, %v1531
        %v1533 = vpop.f32.mrf.mxu0
        %v1534 = vadd.f32 0.0, %v1533
        %v1535 = vpop.f32.mrf.mxu0
        %v1536 = vpop.f32.mrf.mxu0
        %1537 = vdwg.mxu0
        %1538 = vmatprep.subr.bf16.mxu0 %v585
        %1539 = vmatpush1.bf16.msra.mxu0 %v584
        %1540 = vmatprep.subr.bf16.mxu0 %v581
        %1541 = vmatpush1.bf16.msra.mxu0 %v580
        %1542 = vmatprep.subr.bf16.mxu0 %v577
        %1543 = vmatpush1.bf16.msra.mxu0 %v576
        %1544 = vmatprep.subr.bf16.mxu0 %v573
        %1545 = vmatpush1.bf16.msra.mxu0 %v572
        %1546 = vmatprep.subr.bf16.mxu0 %v569
        %1547 = vmatpush1.bf16.msra.mxu0 %v568
        %1548 = vmatprep.subr.bf16.mxu0 %v565
        %1549 = vmatpush1.bf16.msra.mxu0 %v564
        %1550 = vmatprep.subr.bf16.mxu0 %v561
        %1551 = vmatpush1.bf16.msra.mxu0 %v560
        %1552 = vmatprep.subr.bf16.mxu0 %v557
        %1553 = vmatpush1.bf16.msra.mxu0 %v556
        %1554 = vmatprep.subr.bf16.mxu0 0
        %1555 = vmatpush2.bf16.msra.mxu0 0
        %1556 = vmatprep.subr.bf16.mxu0 0
        %1557 = vmatpush2.bf16.msra.mxu0 0
        %1558 = vmatprep.subr.bf16.mxu0 0
        %1559 = vmatpush2.bf16.msra.mxu0 0
        %1560 = vmatprep.subr.bf16.mxu0 0
        %1561 = vmatpush2.bf16.msra.mxu0 0
        %1562 = vmatprep.subr.bf16.mxu0 0
        %1563 = vmatpush2.bf16.msra.mxu0 0
        %1564 = vmatprep.subr.bf16.mxu0 0
        %1565 = vmatpush2.bf16.msra.mxu0 0
        %1566 = vmatprep.subr.bf16.mxu0 0
        %1567 = vmatpush2.bf16.msra.mxu0 0
        %1568 = vmatprep.subr.bf16.mxu0 0
        %1569 = vmatpush2.bf16.msra.mxu0 0
        %1570 = vmatprep.mubr.bf16.mxu0 0
        %1571 = vmatmul.mubr.bf16.gmra.mxu0 %v1496
        %v1572 = vpop.f32.mrf.mxu0
        %v1573 = vadd.f32 0.0, %v1572
        %v1574 = vpop.f32.mrf.mxu0
        %v1575 = vadd.f32 0.0, %v1574
        %v1576 = vpop.f32.mrf.mxu0
        %v1577 = vpop.f32.mrf.mxu0
        %1578 = vdwg.mxu0
        %v1579 = vadd.f32 %v1492, %v1532
        %v1580 = vadd.f32 %v1493, %v1534
        %v1581 = vadd.f32 %v1494, %v1573
        %v1582 = vadd.f32 %v1495, %v1575
        %v1583 = vxor.u32 %v1579, 2147483648
        %v1584 = vmul.f32 %v1583, 1.442695
        %v1585 = vpow.pop %v1584
        %v1586 = vadd.f32 %v1585, 1.0
        %v1587 = vrcp.pop %v1586
        %v1588 = vmul.f32 1.0, %v1587
        %v1589 = vxor.u32 %v1580, 2147483648
        %v1590 = vmul.f32 %v1589, 1.442695
        %v1591 = vpow.pop %v1590
        %v1592 = vadd.f32 %v1591, 1.0
        %v1593 = vrcp.pop %v1592
        %v1594 = vmul.f32 1.0, %v1593
        %v1595 = vtanh.pop %v1581
        %v1596 = vxor.u32 %v1582, 2147483648
        %v1597 = vmul.f32 %v1596, 1.442695
        %v1598 = vpow.pop %v1597
        %v1599 = vadd.f32 %v1598, 1.0
        %v1600 = vrcp.pop %v1599
        %v1601 = vmul.f32 1.0, %v1600
        %v1602 = vmul.f32 %v1594, %v1364
        %v1603 = vmul.f32 %v1588, %v1595
        %v1604 = vadd.f32 %v1602, %v1603
        %v1605 = vtanh.pop %v1604
        %v1606 = vmul.f32 %v1601, %v1605
        %s1607 = scalar_lea.vmem [#allocation6], 24
        %1608 = vst [vmem:[%s1607] sm:$0xff] %v1606
        %s1609 = scalar_lea.vmem %s322, 64 [#allocation9]
        %v1610 = vld [vmem:[%s1609] sm:$0xff]
        %v1611 = vld [vmem:[%s1609 + $0x8] sm:$0xff]
        %v1612 = vunpack.c.l.bf16 %v1610
        %v1613 = vunpack.c.h.bf16 %v1610
        %v1614 = vunpack.c.l.bf16 %v1611
        %v1615 = vunpack.c.h.bf16 %v1611
        %v1616 = vpack.c.bf16 %v1486, %v1486
        %1617 = vmatprep.subr.bf16.mxu0 %v862
        %1618 = vmatpush1.bf16.msra.mxu0 %v861
        %1619 = vmatprep.subr.bf16.mxu0 %v858
        %1620 = vmatpush1.bf16.msra.mxu0 %v857
        %1621 = vmatprep.subr.bf16.mxu0 %v854
        %1622 = vmatpush1.bf16.msra.mxu0 %v853
        %1623 = vmatprep.subr.bf16.mxu0 %v850
        %1624 = vmatpush1.bf16.msra.mxu0 %v849
        %1625 = vmatprep.subr.bf16.mxu0 %v846
        %1626 = vmatpush1.bf16.msra.mxu0 %v845
        %1627 = vmatprep.subr.bf16.mxu0 %v842
        %1628 = vmatpush1.bf16.msra.mxu0 %v841
        %1629 = vmatprep.subr.bf16.mxu0 %v838
        %1630 = vmatpush1.bf16.msra.mxu0 %v837
        %1631 = vmatprep.subr.bf16.mxu0 %v834
        %1632 = vmatpush1.bf16.msra.mxu0 %v833
        %1633 = vmatprep.subr.bf16.mxu0 0
        %1634 = vmatpush2.bf16.msra.mxu0 0
        %1635 = vmatprep.subr.bf16.mxu0 0
        %1636 = vmatpush2.bf16.msra.mxu0 0
        %1637 = vmatprep.subr.bf16.mxu0 0
        %1638 = vmatpush2.bf16.msra.mxu0 0
        %1639 = vmatprep.subr.bf16.mxu0 0
        %1640 = vmatpush2.bf16.msra.mxu0 0
        %1641 = vmatprep.subr.bf16.mxu0 0
        %1642 = vmatpush2.bf16.msra.mxu0 0
        %1643 = vmatprep.subr.bf16.mxu0 0
        %1644 = vmatpush2.bf16.msra.mxu0 0
        %1645 = vmatprep.subr.bf16.mxu0 0
        %1646 = vmatpush2.bf16.msra.mxu0 0
        %1647 = vmatprep.subr.bf16.mxu0 0
        %1648 = vmatpush2.bf16.msra.mxu0 0
        %1649 = vmatprep.mubr.bf16.mxu0 0
        %1650 = vmatmul.mubr.bf16.gmra.mxu0 %v1616
        %v1651 = vpop.f32.mrf.mxu0
        %v1652 = vadd.f32 0.0, %v1651
        %v1653 = vpop.f32.mrf.mxu0
        %v1654 = vadd.f32 0.0, %v1653
        %v1655 = vpop.f32.mrf.mxu0
        %v1656 = vpop.f32.mrf.mxu0
        %1657 = vdwg.mxu0
        %1658 = vmatprep.subr.bf16.mxu0 %v864
        %1659 = vmatpush1.bf16.msra.mxu0 %v863
        %1660 = vmatprep.subr.bf16.mxu0 %v860
        %1661 = vmatpush1.bf16.msra.mxu0 %v859
        %1662 = vmatprep.subr.bf16.mxu0 %v856
        %1663 = vmatpush1.bf16.msra.mxu0 %v855
        %1664 = vmatprep.subr.bf16.mxu0 %v852
        %1665 = vmatpush1.bf16.msra.mxu0 %v851
        %1666 = vmatprep.subr.bf16.mxu0 %v848
        %1667 = vmatpush1.bf16.msra.mxu0 %v847
        %1668 = vmatprep.subr.bf16.mxu0 %v844
        %1669 = vmatpush1.bf16.msra.mxu0 %v843
        %1670 = vmatprep.subr.bf16.mxu0 %v840
        %1671 = vmatpush1.bf16.msra.mxu0 %v839
        %1672 = vmatprep.subr.bf16.mxu0 %v836
        %1673 = vmatpush1.bf16.msra.mxu0 %v835
        %1674 = vmatprep.subr.bf16.mxu0 0
        %1675 = vmatpush2.bf16.msra.mxu0 0
        %1676 = vmatprep.subr.bf16.mxu0 0
        %1677 = vmatpush2.bf16.msra.mxu0 0
        %1678 = vmatprep.subr.bf16.mxu0 0
        %1679 = vmatpush2.bf16.msra.mxu0 0
        %1680 = vmatprep.subr.bf16.mxu0 0
        %1681 = vmatpush2.bf16.msra.mxu0 0
        %1682 = vmatprep.subr.bf16.mxu0 0
        %1683 = vmatpush2.bf16.msra.mxu0 0
        %1684 = vmatprep.subr.bf16.mxu0 0
        %1685 = vmatpush2.bf16.msra.mxu0 0
        %1686 = vmatprep.subr.bf16.mxu0 0
        %1687 = vmatpush2.bf16.msra.mxu0 0
        %1688 = vmatprep.subr.bf16.mxu0 0
        %1689 = vmatpush2.bf16.msra.mxu0 0
        %1690 = vmatprep.mubr.bf16.mxu0 0
        %1691 = vmatmul.mubr.bf16.gmra.mxu0 %v1616
        %v1692 = vpop.f32.mrf.mxu0
        %v1693 = vadd.f32 0.0, %v1692
        %v1694 = vpop.f32.mrf.mxu0
        %v1695 = vadd.f32 0.0, %v1694
        %v1696 = vpop.f32.mrf.mxu0
        %v1697 = vpop.f32.mrf.mxu0
        %1698 = vdwg.mxu0
        %v1699 = vadd.f32 %v1612, %v1652
        %v1700 = vadd.f32 %v1613, %v1654
        %v1701 = vadd.f32 %v1614, %v1693
        %v1702 = vadd.f32 %v1615, %v1695
        %v1703 = vxor.u32 %v1699, 2147483648
        %v1704 = vmul.f32 %v1703, 1.442695
        %v1705 = vpow.pop %v1704
        %v1706 = vadd.f32 %v1705, 1.0
        %v1707 = vrcp.pop %v1706
        %v1708 = vmul.f32 1.0, %v1707
        %v1709 = vxor.u32 %v1700, 2147483648
        %v1710 = vmul.f32 %v1709, 1.442695
        %v1711 = vpow.pop %v1710
        %v1712 = vadd.f32 %v1711, 1.0
        %v1713 = vrcp.pop %v1712
        %v1714 = vmul.f32 1.0, %v1713
        %v1715 = vtanh.pop %v1701
        %v1716 = vxor.u32 %v1702, 2147483648
        %v1717 = vmul.f32 %v1716, 1.442695
        %v1718 = vpow.pop %v1717
        %v1719 = vadd.f32 %v1718, 1.0
        %v1720 = vrcp.pop %v1719
        %v1721 = vmul.f32 1.0, %v1720
        %v1722 = vmul.f32 %v1714, %v1484
        %v1723 = vmul.f32 %v1708, %v1715
        %v1724 = vadd.f32 %v1722, %v1723
        %v1725 = vtanh.pop %v1724
        %v1726 = vmul.f32 %v1721, %v1725
        %s1727 = scalar_lea.vmem [#allocation7], 32
        %1728 = vst [vmem:[%s1727] sm:$0xff] %v1726
        %s1729 = scalar_lea.vmem %s315, 64 [#allocation8]
        %v1730 = vld [vmem:[%s1729] sm:$0xff]
        %v1731 = vld [vmem:[%s1729 + $0x8] sm:$0xff]
        %v1732 = vunpack.c.l.bf16 %v1730
        %v1733 = vunpack.c.h.bf16 %v1730
        %v1734 = vunpack.c.l.bf16 %v1731
        %v1735 = vunpack.c.h.bf16 %v1731
        %v1736 = vpack.c.bf16 %v1606, %v1606
        %1737 = vmatprep.subr.bf16.mxu0 %v583
        %1738 = vmatpush1.bf16.msra.mxu0 %v582
        %1739 = vmatprep.subr.bf16.mxu0 %v579
        %1740 = vmatpush1.bf16.msra.mxu0 %v578
        %1741 = vmatprep.subr.bf16.mxu0 %v575
        %1742 = vmatpush1.bf16.msra.mxu0 %v574
        %1743 = vmatprep.subr.bf16.mxu0 %v571
        %1744 = vmatpush1.bf16.msra.mxu0 %v570
        %1745 = vmatprep.subr.bf16.mxu0 %v567
        %1746 = vmatpush1.bf16.msra.mxu0 %v566
        %1747 = vmatprep.subr.bf16.mxu0 %v563
        %1748 = vmatpush1.bf16.msra.mxu0 %v562
        %1749 = vmatprep.subr.bf16.mxu0 %v559
        %1750 = vmatpush1.bf16.msra.mxu0 %v558
        %1751 = vmatprep.subr.bf16.mxu0 %v555
        %1752 = vmatpush1.bf16.msra.mxu0 %v554
        %1753 = vmatprep.subr.bf16.mxu0 0
        %1754 = vmatpush2.bf16.msra.mxu0 0
        %1755 = vmatprep.subr.bf16.mxu0 0
        %1756 = vmatpush2.bf16.msra.mxu0 0
        %1757 = vmatprep.subr.bf16.mxu0 0
        %1758 = vmatpush2.bf16.msra.mxu0 0
        %1759 = vmatprep.subr.bf16.mxu0 0
        %1760 = vmatpush2.bf16.msra.mxu0 0
        %1761 = vmatprep.subr.bf16.mxu0 0
        %1762 = vmatpush2.bf16.msra.mxu0 0
        %1763 = vmatprep.subr.bf16.mxu0 0
        %1764 = vmatpush2.bf16.msra.mxu0 0
        %1765 = vmatprep.subr.bf16.mxu0 0
        %1766 = vmatpush2.bf16.msra.mxu0 0
        %1767 = vmatprep.subr.bf16.mxu0 0
        %1768 = vmatpush2.bf16.msra.mxu0 0
        %1769 = vmatprep.mubr.bf16.mxu0 0
        %1770 = vmatmul.mubr.bf16.gmra.mxu0 %v1736
        %v1771 = vpop.f32.mrf.mxu0
        %v1772 = vadd.f32 0.0, %v1771
        %v1773 = vpop.f32.mrf.mxu0
        %v1774 = vadd.f32 0.0, %v1773
        %v1775 = vpop.f32.mrf.mxu0
        %v1776 = vpop.f32.mrf.mxu0
        %1777 = vdwg.mxu0
        %1778 = vmatprep.subr.bf16.mxu0 %v585
        %1779 = vmatpush1.bf16.msra.mxu0 %v584
        %1780 = vmatprep.subr.bf16.mxu0 %v581
        %1781 = vmatpush1.bf16.msra.mxu0 %v580
        %1782 = vmatprep.subr.bf16.mxu0 %v577
        %1783 = vmatpush1.bf16.msra.mxu0 %v576
        %1784 = vmatprep.subr.bf16.mxu0 %v573
        %1785 = vmatpush1.bf16.msra.mxu0 %v572
        %1786 = vmatprep.subr.bf16.mxu0 %v569
        %1787 = vmatpush1.bf16.msra.mxu0 %v568
        %1788 = vmatprep.subr.bf16.mxu0 %v565
        %1789 = vmatpush1.bf16.msra.mxu0 %v564
        %1790 = vmatprep.subr.bf16.mxu0 %v561
        %1791 = vmatpush1.bf16.msra.mxu0 %v560
        %1792 = vmatprep.subr.bf16.mxu0 %v557
        %1793 = vmatpush1.bf16.msra.mxu0 %v556
        %1794 = vmatprep.subr.bf16.mxu0 0
        %1795 = vmatpush2.bf16.msra.mxu0 0
        %1796 = vmatprep.subr.bf16.mxu0 0
        %1797 = vmatpush2.bf16.msra.mxu0 0
        %1798 = vmatprep.subr.bf16.mxu0 0
        %1799 = vmatpush2.bf16.msra.mxu0 0
        %1800 = vmatprep.subr.bf16.mxu0 0
        %1801 = vmatpush2.bf16.msra.mxu0 0
        %1802 = vmatprep.subr.bf16.mxu0 0
        %1803 = vmatpush2.bf16.msra.mxu0 0
        %1804 = vmatprep.subr.bf16.mxu0 0
        %1805 = vmatpush2.bf16.msra.mxu0 0
        %1806 = vmatprep.subr.bf16.mxu0 0
        %1807 = vmatpush2.bf16.msra.mxu0 0
        %1808 = vmatprep.subr.bf16.mxu0 0
        %1809 = vmatpush2.bf16.msra.mxu0 0
        %1810 = vmatprep.mubr.bf16.mxu0 0
        %1811 = vmatmul.mubr.bf16.gmra.mxu0 %v1736
        %v1812 = vpop.f32.mrf.mxu0
        %v1813 = vadd.f32 0.0, %v1812
        %v1814 = vpop.f32.mrf.mxu0
        %v1815 = vadd.f32 0.0, %v1814
        %v1816 = vpop.f32.mrf.mxu0
        %v1817 = vpop.f32.mrf.mxu0
        %1818 = vdwg.mxu0
        %v1819 = vadd.f32 %v1732, %v1772
        %v1820 = vadd.f32 %v1733, %v1774
        %v1821 = vadd.f32 %v1734, %v1813
        %v1822 = vadd.f32 %v1735, %v1815
        %v1823 = vxor.u32 %v1819, 2147483648
        %v1824 = vmul.f32 %v1823, 1.442695
        %v1825 = vpow.pop %v1824
        %v1826 = vadd.f32 %v1825, 1.0
        %v1827 = vrcp.pop %v1826
        %v1828 = vmul.f32 1.0, %v1827
        %v1829 = vxor.u32 %v1820, 2147483648
        %v1830 = vmul.f32 %v1829, 1.442695
        %v1831 = vpow.pop %v1830
        %v1832 = vadd.f32 %v1831, 1.0
        %v1833 = vrcp.pop %v1832
        %v1834 = vmul.f32 1.0, %v1833
        %v1835 = vtanh.pop %v1821
        %v1836 = vxor.u32 %v1822, 2147483648
        %v1837 = vmul.f32 %v1836, 1.442695
        %v1838 = vpow.pop %v1837
        %v1839 = vadd.f32 %v1838, 1.0
        %v1840 = vrcp.pop %v1839
        %v1841 = vmul.f32 1.0, %v1840
        %v1842 = vmul.f32 %v1834, %v1604
        %v1843 = vmul.f32 %v1828, %v1835
        %v1844 = vadd.f32 %v1842, %v1843
        %v1845 = vtanh.pop %v1844
        %v1846 = vmul.f32 %v1841, %v1845
        %s1847 = scalar_lea.vmem [#allocation6], 32
        %1848 = vst [vmem:[%s1847] sm:$0xff] %v1846
        %s1849 = scalar_lea.vmem %s322, 48 [#allocation9]
        %v1850 = vld [vmem:[%s1849] sm:$0xff]
        %v1851 = vld [vmem:[%s1849 + $0x8] sm:$0xff]
        %v1852 = vunpack.c.l.bf16 %v1850
        %v1853 = vunpack.c.h.bf16 %v1850
        %v1854 = vunpack.c.l.bf16 %v1851
        %v1855 = vunpack.c.h.bf16 %v1851
        %v1856 = vpack.c.bf16 %v1726, %v1726
        %1857 = vmatprep.subr.bf16.mxu0 %v862
        %1858 = vmatpush1.bf16.msra.mxu0 %v861
        %1859 = vmatprep.subr.bf16.mxu0 %v858
        %1860 = vmatpush1.bf16.msra.mxu0 %v857
        %1861 = vmatprep.subr.bf16.mxu0 %v854
        %1862 = vmatpush1.bf16.msra.mxu0 %v853
        %1863 = vmatprep.subr.bf16.mxu0 %v850
        %1864 = vmatpush1.bf16.msra.mxu0 %v849
        %1865 = vmatprep.subr.bf16.mxu0 %v846
        %1866 = vmatpush1.bf16.msra.mxu0 %v845
        %1867 = vmatprep.subr.bf16.mxu0 %v842
        %1868 = vmatpush1.bf16.msra.mxu0 %v841
        %1869 = vmatprep.subr.bf16.mxu0 %v838
        %1870 = vmatpush1.bf16.msra.mxu0 %v837
        %1871 = vmatprep.subr.bf16.mxu0 %v834
        %1872 = vmatpush1.bf16.msra.mxu0 %v833
        %1873 = vmatprep.subr.bf16.mxu0 0
        %1874 = vmatpush2.bf16.msra.mxu0 0
        %1875 = vmatprep.subr.bf16.mxu0 0
        %1876 = vmatpush2.bf16.msra.mxu0 0
        %1877 = vmatprep.subr.bf16.mxu0 0
        %1878 = vmatpush2.bf16.msra.mxu0 0
        %1879 = vmatprep.subr.bf16.mxu0 0
        %1880 = vmatpush2.bf16.msra.mxu0 0
        %1881 = vmatprep.subr.bf16.mxu0 0
        %1882 = vmatpush2.bf16.msra.mxu0 0
        %1883 = vmatprep.subr.bf16.mxu0 0
        %1884 = vmatpush2.bf16.msra.mxu0 0
        %1885 = vmatprep.subr.bf16.mxu0 0
        %1886 = vmatpush2.bf16.msra.mxu0 0
        %1887 = vmatprep.subr.bf16.mxu0 0
        %1888 = vmatpush2.bf16.msra.mxu0 0
        %1889 = vmatprep.mubr.bf16.mxu0 0
        %1890 = vmatmul.mubr.bf16.gmra.mxu0 %v1856
        %v1891 = vpop.f32.mrf.mxu0
        %v1892 = vadd.f32 0.0, %v1891
        %v1893 = vpop.f32.mrf.mxu0
        %v1894 = vadd.f32 0.0, %v1893
        %v1895 = vpop.f32.mrf.mxu0
        %v1896 = vpop.f32.mrf.mxu0
        %1897 = vdwg.mxu0
        %1898 = vmatprep.subr.bf16.mxu0 %v864
        %1899 = vmatpush1.bf16.msra.mxu0 %v863
        %1900 = vmatprep.subr.bf16.mxu0 %v860
        %1901 = vmatpush1.bf16.msra.mxu0 %v859
        %1902 = vmatprep.subr.bf16.mxu0 %v856
        %1903 = vmatpush1.bf16.msra.mxu0 %v855
        %1904 = vmatprep.subr.bf16.mxu0 %v852
        %1905 = vmatpush1.bf16.msra.mxu0 %v851
        %1906 = vmatprep.subr.bf16.mxu0 %v848
        %1907 = vmatpush1.bf16.msra.mxu0 %v847
        %1908 = vmatprep.subr.bf16.mxu0 %v844
        %1909 = vmatpush1.bf16.msra.mxu0 %v843
        %1910 = vmatprep.subr.bf16.mxu0 %v840
        %1911 = vmatpush1.bf16.msra.mxu0 %v839
        %1912 = vmatprep.subr.bf16.mxu0 %v836
        %1913 = vmatpush1.bf16.msra.mxu0 %v835
        %1914 = vmatprep.subr.bf16.mxu0 0
        %1915 = vmatpush2.bf16.msra.mxu0 0
        %1916 = vmatprep.subr.bf16.mxu0 0
        %1917 = vmatpush2.bf16.msra.mxu0 0
        %1918 = vmatprep.subr.bf16.mxu0 0
        %1919 = vmatpush2.bf16.msra.mxu0 0
        %1920 = vmatprep.subr.bf16.mxu0 0
        %1921 = vmatpush2.bf16.msra.mxu0 0
        %1922 = vmatprep.subr.bf16.mxu0 0
        %1923 = vmatpush2.bf16.msra.mxu0 0
        %1924 = vmatprep.subr.bf16.mxu0 0
        %1925 = vmatpush2.bf16.msra.mxu0 0
        %1926 = vmatprep.subr.bf16.mxu0 0
        %1927 = vmatpush2.bf16.msra.mxu0 0
        %1928 = vmatprep.subr.bf16.mxu0 0
        %1929 = vmatpush2.bf16.msra.mxu0 0
        %1930 = vmatprep.mubr.bf16.mxu0 0
        %1931 = vmatmul.mubr.bf16.gmra.mxu0 %v1856
        %v1932 = vpop.f32.mrf.mxu0
        %v1933 = vadd.f32 0.0, %v1932
        %v1934 = vpop.f32.mrf.mxu0
        %v1935 = vadd.f32 0.0, %v1934
        %v1936 = vpop.f32.mrf.mxu0
        %v1937 = vpop.f32.mrf.mxu0
        %1938 = vdwg.mxu0
        %v1939 = vadd.f32 %v1852, %v1892
        %v1940 = vadd.f32 %v1853, %v1894
        %v1941 = vadd.f32 %v1854, %v1933
        %v1942 = vadd.f32 %v1855, %v1935
        %v1943 = vxor.u32 %v1939, 2147483648
        %v1944 = vmul.f32 %v1943, 1.442695
        %v1945 = vpow.pop %v1944
        %v1946 = vadd.f32 %v1945, 1.0
        %v1947 = vrcp.pop %v1946
        %v1948 = vmul.f32 1.0, %v1947
        %v1949 = vxor.u32 %v1940, 2147483648
        %v1950 = vmul.f32 %v1949, 1.442695
        %v1951 = vpow.pop %v1950
        %v1952 = vadd.f32 %v1951, 1.0
        %v1953 = vrcp.pop %v1952
        %v1954 = vmul.f32 1.0, %v1953
        %v1955 = vtanh.pop %v1941
        %v1956 = vxor.u32 %v1942, 2147483648
        %v1957 = vmul.f32 %v1956, 1.442695
        %v1958 = vpow.pop %v1957
        %v1959 = vadd.f32 %v1958, 1.0
        %v1960 = vrcp.pop %v1959
        %v1961 = vmul.f32 1.0, %v1960
        %v1962 = vmul.f32 %v1954, %v1724
        %v1963 = vmul.f32 %v1948, %v1955
        %v1964 = vadd.f32 %v1962, %v1963
        %v1965 = vtanh.pop %v1964
        %v1966 = vmul.f32 %v1961, %v1965
        %s1967 = scalar_lea.vmem [#allocation7], 24
        %1968 = vst [vmem:[%s1967] sm:$0xff] %v1966
        %s1969 = scalar_lea.vmem %s315, 80 [#allocation8]
        %v1970 = vld [vmem:[%s1969] sm:$0xff]
        %v1971 = vld [vmem:[%s1969 + $0x8] sm:$0xff]
        %v1972 = vunpack.c.l.bf16 %v1970
        %v1973 = vunpack.c.h.bf16 %v1970
        %v1974 = vunpack.c.l.bf16 %v1971
        %v1975 = vunpack.c.h.bf16 %v1971
        %v1976 = vpack.c.bf16 %v1846, %v1846
        %1977 = vmatprep.subr.bf16.mxu0 %v583
        %1978 = vmatpush1.bf16.msra.mxu0 %v582
        %1979 = vmatprep.subr.bf16.mxu0 %v579
        %1980 = vmatpush1.bf16.msra.mxu0 %v578
        %1981 = vmatprep.subr.bf16.mxu0 %v575
        %1982 = vmatpush1.bf16.msra.mxu0 %v574
        %1983 = vmatprep.subr.bf16.mxu0 %v571
        %1984 = vmatpush1.bf16.msra.mxu0 %v570
        %1985 = vmatprep.subr.bf16.mxu0 %v567
        %1986 = vmatpush1.bf16.msra.mxu0 %v566
        %1987 = vmatprep.subr.bf16.mxu0 %v563
        %1988 = vmatpush1.bf16.msra.mxu0 %v562
        %1989 = vmatprep.subr.bf16.mxu0 %v559
        %1990 = vmatpush1.bf16.msra.mxu0 %v558
        %1991 = vmatprep.subr.bf16.mxu0 %v555
        %1992 = vmatpush1.bf16.msra.mxu0 %v554
        %1993 = vmatprep.subr.bf16.mxu0 0
        %1994 = vmatpush2.bf16.msra.mxu0 0
        %1995 = vmatprep.subr.bf16.mxu0 0
        %1996 = vmatpush2.bf16.msra.mxu0 0
        %1997 = vmatprep.subr.bf16.mxu0 0
        %1998 = vmatpush2.bf16.msra.mxu0 0
        %1999 = vmatprep.subr.bf16.mxu0 0
        %2000 = vmatpush2.bf16.msra.mxu0 0
        %2001 = vmatprep.subr.bf16.mxu0 0
        %2002 = vmatpush2.bf16.msra.mxu0 0
        %2003 = vmatprep.subr.bf16.mxu0 0
        %2004 = vmatpush2.bf16.msra.mxu0 0
        %2005 = vmatprep.subr.bf16.mxu0 0
        %2006 = vmatpush2.bf16.msra.mxu0 0
        %2007 = vmatprep.subr.bf16.mxu0 0
        %2008 = vmatpush2.bf16.msra.mxu0 0
        %2009 = vmatprep.mubr.bf16.mxu0 0
        %2010 = vmatmul.mubr.bf16.gmra.mxu0 %v1976
        %v2011 = vpop.f32.mrf.mxu0
        %v2012 = vadd.f32 0.0, %v2011
        %v2013 = vpop.f32.mrf.mxu0
        %v2014 = vadd.f32 0.0, %v2013
        %v2015 = vpop.f32.mrf.mxu0
        %v2016 = vpop.f32.mrf.mxu0
        %2017 = vdwg.mxu0
        %2018 = vmatprep.subr.bf16.mxu0 %v585
        %2019 = vmatpush1.bf16.msra.mxu0 %v584
        %2020 = vmatprep.subr.bf16.mxu0 %v581
        %2021 = vmatpush1.bf16.msra.mxu0 %v580
        %2022 = vmatprep.subr.bf16.mxu0 %v577
        %2023 = vmatpush1.bf16.msra.mxu0 %v576
        %2024 = vmatprep.subr.bf16.mxu0 %v573
        %2025 = vmatpush1.bf16.msra.mxu0 %v572
        %2026 = vmatprep.subr.bf16.mxu0 %v569
        %2027 = vmatpush1.bf16.msra.mxu0 %v568
        %2028 = vmatprep.subr.bf16.mxu0 %v565
        %2029 = vmatpush1.bf16.msra.mxu0 %v564
        %2030 = vmatprep.subr.bf16.mxu0 %v561
        %2031 = vmatpush1.bf16.msra.mxu0 %v560
        %2032 = vmatprep.subr.bf16.mxu0 %v557
        %2033 = vmatpush1.bf16.msra.mxu0 %v556
        %2034 = vmatprep.subr.bf16.mxu0 0
        %2035 = vmatpush2.bf16.msra.mxu0 0
        %2036 = vmatprep.subr.bf16.mxu0 0
        %2037 = vmatpush2.bf16.msra.mxu0 0
        %2038 = vmatprep.subr.bf16.mxu0 0
        %2039 = vmatpush2.bf16.msra.mxu0 0
        %2040 = vmatprep.subr.bf16.mxu0 0
        %2041 = vmatpush2.bf16.msra.mxu0 0
        %2042 = vmatprep.subr.bf16.mxu0 0
        %2043 = vmatpush2.bf16.msra.mxu0 0
        %2044 = vmatprep.subr.bf16.mxu0 0
        %2045 = vmatpush2.bf16.msra.mxu0 0
        %2046 = vmatprep.subr.bf16.mxu0 0
        %2047 = vmatpush2.bf16.msra.mxu0 0
        %2048 = vmatprep.subr.bf16.mxu0 0
        %2049 = vmatpush2.bf16.msra.mxu0 0
        %2050 = vmatprep.mubr.bf16.mxu0 0
        %2051 = vmatmul.mubr.bf16.gmra.mxu0 %v1976
        %v2052 = vpop.f32.mrf.mxu0
        %v2053 = vadd.f32 0.0, %v2052
        %v2054 = vpop.f32.mrf.mxu0
        %v2055 = vadd.f32 0.0, %v2054
        %v2056 = vpop.f32.mrf.mxu0
        %v2057 = vpop.f32.mrf.mxu0
        %2058 = vdwg.mxu0
        %v2059 = vadd.f32 %v1972, %v2012
        %v2060 = vadd.f32 %v1973, %v2014
        %v2061 = vadd.f32 %v1974, %v2053
        %v2062 = vadd.f32 %v1975, %v2055
        %v2063 = vxor.u32 %v2059, 2147483648
        %v2064 = vmul.f32 %v2063, 1.442695
        %v2065 = vpow.pop %v2064
        %v2066 = vadd.f32 %v2065, 1.0
        %v2067 = vrcp.pop %v2066
        %v2068 = vmul.f32 1.0, %v2067
        %v2069 = vxor.u32 %v2060, 2147483648
        %v2070 = vmul.f32 %v2069, 1.442695
        %v2071 = vpow.pop %v2070
        %v2072 = vadd.f32 %v2071, 1.0
        %v2073 = vrcp.pop %v2072
        %v2074 = vmul.f32 1.0, %v2073
        %v2075 = vtanh.pop %v2061
        %v2076 = vxor.u32 %v2062, 2147483648
        %v2077 = vmul.f32 %v2076, 1.442695
        %v2078 = vpow.pop %v2077
        %v2079 = vadd.f32 %v2078, 1.0
        %v2080 = vrcp.pop %v2079
        %v2081 = vmul.f32 1.0, %v2080
        %v2082 = vmul.f32 %v2074, %v1844
        %v2083 = vmul.f32 %v2068, %v2075
        %v2084 = vadd.f32 %v2082, %v2083
        %v2085 = vtanh.pop %v2084
        %v2086 = vmul.f32 %v2081, %v2085
        %s2087 = scalar_lea.vmem [#allocation6], 40
        %2088 = vst [vmem:[%s2087] sm:$0xff] %v2086
        %s2089 = scalar_lea.vmem %s322, 32 [#allocation9]
        %v2090 = vld [vmem:[%s2089] sm:$0xff]
        %v2091 = vld [vmem:[%s2089 + $0x8] sm:$0xff]
        %v2092 = vunpack.c.l.bf16 %v2090
        %v2093 = vunpack.c.h.bf16 %v2090
        %v2094 = vunpack.c.l.bf16 %v2091
        %v2095 = vunpack.c.h.bf16 %v2091
        %v2096 = vpack.c.bf16 %v1966, %v1966
        %2097 = vmatprep.subr.bf16.mxu0 %v862
        %2098 = vmatpush1.bf16.msra.mxu0 %v861
        %2099 = vmatprep.subr.bf16.mxu0 %v858
        %2100 = vmatpush1.bf16.msra.mxu0 %v857
        %2101 = vmatprep.subr.bf16.mxu0 %v854
        %2102 = vmatpush1.bf16.msra.mxu0 %v853
        %2103 = vmatprep.subr.bf16.mxu0 %v850
        %2104 = vmatpush1.bf16.msra.mxu0 %v849
        %2105 = vmatprep.subr.bf16.mxu0 %v846
        %2106 = vmatpush1.bf16.msra.mxu0 %v845
        %2107 = vmatprep.subr.bf16.mxu0 %v842
        %2108 = vmatpush1.bf16.msra.mxu0 %v841
        %2109 = vmatprep.subr.bf16.mxu0 %v838
        %2110 = vmatpush1.bf16.msra.mxu0 %v837
        %2111 = vmatprep.subr.bf16.mxu0 %v834
        %2112 = vmatpush1.bf16.msra.mxu0 %v833
        %2113 = vmatprep.subr.bf16.mxu0 0
        %2114 = vmatpush2.bf16.msra.mxu0 0
        %2115 = vmatprep.subr.bf16.mxu0 0
        %2116 = vmatpush2.bf16.msra.mxu0 0
        %2117 = vmatprep.subr.bf16.mxu0 0
        %2118 = vmatpush2.bf16.msra.mxu0 0
        %2119 = vmatprep.subr.bf16.mxu0 0
        %2120 = vmatpush2.bf16.msra.mxu0 0
        %2121 = vmatprep.subr.bf16.mxu0 0
        %2122 = vmatpush2.bf16.msra.mxu0 0
        %2123 = vmatprep.subr.bf16.mxu0 0
        %2124 = vmatpush2.bf16.msra.mxu0 0
        %2125 = vmatprep.subr.bf16.mxu0 0
        %2126 = vmatpush2.bf16.msra.mxu0 0
        %2127 = vmatprep.subr.bf16.mxu0 0
        %2128 = vmatpush2.bf16.msra.mxu0 0
        %2129 = vmatprep.mubr.bf16.mxu0 0
        %2130 = vmatmul.mubr.bf16.gmra.mxu0 %v2096
        %v2131 = vpop.f32.mrf.mxu0
        %v2132 = vadd.f32 0.0, %v2131
        %v2133 = vpop.f32.mrf.mxu0
        %v2134 = vadd.f32 0.0, %v2133
        %v2135 = vpop.f32.mrf.mxu0
        %v2136 = vpop.f32.mrf.mxu0
        %2137 = vdwg.mxu0
        %2138 = vmatprep.subr.bf16.mxu0 %v864
        %2139 = vmatpush1.bf16.msra.mxu0 %v863
        %2140 = vmatprep.subr.bf16.mxu0 %v860
        %2141 = vmatpush1.bf16.msra.mxu0 %v859
        %2142 = vmatprep.subr.bf16.mxu0 %v856
        %2143 = vmatpush1.bf16.msra.mxu0 %v855
        %2144 = vmatprep.subr.bf16.mxu0 %v852
        %2145 = vmatpush1.bf16.msra.mxu0 %v851
        %2146 = vmatprep.subr.bf16.mxu0 %v848
        %2147 = vmatpush1.bf16.msra.mxu0 %v847
        %2148 = vmatprep.subr.bf16.mxu0 %v844
        %2149 = vmatpush1.bf16.msra.mxu0 %v843
        %2150 = vmatprep.subr.bf16.mxu0 %v840
        %2151 = vmatpush1.bf16.msra.mxu0 %v839
        %2152 = vmatprep.subr.bf16.mxu0 %v836
        %2153 = vmatpush1.bf16.msra.mxu0 %v835
        %2154 = vmatprep.subr.bf16.mxu0 0
        %2155 = vmatpush2.bf16.msra.mxu0 0
        %2156 = vmatprep.subr.bf16.mxu0 0
        %2157 = vmatpush2.bf16.msra.mxu0 0
        %2158 = vmatprep.subr.bf16.mxu0 0
        %2159 = vmatpush2.bf16.msra.mxu0 0
        %2160 = vmatprep.subr.bf16.mxu0 0
        %2161 = vmatpush2.bf16.msra.mxu0 0
        %2162 = vmatprep.subr.bf16.mxu0 0
        %2163 = vmatpush2.bf16.msra.mxu0 0
        %2164 = vmatprep.subr.bf16.mxu0 0
        %2165 = vmatpush2.bf16.msra.mxu0 0
        %2166 = vmatprep.subr.bf16.mxu0 0
        %2167 = vmatpush2.bf16.msra.mxu0 0
        %2168 = vmatprep.subr.bf16.mxu0 0
        %2169 = vmatpush2.bf16.msra.mxu0 0
        %2170 = vmatprep.mubr.bf16.mxu0 0
        %2171 = vmatmul.mubr.bf16.gmra.mxu0 %v2096
        %v2172 = vpop.f32.mrf.mxu0
        %v2173 = vadd.f32 0.0, %v2172
        %v2174 = vpop.f32.mrf.mxu0
        %v2175 = vadd.f32 0.0, %v2174
        %v2176 = vpop.f32.mrf.mxu0
        %v2177 = vpop.f32.mrf.mxu0
        %2178 = vdwg.mxu0
        %v2179 = vadd.f32 %v2092, %v2132
        %v2180 = vadd.f32 %v2093, %v2134
        %v2181 = vadd.f32 %v2094, %v2173
        %v2182 = vadd.f32 %v2095, %v2175
        %v2183 = vxor.u32 %v2179, 2147483648
        %v2184 = vmul.f32 %v2183, 1.442695
        %v2185 = vpow.pop %v2184
        %v2186 = vadd.f32 %v2185, 1.0
        %v2187 = vrcp.pop %v2186
        %v2188 = vmul.f32 1.0, %v2187
        %v2189 = vxor.u32 %v2180, 2147483648
        %v2190 = vmul.f32 %v2189, 1.442695
        %v2191 = vpow.pop %v2190
        %v2192 = vadd.f32 %v2191, 1.0
        %v2193 = vrcp.pop %v2192
        %v2194 = vmul.f32 1.0, %v2193
        %v2195 = vtanh.pop %v2181
        %v2196 = vxor.u32 %v2182, 2147483648
        %v2197 = vmul.f32 %v2196, 1.442695
        %v2198 = vpow.pop %v2197
        %v2199 = vadd.f32 %v2198, 1.0
        %v2200 = vrcp.pop %v2199
        %v2201 = vmul.f32 1.0, %v2200
        %v2202 = vmul.f32 %v2194, %v1964
        %v2203 = vmul.f32 %v2188, %v2195
        %v2204 = vadd.f32 %v2202, %v2203
        %v2205 = vtanh.pop %v2204
        %v2206 = vmul.f32 %v2201, %v2205
        %s2207 = scalar_lea.vmem [#allocation7], 16
        %2208 = vst [vmem:[%s2207] sm:$0xff] %v2206
        %s2209 = scalar_lea.vmem %s315, 96 [#allocation8]
        %v2210 = vld [vmem:[%s2209] sm:$0xff]
        %v2211 = vld [vmem:[%s2209 + $0x8] sm:$0xff]
        %v2212 = vunpack.c.l.bf16 %v2210
        %v2213 = vunpack.c.h.bf16 %v2210
        %v2214 = vunpack.c.l.bf16 %v2211
        %v2215 = vunpack.c.h.bf16 %v2211
        %v2216 = vpack.c.bf16 %v2086, %v2086
        %2217 = vmatprep.subr.bf16.mxu0 %v583
        %2218 = vmatpush1.bf16.msra.mxu0 %v582
        %2219 = vmatprep.subr.bf16.mxu0 %v579
        %2220 = vmatpush1.bf16.msra.mxu0 %v578
        %2221 = vmatprep.subr.bf16.mxu0 %v575
        %2222 = vmatpush1.bf16.msra.mxu0 %v574
        %2223 = vmatprep.subr.bf16.mxu0 %v571
        %2224 = vmatpush1.bf16.msra.mxu0 %v570
        %2225 = vmatprep.subr.bf16.mxu0 %v567
        %2226 = vmatpush1.bf16.msra.mxu0 %v566
        %2227 = vmatprep.subr.bf16.mxu0 %v563
        %2228 = vmatpush1.bf16.msra.mxu0 %v562
        %2229 = vmatprep.subr.bf16.mxu0 %v559
        %2230 = vmatpush1.bf16.msra.mxu0 %v558
        %2231 = vmatprep.subr.bf16.mxu0 %v555
        %2232 = vmatpush1.bf16.msra.mxu0 %v554
        %2233 = vmatprep.subr.bf16.mxu0 0
        %2234 = vmatpush2.bf16.msra.mxu0 0
        %2235 = vmatprep.subr.bf16.mxu0 0
        %2236 = vmatpush2.bf16.msra.mxu0 0
        %2237 = vmatprep.subr.bf16.mxu0 0
        %2238 = vmatpush2.bf16.msra.mxu0 0
        %2239 = vmatprep.subr.bf16.mxu0 0
        %2240 = vmatpush2.bf16.msra.mxu0 0
        %2241 = vmatprep.subr.bf16.mxu0 0
        %2242 = vmatpush2.bf16.msra.mxu0 0
        %2243 = vmatprep.subr.bf16.mxu0 0
        %2244 = vmatpush2.bf16.msra.mxu0 0
        %2245 = vmatprep.subr.bf16.mxu0 0
        %2246 = vmatpush2.bf16.msra.mxu0 0
        %2247 = vmatprep.subr.bf16.mxu0 0
        %2248 = vmatpush2.bf16.msra.mxu0 0
        %2249 = vmatprep.mubr.bf16.mxu0 0
        %2250 = vmatmul.mubr.bf16.gmra.mxu0 %v2216
        %v2251 = vpop.f32.mrf.mxu0
        %v2252 = vadd.f32 0.0, %v2251
        %v2253 = vpop.f32.mrf.mxu0
        %v2254 = vadd.f32 0.0, %v2253
        %v2255 = vpop.f32.mrf.mxu0
        %v2256 = vpop.f32.mrf.mxu0
        %2257 = vdwg.mxu0
        %2258 = vmatprep.subr.bf16.mxu0 %v585
        %2259 = vmatpush1.bf16.msra.mxu0 %v584
        %2260 = vmatprep.subr.bf16.mxu0 %v581
        %2261 = vmatpush1.bf16.msra.mxu0 %v580
        %2262 = vmatprep.subr.bf16.mxu0 %v577
        %2263 = vmatpush1.bf16.msra.mxu0 %v576
        %2264 = vmatprep.subr.bf16.mxu0 %v573
        %2265 = vmatpush1.bf16.msra.mxu0 %v572
        %2266 = vmatprep.subr.bf16.mxu0 %v569
        %2267 = vmatpush1.bf16.msra.mxu0 %v568
        %2268 = vmatprep.subr.bf16.mxu0 %v565
        %2269 = vmatpush1.bf16.msra.mxu0 %v564
        %2270 = vmatprep.subr.bf16.mxu0 %v561
        %2271 = vmatpush1.bf16.msra.mxu0 %v560
        %2272 = vmatprep.subr.bf16.mxu0 %v557
        %2273 = vmatpush1.bf16.msra.mxu0 %v556
        %2274 = vmatprep.subr.bf16.mxu0 0
        %2275 = vmatpush2.bf16.msra.mxu0 0
        %2276 = vmatprep.subr.bf16.mxu0 0
        %2277 = vmatpush2.bf16.msra.mxu0 0
        %2278 = vmatprep.subr.bf16.mxu0 0
        %2279 = vmatpush2.bf16.msra.mxu0 0
        %2280 = vmatprep.subr.bf16.mxu0 0
        %2281 = vmatpush2.bf16.msra.mxu0 0
        %2282 = vmatprep.subr.bf16.mxu0 0
        %2283 = vmatpush2.bf16.msra.mxu0 0
        %2284 = vmatprep.subr.bf16.mxu0 0
        %2285 = vmatpush2.bf16.msra.mxu0 0
        %2286 = vmatprep.subr.bf16.mxu0 0
        %2287 = vmatpush2.bf16.msra.mxu0 0
        %2288 = vmatprep.subr.bf16.mxu0 0
        %2289 = vmatpush2.bf16.msra.mxu0 0
        %2290 = vmatprep.mubr.bf16.mxu0 0
        %2291 = vmatmul.mubr.bf16.gmra.mxu0 %v2216
        %v2292 = vpop.f32.mrf.mxu0
        %v2293 = vadd.f32 0.0, %v2292
        %v2294 = vpop.f32.mrf.mxu0
        %v2295 = vadd.f32 0.0, %v2294
        %v2296 = vpop.f32.mrf.mxu0
        %v2297 = vpop.f32.mrf.mxu0
        %2298 = vdwg.mxu0
        %v2299 = vadd.f32 %v2212, %v2252
        %v2300 = vadd.f32 %v2213, %v2254
        %v2301 = vadd.f32 %v2214, %v2293
        %v2302 = vadd.f32 %v2215, %v2295
        %v2303 = vxor.u32 %v2299, 2147483648
        %v2304 = vmul.f32 %v2303, 1.442695
        %v2305 = vpow.pop %v2304
        %v2306 = vadd.f32 %v2305, 1.0
        %v2307 = vrcp.pop %v2306
        %v2308 = vmul.f32 1.0, %v2307
        %v2309 = vxor.u32 %v2300, 2147483648
        %v2310 = vmul.f32 %v2309, 1.442695
        %v2311 = vpow.pop %v2310
        %v2312 = vadd.f32 %v2311, 1.0
        %v2313 = vrcp.pop %v2312
        %v2314 = vmul.f32 1.0, %v2313
        %v2315 = vtanh.pop %v2301
        %v2316 = vxor.u32 %v2302, 2147483648
        %v2317 = vmul.f32 %v2316, 1.442695
        %v2318 = vpow.pop %v2317
        %v2319 = vadd.f32 %v2318, 1.0
        %v2320 = vrcp.pop %v2319
        %v2321 = vmul.f32 1.0, %v2320
        %v2322 = vmul.f32 %v2314, %v2084
        %v2323 = vmul.f32 %v2308, %v2315
        %v2324 = vadd.f32 %v2322, %v2323
        %v2325 = vtanh.pop %v2324
        %v2326 = vmul.f32 %v2321, %v2325
        %s2327 = scalar_lea.vmem [#allocation6], 48
        %2328 = vst [vmem:[%s2327] sm:$0xff] %v2326
        %s2329 = scalar_lea.vmem %s322, 16 [#allocation9]
        %v2330 = vld [vmem:[%s2329] sm:$0xff]
        %v2331 = vld [vmem:[%s2329 + $0x8] sm:$0xff]
        %v2332 = vunpack.c.l.bf16 %v2330
        %v2333 = vunpack.c.h.bf16 %v2330
        %v2334 = vunpack.c.l.bf16 %v2331
        %v2335 = vunpack.c.h.bf16 %v2331
        %v2336 = vpack.c.bf16 %v2206, %v2206
        %2337 = vmatprep.subr.bf16.mxu0 %v862
        %2338 = vmatpush1.bf16.msra.mxu0 %v861
        %2339 = vmatprep.subr.bf16.mxu0 %v858
        %2340 = vmatpush1.bf16.msra.mxu0 %v857
        %2341 = vmatprep.subr.bf16.mxu0 %v854
        %2342 = vmatpush1.bf16.msra.mxu0 %v853
        %2343 = vmatprep.subr.bf16.mxu0 %v850
        %2344 = vmatpush1.bf16.msra.mxu0 %v849
        %2345 = vmatprep.subr.bf16.mxu0 %v846
        %2346 = vmatpush1.bf16.msra.mxu0 %v845
        %2347 = vmatprep.subr.bf16.mxu0 %v842
        %2348 = vmatpush1.bf16.msra.mxu0 %v841
        %2349 = vmatprep.subr.bf16.mxu0 %v838
        %2350 = vmatpush1.bf16.msra.mxu0 %v837
        %2351 = vmatprep.subr.bf16.mxu0 %v834
        %2352 = vmatpush1.bf16.msra.mxu0 %v833
        %2353 = vmatprep.subr.bf16.mxu0 0
        %2354 = vmatpush2.bf16.msra.mxu0 0
        %2355 = vmatprep.subr.bf16.mxu0 0
        %2356 = vmatpush2.bf16.msra.mxu0 0
        %2357 = vmatprep.subr.bf16.mxu0 0
        %2358 = vmatpush2.bf16.msra.mxu0 0
        %2359 = vmatprep.subr.bf16.mxu0 0
        %2360 = vmatpush2.bf16.msra.mxu0 0
        %2361 = vmatprep.subr.bf16.mxu0 0
        %2362 = vmatpush2.bf16.msra.mxu0 0
        %2363 = vmatprep.subr.bf16.mxu0 0
        %2364 = vmatpush2.bf16.msra.mxu0 0
        %2365 = vmatprep.subr.bf16.mxu0 0
        %2366 = vmatpush2.bf16.msra.mxu0 0
        %2367 = vmatprep.subr.bf16.mxu0 0
        %2368 = vmatpush2.bf16.msra.mxu0 0
        %2369 = vmatprep.mubr.bf16.mxu0 0
        %2370 = vmatmul.mubr.bf16.gmra.mxu0 %v2336
        %v2371 = vpop.f32.mrf.mxu0
        %v2372 = vadd.f32 0.0, %v2371
        %v2373 = vpop.f32.mrf.mxu0
        %v2374 = vadd.f32 0.0, %v2373
        %v2375 = vpop.f32.mrf.mxu0
        %v2376 = vpop.f32.mrf.mxu0
        %2377 = vdwg.mxu0
        %2378 = vmatprep.subr.bf16.mxu0 %v864
        %2379 = vmatpush1.bf16.msra.mxu0 %v863
        %2380 = vmatprep.subr.bf16.mxu0 %v860
        %2381 = vmatpush1.bf16.msra.mxu0 %v859
        %2382 = vmatprep.subr.bf16.mxu0 %v856
        %2383 = vmatpush1.bf16.msra.mxu0 %v855
        %2384 = vmatprep.subr.bf16.mxu0 %v852
        %2385 = vmatpush1.bf16.msra.mxu0 %v851
        %2386 = vmatprep.subr.bf16.mxu0 %v848
        %2387 = vmatpush1.bf16.msra.mxu0 %v847
        %2388 = vmatprep.subr.bf16.mxu0 %v844
        %2389 = vmatpush1.bf16.msra.mxu0 %v843
        %2390 = vmatprep.subr.bf16.mxu0 %v840
        %2391 = vmatpush1.bf16.msra.mxu0 %v839
        %2392 = vmatprep.subr.bf16.mxu0 %v836
        %2393 = vmatpush1.bf16.msra.mxu0 %v835
        %2394 = vmatprep.subr.bf16.mxu0 0
        %2395 = vmatpush2.bf16.msra.mxu0 0
        %2396 = vmatprep.subr.bf16.mxu0 0
        %2397 = vmatpush2.bf16.msra.mxu0 0
        %2398 = vmatprep.subr.bf16.mxu0 0
        %2399 = vmatpush2.bf16.msra.mxu0 0
        %2400 = vmatprep.subr.bf16.mxu0 0
        %2401 = vmatpush2.bf16.msra.mxu0 0
        %2402 = vmatprep.subr.bf16.mxu0 0
        %2403 = vmatpush2.bf16.msra.mxu0 0
        %2404 = vmatprep.subr.bf16.mxu0 0
        %2405 = vmatpush2.bf16.msra.mxu0 0
        %2406 = vmatprep.subr.bf16.mxu0 0
        %2407 = vmatpush2.bf16.msra.mxu0 0
        %2408 = vmatprep.subr.bf16.mxu0 0
        %2409 = vmatpush2.bf16.msra.mxu0 0
        %2410 = vmatprep.mubr.bf16.mxu0 0
        %2411 = vmatmul.mubr.bf16.gmra.mxu0 %v2336
        %v2412 = vpop.f32.mrf.mxu0
        %v2413 = vadd.f32 0.0, %v2412
        %v2414 = vpop.f32.mrf.mxu0
        %v2415 = vadd.f32 0.0, %v2414
        %v2416 = vpop.f32.mrf.mxu0
        %v2417 = vpop.f32.mrf.mxu0
        %2418 = vdwg.mxu0
        %v2419 = vadd.f32 %v2332, %v2372
        %v2420 = vadd.f32 %v2333, %v2374
        %v2421 = vadd.f32 %v2334, %v2413
        %v2422 = vadd.f32 %v2335, %v2415
        %v2423 = vxor.u32 %v2419, 2147483648
        %v2424 = vmul.f32 %v2423, 1.442695
        %v2425 = vpow.pop %v2424
        %v2426 = vadd.f32 %v2425, 1.0
        %v2427 = vrcp.pop %v2426
        %v2428 = vmul.f32 1.0, %v2427
        %v2429 = vxor.u32 %v2420, 2147483648
        %v2430 = vmul.f32 %v2429, 1.442695
        %v2431 = vpow.pop %v2430
        %v2432 = vadd.f32 %v2431, 1.0
        %v2433 = vrcp.pop %v2432
        %v2434 = vmul.f32 1.0, %v2433
        %v2435 = vtanh.pop %v2421
        %v2436 = vxor.u32 %v2422, 2147483648
        %v2437 = vmul.f32 %v2436, 1.442695
        %v2438 = vpow.pop %v2437
        %v2439 = vadd.f32 %v2438, 1.0
        %v2440 = vrcp.pop %v2439
        %v2441 = vmul.f32 1.0, %v2440
        %v2442 = vmul.f32 %v2434, %v2204
        %v2443 = vmul.f32 %v2428, %v2435
        %v2444 = vadd.f32 %v2442, %v2443
        %v2445 = vtanh.pop %v2444
        %v2446 = vmul.f32 %v2441, %v2445
        %s2447 = scalar_lea.vmem [#allocation7], 8
        %2448 = vst [vmem:[%s2447] sm:$0xff] %v2446
        %s2449 = scalar_lea.vmem %s315, 112 [#allocation8]
        %v2450 = vld [vmem:[%s2449] sm:$0xff]
        %v2451 = vld [vmem:[%s2449 + $0x8] sm:$0xff]
        %v2452 = vunpack.c.l.bf16 %v2450
        %v2453 = vunpack.c.h.bf16 %v2450
        %v2454 = vunpack.c.l.bf16 %v2451
        %v2455 = vunpack.c.h.bf16 %v2451
        %v2456 = vpack.c.bf16 %v2326, %v2326
        %2457 = vmatprep.subr.bf16.mxu0 %v583
        %2458 = vmatpush1.bf16.msra.mxu0 %v582
        %2459 = vmatprep.subr.bf16.mxu0 %v579
        %2460 = vmatpush1.bf16.msra.mxu0 %v578
        %2461 = vmatprep.subr.bf16.mxu0 %v575
        %2462 = vmatpush1.bf16.msra.mxu0 %v574
        %2463 = vmatprep.subr.bf16.mxu0 %v571
        %2464 = vmatpush1.bf16.msra.mxu0 %v570
        %2465 = vmatprep.subr.bf16.mxu0 %v567
        %2466 = vmatpush1.bf16.msra.mxu0 %v566
        %2467 = vmatprep.subr.bf16.mxu0 %v563
        %2468 = vmatpush1.bf16.msra.mxu0 %v562
        %2469 = vmatprep.subr.bf16.mxu0 %v559
        %2470 = vmatpush1.bf16.msra.mxu0 %v558
        %2471 = vmatprep.subr.bf16.mxu0 %v555
        %2472 = vmatpush1.bf16.msra.mxu0 %v554
        %2473 = vmatprep.subr.bf16.mxu0 0
        %2474 = vmatpush2.bf16.msra.mxu0 0
        %2475 = vmatprep.subr.bf16.mxu0 0
        %2476 = vmatpush2.bf16.msra.mxu0 0
        %2477 = vmatprep.subr.bf16.mxu0 0
        %2478 = vmatpush2.bf16.msra.mxu0 0
        %2479 = vmatprep.subr.bf16.mxu0 0
        %2480 = vmatpush2.bf16.msra.mxu0 0
        %2481 = vmatprep.subr.bf16.mxu0 0
        %2482 = vmatpush2.bf16.msra.mxu0 0
        %2483 = vmatprep.subr.bf16.mxu0 0
        %2484 = vmatpush2.bf16.msra.mxu0 0
        %2485 = vmatprep.subr.bf16.mxu0 0
        %2486 = vmatpush2.bf16.msra.mxu0 0
        %2487 = vmatprep.subr.bf16.mxu0 0
        %2488 = vmatpush2.bf16.msra.mxu0 0
        %2489 = vmatprep.mubr.bf16.mxu0 0
        %2490 = vmatmul.mubr.bf16.gmra.mxu0 %v2456
        %v2491 = vpop.f32.mrf.mxu0
        %v2492 = vadd.f32 0.0, %v2491
        %v2493 = vpop.f32.mrf.mxu0
        %v2494 = vadd.f32 0.0, %v2493
        %v2495 = vpop.f32.mrf.mxu0
        %v2496 = vpop.f32.mrf.mxu0
        %2497 = vdwg.mxu0
        %2498 = vmatprep.subr.bf16.mxu0 %v585
        %2499 = vmatpush1.bf16.msra.mxu0 %v584
        %2500 = vmatprep.subr.bf16.mxu0 %v581
        %2501 = vmatpush1.bf16.msra.mxu0 %v580
        %2502 = vmatprep.subr.bf16.mxu0 %v577
        %2503 = vmatpush1.bf16.msra.mxu0 %v576
        %2504 = vmatprep.subr.bf16.mxu0 %v573
        %2505 = vmatpush1.bf16.msra.mxu0 %v572
        %2506 = vmatprep.subr.bf16.mxu0 %v569
        %2507 = vmatpush1.bf16.msra.mxu0 %v568
        %2508 = vmatprep.subr.bf16.mxu0 %v565
        %2509 = vmatpush1.bf16.msra.mxu0 %v564
        %2510 = vmatprep.subr.bf16.mxu0 %v561
        %2511 = vmatpush1.bf16.msra.mxu0 %v560
        %2512 = vmatprep.subr.bf16.mxu0 %v557
        %2513 = vmatpush1.bf16.msra.mxu0 %v556
        %2514 = vmatprep.subr.bf16.mxu0 0
        %2515 = vmatpush2.bf16.msra.mxu0 0
        %2516 = vmatprep.subr.bf16.mxu0 0
        %2517 = vmatpush2.bf16.msra.mxu0 0
        %2518 = vmatprep.subr.bf16.mxu0 0
        %2519 = vmatpush2.bf16.msra.mxu0 0
        %2520 = vmatprep.subr.bf16.mxu0 0
        %2521 = vmatpush2.bf16.msra.mxu0 0
        %2522 = vmatprep.subr.bf16.mxu0 0
        %2523 = vmatpush2.bf16.msra.mxu0 0
        %2524 = vmatprep.subr.bf16.mxu0 0
        %2525 = vmatpush2.bf16.msra.mxu0 0
        %2526 = vmatprep.subr.bf16.mxu0 0
        %2527 = vmatpush2.bf16.msra.mxu0 0
        %2528 = vmatprep.subr.bf16.mxu0 0
        %2529 = vmatpush2.bf16.msra.mxu0 0
        %2530 = vmatprep.mubr.bf16.mxu0 0
        %2531 = vmatmul.mubr.bf16.gmra.mxu0 %v2456
        %v2532 = vpop.f32.mrf.mxu0
        %v2533 = vadd.f32 0.0, %v2532
        %v2534 = vpop.f32.mrf.mxu0
        %v2535 = vadd.f32 0.0, %v2534
        %v2536 = vpop.f32.mrf.mxu0
        %v2537 = vpop.f32.mrf.mxu0
        %2538 = vdwg.mxu0
        %v2539 = vadd.f32 %v2452, %v2492
        %v2540 = vadd.f32 %v2453, %v2494
        %v2541 = vadd.f32 %v2454, %v2533
        %v2542 = vadd.f32 %v2455, %v2535
        %v2543 = vxor.u32 %v2539, 2147483648
        %v2544 = vmul.f32 %v2543, 1.442695
        %v2545 = vpow.pop %v2544
        %v2546 = vadd.f32 %v2545, 1.0
        %v2547 = vrcp.pop %v2546
        %v2548 = vmul.f32 1.0, %v2547
        %v2549 = vxor.u32 %v2540, 2147483648
        %v2550 = vmul.f32 %v2549, 1.442695
        %v2551 = vpow.pop %v2550
        %v2552 = vadd.f32 %v2551, 1.0
        %v2553 = vrcp.pop %v2552
        %v2554 = vmul.f32 1.0, %v2553
        %v2555 = vtanh.pop %v2541
        %v2556 = vxor.u32 %v2542, 2147483648
        %v2557 = vmul.f32 %v2556, 1.442695
        %v2558 = vpow.pop %v2557
        %v2559 = vadd.f32 %v2558, 1.0
        %v2560 = vrcp.pop %v2559
        %v2561 = vmul.f32 1.0, %v2560
        %v2562 = vmul.f32 %v2554, %v2324
        %v2563 = vmul.f32 %v2548, %v2555
        %v2564 = vadd.f32 %v2562, %v2563
        %v2565 = vtanh.pop %v2564
        %v2566 = vmul.f32 %v2561, %v2565
        %s2567 = scalar_lea.vmem [#allocation6], 56
        %2568 = vst [vmem:[%s2567] sm:$0xff] %v2566
        %v2569 = vld [vmem:[%s322] sm:$0xff]
        %v2570 = vld [vmem:[%s322 + $0x8] sm:$0xff]
        %v2571 = vunpack.c.l.bf16 %v2569
        %v2572 = vunpack.c.h.bf16 %v2569
        %v2573 = vunpack.c.l.bf16 %v2570
        %v2574 = vunpack.c.h.bf16 %v2570
        %v2575 = vpack.c.bf16 %v2446, %v2446
        %2576 = vmatprep.subr.bf16.mxu0 %v862
        %2577 = vmatpush1.bf16.msra.mxu0 %v861
        %2578 = vmatprep.subr.bf16.mxu0 %v858
        %2579 = vmatpush1.bf16.msra.mxu0 %v857
        %2580 = vmatprep.subr.bf16.mxu0 %v854
        %2581 = vmatpush1.bf16.msra.mxu0 %v853
        %2582 = vmatprep.subr.bf16.mxu0 %v850
        %2583 = vmatpush1.bf16.msra.mxu0 %v849
        %2584 = vmatprep.subr.bf16.mxu0 %v846
        %2585 = vmatpush1.bf16.msra.mxu0 %v845
        %2586 = vmatprep.subr.bf16.mxu0 %v842
        %2587 = vmatpush1.bf16.msra.mxu0 %v841
        %2588 = vmatprep.subr.bf16.mxu0 %v838
        %2589 = vmatpush1.bf16.msra.mxu0 %v837
        %2590 = vmatprep.subr.bf16.mxu0 %v834
        %2591 = vmatpush1.bf16.msra.mxu0 %v833
        %2592 = vmatprep.subr.bf16.mxu0 0
        %2593 = vmatpush2.bf16.msra.mxu0 0
        %2594 = vmatprep.subr.bf16.mxu0 0
        %2595 = vmatpush2.bf16.msra.mxu0 0
        %2596 = vmatprep.subr.bf16.mxu0 0
        %2597 = vmatpush2.bf16.msra.mxu0 0
        %2598 = vmatprep.subr.bf16.mxu0 0
        %2599 = vmatpush2.bf16.msra.mxu0 0
        %2600 = vmatprep.subr.bf16.mxu0 0
        %2601 = vmatpush2.bf16.msra.mxu0 0
        %2602 = vmatprep.subr.bf16.mxu0 0
        %2603 = vmatpush2.bf16.msra.mxu0 0
        %2604 = vmatprep.subr.bf16.mxu0 0
        %2605 = vmatpush2.bf16.msra.mxu0 0
        %2606 = vmatprep.subr.bf16.mxu0 0
        %2607 = vmatpush2.bf16.msra.mxu0 0
        %2608 = vmatprep.mubr.bf16.mxu0 0
        %2609 = vmatmul.mubr.bf16.gmra.mxu0 %v2575
        %v2610 = vpop.f32.mrf.mxu0
        %v2611 = vadd.f32 0.0, %v2610
        %v2612 = vpop.f32.mrf.mxu0
        %v2613 = vadd.f32 0.0, %v2612
        %v2614 = vpop.f32.mrf.mxu0
        %v2615 = vpop.f32.mrf.mxu0
        %2616 = vdwg.mxu0
        %2617 = vmatprep.subr.bf16.mxu0 %v864
        %2618 = vmatpush1.bf16.msra.mxu0 %v863
        %2619 = vmatprep.subr.bf16.mxu0 %v860
        %2620 = vmatpush1.bf16.msra.mxu0 %v859
        %2621 = vmatprep.subr.bf16.mxu0 %v856
        %2622 = vmatpush1.bf16.msra.mxu0 %v855
        %2623 = vmatprep.subr.bf16.mxu0 %v852
        %2624 = vmatpush1.bf16.msra.mxu0 %v851
        %2625 = vmatprep.subr.bf16.mxu0 %v848
        %2626 = vmatpush1.bf16.msra.mxu0 %v847
        %2627 = vmatprep.subr.bf16.mxu0 %v844
        %2628 = vmatpush1.bf16.msra.mxu0 %v843
        %2629 = vmatprep.subr.bf16.mxu0 %v840
        %2630 = vmatpush1.bf16.msra.mxu0 %v839
        %2631 = vmatprep.subr.bf16.mxu0 %v836
        %2632 = vmatpush1.bf16.msra.mxu0 %v835
        %2633 = vmatprep.subr.bf16.mxu0 0
        %2634 = vmatpush2.bf16.msra.mxu0 0
        %2635 = vmatprep.subr.bf16.mxu0 0
        %2636 = vmatpush2.bf16.msra.mxu0 0
        %2637 = vmatprep.subr.bf16.mxu0 0
        %2638 = vmatpush2.bf16.msra.mxu0 0
        %2639 = vmatprep.subr.bf16.mxu0 0
        %2640 = vmatpush2.bf16.msra.mxu0 0
        %2641 = vmatprep.subr.bf16.mxu0 0
        %2642 = vmatpush2.bf16.msra.mxu0 0
        %2643 = vmatprep.subr.bf16.mxu0 0
        %2644 = vmatpush2.bf16.msra.mxu0 0
        %2645 = vmatprep.subr.bf16.mxu0 0
        %2646 = vmatpush2.bf16.msra.mxu0 0
        %2647 = vmatprep.subr.bf16.mxu0 0
        %2648 = vmatpush2.bf16.msra.mxu0 0
        %2649 = vmatprep.mubr.bf16.mxu0 0
        %2650 = vmatmul.mubr.bf16.gmra.mxu0 %v2575
        %v2651 = vpop.f32.mrf.mxu0
        %v2652 = vadd.f32 0.0, %v2651
        %v2653 = vpop.f32.mrf.mxu0
        %v2654 = vadd.f32 0.0, %v2653
        %v2655 = vpop.f32.mrf.mxu0
        %v2656 = vpop.f32.mrf.mxu0
        %2657 = vdwg.mxu0
        %v2658 = vadd.f32 %v2571, %v2611
        %v2659 = vadd.f32 %v2572, %v2613
        %v2660 = vadd.f32 %v2573, %v2652
        %v2661 = vadd.f32 %v2574, %v2654
        %v2662 = vxor.u32 %v2658, 2147483648
        %v2663 = vmul.f32 %v2662, 1.442695
        %v2664 = vpow.pop %v2663
        %v2665 = vadd.f32 %v2664, 1.0
        %v2666 = vrcp.pop %v2665
        %v2667 = vmul.f32 1.0, %v2666
        %v2668 = vxor.u32 %v2659, 2147483648
        %v2669 = vmul.f32 %v2668, 1.442695
        %v2670 = vpow.pop %v2669
        %v2671 = vadd.f32 %v2670, 1.0
        %v2672 = vrcp.pop %v2671
        %v2673 = vmul.f32 1.0, %v2672
        %v2674 = vtanh.pop %v2660
        %v2675 = vxor.u32 %v2661, 2147483648
        %v2676 = vmul.f32 %v2675, 1.442695
        %v2677 = vpow.pop %v2676
        %v2678 = vadd.f32 %v2677, 1.0
        %v2679 = vrcp.pop %v2678
        %v2680 = vmul.f32 1.0, %v2679
        %v2681 = vmul.f32 %v2673, %v2444
        %v2682 = vmul.f32 %v2667, %v2674
        %v2683 = vadd.f32 %v2681, %v2682
        %v2684 = vtanh.pop %v2683
        %v2685 = vmul.f32 %v2680, %v2684
        %2686 = vst [vmem:[#allocation7] sm:$0xff] %v2685
        %2687 = vst [vmem:[#allocation2] sm:$0xff] %v2566
        %2688 = vst [vmem:[#allocation3] sm:$0xff] %v2564
        %2689 = vst [vmem:[#allocation4] sm:$0xff] %v2685
        %2690 = vst [vmem:[#allocation5] sm:$0xff] %v2683
        %v2691 = vld [vmem:[#allocation6] sm:$0xff]
        %v2692 = vld [vmem:[#allocation6 + $0x8] sm:$0xff]
        %v2693 = vld [vmem:[#allocation6 + $0x10] sm:$0xff]
        %v2694 = vld [vmem:[#allocation6 + $0x18] sm:$0xff]
        %v2695 = vld [vmem:[#allocation6 + $0x20] sm:$0xff]
        %v2696 = vld [vmem:[#allocation6 + $0x28] sm:$0xff]
        %v2697 = vld [vmem:[#allocation6 + $0x30] sm:$0xff]
        %v2698 = vld [vmem:[#allocation6 + $0x38] sm:$0xff]
        %v2699 = vpack.c.bf16 %v2691, %v2691
        %v2700 = vpack.c.bf16 %v2692, %v2692
        %v2701 = vpack.c.bf16 %v2693, %v2693
        %v2702 = vpack.c.bf16 %v2694, %v2694
        %v2703 = vpack.c.bf16 %v2695, %v2695
        %v2704 = vpack.c.bf16 %v2696, %v2696
        %v2705 = vpack.c.bf16 %v2697, %v2697
        %v2706 = vpack.c.bf16 %v2698, %v2698
        %2707 = vst [vmem:[%s364] sm:$0xf] %v2699
        %2708 = vst [vmem:[%s364 + $0x4] sm:$0xf] %v2700
        %2709 = vst [vmem:[%s364 + $0x8] sm:$0xf] %v2701
        %2710 = vst [vmem:[%s364 + $0xc] sm:$0xf] %v2702
        %2711 = vst [vmem:[%s364 + $0x10] sm:$0xf] %v2703
        %2712 = vst [vmem:[%s364 + $0x14] sm:$0xf] %v2704
        %2713 = vst [vmem:[%s364 + $0x18] sm:$0xf] %v2705
        %2714 = vst [vmem:[%s364 + $0x1c] sm:$0xf] %v2706
        %v2715 = vld [vmem:[#allocation7] sm:$0xff]
        %v2716 = vld [vmem:[#allocation7 + $0x8] sm:$0xff]
        %v2717 = vld [vmem:[#allocation7 + $0x10] sm:$0xff]
        %v2718 = vld [vmem:[#allocation7 + $0x18] sm:$0xff]
        %v2719 = vld [vmem:[#allocation7 + $0x20] sm:$0xff]
        %v2720 = vld [vmem:[#allocation7 + $0x28] sm:$0xff]
        %v2721 = vld [vmem:[#allocation7 + $0x30] sm:$0xff]
        %v2722 = vld [vmem:[#allocation7 + $0x38] sm:$0xff]
        %v2723 = vpack.c.bf16 %v2715, %v2715
        %v2724 = vpack.c.bf16 %v2716, %v2716
        %v2725 = vpack.c.bf16 %v2717, %v2717
        %v2726 = vpack.c.bf16 %v2718, %v2718
        %v2727 = vpack.c.bf16 %v2719, %v2719
        %v2728 = vpack.c.bf16 %v2720, %v2720
        %v2729 = vpack.c.bf16 %v2721, %v2721
        %v2730 = vpack.c.bf16 %v2722, %v2722
        %2731 = vst [vmem:[%s371] sm:$0xf] %v2723
        %2732 = vst [vmem:[%s371 + $0x4] sm:$0xf] %v2724
        %2733 = vst [vmem:[%s371 + $0x8] sm:$0xf] %v2725
        %2734 = vst [vmem:[%s371 + $0xc] sm:$0xf] %v2726
        %2735 = vst [vmem:[%s371 + $0x10] sm:$0xf] %v2727
        %2736 = vst [vmem:[%s371 + $0x14] sm:$0xf] %v2728
        %2737 = vst [vmem:[%s371 + $0x18] sm:$0xf] %v2729
        %2738 = vst [vmem:[%s371 + $0x1c] sm:$0xf] %v2730
        %s2739 = smul.u32 8, %s17
        %p2740 = scmp.lt.s32.totalorder %s2739, 15
        %s2741 = scalar_select %p2740, %s2739, 15
        %s2742 = smul.addr %s2741, 4
        %s2743 = scalar_lea.vmem %s4, %s2742
        %s2744 = ssub.s32 1, %s17
        %s2745 = smul.u32 8, %s2744
        %p2746 = scmp.lt.s32.totalorder %s2745, 15
        %s2747 = scalar_select %p2746, %s2745, 15
        %s2748 = smul.addr %s2747, 4
        %s2749 = scalar_lea.vmem %s5, %s2748
        // Predicated region
        $region87: #{speech_rnn_ctc_forward.8} parent=73 // pred_check
          %p2750 = pneg %p131
        $region88: #{speech_rnn_ctc_forward.8} parent=73 // pred_check_branch
          %2752 = sbr.rel (%p2750) target = $region90
        $region89: #{speech_rnn_ctc_forward.8} parent=73 // pred_region
          %s2753 = smul.u32 8, %s17
        $region90: #{speech_rnn_ctc_forward.8} parent=73 // pred_fallthru
          _
        // Predicated region
        $region91: #{speech_rnn_ctc_forward.8} parent=73 // pred_check
          %p2754 = pneg %p159
        $region92: #{speech_rnn_ctc_forward.8} parent=73 // pred_check_branch
          %2756 = sbr.rel (%p2754) target = $region94
        $region93: #{speech_rnn_ctc_forward.8} parent=73 // pred_region
          %s2757 = ssub.s32 1, %s17
          %s2758 = smul.u32 8, %s2757
        $region94: #{speech_rnn_ctc_forward.8} parent=73 // pred_fallthru
          _
      $region74: #{speech_rnn_ctc_forward.8} parent=5 // pred_fallthru
        _
      %p2759 = scmp.le.s32.totalorder 2, %s12
      // Predicated region
      $region95: #{speech_rnn_ctc_forward.8} parent=5 // pred_check
        %p2760 = pneg %p2759
      $region96: #{speech_rnn_ctc_forward.8} parent=5 // pred_check_branch
        %2762 = sbr.rel (%p2760) target = $region98
      $region97: #{speech_rnn_ctc_forward.8} parent=5 // pred_region
        %s2763 = ssub.s32 %s12, 2
        // Predicated region
        $region99: #{speech_rnn_ctc_forward.8} parent=97 // pred_check
          %p2764 = pneg %p137
        $region100: #{speech_rnn_ctc_forward.8} parent=97 // pred_check_branch
          %2766 = sbr.rel (%p2764) target = $region102
        $region101: #{speech_rnn_ctc_forward.8} parent=97 // pred_region
          %s2767 = smul.u32 8, %s18
          %p2768 = scmp.lt.s32.totalorder %s2767, 15
          %s2769 = scalar_select %p2768, %s2767, 15
          %s2770 = smul.addr %s2769, 4
          %s2771 = scalar_lea.vmem %s4, %s2770
        $region102: #{speech_rnn_ctc_forward.8} parent=97 // pred_fallthru
          _
        // Predicated region
        $region103: #{speech_rnn_ctc_forward.8} parent=97 // pred_check
          %p2772 = pneg %p165
        $region104: #{speech_rnn_ctc_forward.8} parent=97 // pred_check_branch
          %2774 = sbr.rel (%p2772) target = $region106
        $region105: #{speech_rnn_ctc_forward.8} parent=97 // pred_region
          %s2775 = ssub.s32 1, %s18
          %s2776 = smul.u32 8, %s2775
          %p2777 = scmp.lt.s32.totalorder %s2776, 15
          %s2778 = scalar_select %p2777, %s2776, 15
          %s2779 = smul.addr %s2778, 4
          %s2780 = scalar_lea.vmem %s5, %s2779
        $region106: #{speech_rnn_ctc_forward.8} parent=97 // pred_fallthru
          _
      $region98: #{speech_rnn_ctc_forward.8} parent=5 // pred_fallthru
        _
    $region6: #{speech_rnn_ctc_forward.8} parent=1 // loop_footer
      %s16 = sadd.s32 1, %s12
    $region7: #{speech_rnn_ctc_forward.8} parent=1 // loop_footer_branch
      %11 = sbr.rel target = $region3
    $region8: #{speech_rnn_ctc_forward.8} parent=1 // loop_exit
      _

</llo_original>
